<compile_context>
chip_gen: v5e
topology: v5e:2x2
jax: 0.10.0
libtpu: 0.0.40
codegen_flags: <defaults>
</compile_context>

<pallas_src>
import jax
import jax.numpy as jnp
from jax.experimental import pallas as pl
from jax.experimental.pallas import tpu as pltpu


# ----------------------------- Pallas kernels ------------------------------

def _conv_pool_kernel(x_ref, w1_ref, b1_ref, w2_ref, b2_ref, s28_ref, s14_ref,
                      o_ref, c1_buf, p1_buf, c2_buf):
    """Per-image fused conv1+ReLU+pool1+conv2+ReLU+pool2.

    x_ref   : (1, 1, 1024)  zero-padded 30x30 image, row-major flattened (tail zeros)
    w1_ref  : (32, 9)       conv1 weights  [cout, tap]         (Cin == 1)
    b1_ref  : (32, 1)       conv1 bias
    w2_ref  : (9, 32, 64)   conv2 weights  [tap, cin, cout]
    b2_ref  : (1, 64)       conv2 bias
    s28_ref : (14, 28)      0/1 "take even column" selection matrix
    s14_ref : (7, 14)       0/1 "take even column" selection matrix
    o_ref   : (1, 49, 64)   pooled conv2 features [y*7+x, cout]
    c1_buf  : (896, 32)     conv1+ReLU output, std layout (flat spatial, channel)
    p1_buf  : (304, 32)     zero-padded pooled1 (16x16 grid flattened, row stride 16)
    c2_buf  : (256, 64)     conv2+ReLU output on the 16x16 padded grid (flattened)
    """
    f32 = jnp.float32

    # ---- conv1 (1->32, 3x3, pad=1): implicit im2col over the flattened padded image.
    # Accumulate in transposed form (channels on sublanes, flat spatial on lanes).
    acc1 = jnp.zeros((32, 896), f32)
    for di in range(3):
        for dj in range(3):
            tap = di * 3 + dj
            s = di * 30 + dj                       # flat shift of this tap (row stride 30)
            xs = x_ref[0, :, s:s + 896]            # (1, 896) shifted slab
            acc1 = acc1 + w1_ref[:, tap:tap + 1] * xs   # (32,1)*(1,896) outer mult-add
    acc1 = jnp.maximum(acc1 + b1_ref[...], 0.0)    # bias + ReLU
    # Switch to standard layout (flat spatial on sublanes, channels on lanes).
    c1_buf[...] = jnp.transpose(acc1)              # (896, 32)

    # ---- maxpool 2x2 on conv1 -> pooled1 written into a zero-padded 16x16 flat buffer.
    p1_buf[...] = jnp.zeros_like(p1_buf)
    for r in range(14):                            # pooled rows
        a0 = (2 * r) * 30                          # conv1 row 2r   (flat offset)
        a1 = (2 * r + 1) * 30                      # conv1 row 2r+1
        e0 = c1_buf[a0:a0 + 28, :]
        e1 = c1_buf[a0 + 1:a0 + 29, :]
        o0 = c1_buf[a1:a1 + 28, :]
        o1 = c1_buf[a1 + 1:a1 + 29, :]
        rm = jnp.maximum(jnp.maximum(e0, e1), jnp.maximum(o0, o1))   # (28,32); even rows valid
        sel = jnp.dot(s28_ref[...], rm, preferred_element_type=f32)  # (14,32) take even rows
        # padded 16x16 grid position (r+1, 1..14)
        p1_buf[(r + 1) * 16 + 1:(r + 1) * 16 + 15, :] = sel

    # ---- conv2 (32->64, 3x3, pad=1): 9 shifted MXU matmuls over the padded flat buffer.
    acc2 = jnp.zeros((256, 64), f32)
    for di in range(3):
        for dj in range(3):
            tap = di * 3 + dj
            s2 = di * 16 + dj                      # flat shift (row stride 16)
            acc2 = acc2 + jnp.dot(p1_buf[s2:s2 + 256, :], w2_ref[tap],
                                  preferred_element_type=f32)        # (256,32)@(32,64)
    c2_buf[...] = jnp.maximum(acc2 + b2_ref[...], 0.0)               # bias + ReLU

    # ---- maxpool 2x2 on conv2 -> (49, 64) feature rows for the FC stage.
    for r2 in range(7):
        q0 = (2 * r2) * 16
        q1 = (2 * r2 + 1) * 16
        e0 = c2_buf[q0:q0 + 14, :]
        e1 = c2_buf[q0 + 1:q0 + 15, :]
        o0 = c2_buf[q1:q1 + 14, :]
        o1 = c2_buf[q1 + 1:q1 + 15, :]
        rm = jnp.maximum(jnp.maximum(e0, e1), jnp.maximum(o0, o1))   # (14,64)
        sel = jnp.dot(s14_ref[...], rm, preferred_element_type=f32)  # (7,64) take even rows
        o_ref[0, r2 * 7:(r2 + 1) * 7, :] = sel


def _fc_kernel(f_ref, w1_ref, b1_ref, w2_ref, b2_ref, o_ref):
    """fc1 + ReLU + fc2 (fc2 padded to 128 output lanes for a lane-dense store)."""
    h = jnp.dot(f_ref[...], w1_ref[...], preferred_element_type=jnp.float32) + b1_ref[...]
    h = jnp.maximum(h, 0.0)
    o_ref[...] = jnp.dot(h, w2_ref[...], preferred_element_type=jnp.float32) + b2_ref[...]


# ------------------------------ wrappers / params ---------------------------

def init_params(key):
    """Deterministic synthetic parameters (PyTorch-style init), pre-laid-out for the kernels."""
    ks = jax.random.split(key, 8)

    def u(k, shape, fan_in):
        bound = 1.0 / jnp.sqrt(fan_in)
        return jax.random.uniform(k, shape, jnp.float32, -bound, bound)

    conv1_w = u(ks[0], (32, 1, 3, 3), 9)            # [Cout, Cin, KH, KW]
    conv1_b = u(ks[1], (32,), 9)
    conv2_w = u(ks[2], (64, 32, 3, 3), 32 * 9)
    conv2_b = u(ks[3], (64,), 32 * 9)
    fc1_w = u(ks[4], (128, 64 * 7 * 7), 64 * 7 * 7)  # PyTorch Linear: [out, in]
    fc1_b = u(ks[5], (128,), 64 * 7 * 7)
    fc2_w = u(ks[6], (2, 128), 128)
    fc2_b = u(ks[7], (2,), 128)

    # conv1: [cout, tap] (Cin == 1), tap = di*3 + dj
    w1t = conv1_w.reshape(32, 9)
    b1 = conv1_b.reshape(32, 1)
    # conv2: [tap, cin, cout]
    w2t = jnp.transpose(conv2_w, (2, 3, 1, 0)).reshape(9, 32, 64)
    b2 = conv2_b.reshape(1, 64)
    # fc1: fold the NCHW flatten permutation into the weights.
    # Kernel emits features in (y*7+x)*64 + c order; PyTorch flatten is c*49 + y*7 + x.
    fc1_wm = jnp.transpose(fc1_w.reshape(128, 64, 7, 7), (2, 3, 1, 0)).reshape(3136, 128)
    fc1_bv = fc1_b.reshape(1, 128)
    # fc2: pad N=2 -> 128 lanes (sliced back outside the kernel).
    fc2_wm = jnp.pad(fc2_w.T, ((0, 0), (0, 126)))    # (128, 128)
    fc2_bv = jnp.pad(fc2_b, (0, 126)).reshape(1, 128)

    # 0/1 "take even column" selection matrices used by the fused max-pool.
    s28 = (2 * jnp.arange(14)[:, None] == jnp.arange(28)[None, :]).astype(jnp.float32)
    s14 = (2 * jnp.arange(7)[:, None] == jnp.arange(14)[None, :]).astype(jnp.float32)

    return dict(w1t=w1t, b1=b1, w2t=w2t, b2=b2,
                fc1_wm=fc1_wm, fc1_b=fc1_bv, fc2_wm=fc2_wm, fc2_b=fc2_bv,
                s28=s28, s14=s14)


def subclassnet_forward(x_nchw, params):
    B = x_nchw.shape[0]
    # Tiny XLA prep: zero-pad the 28x28 image and flatten its 30x30 padded grid row-major.
    x = x_nchw.reshape(B, 28, 28).astype(jnp.float32)
    xp = jnp.pad(x, ((0, 0), (1, 1), (1, 1)))                    # (B, 30, 30)
    xflat = jnp.pad(xp.reshape(B, 900), ((0, 0), (0, 124)))      # (B, 1024) zero tail
    xflat = xflat.reshape(B, 1, 1024)

    # ---- fused conv stack: one kernel invocation per image (parallel across cores).
    feat = pl.pallas_call(
        _conv_pool_kernel,
        out_shape=jax.ShapeDtypeStruct((B, 49, 64), jnp.float32),
        grid_spec=pltpu.PrefetchScalarGridSpec(
            num_scalar_prefetch=0,
            grid=(B,),
            in_specs=[
                pl.BlockSpec((1, 1, 1024), lambda b: (b, 0, 0)),
                pl.BlockSpec((32, 9), lambda b: (0, 0)),
                pl.BlockSpec((32, 1), lambda b: (0, 0)),
                pl.BlockSpec((9, 32, 64), lambda b: (0, 0, 0)),
                pl.BlockSpec((1, 64), lambda b: (0, 0)),
                pl.BlockSpec((14, 28), lambda b: (0, 0)),
                pl.BlockSpec((7, 14), lambda b: (0, 0)),
            ],
            out_specs=pl.BlockSpec((1, 49, 64), lambda b: (b, 0, 0)),
            scratch_shapes=[
                pltpu.VMEM((896, 32), jnp.float32),   # conv1+ReLU output
                pltpu.VMEM((304, 32), jnp.float32),   # padded pooled1 (flat 16x16 + tail)
                pltpu.VMEM((256, 64), jnp.float32),   # conv2+ReLU output (flat 16x16)
            ],
        ),
        compiler_params=pltpu.CompilerParams(
            dimension_semantics=("parallel",),
            vmem_limit_bytes=32 * 1024 * 1024,
        ),
    )(xflat, params["w1t"], params["b1"], params["w2t"], params["b2"],
      params["s28"], params["s14"])

    # 25 KB reshape in XLA; the flatten permutation is already folded into fc1 weights.
    feats = feat.reshape(B, 49 * 64)

    # ---- fc1 + ReLU + fc2 (fc2 output padded to 128 lanes, sliced after the kernel).
    tb = B if B <= 256 else 256
    out = pl.pallas_call(
        _fc_kernel,
        out_shape=jax.ShapeDtypeStruct((B, 128), jnp.float32),
        grid_spec=pltpu.PrefetchScalarGridSpec(
            num_scalar_prefetch=0,
            grid=(pl.cdiv(B, tb),),
            in_specs=[
                pl.BlockSpec((tb, 3136), lambda i: (i, 0)),
                pl.BlockSpec((3136, 128), lambda i: (0, 0)),
                pl.BlockSpec((1, 128), lambda i: (0, 0)),
                pl.BlockSpec((128, 128), lambda i: (0, 0)),
                pl.BlockSpec((1, 128), lambda i: (0, 0)),
            ],
            out_specs=pl.BlockSpec((tb, 128), lambda i: (i, 0)),
        ),
        compiler_params=pltpu.CompilerParams(
            dimension_semantics=("parallel",),
            vmem_limit_bytes=32 * 1024 * 1024,
        ),
    )(feats, params["fc1_wm"], params["fc1_b"], params["fc2_wm"], params["fc2_b"])

    return out[:, :2]                                             # [B, 2] logits


if __name__ == "__main__":
    key = jax.random.PRNGKey(0)
    k_x, k_p = jax.random.split(key)

    # batch=2, channels=1, spatial=28 (fixed by fc1 = Linear(64*7*7, 128))
    x = jax.random.normal(k_x, (2, 1, 28, 28), dtype=jnp.float32)
    params = init_params(k_p)

    logits = jax.jit(subclassnet_forward)(x, params)
    logits = jax.block_until_ready(logits)

    assert logits.shape == (2, 2), logits.shape
    assert bool(jnp.all(jnp.isfinite(logits)))
    print("KERNEL_OK")
</pallas_src>

<mosaic_0001>
module attributes {stable_mosaic.version = 11 : i64} {
  func.func @_fc_kernel(%arg0: i32, %arg1: memref<2x3136xf32, #tpu.memory_space<vmem>>, %arg2: memref<3136x128xf32, #tpu.memory_space<vmem>>, %arg3: memref<1x128xf32, #tpu.memory_space<vmem>>, %arg4: memref<128x128xf32, #tpu.memory_space<vmem>>, %arg5: memref<1x128xf32, #tpu.memory_space<vmem>>, %arg6: memref<2x128xf32, #tpu.memory_space<vmem>>) attributes {dimension_semantics = [#tpu.dimension_semantics<parallel>], iteration_bounds = array<i64: 1>, scalar_prefetch = 0 : i64, scratch_operands = 0 : i64, tpu.core_type = #tpu.core_type<tc>, window_params = [{transform_indices = @transform_0, window_bounds = array<i64: 2, 3136>}, {pipeline_mode = #tpu.pipeline_mode<synchronous>, transform_indices = @transform_1, window_bounds = array<i64: 3136, 128>}, {pipeline_mode = #tpu.pipeline_mode<synchronous>, transform_indices = @transform_2, window_bounds = array<i64: 1, 128>}, {pipeline_mode = #tpu.pipeline_mode<synchronous>, transform_indices = @transform_3, window_bounds = array<i64: 128, 128>}, {pipeline_mode = #tpu.pipeline_mode<synchronous>, transform_indices = @transform_4, window_bounds = array<i64: 1, 128>}, {transform_indices = @transform_5, window_bounds = array<i64: 2, 128>}]} {
    %c0 = arith.constant 0 : index
    %c0_0 = arith.constant 0 : index
    %0 = vector.load %arg1[%c0, %c0_0] : memref<2x3136xf32, #tpu.memory_space<vmem>>, vector<2x3136xf32>
    %c0_1 = arith.constant 0 : index
    %c0_2 = arith.constant 0 : index
    %1 = vector.load %arg2[%c0_1, %c0_2] : memref<3136x128xf32, #tpu.memory_space<vmem>>, vector<3136x128xf32>
    %cst = arith.constant dense<0.000000e+00> : vector<2x128xf32>
    %2 = tpu.matmul %0, %1, %cst {dimension_numbers = #tpu.dot_dimension_numbers<[1], [0], [0], [1], [0, 0, 1, 1], [], []>} : vector<2x3136xf32>, vector<3136x128xf32>, vector<2x128xf32> -> vector<2x128xf32>
    %c0_3 = arith.constant 0 : index
    %c0_4 = arith.constant 0 : index
    %3 = vector.load %arg3[%c0_3, %c0_4] : memref<1x128xf32, #tpu.memory_space<vmem>>, vector<1x128xf32>
    %4 = vector.broadcast %3 : vector<1x128xf32> to vector<2x128xf32>
    %5 = arith.addf %2, %4 : vector<2x128xf32>
    %cst_5 = arith.constant 0.000000e+00 : f32
    %6 = vector.broadcast %cst_5 : f32 to vector<2x128xf32>
    %7 = arith.maximumf %5, %6 : vector<2x128xf32>
    %c0_6 = arith.constant 0 : index
    %c0_7 = arith.constant 0 : index
    %8 = vector.load %arg4[%c0_6, %c0_7] : memref<128x128xf32, #tpu.memory_space<vmem>>, vector<128x128xf32>
    %cst_8 = arith.constant dense<0.000000e+00> : vector<2x128xf32>
    %9 = tpu.matmul %7, %8, %cst_8 {dimension_numbers = #tpu.dot_dimension_numbers<[1], [0], [0], [1], [0, 0, 1, 1], [], []>} : vector<2x128xf32>, vector<128x128xf32>, vector<2x128xf32> -> vector<2x128xf32>
    %c0_9 = arith.constant 0 : index
    %c0_10 = arith.constant 0 : index
    %10 = vector.load %arg5[%c0_9, %c0_10] : memref<1x128xf32, #tpu.memory_space<vmem>>, vector<1x128xf32>
    %11 = vector.broadcast %10 : vector<1x128xf32> to vector<2x128xf32>
    %12 = arith.addf %9, %11 : vector<2x128xf32>
    %c0_11 = arith.constant 0 : index
    %c0_12 = arith.constant 0 : index
    %13 = vector.load %arg6[%c0_11, %c0_12] : memref<2x128xf32, #tpu.memory_space<vmem>>, vector<2x128xf32>
    tpu.vector_store %arg6[%c0_11, %c0_12], %12 {strides = array<i32>} : memref<2x128xf32, #tpu.memory_space<vmem>>, vector<2x128xf32>,
    return
  }
  func.func @transform_0(%arg0: i32) -> (i32, i32) {
    %c0_i32 = arith.constant 0 : i32
    %c0_i32_0 = arith.constant 0 : i32
    return %arg0, %c0_i32 : i32, i32
  }
  func.func @transform_1(%arg0: i32) -> (i32, i32) {
    %c0_i32 = arith.constant 0 : i32
    %c0_i32_0 = arith.constant 0 : i32
    %c0_i32_1 = arith.constant 0 : i32
    return %c0_i32, %c0_i32_0 : i32, i32
  }
  func.func @transform_2(%arg0: i32) -> (i32, i32) {
    %c0_i32 = arith.constant 0 : i32
    %c0_i32_0 = arith.constant 0 : i32
    %c0_i32_1 = arith.constant 0 : i32
    return %c0_i32, %c0_i32_0 : i32, i32
  }
  func.func @transform_3(%arg0: i32) -> (i32, i32) {
    %c0_i32 = arith.constant 0 : i32
    %c0_i32_0 = arith.constant 0 : i32
    %c0_i32_1 = arith.constant 0 : i32
    return %c0_i32, %c0_i32_0 : i32, i32
  }
  func.func @transform_4(%arg0: i32) -> (i32, i32) {
    %c0_i32 = arith.constant 0 : i32
    %c0_i32_0 = arith.constant 0 : i32
    %c0_i32_1 = arith.constant 0 : i32
    return %c0_i32, %c0_i32_0 : i32, i32
  }
  func.func @transform_5(%arg0: i32) -> (i32, i32) {
    %c0_i32 = arith.constant 0 : i32
    %c0_i32_0 = arith.constant 0 : i32
    return %arg0, %c0_i32 : i32, i32
  }
}

module attributes {stable_mosaic.version = 11 : i64} {
  func.func @_conv_pool_kernel(%arg0: i32, %arg1: memref<1x1x1024xf32, #tpu.memory_space<vmem>>, %arg2: memref<32x9xf32, #tpu.memory_space<vmem>>, %arg3: memref<32x1xf32, #tpu.memory_space<vmem>>, %arg4: memref<9x32x64xf32, #tpu.memory_space<vmem>>, %arg5: memref<1x64xf32, #tpu.memory_space<vmem>>, %arg6: memref<14x28xf32, #tpu.memory_space<vmem>>, %arg7: memref<7x14xf32, #tpu.memory_space<vmem>>, %arg8: memref<1x49x64xf32, #tpu.memory_space<vmem>>, %arg9: memref<896x32xf32, #tpu.memory_space<vmem>>, %arg10: memref<304x32xf32, #tpu.memory_space<vmem>>, %arg11: memref<256x64xf32, #tpu.memory_space<vmem>>) attributes {dimension_semantics = [#tpu.dimension_semantics<parallel>], iteration_bounds = array<i64: 2>, scalar_prefetch = 0 : i64, scratch_operands = 3 : i64, tpu.core_type = #tpu.core_type<tc>, window_params = [{transform_indices = @transform_0, window_bounds = array<i64: 1, 1, 1024>}, {pipeline_mode = #tpu.pipeline_mode<synchronous>, transform_indices = @transform_1, window_bounds = array<i64: 32, 9>}, {pipeline_mode = #tpu.pipeline_mode<synchronous>, transform_indices = @transform_2, window_bounds = array<i64: 32, 1>}, {pipeline_mode = #tpu.pipeline_mode<synchronous>, transform_indices = @transform_3, window_bounds = array<i64: 9, 32, 64>}, {pipeline_mode = #tpu.pipeline_mode<synchronous>, transform_indices = @transform_4, window_bounds = array<i64: 1, 64>}, {pipeline_mode = #tpu.pipeline_mode<synchronous>, transform_indices = @transform_5, window_bounds = array<i64: 14, 28>}, {pipeline_mode = #tpu.pipeline_mode<synchronous>, transform_indices = @transform_6, window_bounds = array<i64: 7, 14>}, {transform_indices = @transform_7, window_bounds = array<i64: 1, 49, 64>}]} {
    %cst = arith.constant 0.000000e+00 : f32
    %0 = vector.broadcast %cst : f32 to vector<32x896xf32>
    %c0 = arith.constant 0 : index
    %c0_0 = arith.constant 0 : index
    %c0_1 = arith.constant 0 : index
    %1 = vector.load %arg1[%c0, %c0_0, %c0_1] : memref<1x1x1024xf32, #tpu.memory_space<vmem>>, vector<1x1x896xf32>
    %2 = vector.shape_cast %1 : vector<1x1x896xf32> to vector<1x896xf32>
    %c0_2 = arith.constant 0 : index
    %c0_3 = arith.constant 0 : index
    %3 = vector.load %arg2[%c0_2, %c0_3] : memref<32x9xf32, #tpu.memory_space<vmem>>, vector<32x1xf32>
    %4 = vector.broadcast %3 : vector<32x1xf32> to vector<32x896xf32>
    %5 = vector.broadcast %2 : vector<1x896xf32> to vector<32x896xf32>
    %6 = arith.mulf %4, %5 : vector<32x896xf32>
    %7 = arith.addf %0, %6 : vector<32x896xf32>
    %c0_4 = arith.constant 0 : index
    %c0_5 = arith.constant 0 : index
    %c1 = arith.constant 1 : index
    %8 = vector.load %arg1[%c0_4, %c0_5, %c1] : memref<1x1x1024xf32, #tpu.memory_space<vmem>>, vector<1x1x896xf32>
    %9 = vector.shape_cast %8 : vector<1x1x896xf32> to vector<1x896xf32>
    %c0_6 = arith.constant 0 : index
    %c1_7 = arith.constant 1 : index
    %10 = vector.load %arg2[%c0_6, %c1_7] : memref<32x9xf32, #tpu.memory_space<vmem>>, vector<32x1xf32>
    %11 = vector.broadcast %10 : vector<32x1xf32> to vector<32x896xf32>
    %12 = vector.broadcast %9 : vector<1x896xf32> to vector<32x896xf32>
    %13 = arith.mulf %11, %12 : vector<32x896xf32>
    %14 = arith.addf %7, %13 : vector<32x896xf32>
    %c0_8 = arith.constant 0 : index
    %c0_9 = arith.constant 0 : index
    %c2 = arith.constant 2 : index
    %15 = vector.load %arg1[%c0_8, %c0_9, %c2] : memref<1x1x1024xf32, #tpu.memory_space<vmem>>, vector<1x1x896xf32>
    %16 = vector.shape_cast %15 : vector<1x1x896xf32> to vector<1x896xf32>
    %c0_10 = arith.constant 0 : index
    %c2_11 = arith.constant 2 : index
    %17 = vector.load %arg2[%c0_10, %c2_11] : memref<32x9xf32, #tpu.memory_space<vmem>>, vector<32x1xf32>
    %18 = vector.broadcast %17 : vector<32x1xf32> to vector<32x896xf32>
    %19 = vector.broadcast %16 : vector<1x896xf32> to vector<32x896xf32>
    %20 = arith.mulf %18, %19 : vector<32x896xf32>
    %21 = arith.addf %14, %20 : vector<32x896xf32>
    %c0_12 = arith.constant 0 : index
    %c0_13 = arith.constant 0 : index
    %c30 = arith.constant 30 : index
    %22 = vector.load %arg1[%c0_12, %c0_13, %c30] : memref<1x1x1024xf32, #tpu.memory_space<vmem>>, vector<1x1x896xf32>
    %23 = vector.shape_cast %22 : vector<1x1x896xf32> to vector<1x896xf32>
    %c0_14 = arith.constant 0 : index
    %c3 = arith.constant 3 : index
    %24 = vector.load %arg2[%c0_14, %c3] : memref<32x9xf32, #tpu.memory_space<vmem>>, vector<32x1xf32>
    %25 = vector.broadcast %24 : vector<32x1xf32> to vector<32x896xf32>
    %26 = vector.broadcast %23 : vector<1x896xf32> to vector<32x896xf32>
    %27 = arith.mulf %25, %26 : vector<32x896xf32>
    %28 = arith.addf %21, %27 : vector<32x896xf32>
    %c0_15 = arith.constant 0 : index
    %c0_16 = arith.constant 0 : index
    %c31 = arith.constant 31 : index
    %29 = vector.load %arg1[%c0_15, %c0_16, %c31] : memref<1x1x1024xf32, #tpu.memory_space<vmem>>, vector<1x1x896xf32>
    %30 = vector.shape_cast %29 : vector<1x1x896xf32> to vector<1x896xf32>
    %c0_17 = arith.constant 0 : index
    %c4 = arith.constant 4 : index
    %31 = vector.load %arg2[%c0_17, %c4] : memref<32x9xf32, #tpu.memory_space<vmem>>, vector<32x1xf32>
    %32 = vector.broadcast %31 : vector<32x1xf32> to vector<32x896xf32>
    %33 = vector.broadcast %30 : vector<1x896xf32> to vector<32x896xf32>
    %34 = arith.mulf %32, %33 : vector<32x896xf32>
    %35 = arith.addf %28, %34 : vector<32x896xf32>
    %c0_18 = arith.constant 0 : index
    %c0_19 = arith.constant 0 : index
    %c32 = arith.constant 32 : index
    %36 = vector.load %arg1[%c0_18, %c0_19, %c32] : memref<1x1x1024xf32, #tpu.memory_space<vmem>>, vector<1x1x896xf32>
    %37 = vector.shape_cast %36 : vector<1x1x896xf32> to vector<1x896xf32>
    %c0_20 = arith.constant 0 : index
    %c5 = arith.constant 5 : index
    %38 = vector.load %arg2[%c0_20, %c5] : memref<32x9xf32, #tpu.memory_space<vmem>>, vector<32x1xf32>
    %39 = vector.broadcast %38 : vector<32x1xf32> to vector<32x896xf32>
    %40 = vector.broadcast %37 : vector<1x896xf32> to vector<32x896xf32>
    %41 = arith.mulf %39, %40 : vector<32x896xf32>
    %42 = arith.addf %35, %41 : vector<32x896xf32>
    %c0_21 = arith.constant 0 : index
    %c0_22 = arith.constant 0 : index
    %c60 = arith.constant 60 : index
    %43 = vector.load %arg1[%c0_21, %c0_22, %c60] : memref<1x1x1024xf32, #tpu.memory_space<vmem>>, vector<1x1x896xf32>
    %44 = vector.shape_cast %43 : vector<1x1x896xf32> to vector<1x896xf32>
    %c0_23 = arith.constant 0 : index
    %c6 = arith.constant 6 : index
    %45 = vector.load %arg2[%c0_23, %c6] : memref<32x9xf32, #tpu.memory_space<vmem>>, vector<32x1xf32>
    %46 = vector.broadcast %45 : vector<32x1xf32> to vector<32x896xf32>
    %47 = vector.broadcast %44 : vector<1x896xf32> to vector<32x896xf32>
    %48 = arith.mulf %46, %47 : vector<32x896xf32>
    %49 = arith.addf %42, %48 : vector<32x896xf32>
    %c0_24 = arith.constant 0 : index
    %c0_25 = arith.constant 0 : index
    %c61 = arith.constant 61 : index
    %50 = vector.load %arg1[%c0_24, %c0_25, %c61] : memref<1x1x1024xf32, #tpu.memory_space<vmem>>, vector<1x1x896xf32>
    %51 = vector.shape_cast %50 : vector<1x1x896xf32> to vector<1x896xf32>
    %c0_26 = arith.constant 0 : index
    %c7 = arith.constant 7 : index
    %52 = vector.load %arg2[%c0_26, %c7] : memref<32x9xf32, #tpu.memory_space<vmem>>, vector<32x1xf32>
    %53 = vector.broadcast %52 : vector<32x1xf32> to vector<32x896xf32>
    %54 = vector.broadcast %51 : vector<1x896xf32> to vector<32x896xf32>
    %55 = arith.mulf %53, %54 : vector<32x896xf32>
    %56 = arith.addf %49, %55 : vector<32x896xf32>
    %c0_27 = arith.constant 0 : index
    %c0_28 = arith.constant 0 : index
    %c62 = arith.constant 62 : index
    %57 = vector.load %arg1[%c0_27, %c0_28, %c62] : memref<1x1x1024xf32, #tpu.memory_space<vmem>>, vector<1x1x896xf32>
    %58 = vector.shape_cast %57 : vector<1x1x896xf32> to vector<1x896xf32>
    %c0_29 = arith.constant 0 : index
    %c8 = arith.constant 8 : index
    %59 = vector.load %arg2[%c0_29, %c8] : memref<32x9xf32, #tpu.memory_space<vmem>>, vector<32x1xf32>
    %60 = vector.broadcast %59 : vector<32x1xf32> to vector<32x896xf32>
    %61 = vector.broadcast %58 : vector<1x896xf32> to vector<32x896xf32>
    %62 = arith.mulf %60, %61 : vector<32x896xf32>
    %63 = arith.addf %56, %62 : vector<32x896xf32>
    %c0_30 = arith.constant 0 : index
    %c0_31 = arith.constant 0 : index
    %64 = vector.load %arg3[%c0_30, %c0_31] : memref<32x1xf32, #tpu.memory_space<vmem>>, vector<32x1xf32>
    %65 = vector.broadcast %64 : vector<32x1xf32> to vector<32x896xf32>
    %66 = arith.addf %63, %65 : vector<32x896xf32>
    %cst_32 = arith.constant 0.000000e+00 : f32
    %67 = vector.broadcast %cst_32 : f32 to vector<32x896xf32>
    %68 = arith.maximumf %66, %67 : vector<32x896xf32>
    %69 = tpu.transpose %68, [1, 0] : vector<32x896xf32> -> vector<896x32xf32>
    %c0_33 = arith.constant 0 : index
    %c0_34 = arith.constant 0 : index
    %70 = vector.load %arg9[%c0_33, %c0_34] : memref<896x32xf32, #tpu.memory_space<vmem>>, vector<896x32xf32>
    tpu.vector_store %arg9[%c0_33, %c0_34], %69 {strides = array<i32>} : memref<896x32xf32, #tpu.memory_space<vmem>>, vector<896x32xf32>,
    %cst_35 = arith.constant 0.000000e+00 : f32
    %71 = vector.broadcast %cst_35 : f32 to vector<304x32xf32>
    %c0_36 = arith.constant 0 : index
    %c0_37 = arith.constant 0 : index
    %72 = vector.load %arg10[%c0_36, %c0_37] : memref<304x32xf32, #tpu.memory_space<vmem>>, vector<304x32xf32>
    tpu.vector_store %arg10[%c0_36, %c0_37], %71 {strides = array<i32>} : memref<304x32xf32, #tpu.memory_space<vmem>>, vector<304x32xf32>,
    %c0_38 = arith.constant 0 : index
    %c0_39 = arith.constant 0 : index
    %73 = vector.load %arg9[%c0_38, %c0_39] : memref<896x32xf32, #tpu.memory_space<vmem>>, vector<28x32xf32>
    %c1_40 = arith.constant 1 : index
    %c0_41 = arith.constant 0 : index
    %74 = vector.load %arg9[%c1_40, %c0_41] : memref<896x32xf32, #tpu.memory_space<vmem>>, vector<28x32xf32>
    %c30_42 = arith.constant 30 : index
    %c0_43 = arith.constant 0 : index
    %75 = vector.load %arg9[%c30_42, %c0_43] : memref<896x32xf32, #tpu.memory_space<vmem>>, vector<28x32xf32>
    %c31_44 = arith.constant 31 : index
    %c0_45 = arith.constant 0 : index
    %76 = vector.load %arg9[%c31_44, %c0_45] : memref<896x32xf32, #tpu.memory_space<vmem>>, vector<28x32xf32>
    %77 = arith.maximumf %73, %74 : vector<28x32xf32>
    %78 = arith.maximumf %75, %76 : vector<28x32xf32>
    %79 = arith.maximumf %77, %78 : vector<28x32xf32>
    %c0_46 = arith.constant 0 : index
    %c0_47 = arith.constant 0 : index
    %80 = vector.load %arg6[%c0_46, %c0_47] : memref<14x28xf32, #tpu.memory_space<vmem>>, vector<14x28xf32>
    %cst_48 = arith.constant dense<0.000000e+00> : vector<14x32xf32>
    %81 = tpu.matmul %80, %79, %cst_48 {dimension_numbers = #tpu.dot_dimension_numbers<[1], [0], [0], [1], [0, 0, 1, 1], [], []>} : vector<14x28xf32>, vector<28x32xf32>, vector<14x32xf32> -> vector<14x32xf32>
    %c17 = arith.constant 17 : index
    %c0_49 = arith.constant 0 : index
    %82 = vector.load %arg10[%c17, %c0_49] : memref<304x32xf32, #tpu.memory_space<vmem>>, vector<14x32xf32>
    tpu.vector_store %arg10[%c17, %c0_49], %81 {strides = array<i32>} : memref<304x32xf32, #tpu.memory_space<vmem>>, vector<14x32xf32>,
    %c60_50 = arith.constant 60 : index
    %c0_51 = arith.constant 0 : index
    %83 = vector.load %arg9[%c60_50, %c0_51] : memref<896x32xf32, #tpu.memory_space<vmem>>, vector<28x32xf32>
    %c61_52 = arith.constant 61 : index
    %c0_53 = arith.constant 0 : index
    %84 = vector.load %arg9[%c61_52, %c0_53] : memref<896x32xf32, #tpu.memory_space<vmem>>, vector<28x32xf32>
    %c90 = arith.constant 90 : index
    %c0_54 = arith.constant 0 : index
    %85 = vector.load %arg9[%c90, %c0_54] : memref<896x32xf32, #tpu.memory_space<vmem>>, vector<28x32xf32>
    %c91 = arith.constant 91 : index
    %c0_55 = arith.constant 0 : index
    %86 = vector.load %arg9[%c91, %c0_55] : memref<896x32xf32, #tpu.memory_space<vmem>>, vector<28x32xf32>
    %87 = arith.maximumf %83, %84 : vector<28x32xf32>
    %88 = arith.maximumf %85, %86 : vector<28x32xf32>
    %89 = arith.maximumf %87, %88 : vector<28x32xf32>
    %c0_56 = arith.constant 0 : index
    %c0_57 = arith.constant 0 : index
    %90 = vector.load %arg6[%c0_56, %c0_57] : memref<14x28xf32, #tpu.memory_space<vmem>>, vector<14x28xf32>
    %cst_58 = arith.constant dense<0.000000e+00> : vector<14x32xf32>
    %91 = tpu.matmul %90, %89, %cst_58 {dimension_numbers = #tpu.dot_dimension_numbers<[1], [0], [0], [1], [0, 0, 1, 1], [], []>} : vector<14x28xf32>, vector<28x32xf32>, vector<14x32xf32> -> vector<14x32xf32>
    %c33 = arith.constant 33 : index
    %c0_59 = arith.constant 0 : index
    %92 = vector.load %arg10[%c33, %c0_59] : memref<304x32xf32, #tpu.memory_space<vmem>>, vector<14x32xf32>
    tpu.vector_store %arg10[%c33, %c0_59], %91 {strides = array<i32>} : memref<304x32xf32, #tpu.memory_space<vmem>>, vector<14x32xf32>,
    %c120 = arith.constant 120 : index
    %c0_60 = arith.constant 0 : index
    %93 = vector.load %arg9[%c120, %c0_60] : memref<896x32xf32, #tpu.memory_space<vmem>>, vector<28x32xf32>
    %c121 = arith.constant 121 : index
    %c0_61 = arith.constant 0 : index
    %94 = vector.load %arg9[%c121, %c0_61] : memref<896x32xf32, #tpu.memory_space<vmem>>, vector<28x32xf32>
    %c150 = arith.constant 150 : index
    %c0_62 = arith.constant 0 : index
    %95 = vector.load %arg9[%c150, %c0_62] : memref<896x32xf32, #tpu.memory_space<vmem>>, vector<28x32xf32>
    %c151 = arith.constant 151 : index
    %c0_63 = arith.constant 0 : index
    %96 = vector.load %arg9[%c151, %c0_63] : memref<896x32xf32, #tpu.memory_space<vmem>>, vector<28x32xf32>
    %97 = arith.maximumf %93, %94 : vector<28x32xf32>
    %98 = arith.maximumf %95, %96 : vector<28x32xf32>
    %99 = arith.maximumf %97, %98 : vector<28x32xf32>
    %c0_64 = arith.constant 0 : index
    %c0_65 = arith.constant 0 : index
    %100 = vector.load %arg6[%c0_64, %c0_65] : memref<14x28xf32, #tpu.memory_space<vmem>>, vector<14x28xf32>
    %cst_66 = arith.constant dense<0.000000e+00> : vector<14x32xf32>
    %101 = tpu.matmul %100, %99, %cst_66 {dimension_numbers = #tpu.dot_dimension_numbers<[1], [0], [0], [1], [0, 0, 1, 1], [], []>} : vector<14x28xf32>, vector<28x32xf32>, vector<14x32xf32> -> vector<14x32xf32>
    %c49 = arith.constant 49 : index
    %c0_67 = arith.constant 0 : index
    %102 = vector.load %arg10[%c49, %c0_67] : memref<304x32xf32, #tpu.memory_space<vmem>>, vector<14x32xf32>
    tpu.vector_store %arg10[%c49, %c0_67], %101 {strides = array<i32>} : memref<304x32xf32, #tpu.memory_space<vmem>>, vector<14x32xf32>,
    %c180 = arith.constant 180 : index
    %c0_68 = arith.constant 0 : index
    %103 = vector.load %arg9[%c180, %c0_68] : memref<896x32xf32, #tpu.memory_space<vmem>>, vector<28x32xf32>
    %c181 = arith.constant 181 : index
    %c0_69 = arith.constant 0 : index
    %104 = vector.load %arg9[%c181, %c0_69] : memref<896x32xf32, #tpu.memory_space<vmem>>, vector<28x32xf32>
    %c210 = arith.constant 210 : index
    %c0_70 = arith.constant 0 : index
    %105 = vector.load %arg9[%c210, %c0_70] : memref<896x32xf32, #tpu.memory_space<vmem>>, vector<28x32xf32>
    %c211 = arith.constant 211 : index
    %c0_71 = arith.constant 0 : index
    %106 = vector.load %arg9[%c211, %c0_71] : memref<896x32xf32, #tpu.memory_space<vmem>>, vector<28x32xf32>
    %107 = arith.maximumf %103, %104 : vector<28x32xf32>
    %108 = arith.maximumf %105, %106 : vector<28x32xf32>
    %109 = arith.maximumf %107, %108 : vector<28x32xf32>
    %c0_72 = arith.constant 0 : index
    %c0_73 = arith.constant 0 : index
    %110 = vector.load %arg6[%c0_72, %c0_73] : memref<14x28xf32, #tpu.memory_space<vmem>>, vector<14x28xf32>
    %cst_74 = arith.constant dense<0.000000e+00> : vector<14x32xf32>
    %111 = tpu.matmul %110, %109, %cst_74 {dimension_numbers = #tpu.dot_dimension_numbers<[1], [0], [0], [1], [0, 0, 1, 1], [], []>} : vector<14x28xf32>, vector<28x32xf32>, vector<14x32xf32> -> vector<14x32xf32>
    %c65 = arith.constant 65 : index
    %c0_75 = arith.constant 0 : index
    %112 = vector.load %arg10[%c65, %c0_75] : memref<304x32xf32, #tpu.memory_space<vmem>>, vector<14x32xf32>
    tpu.vector_store %arg10[%c65, %c0_75], %111 {strides = array<i32>} : memref<304x32xf32, #tpu.memory_space<vmem>>, vector<14x32xf32>,
    %c240 = arith.constant 240 : index
    %c0_76 = arith.constant 0 : index
    %113 = vector.load %arg9[%c240, %c0_76] : memref<896x32xf32, #tpu.memory_space<vmem>>, vector<28x32xf32>
    %c241 = arith.constant 241 : index
    %c0_77 = arith.constant 0 : index
    %114 = vector.load %arg9[%c241, %c0_77] : memref<896x32xf32, #tpu.memory_space<vmem>>, vector<28x32xf32>
    %c270 = arith.constant 270 : index
    %c0_78 = arith.constant 0 : index
    %115 = vector.load %arg9[%c270, %c0_78] : memref<896x32xf32, #tpu.memory_space<vmem>>, vector<28x32xf32>
    %c271 = arith.constant 271 : index
    %c0_79 = arith.constant 0 : index
    %116 = vector.load %arg9[%c271, %c0_79] : memref<896x32xf32, #tpu.memory_space<vmem>>, vector<28x32xf32>
    %117 = arith.maximumf %113, %114 : vector<28x32xf32>
    %118 = arith.maximumf %115, %116 : vector<28x32xf32>
    %119 = arith.maximumf %117, %118 : vector<28x32xf32>
    %c0_80 = arith.constant 0 : index
    %c0_81 = arith.constant 0 : index
    %120 = vector.load %arg6[%c0_80, %c0_81] : memref<14x28xf32, #tpu.memory_space<vmem>>, vector<14x28xf32>
    %cst_82 = arith.constant dense<0.000000e+00> : vector<14x32xf32>
    %121 = tpu.matmul %120, %119, %cst_82 {dimension_numbers = #tpu.dot_dimension_numbers<[1], [0], [0], [1], [0, 0, 1, 1], [], []>} : vector<14x28xf32>, vector<28x32xf32>, vector<14x32xf32> -> vector<14x32xf32>
    %c81 = arith.constant 81 : index
    %c0_83 = arith.constant 0 : index
    %122 = vector.load %arg10[%c81, %c0_83] : memref<304x32xf32, #tpu.memory_space<vmem>>, vector<14x32xf32>
    tpu.vector_store %arg10[%c81, %c0_83], %121 {strides = array<i32>} : memref<304x32xf32, #tpu.memory_space<vmem>>, vector<14x32xf32>,
    %c300 = arith.constant 300 : index
    %c0_84 = arith.constant 0 : index
    %123 = vector.load %arg9[%c300, %c0_84] : memref<896x32xf32, #tpu.memory_space<vmem>>, vector<28x32xf32>
    %c301 = arith.constant 301 : index
    %c0_85 = arith.constant 0 : index
    %124 = vector.load %arg9[%c301, %c0_85] : memref<896x32xf32, #tpu.memory_space<vmem>>, vector<28x32xf32>
    %c330 = arith.constant 330 : index
    %c0_86 = arith.constant 0 : index
    %125 = vector.load %arg9[%c330, %c0_86] : memref<896x32xf32, #tpu.memory_space<vmem>>, vector<28x32xf32>
    %c331 = arith.constant 331 : index
    %c0_87 = arith.constant 0 : index
    %126 = vector.load %arg9[%c331, %c0_87] : memref<896x32xf32, #tpu.memory_space<vmem>>, vector<28x32xf32>
    %127 = arith.maximumf %123, %124 : vector<28x32xf32>
    %128 = arith.maximumf %125, %126 : vector<28x32xf32>
    %129 = arith.maximumf %127, %128 : vector<28x32xf32>
    %c0_88 = arith.constant 0 : index
    %c0_89 = arith.constant 0 : index
    %130 = vector.load %arg6[%c0_88, %c0_89] : memref<14x28xf32, #tpu.memory_space<vmem>>, vector<14x28xf32>
    %cst_90 = arith.constant dense<0.000000e+00> : vector<14x32xf32>
    %131 = tpu.matmul %130, %129, %cst_90 {dimension_numbers = #tpu.dot_dimension_numbers<[1], [0], [0], [1], [0, 0, 1, 1], [], []>} : vector<14x28xf32>, vector<28x32xf32>, vector<14x32xf32> -> vector<14x32xf32>
    %c97 = arith.constant 97 : index
    %c0_91 = arith.constant 0 : index
    %132 = vector.load %arg10[%c97, %c0_91] : memref<304x32xf32, #tpu.memory_space<vmem>>, vector<14x32xf32>
    tpu.vector_store %arg10[%c97, %c0_91], %131 {strides = array<i32>} : memref<304x32xf32, #tpu.memory_space<vmem>>, vector<14x32xf32>,
    %c360 = arith.constant 360 : index
    %c0_92 = arith.constant 0 : index
    %133 = vector.load %arg9[%c360, %c0_92] : memref<896x32xf32, #tpu.memory_space<vmem>>, vector<28x32xf32>
    %c361 = arith.constant 361 : index
    %c0_93 = arith.constant 0 : index
    %134 = vector.load %arg9[%c361, %c0_93] : memref<896x32xf32, #tpu.memory_space<vmem>>, vector<28x32xf32>
    %c390 = arith.constant 390 : index
    %c0_94 = arith.constant 0 : index
    %135 = vector.load %arg9[%c390, %c0_94] : memref<896x32xf32, #tpu.memory_space<vmem>>, vector<28x32xf32>
    %c391 = arith.constant 391 : index
    %c0_95 = arith.constant 0 : index
    %136 = vector.load %arg9[%c391, %c0_95] : memref<896x32xf32, #tpu.memory_space<vmem>>, vector<28x32xf32>
    %137 = arith.maximumf %133, %134 : vector<28x32xf32>
    %138 = arith.maximumf %135, %136 : vector<28x32xf32>
    %139 = arith.maximumf %137, %138 : vector<28x32xf32>
    %c0_96 = arith.constant 0 : index
    %c0_97 = arith.constant 0 : index
    %140 = vector.load %arg6[%c0_96, %c0_97] : memref<14x28xf32, #tpu.memory_space<vmem>>, vector<14x28xf32>
    %cst_98 = arith.constant dense<0.000000e+00> : vector<14x32xf32>
    %141 = tpu.matmul %140, %139, %cst_98 {dimension_numbers = #tpu.dot_dimension_numbers<[1], [0], [0], [1], [0, 0, 1, 1], [], []>} : vector<14x28xf32>, vector<28x32xf32>, vector<14x32xf32> -> vector<14x32xf32>
    %c113 = arith.constant 113 : index
    %c0_99 = arith.constant 0 : index
    %142 = vector.load %arg10[%c113, %c0_99] : memref<304x32xf32, #tpu.memory_space<vmem>>, vector<14x32xf32>
    tpu.vector_store %arg10[%c113, %c0_99], %141 {strides = array<i32>} : memref<304x32xf32, #tpu.memory_space<vmem>>, vector<14x32xf32>,
    %c420 = arith.constant 420 : index
    %c0_100 = arith.constant 0 : index
    %143 = vector.load %arg9[%c420, %c0_100] : memref<896x32xf32, #tpu.memory_space<vmem>>, vector<28x32xf32>
    %c421 = arith.constant 421 : index
    %c0_101 = arith.constant 0 : index
    %144 = vector.load %arg9[%c421, %c0_101] : memref<896x32xf32, #tpu.memory_space<vmem>>, vector<28x32xf32>
    %c450 = arith.constant 450 : index
    %c0_102 = arith.constant 0 : index
    %145 = vector.load %arg9[%c450, %c0_102] : memref<896x32xf32, #tpu.memory_space<vmem>>, vector<28x32xf32>
    %c451 = arith.constant 451 : index
    %c0_103 = arith.constant 0 : index
    %146 = vector.load %arg9[%c451, %c0_103] : memref<896x32xf32, #tpu.memory_space<vmem>>, vector<28x32xf32>
    %147 = arith.maximumf %143, %144 : vector<28x32xf32>
    %148 = arith.maximumf %145, %146 : vector<28x32xf32>
    %149 = arith.maximumf %147, %148 : vector<28x32xf32>
    %c0_104 = arith.constant 0 : index
    %c0_105 = arith.constant 0 : index
    %150 = vector.load %arg6[%c0_104, %c0_105] : memref<14x28xf32, #tpu.memory_space<vmem>>, vector<14x28xf32>
    %cst_106 = arith.constant dense<0.000000e+00> : vector<14x32xf32>
    %151 = tpu.matmul %150, %149, %cst_106 {dimension_numbers = #tpu.dot_dimension_numbers<[1], [0], [0], [1], [0, 0, 1, 1], [], []>} : vector<14x28xf32>, vector<28x32xf32>, vector<14x32xf32> -> vector<14x32xf32>
    %c129 = arith.constant 129 : index
    %c0_107 = arith.constant 0 : index
    %152 = vector.load %arg10[%c129, %c0_107] : memref<304x32xf32, #tpu.memory_space<vmem>>, vector<14x32xf32>
    tpu.vector_store %arg10[%c129, %c0_107], %151 {strides = array<i32>} : memref<304x32xf32, #tpu.memory_space<vmem>>, vector<14x32xf32>,
    %c480 = arith.constant 480 : index
    %c0_108 = arith.constant 0 : index
    %153 = vector.load %arg9[%c480, %c0_108] : memref<896x32xf32, #tpu.memory_space<vmem>>, vector<28x32xf32>
    %c481 = arith.constant 481 : index
    %c0_109 = arith.constant 0 : index
    %154 = vector.load %arg9[%c481, %c0_109] : memref<896x32xf32, #tpu.memory_space<vmem>>, vector<28x32xf32>
    %c510 = arith.constant 510 : index
    %c0_110 = arith.constant 0 : index
    %155 = vector.load %arg9[%c510, %c0_110] : memref<896x32xf32, #tpu.memory_space<vmem>>, vector<28x32xf32>
    %c511 = arith.constant 511 : index
    %c0_111 = arith.constant 0 : index
    %156 = vector.load %arg9[%c511, %c0_111] : memref<896x32xf32, #tpu.memory_space<vmem>>, vector<28x32xf32>
    %157 = arith.maximumf %153, %154 : vector<28x32xf32>
    %158 = arith.maximumf %155, %156 : vector<28x32xf32>
    %159 = arith.maximumf %157, %158 : vector<28x32xf32>
    %c0_112 = arith.constant 0 : index
    %c0_113 = arith.constant 0 : index
    %160 = vector.load %arg6[%c0_112, %c0_113] : memref<14x28xf32, #tpu.memory_space<vmem>>, vector<14x28xf32>
    %cst_114 = arith.constant dense<0.000000e+00> : vector<14x32xf32>
    %161 = tpu.matmul %160, %159, %cst_114 {dimension_numbers = #tpu.dot_dimension_numbers<[1], [0], [0], [1], [0, 0, 1, 1], [], []>} : vector<14x28xf32>, vector<28x32xf32>, vector<14x32xf32> -> vector<14x32xf32>
    %c145 = arith.constant 145 : index
    %c0_115 = arith.constant 0 : index
    %162 = vector.load %arg10[%c145, %c0_115] : memref<304x32xf32, #tpu.memory_space<vmem>>, vector<14x32xf32>
    tpu.vector_store %arg10[%c145, %c0_115], %161 {strides = array<i32>} : memref<304x32xf32, #tpu.memory_space<vmem>>, vector<14x32xf32>,
    %c540 = arith.constant 540 : index
    %c0_116 = arith.constant 0 : index
    %163 = vector.load %arg9[%c540, %c0_116] : memref<896x32xf32, #tpu.memory_space<vmem>>, vector<28x32xf32>
    %c541 = arith.constant 541 : index
    %c0_117 = arith.constant 0 : index
    %164 = vector.load %arg9[%c541, %c0_117] : memref<896x32xf32, #tpu.memory_space<vmem>>, vector<28x32xf32>
    %c570 = arith.constant 570 : index
    %c0_118 = arith.constant 0 : index
    %165 = vector.load %arg9[%c570, %c0_118] : memref<896x32xf32, #tpu.memory_space<vmem>>, vector<28x32xf32>
    %c571 = arith.constant 571 : index
    %c0_119 = arith.constant 0 : index
    %166 = vector.load %arg9[%c571, %c0_119] : memref<896x32xf32, #tpu.memory_space<vmem>>, vector<28x32xf32>
    %167 = arith.maximumf %163, %164 : vector<28x32xf32>
    %168 = arith.maximumf %165, %166 : vector<28x32xf32>
    %169 = arith.maximumf %167, %168 : vector<28x32xf32>
    %c0_120 = arith.constant 0 : index
    %c0_121 = arith.constant 0 : index
    %170 = vector.load %arg6[%c0_120, %c0_121] : memref<14x28xf32, #tpu.memory_space<vmem>>, vector<14x28xf32>
    %cst_122 = arith.constant dense<0.000000e+00> : vector<14x32xf32>
    %171 = tpu.matmul %170, %169, %cst_122 {dimension_numbers = #tpu.dot_dimension_numbers<[1], [0], [0], [1], [0, 0, 1, 1], [], []>} : vector<14x28xf32>, vector<28x32xf32>, vector<14x32xf32> -> vector<14x32xf32>
    %c161 = arith.constant 161 : index
    %c0_123 = arith.constant 0 : index
    %172 = vector.load %arg10[%c161, %c0_123] : memref<304x32xf32, #tpu.memory_space<vmem>>, vector<14x32xf32>
    tpu.vector_store %arg10[%c161, %c0_123], %171 {strides = array<i32>} : memref<304x32xf32, #tpu.memory_space<vmem>>, vector<14x32xf32>,
    %c600 = arith.constant 600 : index
    %c0_124 = arith.constant 0 : index
    %173 = vector.load %arg9[%c600, %c0_124] : memref<896x32xf32, #tpu.memory_space<vmem>>, vector<28x32xf32>
    %c601 = arith.constant 601 : index
    %c0_125 = arith.constant 0 : index
    %174 = vector.load %arg9[%c601, %c0_125] : memref<896x32xf32, #tpu.memory_space<vmem>>, vector<28x32xf32>
    %c630 = arith.constant 630 : index
    %c0_126 = arith.constant 0 : index
    %175 = vector.load %arg9[%c630, %c0_126] : memref<896x32xf32, #tpu.memory_space<vmem>>, vector<28x32xf32>
    %c631 = arith.constant 631 : index
    %c0_127 = arith.constant 0 : index
    %176 = vector.load %arg9[%c631, %c0_127] : memref<896x32xf32, #tpu.memory_space<vmem>>, vector<28x32xf32>
    %177 = arith.maximumf %173, %174 : vector<28x32xf32>
    %178 = arith.maximumf %175, %176 : vector<28x32xf32>
    %179 = arith.maximumf %177, %178 : vector<28x32xf32>
    %c0_128 = arith.constant 0 : index
    %c0_129 = arith.constant 0 : index
    %180 = vector.load %arg6[%c0_128, %c0_129] : memref<14x28xf32, #tpu.memory_space<vmem>>, vector<14x28xf32>
    %cst_130 = arith.constant dense<0.000000e+00> : vector<14x32xf32>
    %181 = tpu.matmul %180, %179, %cst_130 {dimension_numbers = #tpu.dot_dimension_numbers<[1], [0], [0], [1], [0, 0, 1, 1], [], []>} : vector<14x28xf32>, vector<28x32xf32>, vector<14x32xf32> -> vector<14x32xf32>
    %c177 = arith.constant 177 : index
    %c0_131 = arith.constant 0 : index
    %182 = vector.load %arg10[%c177, %c0_131] : memref<304x32xf32, #tpu.memory_space<vmem>>, vector<14x32xf32>
    tpu.vector_store %arg10[%c177, %c0_131], %181 {strides = array<i32>} : memref<304x32xf32, #tpu.memory_space<vmem>>, vector<14x32xf32>,
    %c660 = arith.constant 660 : index
    %c0_132 = arith.constant 0 : index
    %183 = vector.load %arg9[%c660, %c0_132] : memref<896x32xf32, #tpu.memory_space<vmem>>, vector<28x32xf32>
    %c661 = arith.constant 661 : index
    %c0_133 = arith.constant 0 : index
    %184 = vector.load %arg9[%c661, %c0_133] : memref<896x32xf32, #tpu.memory_space<vmem>>, vector<28x32xf32>
    %c690 = arith.constant 690 : index
    %c0_134 = arith.constant 0 : index
    %185 = vector.load %arg9[%c690, %c0_134] : memref<896x32xf32, #tpu.memory_space<vmem>>, vector<28x32xf32>
    %c691 = arith.constant 691 : index
    %c0_135 = arith.constant 0 : index
    %186 = vector.load %arg9[%c691, %c0_135] : memref<896x32xf32, #tpu.memory_space<vmem>>, vector<28x32xf32>
    %187 = arith.maximumf %183, %184 : vector<28x32xf32>
    %188 = arith.maximumf %185, %186 : vector<28x32xf32>
    %189 = arith.maximumf %187, %188 : vector<28x32xf32>
    %c0_136 = arith.constant 0 : index
    %c0_137 = arith.constant 0 : index
    %190 = vector.load %arg6[%c0_136, %c0_137] : memref<14x28xf32, #tpu.memory_space<vmem>>, vector<14x28xf32>
    %cst_138 = arith.constant dense<0.000000e+00> : vector<14x32xf32>
    %191 = tpu.matmul %190, %189, %cst_138 {dimension_numbers = #tpu.dot_dimension_numbers<[1], [0], [0], [1], [0, 0, 1, 1], [], []>} : vector<14x28xf32>, vector<28x32xf32>, vector<14x32xf32> -> vector<14x32xf32>
    %c193 = arith.constant 193 : index
    %c0_139 = arith.constant 0 : index
    %192 = vector.load %arg10[%c193, %c0_139] : memref<304x32xf32, #tpu.memory_space<vmem>>, vector<14x32xf32>
    tpu.vector_store %arg10[%c193, %c0_139], %191 {strides = array<i32>} : memref<304x32xf32, #tpu.memory_space<vmem>>, vector<14x32xf32>,
    %c720 = arith.constant 720 : index
    %c0_140 = arith.constant 0 : index
    %193 = vector.load %arg9[%c720, %c0_140] : memref<896x32xf32, #tpu.memory_space<vmem>>, vector<28x32xf32>
    %c721 = arith.constant 721 : index
    %c0_141 = arith.constant 0 : index
    %194 = vector.load %arg9[%c721, %c0_141] : memref<896x32xf32, #tpu.memory_space<vmem>>, vector<28x32xf32>
    %c750 = arith.constant 750 : index
    %c0_142 = arith.constant 0 : index
    %195 = vector.load %arg9[%c750, %c0_142] : memref<896x32xf32, #tpu.memory_space<vmem>>, vector<28x32xf32>
    %c751 = arith.constant 751 : index
    %c0_143 = arith.constant 0 : index
    %196 = vector.load %arg9[%c751, %c0_143] : memref<896x32xf32, #tpu.memory_space<vmem>>, vector<28x32xf32>
    %197 = arith.maximumf %193, %194 : vector<28x32xf32>
    %198 = arith.maximumf %195, %196 : vector<28x32xf32>
    %199 = arith.maximumf %197, %198 : vector<28x32xf32>
    %c0_144 = arith.constant 0 : index
    %c0_145 = arith.constant 0 : index
    %200 = vector.load %arg6[%c0_144, %c0_145] : memref<14x28xf32, #tpu.memory_space<vmem>>, vector<14x28xf32>
    %cst_146 = arith.constant dense<0.000000e+00> : vector<14x32xf32>
    %201 = tpu.matmul %200, %199, %cst_146 {dimension_numbers = #tpu.dot_dimension_numbers<[1], [0], [0], [1], [0, 0, 1, 1], [], []>} : vector<14x28xf32>, vector<28x32xf32>, vector<14x32xf32> -> vector<14x32xf32>
    %c209 = arith.constant 209 : index
    %c0_147 = arith.constant 0 : index
    %202 = vector.load %arg10[%c209, %c0_147] : memref<304x32xf32, #tpu.memory_space<vmem>>, vector<14x32xf32>
    tpu.vector_store %arg10[%c209, %c0_147], %201 {strides = array<i32>} : memref<304x32xf32, #tpu.memory_space<vmem>>, vector<14x32xf32>,
    %c780 = arith.constant 780 : index
    %c0_148 = arith.constant 0 : index
    %203 = vector.load %arg9[%c780, %c0_148] : memref<896x32xf32, #tpu.memory_space<vmem>>, vector<28x32xf32>
    %c781 = arith.constant 781 : index
    %c0_149 = arith.constant 0 : index
    %204 = vector.load %arg9[%c781, %c0_149] : memref<896x32xf32, #tpu.memory_space<vmem>>, vector<28x32xf32>
    %c810 = arith.constant 810 : index
    %c0_150 = arith.constant 0 : index
    %205 = vector.load %arg9[%c810, %c0_150] : memref<896x32xf32, #tpu.memory_space<vmem>>, vector<28x32xf32>
    %c811 = arith.constant 811 : index
    %c0_151 = arith.constant 0 : index
    %206 = vector.load %arg9[%c811, %c0_151] : memref<896x32xf32, #tpu.memory_space<vmem>>, vector<28x32xf32>
    %207 = arith.maximumf %203, %204 : vector<28x32xf32>
    %208 = arith.maximumf %205, %206 : vector<28x32xf32>
    %209 = arith.maximumf %207, %208 : vector<28x32xf32>
    %c0_152 = arith.constant 0 : index
    %c0_153 = arith.constant 0 : index
    %210 = vector.load %arg6[%c0_152, %c0_153] : memref<14x28xf32, #tpu.memory_space<vmem>>, vector<14x28xf32>
    %cst_154 = arith.constant dense<0.000000e+00> : vector<14x32xf32>
    %211 = tpu.matmul %210, %209, %cst_154 {dimension_numbers = #tpu.dot_dimension_numbers<[1], [0], [0], [1], [0, 0, 1, 1], [], []>} : vector<14x28xf32>, vector<28x32xf32>, vector<14x32xf32> -> vector<14x32xf32>
    %c225 = arith.constant 225 : index
    %c0_155 = arith.constant 0 : index
    %212 = vector.load %arg10[%c225, %c0_155] : memref<304x32xf32, #tpu.memory_space<vmem>>, vector<14x32xf32>
    tpu.vector_store %arg10[%c225, %c0_155], %211 {strides = array<i32>} : memref<304x32xf32, #tpu.memory_space<vmem>>, vector<14x32xf32>,
    %cst_156 = arith.constant 0.000000e+00 : f32
    %213 = vector.broadcast %cst_156 : f32 to vector<256x64xf32>
    %c0_157 = arith.constant 0 : index
    %c0_158 = arith.constant 0 : index
    %214 = vector.load %arg10[%c0_157, %c0_158] : memref<304x32xf32, #tpu.memory_space<vmem>>, vector<256x32xf32>
    %c0_159 = arith.constant 0 : index
    %c0_160 = arith.constant 0 : index
    %c0_161 = arith.constant 0 : index
    %215 = vector.load %arg4[%c0_159, %c0_160, %c0_161] : memref<9x32x64xf32, #tpu.memory_space<vmem>>, vector<1x32x64xf32>
    %216 = vector.shape_cast %215 : vector<1x32x64xf32> to vector<32x64xf32>
    %cst_162 = arith.constant dense<0.000000e+00> : vector<256x64xf32>
    %217 = tpu.matmul %214, %216, %cst_162 {dimension_numbers = #tpu.dot_dimension_numbers<[1], [0], [0], [1], [0, 0, 1, 1], [], []>} : vector<256x32xf32>, vector<32x64xf32>, vector<256x64xf32> -> vector<256x64xf32>
    %218 = arith.addf %213, %217 : vector<256x64xf32>
    %c1_163 = arith.constant 1 : index
    %c0_164 = arith.constant 0 : index
    %219 = vector.load %arg10[%c1_163, %c0_164] : memref<304x32xf32, #tpu.memory_space<vmem>>, vector<256x32xf32>
    %c1_165 = arith.constant 1 : index
    %c0_166 = arith.constant 0 : index
    %c0_167 = arith.constant 0 : index
    %220 = vector.load %arg4[%c1_165, %c0_166, %c0_167] : memref<9x32x64xf32, #tpu.memory_space<vmem>>, vector<1x32x64xf32>
    %221 = vector.shape_cast %220 : vector<1x32x64xf32> to vector<32x64xf32>
    %cst_168 = arith.constant dense<0.000000e+00> : vector<256x64xf32>
    %222 = tpu.matmul %219, %221, %cst_168 {dimension_numbers = #tpu.dot_dimension_numbers<[1], [0], [0], [1], [0, 0, 1, 1], [], []>} : vector<256x32xf32>, vector<32x64xf32>, vector<256x64xf32> -> vector<256x64xf32>
    %223 = arith.addf %218, %222 : vector<256x64xf32>
    %c2_169 = arith.constant 2 : index
    %c0_170 = arith.constant 0 : index
    %224 = vector.load %arg10[%c2_169, %c0_170] : memref<304x32xf32, #tpu.memory_space<vmem>>, vector<256x32xf32>
    %c2_171 = arith.constant 2 : index
    %c0_172 = arith.constant 0 : index
    %c0_173 = arith.constant 0 : index
    %225 = vector.load %arg4[%c2_171, %c0_172, %c0_173] : memref<9x32x64xf32, #tpu.memory_space<vmem>>, vector<1x32x64xf32>
    %226 = vector.shape_cast %225 : vector<1x32x64xf32> to vector<32x64xf32>
    %cst_174 = arith.constant dense<0.000000e+00> : vector<256x64xf32>
    %227 = tpu.matmul %224, %226, %cst_174 {dimension_numbers = #tpu.dot_dimension_numbers<[1], [0], [0], [1], [0, 0, 1, 1], [], []>} : vector<256x32xf32>, vector<32x64xf32>, vector<256x64xf32> -> vector<256x64xf32>
    %228 = arith.addf %223, %227 : vector<256x64xf32>
    %c16 = arith.constant 16 : index
    %c0_175 = arith.constant 0 : index
    %229 = vector.load %arg10[%c16, %c0_175] : memref<304x32xf32, #tpu.memory_space<vmem>>, vector<256x32xf32>
    %c3_176 = arith.constant 3 : index
    %c0_177 = arith.constant 0 : index
    %c0_178 = arith.constant 0 : index
    %230 = vector.load %arg4[%c3_176, %c0_177, %c0_178] : memref<9x32x64xf32, #tpu.memory_space<vmem>>, vector<1x32x64xf32>
    %231 = vector.shape_cast %230 : vector<1x32x64xf32> to vector<32x64xf32>
    %cst_179 = arith.constant dense<0.000000e+00> : vector<256x64xf32>
    %232 = tpu.matmul %229, %231, %cst_179 {dimension_numbers = #tpu.dot_dimension_numbers<[1], [0], [0], [1], [0, 0, 1, 1], [], []>} : vector<256x32xf32>, vector<32x64xf32>, vector<256x64xf32> -> vector<256x64xf32>
    %233 = arith.addf %228, %232 : vector<256x64xf32>
    %c17_180 = arith.constant 17 : index
    %c0_181 = arith.constant 0 : index
    %234 = vector.load %arg10[%c17_180, %c0_181] : memref<304x32xf32, #tpu.memory_space<vmem>>, vector<256x32xf32>
    %c4_182 = arith.constant 4 : index
    %c0_183 = arith.constant 0 : index
    %c0_184 = arith.constant 0 : index
    %235 = vector.load %arg4[%c4_182, %c0_183, %c0_184] : memref<9x32x64xf32, #tpu.memory_space<vmem>>, vector<1x32x64xf32>
    %236 = vector.shape_cast %235 : vector<1x32x64xf32> to vector<32x64xf32>
    %cst_185 = arith.constant dense<0.000000e+00> : vector<256x64xf32>
    %237 = tpu.matmul %234, %236, %cst_185 {dimension_numbers = #tpu.dot_dimension_numbers<[1], [0], [0], [1], [0, 0, 1, 1], [], []>} : vector<256x32xf32>, vector<32x64xf32>, vector<256x64xf32> -> vector<256x64xf32>
    %238 = arith.addf %233, %237 : vector<256x64xf32>
    %c18 = arith.constant 18 : index
    %c0_186 = arith.constant 0 : index
    %239 = vector.load %arg10[%c18, %c0_186] : memref<304x32xf32, #tpu.memory_space<vmem>>, vector<256x32xf32>
    %c5_187 = arith.constant 5 : index
    %c0_188 = arith.constant 0 : index
    %c0_189 = arith.constant 0 : index
    %240 = vector.load %arg4[%c5_187, %c0_188, %c0_189] : memref<9x32x64xf32, #tpu.memory_space<vmem>>, vector<1x32x64xf32>
    %241 = vector.shape_cast %240 : vector<1x32x64xf32> to vector<32x64xf32>
    %cst_190 = arith.constant dense<0.000000e+00> : vector<256x64xf32>
    %242 = tpu.matmul %239, %241, %cst_190 {dimension_numbers = #tpu.dot_dimension_numbers<[1], [0], [0], [1], [0, 0, 1, 1], [], []>} : vector<256x32xf32>, vector<32x64xf32>, vector<256x64xf32> -> vector<256x64xf32>
    %243 = arith.addf %238, %242 : vector<256x64xf32>
    %c32_191 = arith.constant 32 : index
    %c0_192 = arith.constant 0 : index
    %244 = vector.load %arg10[%c32_191, %c0_192] : memref<304x32xf32, #tpu.memory_space<vmem>>, vector<256x32xf32>
    %c6_193 = arith.constant 6 : index
    %c0_194 = arith.constant 0 : index
    %c0_195 = arith.constant 0 : index
    %245 = vector.load %arg4[%c6_193, %c0_194, %c0_195] : memref<9x32x64xf32, #tpu.memory_space<vmem>>, vector<1x32x64xf32>
    %246 = vector.shape_cast %245 : vector<1x32x64xf32> to vector<32x64xf32>
    %cst_196 = arith.constant dense<0.000000e+00> : vector<256x64xf32>
    %247 = tpu.matmul %244, %246, %cst_196 {dimension_numbers = #tpu.dot_dimension_numbers<[1], [0], [0], [1], [0, 0, 1, 1], [], []>} : vector<256x32xf32>, vector<32x64xf32>, vector<256x64xf32> -> vector<256x64xf32>
    %248 = arith.addf %243, %247 : vector<256x64xf32>
    %c33_197 = arith.constant 33 : index
    %c0_198 = arith.constant 0 : index
    %249 = vector.load %arg10[%c33_197, %c0_198] : memref<304x32xf32, #tpu.memory_space<vmem>>, vector<256x32xf32>
    %c7_199 = arith.constant 7 : index
    %c0_200 = arith.constant 0 : index
    %c0_201 = arith.constant 0 : index
    %250 = vector.load %arg4[%c7_199, %c0_200, %c0_201] : memref<9x32x64xf32, #tpu.memory_space<vmem>>, vector<1x32x64xf32>
    %251 = vector.shape_cast %250 : vector<1x32x64xf32> to vector<32x64xf32>
    %cst_202 = arith.constant dense<0.000000e+00> : vector<256x64xf32>
    %252 = tpu.matmul %249, %251, %cst_202 {dimension_numbers = #tpu.dot_dimension_numbers<[1], [0], [0], [1], [0, 0, 1, 1], [], []>} : vector<256x32xf32>, vector<32x64xf32>, vector<256x64xf32> -> vector<256x64xf32>
    %253 = arith.addf %248, %252 : vector<256x64xf32>
    %c34 = arith.constant 34 : index
    %c0_203 = arith.constant 0 : index
    %254 = vector.load %arg10[%c34, %c0_203] : memref<304x32xf32, #tpu.memory_space<vmem>>, vector<256x32xf32>
    %c8_204 = arith.constant 8 : index
    %c0_205 = arith.constant 0 : index
    %c0_206 = arith.constant 0 : index
    %255 = vector.load %arg4[%c8_204, %c0_205, %c0_206] : memref<9x32x64xf32, #tpu.memory_space<vmem>>, vector<1x32x64xf32>
    %256 = vector.shape_cast %255 : vector<1x32x64xf32> to vector<32x64xf32>
    %cst_207 = arith.constant dense<0.000000e+00> : vector<256x64xf32>
    %257 = tpu.matmul %254, %256, %cst_207 {dimension_numbers = #tpu.dot_dimension_numbers<[1], [0], [0], [1], [0, 0, 1, 1], [], []>} : vector<256x32xf32>, vector<32x64xf32>, vector<256x64xf32> -> vector<256x64xf32>
    %258 = arith.addf %253, %257 : vector<256x64xf32>
    %c0_208 = arith.constant 0 : index
    %c0_209 = arith.constant 0 : index
    %259 = vector.load %arg5[%c0_208, %c0_209] : memref<1x64xf32, #tpu.memory_space<vmem>>, vector<1x64xf32>
    %260 = vector.broadcast %259 : vector<1x64xf32> to vector<256x64xf32>
    %261 = arith.addf %258, %260 : vector<256x64xf32>
    %cst_210 = arith.constant 0.000000e+00 : f32
    %262 = vector.broadcast %cst_210 : f32 to vector<256x64xf32>
    %263 = arith.maximumf %261, %262 : vector<256x64xf32>
    %c0_211 = arith.constant 0 : index
    %c0_212 = arith.constant 0 : index
    %264 = vector.load %arg11[%c0_211, %c0_212] : memref<256x64xf32, #tpu.memory_space<vmem>>, vector<256x64xf32>
    tpu.vector_store %arg11[%c0_211, %c0_212], %263 {strides = array<i32>} : memref<256x64xf32, #tpu.memory_space<vmem>>, vector<256x64xf32>,
    %c0_213 = arith.constant 0 : index
    %c0_214 = arith.constant 0 : index
    %265 = vector.load %arg11[%c0_213, %c0_214] : memref<256x64xf32, #tpu.memory_space<vmem>>, vector<14x64xf32>
    %c1_215 = arith.constant 1 : index
    %c0_216 = arith.constant 0 : index
    %266 = vector.load %arg11[%c1_215, %c0_216] : memref<256x64xf32, #tpu.memory_space<vmem>>, vector<14x64xf32>
    %c16_217 = arith.constant 16 : index
    %c0_218 = arith.constant 0 : index
    %267 = vector.load %arg11[%c16_217, %c0_218] : memref<256x64xf32, #tpu.memory_space<vmem>>, vector<14x64xf32>
    %c17_219 = arith.constant 17 : index
    %c0_220 = arith.constant 0 : index
    %268 = vector.load %arg11[%c17_219, %c0_220] : memref<256x64xf32, #tpu.memory_space<vmem>>, vector<14x64xf32>
    %269 = arith.maximumf %265, %266 : vector<14x64xf32>
    %270 = arith.maximumf %267, %268 : vector<14x64xf32>
    %271 = arith.maximumf %269, %270 : vector<14x64xf32>
    %c0_221 = arith.constant 0 : index
    %c0_222 = arith.constant 0 : index
    %272 = vector.load %arg7[%c0_221, %c0_222] : memref<7x14xf32, #tpu.memory_space<vmem>>, vector<7x14xf32>
    %cst_223 = arith.constant dense<0.000000e+00> : vector<7x64xf32>
    %273 = tpu.matmul %272, %271, %cst_223 {dimension_numbers = #tpu.dot_dimension_numbers<[1], [0], [0], [1], [0, 0, 1, 1], [], []>} : vector<7x14xf32>, vector<14x64xf32>, vector<7x64xf32> -> vector<7x64xf32>
    %c0_224 = arith.constant 0 : index
    %c0_225 = arith.constant 0 : index
    %c0_226 = arith.constant 0 : index
    %274 = vector.load %arg8[%c0_224, %c0_225, %c0_226] : memref<1x49x64xf32, #tpu.memory_space<vmem>>, vector<1x7x64xf32>
    %275 = vector.shape_cast %274 : vector<1x7x64xf32> to vector<7x64xf32>
    %276 = vector.shape_cast %273 : vector<7x64xf32> to vector<1x7x64xf32>
    tpu.vector_store %arg8[%c0_224, %c0_225, %c0_226], %276 {strides = array<i32>} : memref<1x49x64xf32, #tpu.memory_space<vmem>>, vector<1x7x64xf32>,
    %c32_227 = arith.constant 32 : index
    %c0_228 = arith.constant 0 : index
    %277 = vector.load %arg11[%c32_227, %c0_228] : memref<256x64xf32, #tpu.memory_space<vmem>>, vector<14x64xf32>
    %c33_229 = arith.constant 33 : index
    %c0_230 = arith.constant 0 : index
    %278 = vector.load %arg11[%c33_229, %c0_230] : memref<256x64xf32, #tpu.memory_space<vmem>>, vector<14x64xf32>
    %c48 = arith.constant 48 : index
    %c0_231 = arith.constant 0 : index
    %279 = vector.load %arg11[%c48, %c0_231] : memref<256x64xf32, #tpu.memory_space<vmem>>, vector<14x64xf32>
    %c49_232 = arith.constant 49 : index
    %c0_233 = arith.constant 0 : index
    %280 = vector.load %arg11[%c49_232, %c0_233] : memref<256x64xf32, #tpu.memory_space<vmem>>, vector<14x64xf32>
    %281 = arith.maximumf %277, %278 : vector<14x64xf32>
    %282 = arith.maximumf %279, %280 : vector<14x64xf32>
    %283 = arith.maximumf %281, %282 : vector<14x64xf32>
    %c0_234 = arith.constant 0 : index
    %c0_235 = arith.constant 0 : index
    %284 = vector.load %arg7[%c0_234, %c0_235] : memref<7x14xf32, #tpu.memory_space<vmem>>, vector<7x14xf32>
    %cst_236 = arith.constant dense<0.000000e+00> : vector<7x64xf32>
    %285 = tpu.matmul %284, %283, %cst_236 {dimension_numbers = #tpu.dot_dimension_numbers<[1], [0], [0], [1], [0, 0, 1, 1], [], []>} : vector<7x14xf32>, vector<14x64xf32>, vector<7x64xf32> -> vector<7x64xf32>
    %c0_237 = arith.constant 0 : index
    %c7_238 = arith.constant 7 : index
    %c0_239 = arith.constant 0 : index
    %286 = vector.load %arg8[%c0_237, %c7_238, %c0_239] : memref<1x49x64xf32, #tpu.memory_space<vmem>>, vector<1x7x64xf32>
    %287 = vector.shape_cast %286 : vector<1x7x64xf32> to vector<7x64xf32>
    %288 = vector.shape_cast %285 : vector<7x64xf32> to vector<1x7x64xf32>
    tpu.vector_store %arg8[%c0_237, %c7_238, %c0_239], %288 {strides = array<i32>} : memref<1x49x64xf32, #tpu.memory_space<vmem>>, vector<1x7x64xf32>,
    %c64 = arith.constant 64 : index
    %c0_240 = arith.constant 0 : index
    %289 = vector.load %arg11[%c64, %c0_240] : memref<256x64xf32, #tpu.memory_space<vmem>>, vector<14x64xf32>
    %c65_241 = arith.constant 65 : index
    %c0_242 = arith.constant 0 : index
    %290 = vector.load %arg11[%c65_241, %c0_242] : memref<256x64xf32, #tpu.memory_space<vmem>>, vector<14x64xf32>
    %c80 = arith.constant 80 : index
    %c0_243 = arith.constant 0 : index
    %291 = vector.load %arg11[%c80, %c0_243] : memref<256x64xf32, #tpu.memory_space<vmem>>, vector<14x64xf32>
    %c81_244 = arith.constant 81 : index
    %c0_245 = arith.constant 0 : index
    %292 = vector.load %arg11[%c81_244, %c0_245] : memref<256x64xf32, #tpu.memory_space<vmem>>, vector<14x64xf32>
    %293 = arith.maximumf %289, %290 : vector<14x64xf32>
    %294 = arith.maximumf %291, %292 : vector<14x64xf32>
    %295 = arith.maximumf %293, %294 : vector<14x64xf32>
    %c0_246 = arith.constant 0 : index
    %c0_247 = arith.constant 0 : index
    %296 = vector.load %arg7[%c0_246, %c0_247] : memref<7x14xf32, #tpu.memory_space<vmem>>, vector<7x14xf32>
    %cst_248 = arith.constant dense<0.000000e+00> : vector<7x64xf32>
    %297 = tpu.matmul %296, %295, %cst_248 {dimension_numbers = #tpu.dot_dimension_numbers<[1], [0], [0], [1], [0, 0, 1, 1], [], []>} : vector<7x14xf32>, vector<14x64xf32>, vector<7x64xf32> -> vector<7x64xf32>
    %c0_249 = arith.constant 0 : index
    %c14 = arith.constant 14 : index
    %c0_250 = arith.constant 0 : index
    %298 = vector.load %arg8[%c0_249, %c14, %c0_250] : memref<1x49x64xf32, #tpu.memory_space<vmem>>, vector<1x7x64xf32>
    %299 = vector.shape_cast %298 : vector<1x7x64xf32> to vector<7x64xf32>
    %300 = vector.shape_cast %297 : vector<7x64xf32> to vector<1x7x64xf32>
    tpu.vector_store %arg8[%c0_249, %c14, %c0_250], %300 {strides = array<i32>} : memref<1x49x64xf32, #tpu.memory_space<vmem>>, vector<1x7x64xf32>,
    %c96 = arith.constant 96 : index
    %c0_251 = arith.constant 0 : index
    %301 = vector.load %arg11[%c96, %c0_251] : memref<256x64xf32, #tpu.memory_space<vmem>>, vector<14x64xf32>
    %c97_252 = arith.constant 97 : index
    %c0_253 = arith.constant 0 : index
    %302 = vector.load %arg11[%c97_252, %c0_253] : memref<256x64xf32, #tpu.memory_space<vmem>>, vector<14x64xf32>
    %c112 = arith.constant 112 : index
    %c0_254 = arith.constant 0 : index
    %303 = vector.load %arg11[%c112, %c0_254] : memref<256x64xf32, #tpu.memory_space<vmem>>, vector<14x64xf32>
    %c113_255 = arith.constant 113 : index
    %c0_256 = arith.constant 0 : index
    %304 = vector.load %arg11[%c113_255, %c0_256] : memref<256x64xf32, #tpu.memory_space<vmem>>, vector<14x64xf32>
    %305 = arith.maximumf %301, %302 : vector<14x64xf32>
    %306 = arith.maximumf %303, %304 : vector<14x64xf32>
    %307 = arith.maximumf %305, %306 : vector<14x64xf32>
    %c0_257 = arith.constant 0 : index
    %c0_258 = arith.constant 0 : index
    %308 = vector.load %arg7[%c0_257, %c0_258] : memref<7x14xf32, #tpu.memory_space<vmem>>, vector<7x14xf32>
    %cst_259 = arith.constant dense<0.000000e+00> : vector<7x64xf32>
    %309 = tpu.matmul %308, %307, %cst_259 {dimension_numbers = #tpu.dot_dimension_numbers<[1], [0], [0], [1], [0, 0, 1, 1], [], []>} : vector<7x14xf32>, vector<14x64xf32>, vector<7x64xf32> -> vector<7x64xf32>
    %c0_260 = arith.constant 0 : index
    %c21 = arith.constant 21 : index
    %c0_261 = arith.constant 0 : index
    %310 = vector.load %arg8[%c0_260, %c21, %c0_261] : memref<1x49x64xf32, #tpu.memory_space<vmem>>, vector<1x7x64xf32>
    %311 = vector.shape_cast %310 : vector<1x7x64xf32> to vector<7x64xf32>
    %312 = vector.shape_cast %309 : vector<7x64xf32> to vector<1x7x64xf32>
    tpu.vector_store %arg8[%c0_260, %c21, %c0_261], %312 {strides = array<i32>} : memref<1x49x64xf32, #tpu.memory_space<vmem>>, vector<1x7x64xf32>,
    %c128 = arith.constant 128 : index
    %c0_262 = arith.constant 0 : index
    %313 = vector.load %arg11[%c128, %c0_262] : memref<256x64xf32, #tpu.memory_space<vmem>>, vector<14x64xf32>
    %c129_263 = arith.constant 129 : index
    %c0_264 = arith.constant 0 : index
    %314 = vector.load %arg11[%c129_263, %c0_264] : memref<256x64xf32, #tpu.memory_space<vmem>>, vector<14x64xf32>
    %c144 = arith.constant 144 : index
    %c0_265 = arith.constant 0 : index
    %315 = vector.load %arg11[%c144, %c0_265] : memref<256x64xf32, #tpu.memory_space<vmem>>, vector<14x64xf32>
    %c145_266 = arith.constant 145 : index
    %c0_267 = arith.constant 0 : index
    %316 = vector.load %arg11[%c145_266, %c0_267] : memref<256x64xf32, #tpu.memory_space<vmem>>, vector<14x64xf32>
    %317 = arith.maximumf %313, %314 : vector<14x64xf32>
    %318 = arith.maximumf %315, %316 : vector<14x64xf32>
    %319 = arith.maximumf %317, %318 : vector<14x64xf32>
    %c0_268 = arith.constant 0 : index
    %c0_269 = arith.constant 0 : index
    %320 = vector.load %arg7[%c0_268, %c0_269] : memref<7x14xf32, #tpu.memory_space<vmem>>, vector<7x14xf32>
    %cst_270 = arith.constant dense<0.000000e+00> : vector<7x64xf32>
    %321 = tpu.matmul %320, %319, %cst_270 {dimension_numbers = #tpu.dot_dimension_numbers<[1], [0], [0], [1], [0, 0, 1, 1], [], []>} : vector<7x14xf32>, vector<14x64xf32>, vector<7x64xf32> -> vector<7x64xf32>
    %c0_271 = arith.constant 0 : index
    %c28 = arith.constant 28 : index
    %c0_272 = arith.constant 0 : index
    %322 = vector.load %arg8[%c0_271, %c28, %c0_272] : memref<1x49x64xf32, #tpu.memory_space<vmem>>, vector<1x7x64xf32>
    %323 = vector.shape_cast %322 : vector<1x7x64xf32> to vector<7x64xf32>
    %324 = vector.shape_cast %321 : vector<7x64xf32> to vector<1x7x64xf32>
    tpu.vector_store %arg8[%c0_271, %c28, %c0_272], %324 {strides = array<i32>} : memref<1x49x64xf32, #tpu.memory_space<vmem>>, vector<1x7x64xf32>,
    %c160 = arith.constant 160 : index
    %c0_273 = arith.constant 0 : index
    %325 = vector.load %arg11[%c160, %c0_273] : memref<256x64xf32, #tpu.memory_space<vmem>>, vector<14x64xf32>
    %c161_274 = arith.constant 161 : index
    %c0_275 = arith.constant 0 : index
    %326 = vector.load %arg11[%c161_274, %c0_275] : memref<256x64xf32, #tpu.memory_space<vmem>>, vector<14x64xf32>
    %c176 = arith.constant 176 : index
    %c0_276 = arith.constant 0 : index
    %327 = vector.load %arg11[%c176, %c0_276] : memref<256x64xf32, #tpu.memory_space<vmem>>, vector<14x64xf32>
    %c177_277 = arith.constant 177 : index
    %c0_278 = arith.constant 0 : index
    %328 = vector.load %arg11[%c177_277, %c0_278] : memref<256x64xf32, #tpu.memory_space<vmem>>, vector<14x64xf32>
    %329 = arith.maximumf %325, %326 : vector<14x64xf32>
    %330 = arith.maximumf %327, %328 : vector<14x64xf32>
    %331 = arith.maximumf %329, %330 : vector<14x64xf32>
    %c0_279 = arith.constant 0 : index
    %c0_280 = arith.constant 0 : index
    %332 = vector.load %arg7[%c0_279, %c0_280] : memref<7x14xf32, #tpu.memory_space<vmem>>, vector<7x14xf32>
    %cst_281 = arith.constant dense<0.000000e+00> : vector<7x64xf32>
    %333 = tpu.matmul %332, %331, %cst_281 {dimension_numbers = #tpu.dot_dimension_numbers<[1], [0], [0], [1], [0, 0, 1, 1], [], []>} : vector<7x14xf32>, vector<14x64xf32>, vector<7x64xf32> -> vector<7x64xf32>
    %c0_282 = arith.constant 0 : index
    %c35 = arith.constant 35 : index
    %c0_283 = arith.constant 0 : index
    %334 = vector.load %arg8[%c0_282, %c35, %c0_283] : memref<1x49x64xf32, #tpu.memory_space<vmem>>, vector<1x7x64xf32>
    %335 = vector.shape_cast %334 : vector<1x7x64xf32> to vector<7x64xf32>
    %336 = vector.shape_cast %333 : vector<7x64xf32> to vector<1x7x64xf32>
    tpu.vector_store %arg8[%c0_282, %c35, %c0_283], %336 {strides = array<i32>} : memref<1x49x64xf32, #tpu.memory_space<vmem>>, vector<1x7x64xf32>,
    %c192 = arith.constant 192 : index
    %c0_284 = arith.constant 0 : index
    %337 = vector.load %arg11[%c192, %c0_284] : memref<256x64xf32, #tpu.memory_space<vmem>>, vector<14x64xf32>
    %c193_285 = arith.constant 193 : index
    %c0_286 = arith.constant 0 : index
    %338 = vector.load %arg11[%c193_285, %c0_286] : memref<256x64xf32, #tpu.memory_space<vmem>>, vector<14x64xf32>
    %c208 = arith.constant 208 : index
    %c0_287 = arith.constant 0 : index
    %339 = vector.load %arg11[%c208, %c0_287] : memref<256x64xf32, #tpu.memory_space<vmem>>, vector<14x64xf32>
    %c209_288 = arith.constant 209 : index
    %c0_289 = arith.constant 0 : index
    %340 = vector.load %arg11[%c209_288, %c0_289] : memref<256x64xf32, #tpu.memory_space<vmem>>, vector<14x64xf32>
    %341 = arith.maximumf %337, %338 : vector<14x64xf32>
    %342 = arith.maximumf %339, %340 : vector<14x64xf32>
    %343 = arith.maximumf %341, %342 : vector<14x64xf32>
    %c0_290 = arith.constant 0 : index
    %c0_291 = arith.constant 0 : index
    %344 = vector.load %arg7[%c0_290, %c0_291] : memref<7x14xf32, #tpu.memory_space<vmem>>, vector<7x14xf32>
    %cst_292 = arith.constant dense<0.000000e+00> : vector<7x64xf32>
    %345 = tpu.matmul %344, %343, %cst_292 {dimension_numbers = #tpu.dot_dimension_numbers<[1], [0], [0], [1], [0, 0, 1, 1], [], []>} : vector<7x14xf32>, vector<14x64xf32>, vector<7x64xf32> -> vector<7x64xf32>
    %c0_293 = arith.constant 0 : index
    %c42 = arith.constant 42 : index
    %c0_294 = arith.constant 0 : index
    %346 = vector.load %arg8[%c0_293, %c42, %c0_294] : memref<1x49x64xf32, #tpu.memory_space<vmem>>, vector<1x7x64xf32>
    %347 = vector.shape_cast %346 : vector<1x7x64xf32> to vector<7x64xf32>
    %348 = vector.shape_cast %345 : vector<7x64xf32> to vector<1x7x64xf32>
    tpu.vector_store %arg8[%c0_293, %c42, %c0_294], %348 {strides = array<i32>} : memref<1x49x64xf32, #tpu.memory_space<vmem>>, vector<1x7x64xf32>,
    return
  }
  func.func @transform_0(%arg0: i32) -> (i32, i32, i32) {
    %c0_i32 = arith.constant 0 : i32
    %c0_i32_0 = arith.constant 0 : i32
    %c0_i32_1 = arith.constant 0 : i32
    return %arg0, %c0_i32, %c0_i32_0 : i32, i32, i32
  }
  func.func @transform_1(%arg0: i32) -> (i32, i32) {
    %c0_i32 = arith.constant 0 : i32
    %c0_i32_0 = arith.constant 0 : i32
    %c0_i32_1 = arith.constant 0 : i32
    return %c0_i32, %c0_i32_0 : i32, i32
  }
  func.func @transform_2(%arg0: i32) -> (i32, i32) {
    %c0_i32 = arith.constant 0 : i32
    %c0_i32_0 = arith.constant 0 : i32
    %c0_i32_1 = arith.constant 0 : i32
    return %c0_i32, %c0_i32_0 : i32, i32
  }
  func.func @transform_3(%arg0: i32) -> (i32, i32, i32) {
    %c0_i32 = arith.constant 0 : i32
    %c0_i32_0 = arith.constant 0 : i32
    %c0_i32_1 = arith.constant 0 : i32
    %c0_i32_2 = arith.constant 0 : i32
    return %c0_i32, %c0_i32_0, %c0_i32_1 : i32, i32, i32
  }
  func.func @transform_4(%arg0: i32) -> (i32, i32) {
    %c0_i32 = arith.constant 0 : i32
    %c0_i32_0 = arith.constant 0 : i32
    %c0_i32_1 = arith.constant 0 : i32
    return %c0_i32, %c0_i32_0 : i32, i32
  }
  func.func @transform_5(%arg0: i32) -> (i32, i32) {
    %c0_i32 = arith.constant 0 : i32
    %c0_i32_0 = arith.constant 0 : i32
    %c0_i32_1 = arith.constant 0 : i32
    return %c0_i32, %c0_i32_0 : i32, i32
  }
  func.func @transform_6(%arg0: i32) -> (i32, i32) {
    %c0_i32 = arith.constant 0 : i32
    %c0_i32_0 = arith.constant 0 : i32
    %c0_i32_1 = arith.constant 0 : i32
    return %c0_i32, %c0_i32_0 : i32, i32
  }
  func.func @transform_7(%arg0: i32) -> (i32, i32, i32) {
    %c0_i32 = arith.constant 0 : i32
    %c0_i32_0 = arith.constant 0 : i32
    %c0_i32_1 = arith.constant 0 : i32
    return %arg0, %c0_i32, %c0_i32_0 : i32, i32, i32
  }
}

</mosaic_0001>

<llo_original>
// kernel: subclassnet_forward.3
$region0: #{subclassnet_forward.3}
  #allocation0 [shape = 'u32[]', space=smem, size = 0x4, offset = 0x4, fixed_abs, tag = 'smem constant byte address 0x4 - core index']
  #allocation1 [shape = 'u32[72,128]{1,0:T(1,128)}', space=vmem, size = 0x9000, scoped, tag = 'internal scratch']
  %s0 = inlined_call_operand.vmem [shape: f32[2,3136], index: 0, kind: input, shape index: {}]
  %s1 = inlined_call_operand.hbm [shape: f32[3136,128], index: 1, kind: input, shape index: {}]
  %s2 = inlined_call_operand.hbm [shape: f32[1,128], index: 2, kind: input, shape index: {}]
  %s3 = inlined_call_operand.hbm [shape: f32[128,128], index: 3, kind: input, shape index: {}]
  %s4 = inlined_call_operand.hbm [shape: f32[1,128], index: 4, kind: input, shape index: {}]
  %s5 = inlined_call_operand.hbm [shape: f32[2,128], index: 5, kind: output, shape index: {}]
  %s6 = sld [smem:[#allocation0]]
  $region46: #{subclassnet_forward.3} parent=0
    _
  %s8 = ssub.s32 1, %s6
  %s9 = scalar_select 0, %s8, %s6
  $region1: #{subclassnet_forward.3} parent=0
    #allocation2 [shape = 'u8[1605632]{0}', space=vmem, size = 0x188000, scoped, tag = 'input window, operand 1, single buffered']
    #allocation3 [shape = 's32[1]{0}', space=sflag, size = 0x4, scoped, tag = 'scoped memory for subclassnet_forward.3']
    #allocation4 [shape = 's32[1]{0}', space=sflag, size = 0x4, scoped, tag = 'scoped memory for subclassnet_forward.3']
    #allocation5 [shape = 'u8[512]{0}', space=vmem, size = 0x400, scoped, tag = 'input window, operand 2, single buffered']
    #allocation6 [shape = 's32[1]{0}', space=sflag, size = 0x4, scoped, tag = 'scoped memory for subclassnet_forward.3']
    #allocation7 [shape = 'u8[65536]{0}', space=vmem, size = 0x10000, scoped, tag = 'input window, operand 3, single buffered']
    #allocation8 [shape = 'u8[512]{0}', space=vmem, size = 0x400, scoped, tag = 'input window, operand 4, single buffered']
    #allocation9 [shape = 's32[1]{0}', space=sflag, size = 0x4, scoped, tag = 'scoped memory for subclassnet_forward.3']
    #allocation10 [shape = 'u8[1024]{0}', space=vmem, size = 0x400, scoped, tag = 'output window, operand 0, single buffered']
    %10 = vsyncpa [#allocation3], 0
    %11 = vsyncpa [#allocation6], 0
    %12 = vsyncpa [#allocation9], 0
    %13 = vsyncpa [#allocation4], 0
    // Predicated region
    $region2: #{subclassnet_forward.3} parent=1 // pred_check
      _
    $region3: #{subclassnet_forward.3} parent=1 // pred_check_branch
      %15 = sbr.rel (0) target = $region5
    $region4: #{subclassnet_forward.3} parent=1 // pred_region
      _
    $region5: #{subclassnet_forward.3} parent=1 // pred_fallthru
      _
    // Predicated region
    $region6: #{subclassnet_forward.3} parent=1 // pred_check
      _
    $region7: #{subclassnet_forward.3} parent=1 // pred_check_branch
      %17 = sbr.rel (0) target = $region9
    $region8: #{subclassnet_forward.3} parent=1 // pred_region
      %19 = vsyncadd [#allocation3], 0
      %s20 = sshll.u32 %s1, 4
      %s21 = int_to_ptr.hbm [resolvable:$true] %s20
      %s22 = sshll.u32 [#allocation2], 4
      %s23 = int_to_ptr.vmem [resolvable:$true] %s22
      %28 = dma.hbm_to_vmem [thread:$0]  %s21, 50176, %s23, [#allocation3], 128, 128, 8
    $region9: #{subclassnet_forward.3} parent=1 // pred_fallthru
      _
    // Predicated region
    $region10: #{subclassnet_forward.3} parent=1 // pred_check
      _
    $region11: #{subclassnet_forward.3} parent=1 // pred_check_branch
      %30 = sbr.rel (0) target = $region13
    $region12: #{subclassnet_forward.3} parent=1 // pred_region
      %32 = vsyncadd [#allocation6], 0
      %s34 = sshll.u32 %s2, 4
      %s35 = int_to_ptr.hbm [resolvable:$true] %s34
      %s36 = sshll.u32 [#allocation5], 4
      %s37 = int_to_ptr.vmem [resolvable:$true] %s36
      %39 = dma.hbm_to_vmem [thread:$0]  %s35, 16, %s37, [#allocation6]
    $region13: #{subclassnet_forward.3} parent=1 // pred_fallthru
      _
    // Predicated region
    $region14: #{subclassnet_forward.3} parent=1 // pred_check
      _
    $region15: #{subclassnet_forward.3} parent=1 // pred_check_branch
      %41 = sbr.rel (0) target = $region17
    $region16: #{subclassnet_forward.3} parent=1 // pred_region
      %43 = vsyncadd [#allocation6], 0
      %s44 = sshll.u32 %s3, 4
      %s45 = int_to_ptr.hbm [resolvable:$true] %s44
      %s46 = sshll.u32 [#allocation7], 4
      %s47 = int_to_ptr.vmem [resolvable:$true] %s46
      %52 = dma.hbm_to_vmem [thread:$0]  %s45, 2048, %s47, [#allocation6], 128, 128, 8
    $region17: #{subclassnet_forward.3} parent=1 // pred_fallthru
      _
    // Predicated region
    $region18: #{subclassnet_forward.3} parent=1 // pred_check
      _
    $region19: #{subclassnet_forward.3} parent=1 // pred_check_branch
      %54 = sbr.rel (0) target = $region21
    $region20: #{subclassnet_forward.3} parent=1 // pred_region
      %56 = vsyncadd [#allocation9], 0
      %s58 = sshll.u32 %s4, 4
      %s59 = int_to_ptr.hbm [resolvable:$true] %s58
      %s60 = sshll.u32 [#allocation8], 4
      %s61 = int_to_ptr.vmem [resolvable:$true] %s60
      %63 = dma.hbm_to_vmem [thread:$0]  %s59, 16, %s61, [#allocation9]
    $region21: #{subclassnet_forward.3} parent=1 // pred_fallthru
      _
    // Predicated region
    $region22: #{subclassnet_forward.3} parent=1 // pred_check
      _
    $region23: #{subclassnet_forward.3} parent=1 // pred_check_branch
      %65 = sbr.rel (0) target = $region25
    $region24: #{subclassnet_forward.3} parent=1 // pred_region
      %67 = dma.done [#allocation3], 50176
    $region25: #{subclassnet_forward.3} parent=1 // pred_fallthru
      _
    // Predicated region
    $region26: #{subclassnet_forward.3} parent=1 // pred_check
      _
    $region27: #{subclassnet_forward.3} parent=1 // pred_check_branch
      %69 = sbr.rel (0) target = $region29
    $region28: #{subclassnet_forward.3} parent=1 // pred_region
      %71 = dma.done [#allocation6], 16
    $region29: #{subclassnet_forward.3} parent=1 // pred_fallthru
      _
    // Predicated region
    $region30: #{subclassnet_forward.3} parent=1 // pred_check
      _
    $region31: #{subclassnet_forward.3} parent=1 // pred_check_branch
      %73 = sbr.rel (0) target = $region33
    $region32: #{subclassnet_forward.3} parent=1 // pred_region
      %75 = dma.done [#allocation6], 2048
    $region33: #{subclassnet_forward.3} parent=1 // pred_fallthru
      _
    // Predicated region
    $region34: #{subclassnet_forward.3} parent=1 // pred_check
      _
    $region35: #{subclassnet_forward.3} parent=1 // pred_check_branch
      %77 = sbr.rel (0) target = $region37
    $region36: #{subclassnet_forward.3} parent=1 // pred_region
      %79 = dma.done [#allocation9], 16
    $region37: #{subclassnet_forward.3} parent=1 // pred_fallthru
      _
    %v80 = vld [vmem:[%s0] sm:$0xff]
    %v81 = vld [vmem:[%s0 + $0x8] sm:$0xff]
    %v82 = vld [vmem:[%s0 + $0x10] sm:$0xff]
    %v83 = vld [vmem:[%s0 + $0x18] sm:$0xff]
    %v84 = vld [vmem:[%s0 + $0x20] sm:$0xff]
    %v85 = vld [vmem:[%s0 + $0x28] sm:$0xff]
    %v86 = vld [vmem:[%s0 + $0x30] sm:$0x3]
    %v87 = vld [vmem:[#allocation2] sm:$0xff]
    %v88 = vld [vmem:[#allocation2 + $0x8] sm:$0xff]
    %v89 = vld [vmem:[#allocation2 + $0x10] sm:$0xff]
    %v90 = vld [vmem:[#allocation2 + $0x18] sm:$0xff]
    %v91 = vld [vmem:[#allocation2 + $0x20] sm:$0xff]
    %v92 = vld [vmem:[#allocation2 + $0x28] sm:$0xff]
    %v93 = vld [vmem:[#allocation2 + $0x30] sm:$0xff]
    %v94 = vld [vmem:[#allocation2 + $0x38] sm:$0xff]
    %v95 = vld [vmem:[#allocation2 + $0x40] sm:$0xff]
    %v96 = vld [vmem:[#allocation2 + $0x48] sm:$0xff]
    %v97 = vld [vmem:[#allocation2 + $0x50] sm:$0xff]
    %v98 = vld [vmem:[#allocation2 + $0x58] sm:$0xff]
    %v99 = vld [vmem:[#allocation2 + $0x60] sm:$0xff]
    %v100 = vld [vmem:[#allocation2 + $0x68] sm:$0xff]
    %v101 = vld [vmem:[#allocation2 + $0x70] sm:$0xff]
    %v102 = vld [vmem:[#allocation2 + $0x78] sm:$0xff]
    %v103 = vld [vmem:[#allocation2 + $0x80] sm:$0xff]
    %v104 = vld [vmem:[#allocation2 + $0x88] sm:$0xff]
    %v105 = vld [vmem:[#allocation2 + $0x90] sm:$0xff]
    %v106 = vld [vmem:[#allocation2 + $0x98] sm:$0xff]
    %v107 = vld [vmem:[#allocation2 + $0xa0] sm:$0xff]
    %v108 = vld [vmem:[#allocation2 + $0xa8] sm:$0xff]
    %v109 = vld [vmem:[#allocation2 + $0xb0] sm:$0xff]
    %v110 = vld [vmem:[#allocation2 + $0xb8] sm:$0xff]
    %v111 = vld [vmem:[#allocation2 + $0xc0] sm:$0xff]
    %v112 = vld [vmem:[#allocation2 + $0xc8] sm:$0xff]
    %v113 = vld [vmem:[#allocation2 + $0xd0] sm:$0xff]
    %v114 = vld [vmem:[#allocation2 + $0xd8] sm:$0xff]
    %v115 = vld [vmem:[#allocation2 + $0xe0] sm:$0xff]
    %v116 = vld [vmem:[#allocation2 + $0xe8] sm:$0xff]
    %v117 = vld [vmem:[#allocation2 + $0xf0] sm:$0xff]
    %v118 = vld [vmem:[#allocation2 + $0xf8] sm:$0xff]
    %v119 = vld [vmem:[#allocation2 + $0x100] sm:$0xff]
    %v120 = vld [vmem:[#allocation2 + $0x108] sm:$0xff]
    %v121 = vld [vmem:[#allocation2 + $0x110] sm:$0xff]
    %v122 = vld [vmem:[#allocation2 + $0x118] sm:$0xff]
    %v123 = vld [vmem:[#allocation2 + $0x120] sm:$0xff]
    %v124 = vld [vmem:[#allocation2 + $0x128] sm:$0xff]
    %v125 = vld [vmem:[#allocation2 + $0x130] sm:$0xff]
    %v126 = vld [vmem:[#allocation2 + $0x138] sm:$0xff]
    %v127 = vld [vmem:[#allocation2 + $0x140] sm:$0xff]
    %v128 = vld [vmem:[#allocation2 + $0x148] sm:$0xff]
    %v129 = vld [vmem:[#allocation2 + $0x150] sm:$0xff]
    %v130 = vld [vmem:[#allocation2 + $0x158] sm:$0xff]
    %v131 = vld [vmem:[#allocation2 + $0x160] sm:$0xff]
    %v132 = vld [vmem:[#allocation2 + $0x168] sm:$0xff]
    %v133 = vld [vmem:[#allocation2 + $0x170] sm:$0xff]
    %v134 = vld [vmem:[#allocation2 + $0x178] sm:$0xff]
    %v135 = vld [vmem:[#allocation2 + $0x180] sm:$0xff]
    %v136 = vld [vmem:[#allocation2 + $0x188] sm:$0xff]
    %v137 = vld [vmem:[#allocation2 + $0x190] sm:$0xff]
    %v138 = vld [vmem:[#allocation2 + $0x198] sm:$0xff]
    %v139 = vld [vmem:[#allocation2 + $0x1a0] sm:$0xff]
    %v140 = vld [vmem:[#allocation2 + $0x1a8] sm:$0xff]
    %v141 = vld [vmem:[#allocation2 + $0x1b0] sm:$0xff]
    %v142 = vld [vmem:[#allocation2 + $0x1b8] sm:$0xff]
    %v143 = vld [vmem:[#allocation2 + $0x1c0] sm:$0xff]
    %v144 = vld [vmem:[#allocation2 + $0x1c8] sm:$0xff]
    %v145 = vld [vmem:[#allocation2 + $0x1d0] sm:$0xff]
    %v146 = vld [vmem:[#allocation2 + $0x1d8] sm:$0xff]
    %v147 = vld [vmem:[#allocation2 + $0x1e0] sm:$0xff]
    %v148 = vld [vmem:[#allocation2 + $0x1e8] sm:$0xff]
    %v149 = vld [vmem:[#allocation2 + $0x1f0] sm:$0xff]
    %v150 = vld [vmem:[#allocation2 + $0x1f8] sm:$0xff]
    %v151 = vld [vmem:[#allocation2 + $0x200] sm:$0xff]
    %v152 = vld [vmem:[#allocation2 + $0x208] sm:$0xff]
    %v153 = vld [vmem:[#allocation2 + $0x210] sm:$0xff]
    %v154 = vld [vmem:[#allocation2 + $0x218] sm:$0xff]
    %v155 = vld [vmem:[#allocation2 + $0x220] sm:$0xff]
    %v156 = vld [vmem:[#allocation2 + $0x228] sm:$0xff]
    %v157 = vld [vmem:[#allocation2 + $0x230] sm:$0xff]
    %v158 = vld [vmem:[#allocation2 + $0x238] sm:$0xff]
    %v159 = vld [vmem:[#allocation2 + $0x240] sm:$0xff]
    %v160 = vld [vmem:[#allocation2 + $0x248] sm:$0xff]
    %v161 = vld [vmem:[#allocation2 + $0x250] sm:$0xff]
    %v162 = vld [vmem:[#allocation2 + $0x258] sm:$0xff]
    %v163 = vld [vmem:[#allocation2 + $0x260] sm:$0xff]
    %v164 = vld [vmem:[#allocation2 + $0x268] sm:$0xff]
    %v165 = vld [vmem:[#allocation2 + $0x270] sm:$0xff]
    %v166 = vld [vmem:[#allocation2 + $0x278] sm:$0xff]
    %v167 = vld [vmem:[#allocation2 + $0x280] sm:$0xff]
    %v168 = vld [vmem:[#allocation2 + $0x288] sm:$0xff]
    %v169 = vld [vmem:[#allocation2 + $0x290] sm:$0xff]
    %v170 = vld [vmem:[#allocation2 + $0x298] sm:$0xff]
    %v171 = vld [vmem:[#allocation2 + $0x2a0] sm:$0xff]
    %v172 = vld [vmem:[#allocation2 + $0x2a8] sm:$0xff]
    %v173 = vld [vmem:[#allocation2 + $0x2b0] sm:$0xff]
    %v174 = vld [vmem:[#allocation2 + $0x2b8] sm:$0xff]
    %v175 = vld [vmem:[#allocation2 + $0x2c0] sm:$0xff]
    %v176 = vld [vmem:[#allocation2 + $0x2c8] sm:$0xff]
    %v177 = vld [vmem:[#allocation2 + $0x2d0] sm:$0xff]
    %v178 = vld [vmem:[#allocation2 + $0x2d8] sm:$0xff]
    %v179 = vld [vmem:[#allocation2 + $0x2e0] sm:$0xff]
    %v180 = vld [vmem:[#allocation2 + $0x2e8] sm:$0xff]
    %v181 = vld [vmem:[#allocation2 + $0x2f0] sm:$0xff]
    %v182 = vld [vmem:[#allocation2 + $0x2f8] sm:$0xff]
    %v183 = vld [vmem:[#allocation2 + $0x300] sm:$0xff]
    %v184 = vld [vmem:[#allocation2 + $0x308] sm:$0xff]
    %v185 = vld [vmem:[#allocation2 + $0x310] sm:$0xff]
    %v186 = vld [vmem:[#allocation2 + $0x318] sm:$0xff]
    %v187 = vld [vmem:[#allocation2 + $0x320] sm:$0xff]
    %v188 = vld [vmem:[#allocation2 + $0x328] sm:$0xff]
    %v189 = vld [vmem:[#allocation2 + $0x330] sm:$0xff]
    %v190 = vld [vmem:[#allocation2 + $0x338] sm:$0xff]
    %v191 = vld [vmem:[#allocation2 + $0x340] sm:$0xff]
    %v192 = vld [vmem:[#allocation2 + $0x348] sm:$0xff]
    %v193 = vld [vmem:[#allocation2 + $0x350] sm:$0xff]
    %v194 = vld [vmem:[#allocation2 + $0x358] sm:$0xff]
    %v195 = vld [vmem:[#allocation2 + $0x360] sm:$0xff]
    %v196 = vld [vmem:[#allocation2 + $0x368] sm:$0xff]
    %v197 = vld [vmem:[#allocation2 + $0x370] sm:$0xff]
    %v198 = vld [vmem:[#allocation2 + $0x378] sm:$0xff]
    %v199 = vld [vmem:[#allocation2 + $0x380] sm:$0xff]
    %v200 = vld [vmem:[#allocation2 + $0x388] sm:$0xff]
    %v201 = vld [vmem:[#allocation2 + $0x390] sm:$0xff]
    %v202 = vld [vmem:[#allocation2 + $0x398] sm:$0xff]
    %v203 = vld [vmem:[#allocation2 + $0x3a0] sm:$0xff]
    %v204 = vld [vmem:[#allocation2 + $0x3a8] sm:$0xff]
    %v205 = vld [vmem:[#allocation2 + $0x3b0] sm:$0xff]
    %v206 = vld [vmem:[#allocation2 + $0x3b8] sm:$0xff]
    %v207 = vld [vmem:[#allocation2 + $0x3c0] sm:$0xff]
    %v208 = vld [vmem:[#allocation2 + $0x3c8] sm:$0xff]
    %v209 = vld [vmem:[#allocation2 + $0x3d0] sm:$0xff]
    %v210 = vld [vmem:[#allocation2 + $0x3d8] sm:$0xff]
    %v211 = vld [vmem:[#allocation2 + $0x3e0] sm:$0xff]
    %v212 = vld [vmem:[#allocation2 + $0x3e8] sm:$0xff]
    %v213 = vld [vmem:[#allocation2 + $0x3f0] sm:$0xff]
    %v214 = vld [vmem:[#allocation2 + $0x3f8] sm:$0xff]
    %v215 = vld [vmem:[#allocation2 + $0x400] sm:$0xff]
    %v216 = vld [vmem:[#allocation2 + $0x408] sm:$0xff]
    %v217 = vld [vmem:[#allocation2 + $0x410] sm:$0xff]
    %v218 = vld [vmem:[#allocation2 + $0x418] sm:$0xff]
    %v219 = vld [vmem:[#allocation2 + $0x420] sm:$0xff]
    %v220 = vld [vmem:[#allocation2 + $0x428] sm:$0xff]
    %v221 = vld [vmem:[#allocation2 + $0x430] sm:$0xff]
    %v222 = vld [vmem:[#allocation2 + $0x438] sm:$0xff]
    %v223 = vld [vmem:[#allocation2 + $0x440] sm:$0xff]
    %v224 = vld [vmem:[#allocation2 + $0x448] sm:$0xff]
    %v225 = vld [vmem:[#allocation2 + $0x450] sm:$0xff]
    %v226 = vld [vmem:[#allocation2 + $0x458] sm:$0xff]
    %v227 = vld [vmem:[#allocation2 + $0x460] sm:$0xff]
    %v228 = vld [vmem:[#allocation2 + $0x468] sm:$0xff]
    %v229 = vld [vmem:[#allocation2 + $0x470] sm:$0xff]
    %v230 = vld [vmem:[#allocation2 + $0x478] sm:$0xff]
    %v231 = vld [vmem:[#allocation2 + $0x480] sm:$0xff]
    %v232 = vld [vmem:[#allocation2 + $0x488] sm:$0xff]
    %v233 = vld [vmem:[#allocation2 + $0x490] sm:$0xff]
    %v234 = vld [vmem:[#allocation2 + $0x498] sm:$0xff]
    %v235 = vld [vmem:[#allocation2 + $0x4a0] sm:$0xff]
    %v236 = vld [vmem:[#allocation2 + $0x4a8] sm:$0xff]
    %v237 = vld [vmem:[#allocation2 + $0x4b0] sm:$0xff]
    %v238 = vld [vmem:[#allocation2 + $0x4b8] sm:$0xff]
    %v239 = vld [vmem:[#allocation2 + $0x4c0] sm:$0xff]
    %v240 = vld [vmem:[#allocation2 + $0x4c8] sm:$0xff]
    %v241 = vld [vmem:[#allocation2 + $0x4d0] sm:$0xff]
    %v242 = vld [vmem:[#allocation2 + $0x4d8] sm:$0xff]
    %v243 = vld [vmem:[#allocation2 + $0x4e0] sm:$0xff]
    %v244 = vld [vmem:[#allocation2 + $0x4e8] sm:$0xff]
    %v245 = vld [vmem:[#allocation2 + $0x4f0] sm:$0xff]
    %v246 = vld [vmem:[#allocation2 + $0x4f8] sm:$0xff]
    %v247 = vld [vmem:[#allocation2 + $0x500] sm:$0xff]
    %v248 = vld [vmem:[#allocation2 + $0x508] sm:$0xff]
    %v249 = vld [vmem:[#allocation2 + $0x510] sm:$0xff]
    %v250 = vld [vmem:[#allocation2 + $0x518] sm:$0xff]
    %v251 = vld [vmem:[#allocation2 + $0x520] sm:$0xff]
    %v252 = vld [vmem:[#allocation2 + $0x528] sm:$0xff]
    %v253 = vld [vmem:[#allocation2 + $0x530] sm:$0xff]
    %v254 = vld [vmem:[#allocation2 + $0x538] sm:$0xff]
    %v255 = vld [vmem:[#allocation2 + $0x540] sm:$0xff]
    %v256 = vld [vmem:[#allocation2 + $0x548] sm:$0xff]
    %v257 = vld [vmem:[#allocation2 + $0x550] sm:$0xff]
    %v258 = vld [vmem:[#allocation2 + $0x558] sm:$0xff]
    %v259 = vld [vmem:[#allocation2 + $0x560] sm:$0xff]
    %v260 = vld [vmem:[#allocation2 + $0x568] sm:$0xff]
    %v261 = vld [vmem:[#allocation2 + $0x570] sm:$0xff]
    %v262 = vld [vmem:[#allocation2 + $0x578] sm:$0xff]
    %v263 = vld [vmem:[#allocation2 + $0x580] sm:$0xff]
    %v264 = vld [vmem:[#allocation2 + $0x588] sm:$0xff]
    %v265 = vld [vmem:[#allocation2 + $0x590] sm:$0xff]
    %v266 = vld [vmem:[#allocation2 + $0x598] sm:$0xff]
    %v267 = vld [vmem:[#allocation2 + $0x5a0] sm:$0xff]
    %v268 = vld [vmem:[#allocation2 + $0x5a8] sm:$0xff]
    %v269 = vld [vmem:[#allocation2 + $0x5b0] sm:$0xff]
    %v270 = vld [vmem:[#allocation2 + $0x5b8] sm:$0xff]
    %v271 = vld [vmem:[#allocation2 + $0x5c0] sm:$0xff]
    %v272 = vld [vmem:[#allocation2 + $0x5c8] sm:$0xff]
    %v273 = vld [vmem:[#allocation2 + $0x5d0] sm:$0xff]
    %v274 = vld [vmem:[#allocation2 + $0x5d8] sm:$0xff]
    %v275 = vld [vmem:[#allocation2 + $0x5e0] sm:$0xff]
    %v276 = vld [vmem:[#allocation2 + $0x5e8] sm:$0xff]
    %v277 = vld [vmem:[#allocation2 + $0x5f0] sm:$0xff]
    %v278 = vld [vmem:[#allocation2 + $0x5f8] sm:$0xff]
    %v279 = vld [vmem:[#allocation2 + $0x600] sm:$0xff]
    %v280 = vld [vmem:[#allocation2 + $0x608] sm:$0xff]
    %v281 = vld [vmem:[#allocation2 + $0x610] sm:$0xff]
    %v282 = vld [vmem:[#allocation2 + $0x618] sm:$0xff]
    %v283 = vld [vmem:[#allocation2 + $0x620] sm:$0xff]
    %v284 = vld [vmem:[#allocation2 + $0x628] sm:$0xff]
    %v285 = vld [vmem:[#allocation2 + $0x630] sm:$0xff]
    %v286 = vld [vmem:[#allocation2 + $0x638] sm:$0xff]
    %v287 = vld [vmem:[#allocation2 + $0x640] sm:$0xff]
    %v288 = vld [vmem:[#allocation2 + $0x648] sm:$0xff]
    %v289 = vld [vmem:[#allocation2 + $0x650] sm:$0xff]
    %v290 = vld [vmem:[#allocation2 + $0x658] sm:$0xff]
    %v291 = vld [vmem:[#allocation2 + $0x660] sm:$0xff]
    %v292 = vld [vmem:[#allocation2 + $0x668] sm:$0xff]
    %v293 = vld [vmem:[#allocation2 + $0x670] sm:$0xff]
    %v294 = vld [vmem:[#allocation2 + $0x678] sm:$0xff]
    %v295 = vld [vmem:[#allocation2 + $0x680] sm:$0xff]
    %v296 = vld [vmem:[#allocation2 + $0x688] sm:$0xff]
    %v297 = vld [vmem:[#allocation2 + $0x690] sm:$0xff]
    %v298 = vld [vmem:[#allocation2 + $0x698] sm:$0xff]
    %v299 = vld [vmem:[#allocation2 + $0x6a0] sm:$0xff]
    %v300 = vld [vmem:[#allocation2 + $0x6a8] sm:$0xff]
    %v301 = vld [vmem:[#allocation2 + $0x6b0] sm:$0xff]
    %v302 = vld [vmem:[#allocation2 + $0x6b8] sm:$0xff]
    %v303 = vld [vmem:[#allocation2 + $0x6c0] sm:$0xff]
    %v304 = vld [vmem:[#allocation2 + $0x6c8] sm:$0xff]
    %v305 = vld [vmem:[#allocation2 + $0x6d0] sm:$0xff]
    %v306 = vld [vmem:[#allocation2 + $0x6d8] sm:$0xff]
    %v307 = vld [vmem:[#allocation2 + $0x6e0] sm:$0xff]
    %v308 = vld [vmem:[#allocation2 + $0x6e8] sm:$0xff]
    %v309 = vld [vmem:[#allocation2 + $0x6f0] sm:$0xff]
    %v310 = vld [vmem:[#allocation2 + $0x6f8] sm:$0xff]
    %v311 = vld [vmem:[#allocation2 + $0x700] sm:$0xff]
    %v312 = vld [vmem:[#allocation2 + $0x708] sm:$0xff]
    %v313 = vld [vmem:[#allocation2 + $0x710] sm:$0xff]
    %v314 = vld [vmem:[#allocation2 + $0x718] sm:$0xff]
    %v315 = vld [vmem:[#allocation2 + $0x720] sm:$0xff]
    %v316 = vld [vmem:[#allocation2 + $0x728] sm:$0xff]
    %v317 = vld [vmem:[#allocation2 + $0x730] sm:$0xff]
    %v318 = vld [vmem:[#allocation2 + $0x738] sm:$0xff]
    %v319 = vld [vmem:[#allocation2 + $0x740] sm:$0xff]
    %v320 = vld [vmem:[#allocation2 + $0x748] sm:$0xff]
    %v321 = vld [vmem:[#allocation2 + $0x750] sm:$0xff]
    %v322 = vld [vmem:[#allocation2 + $0x758] sm:$0xff]
    %v323 = vld [vmem:[#allocation2 + $0x760] sm:$0xff]
    %v324 = vld [vmem:[#allocation2 + $0x768] sm:$0xff]
    %v325 = vld [vmem:[#allocation2 + $0x770] sm:$0xff]
    %v326 = vld [vmem:[#allocation2 + $0x778] sm:$0xff]
    %v327 = vld [vmem:[#allocation2 + $0x780] sm:$0xff]
    %v328 = vld [vmem:[#allocation2 + $0x788] sm:$0xff]
    %v329 = vld [vmem:[#allocation2 + $0x790] sm:$0xff]
    %v330 = vld [vmem:[#allocation2 + $0x798] sm:$0xff]
    %v331 = vld [vmem:[#allocation2 + $0x7a0] sm:$0xff]
    %v332 = vld [vmem:[#allocation2 + $0x7a8] sm:$0xff]
    %v333 = vld [vmem:[#allocation2 + $0x7b0] sm:$0xff]
    %v334 = vld [vmem:[#allocation2 + $0x7b8] sm:$0xff]
    %v335 = vld [vmem:[#allocation2 + $0x7c0] sm:$0xff]
    %v336 = vld [vmem:[#allocation2 + $0x7c8] sm:$0xff]
    %v337 = vld [vmem:[#allocation2 + $0x7d0] sm:$0xff]
    %v338 = vld [vmem:[#allocation2 + $0x7d8] sm:$0xff]
    %v339 = vld [vmem:[#allocation2 + $0x7e0] sm:$0xff]
    %v340 = vld [vmem:[#allocation2 + $0x7e8] sm:$0xff]
    %v341 = vld [vmem:[#allocation2 + $0x7f0] sm:$0xff]
    %v342 = vld [vmem:[#allocation2 + $0x7f8] sm:$0xff]
    %v343 = vld [vmem:[#allocation2 + $0x800] sm:$0xff]
    %v344 = vld [vmem:[#allocation2 + $0x808] sm:$0xff]
    %v345 = vld [vmem:[#allocation2 + $0x810] sm:$0xff]
    %v346 = vld [vmem:[#allocation2 + $0x818] sm:$0xff]
    %v347 = vld [vmem:[#allocation2 + $0x820] sm:$0xff]
    %v348 = vld [vmem:[#allocation2 + $0x828] sm:$0xff]
    %v349 = vld [vmem:[#allocation2 + $0x830] sm:$0xff]
    %v350 = vld [vmem:[#allocation2 + $0x838] sm:$0xff]
    %v351 = vld [vmem:[#allocation2 + $0x840] sm:$0xff]
    %v352 = vld [vmem:[#allocation2 + $0x848] sm:$0xff]
    %v353 = vld [vmem:[#allocation2 + $0x850] sm:$0xff]
    %v354 = vld [vmem:[#allocation2 + $0x858] sm:$0xff]
    %v355 = vld [vmem:[#allocation2 + $0x860] sm:$0xff]
    %v356 = vld [vmem:[#allocation2 + $0x868] sm:$0xff]
    %v357 = vld [vmem:[#allocation2 + $0x870] sm:$0xff]
    %v358 = vld [vmem:[#allocation2 + $0x878] sm:$0xff]
    %v359 = vld [vmem:[#allocation2 + $0x880] sm:$0xff]
    %v360 = vld [vmem:[#allocation2 + $0x888] sm:$0xff]
    %v361 = vld [vmem:[#allocation2 + $0x890] sm:$0xff]
    %v362 = vld [vmem:[#allocation2 + $0x898] sm:$0xff]
    %v363 = vld [vmem:[#allocation2 + $0x8a0] sm:$0xff]
    %v364 = vld [vmem:[#allocation2 + $0x8a8] sm:$0xff]
    %v365 = vld [vmem:[#allocation2 + $0x8b0] sm:$0xff]
    %v366 = vld [vmem:[#allocation2 + $0x8b8] sm:$0xff]
    %v367 = vld [vmem:[#allocation2 + $0x8c0] sm:$0xff]
    %v368 = vld [vmem:[#allocation2 + $0x8c8] sm:$0xff]
    %v369 = vld [vmem:[#allocation2 + $0x8d0] sm:$0xff]
    %v370 = vld [vmem:[#allocation2 + $0x8d8] sm:$0xff]
    %v371 = vld [vmem:[#allocation2 + $0x8e0] sm:$0xff]
    %v372 = vld [vmem:[#allocation2 + $0x8e8] sm:$0xff]
    %v373 = vld [vmem:[#allocation2 + $0x8f0] sm:$0xff]
    %v374 = vld [vmem:[#allocation2 + $0x8f8] sm:$0xff]
    %v375 = vld [vmem:[#allocation2 + $0x900] sm:$0xff]
    %v376 = vld [vmem:[#allocation2 + $0x908] sm:$0xff]
    %v377 = vld [vmem:[#allocation2 + $0x910] sm:$0xff]
    %v378 = vld [vmem:[#allocation2 + $0x918] sm:$0xff]
    %v379 = vld [vmem:[#allocation2 + $0x920] sm:$0xff]
    %v380 = vld [vmem:[#allocation2 + $0x928] sm:$0xff]
    %v381 = vld [vmem:[#allocation2 + $0x930] sm:$0xff]
    %v382 = vld [vmem:[#allocation2 + $0x938] sm:$0xff]
    %v383 = vld [vmem:[#allocation2 + $0x940] sm:$0xff]
    %v384 = vld [vmem:[#allocation2 + $0x948] sm:$0xff]
    %v385 = vld [vmem:[#allocation2 + $0x950] sm:$0xff]
    %v386 = vld [vmem:[#allocation2 + $0x958] sm:$0xff]
    %v387 = vld [vmem:[#allocation2 + $0x960] sm:$0xff]
    %v388 = vld [vmem:[#allocation2 + $0x968] sm:$0xff]
    %v389 = vld [vmem:[#allocation2 + $0x970] sm:$0xff]
    %v390 = vld [vmem:[#allocation2 + $0x978] sm:$0xff]
    %v391 = vld [vmem:[#allocation2 + $0x980] sm:$0xff]
    %v392 = vld [vmem:[#allocation2 + $0x988] sm:$0xff]
    %v393 = vld [vmem:[#allocation2 + $0x990] sm:$0xff]
    %v394 = vld [vmem:[#allocation2 + $0x998] sm:$0xff]
    %v395 = vld [vmem:[#allocation2 + $0x9a0] sm:$0xff]
    %v396 = vld [vmem:[#allocation2 + $0x9a8] sm:$0xff]
    %v397 = vld [vmem:[#allocation2 + $0x9b0] sm:$0xff]
    %v398 = vld [vmem:[#allocation2 + $0x9b8] sm:$0xff]
    %v399 = vld [vmem:[#allocation2 + $0x9c0] sm:$0xff]
    %v400 = vld [vmem:[#allocation2 + $0x9c8] sm:$0xff]
    %v401 = vld [vmem:[#allocation2 + $0x9d0] sm:$0xff]
    %v402 = vld [vmem:[#allocation2 + $0x9d8] sm:$0xff]
    %v403 = vld [vmem:[#allocation2 + $0x9e0] sm:$0xff]
    %v404 = vld [vmem:[#allocation2 + $0x9e8] sm:$0xff]
    %v405 = vld [vmem:[#allocation2 + $0x9f0] sm:$0xff]
    %v406 = vld [vmem:[#allocation2 + $0x9f8] sm:$0xff]
    %v407 = vld [vmem:[#allocation2 + $0xa00] sm:$0xff]
    %v408 = vld [vmem:[#allocation2 + $0xa08] sm:$0xff]
    %v409 = vld [vmem:[#allocation2 + $0xa10] sm:$0xff]
    %v410 = vld [vmem:[#allocation2 + $0xa18] sm:$0xff]
    %v411 = vld [vmem:[#allocation2 + $0xa20] sm:$0xff]
    %v412 = vld [vmem:[#allocation2 + $0xa28] sm:$0xff]
    %v413 = vld [vmem:[#allocation2 + $0xa30] sm:$0xff]
    %v414 = vld [vmem:[#allocation2 + $0xa38] sm:$0xff]
    %v415 = vld [vmem:[#allocation2 + $0xa40] sm:$0xff]
    %v416 = vld [vmem:[#allocation2 + $0xa48] sm:$0xff]
    %v417 = vld [vmem:[#allocation2 + $0xa50] sm:$0xff]
    %v418 = vld [vmem:[#allocation2 + $0xa58] sm:$0xff]
    %v419 = vld [vmem:[#allocation2 + $0xa60] sm:$0xff]
    %v420 = vld [vmem:[#allocation2 + $0xa68] sm:$0xff]
    %v421 = vld [vmem:[#allocation2 + $0xa70] sm:$0xff]
    %v422 = vld [vmem:[#allocation2 + $0xa78] sm:$0xff]
    %v423 = vld [vmem:[#allocation2 + $0xa80] sm:$0xff]
    %v424 = vld [vmem:[#allocation2 + $0xa88] sm:$0xff]
    %v425 = vld [vmem:[#allocation2 + $0xa90] sm:$0xff]
    %v426 = vld [vmem:[#allocation2 + $0xa98] sm:$0xff]
    %v427 = vld [vmem:[#allocation2 + $0xaa0] sm:$0xff]
    %v428 = vld [vmem:[#allocation2 + $0xaa8] sm:$0xff]
    %v429 = vld [vmem:[#allocation2 + $0xab0] sm:$0xff]
    %v430 = vld [vmem:[#allocation2 + $0xab8] sm:$0xff]
    %v431 = vld [vmem:[#allocation2 + $0xac0] sm:$0xff]
    %v432 = vld [vmem:[#allocation2 + $0xac8] sm:$0xff]
    %v433 = vld [vmem:[#allocation2 + $0xad0] sm:$0xff]
    %v434 = vld [vmem:[#allocation2 + $0xad8] sm:$0xff]
    %v435 = vld [vmem:[#allocation2 + $0xae0] sm:$0xff]
    %v436 = vld [vmem:[#allocation2 + $0xae8] sm:$0xff]
    %v437 = vld [vmem:[#allocation2 + $0xaf0] sm:$0xff]
    %v438 = vld [vmem:[#allocation2 + $0xaf8] sm:$0xff]
    %v439 = vld [vmem:[#allocation2 + $0xb00] sm:$0xff]
    %v440 = vld [vmem:[#allocation2 + $0xb08] sm:$0xff]
    %v441 = vld [vmem:[#allocation2 + $0xb10] sm:$0xff]
    %v442 = vld [vmem:[#allocation2 + $0xb18] sm:$0xff]
    %v443 = vld [vmem:[#allocation2 + $0xb20] sm:$0xff]
    %v444 = vld [vmem:[#allocation2 + $0xb28] sm:$0xff]
    %v445 = vld [vmem:[#allocation2 + $0xb30] sm:$0xff]
    %v446 = vld [vmem:[#allocation2 + $0xb38] sm:$0xff]
    %v447 = vld [vmem:[#allocation2 + $0xb40] sm:$0xff]
    %v448 = vld [vmem:[#allocation2 + $0xb48] sm:$0xff]
    %v449 = vld [vmem:[#allocation2 + $0xb50] sm:$0xff]
    %v450 = vld [vmem:[#allocation2 + $0xb58] sm:$0xff]
    %v451 = vld [vmem:[#allocation2 + $0xb60] sm:$0xff]
    %v452 = vld [vmem:[#allocation2 + $0xb68] sm:$0xff]
    %v453 = vld [vmem:[#allocation2 + $0xb70] sm:$0xff]
    %v454 = vld [vmem:[#allocation2 + $0xb78] sm:$0xff]
    %v455 = vld [vmem:[#allocation2 + $0xb80] sm:$0xff]
    %v456 = vld [vmem:[#allocation2 + $0xb88] sm:$0xff]
    %v457 = vld [vmem:[#allocation2 + $0xb90] sm:$0xff]
    %v458 = vld [vmem:[#allocation2 + $0xb98] sm:$0xff]
    %v459 = vld [vmem:[#allocation2 + $0xba0] sm:$0xff]
    %v460 = vld [vmem:[#allocation2 + $0xba8] sm:$0xff]
    %v461 = vld [vmem:[#allocation2 + $0xbb0] sm:$0xff]
    %v462 = vld [vmem:[#allocation2 + $0xbb8] sm:$0xff]
    %v463 = vld [vmem:[#allocation2 + $0xbc0] sm:$0xff]
    %v464 = vld [vmem:[#allocation2 + $0xbc8] sm:$0xff]
    %v465 = vld [vmem:[#allocation2 + $0xbd0] sm:$0xff]
    %v466 = vld [vmem:[#allocation2 + $0xbd8] sm:$0xff]
    %v467 = vld [vmem:[#allocation2 + $0xbe0] sm:$0xff]
    %v468 = vld [vmem:[#allocation2 + $0xbe8] sm:$0xff]
    %v469 = vld [vmem:[#allocation2 + $0xbf0] sm:$0xff]
    %v470 = vld [vmem:[#allocation2 + $0xbf8] sm:$0xff]
    %v471 = vld [vmem:[#allocation2 + $0xc00] sm:$0xff]
    %v472 = vld [vmem:[#allocation2 + $0xc08] sm:$0xff]
    %v473 = vld [vmem:[#allocation2 + $0xc10] sm:$0xff]
    %v474 = vld [vmem:[#allocation2 + $0xc18] sm:$0xff]
    %v475 = vld [vmem:[#allocation2 + $0xc20] sm:$0xff]
    %v476 = vld [vmem:[#allocation2 + $0xc28] sm:$0xff]
    %v477 = vld [vmem:[#allocation2 + $0xc30] sm:$0xff]
    %v478 = vld [vmem:[#allocation2 + $0xc38] sm:$0xff]
    %v479 = vld [vmem:[#allocation5] sm:$0x1]
    %v481 = vperm.slane %v479, 0
    %490 = vst [vmem:[#allocation1] ss:$4 sm:$0xff] %v80
    %s491 = scalar_lea.vmem [#allocation1], 32
    %492 = vst [vmem:[%s491] ss:$4 sm:$0xff] %v81
    %v493 = vld.sshfl [vmem:[#allocation1] sm:$0xff pattern:$0x73625140]
    %v494 = vld.sshfl [vmem:[#allocation1 + $0x8] sm:$0xff pattern:$0x73625140]
    %v495 = vld.sshfl [vmem:[#allocation1 + $0x10] sm:$0xff pattern:$0x73625140]
    %v496 = vld.sshfl [vmem:[#allocation1 + $0x18] sm:$0xff pattern:$0x73625140]
    %v497 = vld.sshfl [vmem:[#allocation1 + $0x20] sm:$0xff pattern:$0x73625140]
    %v498 = vld.sshfl [vmem:[#allocation1 + $0x28] sm:$0xff pattern:$0x73625140]
    %v499 = vld.sshfl [vmem:[#allocation1 + $0x30] sm:$0xff pattern:$0x73625140]
    %v500 = vld.sshfl [vmem:[#allocation1 + $0x38] sm:$0xff pattern:$0x73625140]
    %501 = vst [vmem:[#allocation1] ss:$4 sm:$0xff] %v82
    %502 = vst [vmem:[%s491] ss:$4 sm:$0xff] %v83
    %v503 = vld.sshfl [vmem:[#allocation1] sm:$0xff pattern:$0x73625140]
    %v504 = vld.sshfl [vmem:[#allocation1 + $0x8] sm:$0xff pattern:$0x73625140]
    %v505 = vld.sshfl [vmem:[#allocation1 + $0x10] sm:$0xff pattern:$0x73625140]
    %v506 = vld.sshfl [vmem:[#allocation1 + $0x18] sm:$0xff pattern:$0x73625140]
    %v507 = vld.sshfl [vmem:[#allocation1 + $0x20] sm:$0xff pattern:$0x73625140]
    %v508 = vld.sshfl [vmem:[#allocation1 + $0x28] sm:$0xff pattern:$0x73625140]
    %v509 = vld.sshfl [vmem:[#allocation1 + $0x30] sm:$0xff pattern:$0x73625140]
    %v510 = vld.sshfl [vmem:[#allocation1 + $0x38] sm:$0xff pattern:$0x73625140]
    %511 = vst [vmem:[#allocation1] ss:$4 sm:$0xff] %v84
    %512 = vst [vmem:[%s491] ss:$4 sm:$0xff] %v85
    %v513 = vld.sshfl [vmem:[#allocation1] sm:$0xff pattern:$0x73625140]
    %v514 = vld.sshfl [vmem:[#allocation1 + $0x8] sm:$0xff pattern:$0x73625140]
    %v515 = vld.sshfl [vmem:[#allocation1 + $0x10] sm:$0xff pattern:$0x73625140]
    %v516 = vld.sshfl [vmem:[#allocation1 + $0x18] sm:$0xff pattern:$0x73625140]
    %v517 = vld.sshfl [vmem:[#allocation1 + $0x20] sm:$0xff pattern:$0x73625140]
    %v518 = vld.sshfl [vmem:[#allocation1 + $0x28] sm:$0xff pattern:$0x73625140]
    %v519 = vld.sshfl [vmem:[#allocation1 + $0x30] sm:$0xff pattern:$0x73625140]
    %v520 = vld.sshfl [vmem:[#allocation1 + $0x38] sm:$0xff pattern:$0x73625140]
    %521 = vst [vmem:[#allocation1] ss:$4 sm:$0xff] %v86
    %v522 = vld.sshfl [vmem:[#allocation1] sm:$0xff pattern:$0x73625140]
    %vm547 = vcmask 523264
    %v548 = vsel %vm547, %v522, 0
    %550 = vmatpush.msra.mxu0 %v102
    %551 = vmatpush.msra.mxu0 %v101
    %552 = vmatpush.msra.mxu0 %v100
    %553 = vmatpush.msra.mxu0 %v99
    %554 = vmatpush.msra.mxu0 %v98
    %555 = vmatpush.msra.mxu0 %v97
    %556 = vmatpush.msra.mxu0 %v96
    %557 = vmatpush.msra.mxu0 %v95
    %558 = vmatpush.msra.mxu0 %v94
    %559 = vmatpush.msra.mxu0 %v93
    %560 = vmatpush.msra.mxu0 %v92
    %561 = vmatpush.msra.mxu0 %v91
    %562 = vmatpush.msra.mxu0 %v90
    %563 = vmatpush.msra.mxu0 %v89
    %564 = vmatpush.msra.mxu0 %v88
    %565 = vmatpush.msra.mxu0 %v87
    %566 = vmatmul.f32.gmra.mxu0 %v493
    %v567 = vpop.f32.mrf.mxu0
    %v568 = vadd.f32 %v481, %v567
    %569 = vdwg.mxu0
    %570 = vmatpush.msra.mxu0 %v118
    %571 = vmatpush.msra.mxu0 %v117
    %572 = vmatpush.msra.mxu0 %v116
    %573 = vmatpush.msra.mxu0 %v115
    %574 = vmatpush.msra.mxu0 %v114
    %575 = vmatpush.msra.mxu0 %v113
    %576 = vmatpush.msra.mxu0 %v112
    %577 = vmatpush.msra.mxu0 %v111
    %578 = vmatpush.msra.mxu0 %v110
    %579 = vmatpush.msra.mxu0 %v109
    %580 = vmatpush.msra.mxu0 %v108
    %581 = vmatpush.msra.mxu0 %v107
    %582 = vmatpush.msra.mxu0 %v106
    %583 = vmatpush.msra.mxu0 %v105
    %584 = vmatpush.msra.mxu0 %v104
    %585 = vmatpush.msra.mxu0 %v103
    %586 = vmatmul.f32.gmra.mxu0 %v494
    %v587 = vpop.f32.mrf.mxu0
    %v588 = vadd.f32 %v568, %v587
    %589 = vdwg.mxu0
    %590 = vmatpush.msra.mxu0 %v134
    %591 = vmatpush.msra.mxu0 %v133
    %592 = vmatpush.msra.mxu0 %v132
    %593 = vmatpush.msra.mxu0 %v131
    %594 = vmatpush.msra.mxu0 %v130
    %595 = vmatpush.msra.mxu0 %v129
    %596 = vmatpush.msra.mxu0 %v128
    %597 = vmatpush.msra.mxu0 %v127
    %598 = vmatpush.msra.mxu0 %v126
    %599 = vmatpush.msra.mxu0 %v125
    %600 = vmatpush.msra.mxu0 %v124
    %601 = vmatpush.msra.mxu0 %v123
    %602 = vmatpush.msra.mxu0 %v122
    %603 = vmatpush.msra.mxu0 %v121
    %604 = vmatpush.msra.mxu0 %v120
    %605 = vmatpush.msra.mxu0 %v119
    %606 = vmatmul.f32.gmra.mxu0 %v495
    %v607 = vpop.f32.mrf.mxu0
    %v608 = vadd.f32 %v588, %v607
    %609 = vdwg.mxu0
    %610 = vmatpush.msra.mxu0 %v150
    %611 = vmatpush.msra.mxu0 %v149
    %612 = vmatpush.msra.mxu0 %v148
    %613 = vmatpush.msra.mxu0 %v147
    %614 = vmatpush.msra.mxu0 %v146
    %615 = vmatpush.msra.mxu0 %v145
    %616 = vmatpush.msra.mxu0 %v144
    %617 = vmatpush.msra.mxu0 %v143
    %618 = vmatpush.msra.mxu0 %v142
    %619 = vmatpush.msra.mxu0 %v141
    %620 = vmatpush.msra.mxu0 %v140
    %621 = vmatpush.msra.mxu0 %v139
    %622 = vmatpush.msra.mxu0 %v138
    %623 = vmatpush.msra.mxu0 %v137
    %624 = vmatpush.msra.mxu0 %v136
    %625 = vmatpush.msra.mxu0 %v135
    %626 = vmatmul.f32.gmra.mxu0 %v496
    %v627 = vpop.f32.mrf.mxu0
    %v628 = vadd.f32 %v608, %v627
    %629 = vdwg.mxu0
    %630 = vmatpush.msra.mxu0 %v166
    %631 = vmatpush.msra.mxu0 %v165
    %632 = vmatpush.msra.mxu0 %v164
    %633 = vmatpush.msra.mxu0 %v163
    %634 = vmatpush.msra.mxu0 %v162
    %635 = vmatpush.msra.mxu0 %v161
    %636 = vmatpush.msra.mxu0 %v160
    %637 = vmatpush.msra.mxu0 %v159
    %638 = vmatpush.msra.mxu0 %v158
    %639 = vmatpush.msra.mxu0 %v157
    %640 = vmatpush.msra.mxu0 %v156
    %641 = vmatpush.msra.mxu0 %v155
    %642 = vmatpush.msra.mxu0 %v154
    %643 = vmatpush.msra.mxu0 %v153
    %644 = vmatpush.msra.mxu0 %v152
    %645 = vmatpush.msra.mxu0 %v151
    %646 = vmatmul.f32.gmra.mxu0 %v497
    %v647 = vpop.f32.mrf.mxu0
    %v648 = vadd.f32 %v628, %v647
    %649 = vdwg.mxu0
    %650 = vmatpush.msra.mxu0 %v182
    %651 = vmatpush.msra.mxu0 %v181
    %652 = vmatpush.msra.mxu0 %v180
    %653 = vmatpush.msra.mxu0 %v179
    %654 = vmatpush.msra.mxu0 %v178
    %655 = vmatpush.msra.mxu0 %v177
    %656 = vmatpush.msra.mxu0 %v176
    %657 = vmatpush.msra.mxu0 %v175
    %658 = vmatpush.msra.mxu0 %v174
    %659 = vmatpush.msra.mxu0 %v173
    %660 = vmatpush.msra.mxu0 %v172
    %661 = vmatpush.msra.mxu0 %v171
    %662 = vmatpush.msra.mxu0 %v170
    %663 = vmatpush.msra.mxu0 %v169
    %664 = vmatpush.msra.mxu0 %v168
    %665 = vmatpush.msra.mxu0 %v167
    %666 = vmatmul.f32.gmra.mxu0 %v498
    %v667 = vpop.f32.mrf.mxu0
    %v668 = vadd.f32 %v648, %v667
    %669 = vdwg.mxu0
    %670 = vmatpush.msra.mxu0 %v198
    %671 = vmatpush.msra.mxu0 %v197
    %672 = vmatpush.msra.mxu0 %v196
    %673 = vmatpush.msra.mxu0 %v195
    %674 = vmatpush.msra.mxu0 %v194
    %675 = vmatpush.msra.mxu0 %v193
    %676 = vmatpush.msra.mxu0 %v192
    %677 = vmatpush.msra.mxu0 %v191
    %678 = vmatpush.msra.mxu0 %v190
    %679 = vmatpush.msra.mxu0 %v189
    %680 = vmatpush.msra.mxu0 %v188
    %681 = vmatpush.msra.mxu0 %v187
    %682 = vmatpush.msra.mxu0 %v186
    %683 = vmatpush.msra.mxu0 %v185
    %684 = vmatpush.msra.mxu0 %v184
    %685 = vmatpush.msra.mxu0 %v183
    %686 = vmatmul.f32.gmra.mxu0 %v499
    %v687 = vpop.f32.mrf.mxu0
    %v688 = vadd.f32 %v668, %v687
    %689 = vdwg.mxu0
    %690 = vmatpush.msra.mxu0 %v214
    %691 = vmatpush.msra.mxu0 %v213
    %692 = vmatpush.msra.mxu0 %v212
    %693 = vmatpush.msra.mxu0 %v211
    %694 = vmatpush.msra.mxu0 %v210
    %695 = vmatpush.msra.mxu0 %v209
    %696 = vmatpush.msra.mxu0 %v208
    %697 = vmatpush.msra.mxu0 %v207
    %698 = vmatpush.msra.mxu0 %v206
    %699 = vmatpush.msra.mxu0 %v205
    %700 = vmatpush.msra.mxu0 %v204
    %701 = vmatpush.msra.mxu0 %v203
    %702 = vmatpush.msra.mxu0 %v202
    %703 = vmatpush.msra.mxu0 %v201
    %704 = vmatpush.msra.mxu0 %v200
    %705 = vmatpush.msra.mxu0 %v199
    %706 = vmatmul.f32.gmra.mxu0 %v500
    %v707 = vpop.f32.mrf.mxu0
    %v708 = vadd.f32 %v688, %v707
    %709 = vdwg.mxu0
    %710 = vmatpush.msra.mxu0 %v230
    %711 = vmatpush.msra.mxu0 %v229
    %712 = vmatpush.msra.mxu0 %v228
    %713 = vmatpush.msra.mxu0 %v227
    %714 = vmatpush.msra.mxu0 %v226
    %715 = vmatpush.msra.mxu0 %v225
    %716 = vmatpush.msra.mxu0 %v224
    %717 = vmatpush.msra.mxu0 %v223
    %718 = vmatpush.msra.mxu0 %v222
    %719 = vmatpush.msra.mxu0 %v221
    %720 = vmatpush.msra.mxu0 %v220
    %721 = vmatpush.msra.mxu0 %v219
    %722 = vmatpush.msra.mxu0 %v218
    %723 = vmatpush.msra.mxu0 %v217
    %724 = vmatpush.msra.mxu0 %v216
    %725 = vmatpush.msra.mxu0 %v215
    %726 = vmatmul.f32.gmra.mxu0 %v503
    %v727 = vpop.f32.mrf.mxu0
    %v728 = vadd.f32 %v708, %v727
    %729 = vdwg.mxu0
    %730 = vmatpush.msra.mxu0 %v246
    %731 = vmatpush.msra.mxu0 %v245
    %732 = vmatpush.msra.mxu0 %v244
    %733 = vmatpush.msra.mxu0 %v243
    %734 = vmatpush.msra.mxu0 %v242
    %735 = vmatpush.msra.mxu0 %v241
    %736 = vmatpush.msra.mxu0 %v240
    %737 = vmatpush.msra.mxu0 %v239
    %738 = vmatpush.msra.mxu0 %v238
    %739 = vmatpush.msra.mxu0 %v237
    %740 = vmatpush.msra.mxu0 %v236
    %741 = vmatpush.msra.mxu0 %v235
    %742 = vmatpush.msra.mxu0 %v234
    %743 = vmatpush.msra.mxu0 %v233
    %744 = vmatpush.msra.mxu0 %v232
    %745 = vmatpush.msra.mxu0 %v231
    %746 = vmatmul.f32.gmra.mxu0 %v504
    %v747 = vpop.f32.mrf.mxu0
    %v748 = vadd.f32 %v728, %v747
    %749 = vdwg.mxu0
    %750 = vmatpush.msra.mxu0 %v262
    %751 = vmatpush.msra.mxu0 %v261
    %752 = vmatpush.msra.mxu0 %v260
    %753 = vmatpush.msra.mxu0 %v259
    %754 = vmatpush.msra.mxu0 %v258
    %755 = vmatpush.msra.mxu0 %v257
    %756 = vmatpush.msra.mxu0 %v256
    %757 = vmatpush.msra.mxu0 %v255
    %758 = vmatpush.msra.mxu0 %v254
    %759 = vmatpush.msra.mxu0 %v253
    %760 = vmatpush.msra.mxu0 %v252
    %761 = vmatpush.msra.mxu0 %v251
    %762 = vmatpush.msra.mxu0 %v250
    %763 = vmatpush.msra.mxu0 %v249
    %764 = vmatpush.msra.mxu0 %v248
    %765 = vmatpush.msra.mxu0 %v247
    %766 = vmatmul.f32.gmra.mxu0 %v505
    %v767 = vpop.f32.mrf.mxu0
    %v768 = vadd.f32 %v748, %v767
    %769 = vdwg.mxu0
    %770 = vmatpush.msra.mxu0 %v278
    %771 = vmatpush.msra.mxu0 %v277
    %772 = vmatpush.msra.mxu0 %v276
    %773 = vmatpush.msra.mxu0 %v275
    %774 = vmatpush.msra.mxu0 %v274
    %775 = vmatpush.msra.mxu0 %v273
    %776 = vmatpush.msra.mxu0 %v272
    %777 = vmatpush.msra.mxu0 %v271
    %778 = vmatpush.msra.mxu0 %v270
    %779 = vmatpush.msra.mxu0 %v269
    %780 = vmatpush.msra.mxu0 %v268
    %781 = vmatpush.msra.mxu0 %v267
    %782 = vmatpush.msra.mxu0 %v266
    %783 = vmatpush.msra.mxu0 %v265
    %784 = vmatpush.msra.mxu0 %v264
    %785 = vmatpush.msra.mxu0 %v263
    %786 = vmatmul.f32.gmra.mxu0 %v506
    %v787 = vpop.f32.mrf.mxu0
    %v788 = vadd.f32 %v768, %v787
    %789 = vdwg.mxu0
    %790 = vmatpush.msra.mxu0 %v294
    %791 = vmatpush.msra.mxu0 %v293
    %792 = vmatpush.msra.mxu0 %v292
    %793 = vmatpush.msra.mxu0 %v291
    %794 = vmatpush.msra.mxu0 %v290
    %795 = vmatpush.msra.mxu0 %v289
    %796 = vmatpush.msra.mxu0 %v288
    %797 = vmatpush.msra.mxu0 %v287
    %798 = vmatpush.msra.mxu0 %v286
    %799 = vmatpush.msra.mxu0 %v285
    %800 = vmatpush.msra.mxu0 %v284
    %801 = vmatpush.msra.mxu0 %v283
    %802 = vmatpush.msra.mxu0 %v282
    %803 = vmatpush.msra.mxu0 %v281
    %804 = vmatpush.msra.mxu0 %v280
    %805 = vmatpush.msra.mxu0 %v279
    %806 = vmatmul.f32.gmra.mxu0 %v507
    %v807 = vpop.f32.mrf.mxu0
    %v808 = vadd.f32 %v788, %v807
    %809 = vdwg.mxu0
    %810 = vmatpush.msra.mxu0 %v310
    %811 = vmatpush.msra.mxu0 %v309
    %812 = vmatpush.msra.mxu0 %v308
    %813 = vmatpush.msra.mxu0 %v307
    %814 = vmatpush.msra.mxu0 %v306
    %815 = vmatpush.msra.mxu0 %v305
    %816 = vmatpush.msra.mxu0 %v304
    %817 = vmatpush.msra.mxu0 %v303
    %818 = vmatpush.msra.mxu0 %v302
    %819 = vmatpush.msra.mxu0 %v301
    %820 = vmatpush.msra.mxu0 %v300
    %821 = vmatpush.msra.mxu0 %v299
    %822 = vmatpush.msra.mxu0 %v298
    %823 = vmatpush.msra.mxu0 %v297
    %824 = vmatpush.msra.mxu0 %v296
    %825 = vmatpush.msra.mxu0 %v295
    %826 = vmatmul.f32.gmra.mxu0 %v508
    %v827 = vpop.f32.mrf.mxu0
    %v828 = vadd.f32 %v808, %v827
    %829 = vdwg.mxu0
    %830 = vmatpush.msra.mxu0 %v326
    %831 = vmatpush.msra.mxu0 %v325
    %832 = vmatpush.msra.mxu0 %v324
    %833 = vmatpush.msra.mxu0 %v323
    %834 = vmatpush.msra.mxu0 %v322
    %835 = vmatpush.msra.mxu0 %v321
    %836 = vmatpush.msra.mxu0 %v320
    %837 = vmatpush.msra.mxu0 %v319
    %838 = vmatpush.msra.mxu0 %v318
    %839 = vmatpush.msra.mxu0 %v317
    %840 = vmatpush.msra.mxu0 %v316
    %841 = vmatpush.msra.mxu0 %v315
    %842 = vmatpush.msra.mxu0 %v314
    %843 = vmatpush.msra.mxu0 %v313
    %844 = vmatpush.msra.mxu0 %v312
    %845 = vmatpush.msra.mxu0 %v311
    %846 = vmatmul.f32.gmra.mxu0 %v509
    %v847 = vpop.f32.mrf.mxu0
    %v848 = vadd.f32 %v828, %v847
    %849 = vdwg.mxu0
    %850 = vmatpush.msra.mxu0 %v342
    %851 = vmatpush.msra.mxu0 %v341
    %852 = vmatpush.msra.mxu0 %v340
    %853 = vmatpush.msra.mxu0 %v339
    %854 = vmatpush.msra.mxu0 %v338
    %855 = vmatpush.msra.mxu0 %v337
    %856 = vmatpush.msra.mxu0 %v336
    %857 = vmatpush.msra.mxu0 %v335
    %858 = vmatpush.msra.mxu0 %v334
    %859 = vmatpush.msra.mxu0 %v333
    %860 = vmatpush.msra.mxu0 %v332
    %861 = vmatpush.msra.mxu0 %v331
    %862 = vmatpush.msra.mxu0 %v330
    %863 = vmatpush.msra.mxu0 %v329
    %864 = vmatpush.msra.mxu0 %v328
    %865 = vmatpush.msra.mxu0 %v327
    %866 = vmatmul.f32.gmra.mxu0 %v510
    %v867 = vpop.f32.mrf.mxu0
    %v868 = vadd.f32 %v848, %v867
    %869 = vdwg.mxu0
    %870 = vmatpush.msra.mxu0 %v358
    %871 = vmatpush.msra.mxu0 %v357
    %872 = vmatpush.msra.mxu0 %v356
    %873 = vmatpush.msra.mxu0 %v355
    %874 = vmatpush.msra.mxu0 %v354
    %875 = vmatpush.msra.mxu0 %v353
    %876 = vmatpush.msra.mxu0 %v352
    %877 = vmatpush.msra.mxu0 %v351
    %878 = vmatpush.msra.mxu0 %v350
    %879 = vmatpush.msra.mxu0 %v349
    %880 = vmatpush.msra.mxu0 %v348
    %881 = vmatpush.msra.mxu0 %v347
    %882 = vmatpush.msra.mxu0 %v346
    %883 = vmatpush.msra.mxu0 %v345
    %884 = vmatpush.msra.mxu0 %v344
    %885 = vmatpush.msra.mxu0 %v343
    %886 = vmatmul.f32.gmra.mxu0 %v513
    %v887 = vpop.f32.mrf.mxu0
    %v888 = vadd.f32 %v868, %v887
    %889 = vdwg.mxu0
    %890 = vmatpush.msra.mxu0 %v374
    %891 = vmatpush.msra.mxu0 %v373
    %892 = vmatpush.msra.mxu0 %v372
    %893 = vmatpush.msra.mxu0 %v371
    %894 = vmatpush.msra.mxu0 %v370
    %895 = vmatpush.msra.mxu0 %v369
    %896 = vmatpush.msra.mxu0 %v368
    %897 = vmatpush.msra.mxu0 %v367
    %898 = vmatpush.msra.mxu0 %v366
    %899 = vmatpush.msra.mxu0 %v365
    %900 = vmatpush.msra.mxu0 %v364
    %901 = vmatpush.msra.mxu0 %v363
    %902 = vmatpush.msra.mxu0 %v362
    %903 = vmatpush.msra.mxu0 %v361
    %904 = vmatpush.msra.mxu0 %v360
    %905 = vmatpush.msra.mxu0 %v359
    %906 = vmatmul.f32.gmra.mxu0 %v514
    %v907 = vpop.f32.mrf.mxu0
    %v908 = vadd.f32 %v888, %v907
    %909 = vdwg.mxu0
    %910 = vmatpush.msra.mxu0 %v390
    %911 = vmatpush.msra.mxu0 %v389
    %912 = vmatpush.msra.mxu0 %v388
    %913 = vmatpush.msra.mxu0 %v387
    %914 = vmatpush.msra.mxu0 %v386
    %915 = vmatpush.msra.mxu0 %v385
    %916 = vmatpush.msra.mxu0 %v384
    %917 = vmatpush.msra.mxu0 %v383
    %918 = vmatpush.msra.mxu0 %v382
    %919 = vmatpush.msra.mxu0 %v381
    %920 = vmatpush.msra.mxu0 %v380
    %921 = vmatpush.msra.mxu0 %v379
    %922 = vmatpush.msra.mxu0 %v378
    %923 = vmatpush.msra.mxu0 %v377
    %924 = vmatpush.msra.mxu0 %v376
    %925 = vmatpush.msra.mxu0 %v375
    %926 = vmatmul.f32.gmra.mxu0 %v515
    %v927 = vpop.f32.mrf.mxu0
    %v928 = vadd.f32 %v908, %v927
    %929 = vdwg.mxu0
    %930 = vmatpush.msra.mxu0 %v406
    %931 = vmatpush.msra.mxu0 %v405
    %932 = vmatpush.msra.mxu0 %v404
    %933 = vmatpush.msra.mxu0 %v403
    %934 = vmatpush.msra.mxu0 %v402
    %935 = vmatpush.msra.mxu0 %v401
    %936 = vmatpush.msra.mxu0 %v400
    %937 = vmatpush.msra.mxu0 %v399
    %938 = vmatpush.msra.mxu0 %v398
    %939 = vmatpush.msra.mxu0 %v397
    %940 = vmatpush.msra.mxu0 %v396
    %941 = vmatpush.msra.mxu0 %v395
    %942 = vmatpush.msra.mxu0 %v394
    %943 = vmatpush.msra.mxu0 %v393
    %944 = vmatpush.msra.mxu0 %v392
    %945 = vmatpush.msra.mxu0 %v391
    %946 = vmatmul.f32.gmra.mxu0 %v516
    %v947 = vpop.f32.mrf.mxu0
    %v948 = vadd.f32 %v928, %v947
    %949 = vdwg.mxu0
    %950 = vmatpush.msra.mxu0 %v422
    %951 = vmatpush.msra.mxu0 %v421
    %952 = vmatpush.msra.mxu0 %v420
    %953 = vmatpush.msra.mxu0 %v419
    %954 = vmatpush.msra.mxu0 %v418
    %955 = vmatpush.msra.mxu0 %v417
    %956 = vmatpush.msra.mxu0 %v416
    %957 = vmatpush.msra.mxu0 %v415
    %958 = vmatpush.msra.mxu0 %v414
    %959 = vmatpush.msra.mxu0 %v413
    %960 = vmatpush.msra.mxu0 %v412
    %961 = vmatpush.msra.mxu0 %v411
    %962 = vmatpush.msra.mxu0 %v410
    %963 = vmatpush.msra.mxu0 %v409
    %964 = vmatpush.msra.mxu0 %v408
    %965 = vmatpush.msra.mxu0 %v407
    %966 = vmatmul.f32.gmra.mxu0 %v517
    %v967 = vpop.f32.mrf.mxu0
    %v968 = vadd.f32 %v948, %v967
    %969 = vdwg.mxu0
    %970 = vmatpush.msra.mxu0 %v438
    %971 = vmatpush.msra.mxu0 %v437
    %972 = vmatpush.msra.mxu0 %v436
    %973 = vmatpush.msra.mxu0 %v435
    %974 = vmatpush.msra.mxu0 %v434
    %975 = vmatpush.msra.mxu0 %v433
    %976 = vmatpush.msra.mxu0 %v432
    %977 = vmatpush.msra.mxu0 %v431
    %978 = vmatpush.msra.mxu0 %v430
    %979 = vmatpush.msra.mxu0 %v429
    %980 = vmatpush.msra.mxu0 %v428
    %981 = vmatpush.msra.mxu0 %v427
    %982 = vmatpush.msra.mxu0 %v426
    %983 = vmatpush.msra.mxu0 %v425
    %984 = vmatpush.msra.mxu0 %v424
    %985 = vmatpush.msra.mxu0 %v423
    %986 = vmatmul.f32.gmra.mxu0 %v518
    %v987 = vpop.f32.mrf.mxu0
    %v988 = vadd.f32 %v968, %v987
    %989 = vdwg.mxu0
    %990 = vmatpush.msra.mxu0 %v454
    %991 = vmatpush.msra.mxu0 %v453
    %992 = vmatpush.msra.mxu0 %v452
    %993 = vmatpush.msra.mxu0 %v451
    %994 = vmatpush.msra.mxu0 %v450
    %995 = vmatpush.msra.mxu0 %v449
    %996 = vmatpush.msra.mxu0 %v448
    %997 = vmatpush.msra.mxu0 %v447
    %998 = vmatpush.msra.mxu0 %v446
    %999 = vmatpush.msra.mxu0 %v445
    %1000 = vmatpush.msra.mxu0 %v444
    %1001 = vmatpush.msra.mxu0 %v443
    %1002 = vmatpush.msra.mxu0 %v442
    %1003 = vmatpush.msra.mxu0 %v441
    %1004 = vmatpush.msra.mxu0 %v440
    %1005 = vmatpush.msra.mxu0 %v439
    %1006 = vmatmul.f32.gmra.mxu0 %v519
    %v1007 = vpop.f32.mrf.mxu0
    %v1008 = vadd.f32 %v988, %v1007
    %1009 = vdwg.mxu0
    %1010 = vmatpush.msra.mxu0 %v470
    %1011 = vmatpush.msra.mxu0 %v469
    %1012 = vmatpush.msra.mxu0 %v468
    %1013 = vmatpush.msra.mxu0 %v467
    %1014 = vmatpush.msra.mxu0 %v466
    %1015 = vmatpush.msra.mxu0 %v465
    %1016 = vmatpush.msra.mxu0 %v464
    %1017 = vmatpush.msra.mxu0 %v463
    %1018 = vmatpush.msra.mxu0 %v462
    %1019 = vmatpush.msra.mxu0 %v461
    %1020 = vmatpush.msra.mxu0 %v460
    %1021 = vmatpush.msra.mxu0 %v459
    %1022 = vmatpush.msra.mxu0 %v458
    %1023 = vmatpush.msra.mxu0 %v457
    %1024 = vmatpush.msra.mxu0 %v456
    %1025 = vmatpush.msra.mxu0 %v455
    %1026 = vmatmul.f32.gmra.mxu0 %v520
    %v1027 = vpop.f32.mrf.mxu0
    %v1028 = vadd.f32 %v1008, %v1027
    %1029 = vdwg.mxu0
    %1030 = vmatpush.msra.mxu0 0.0
    %1031 = vmatpush.msra.mxu0 0.0
    %1032 = vmatpush.msra.mxu0 0.0
    %1033 = vmatpush.msra.mxu0 0.0
    %1034 = vmatpush.msra.mxu0 0.0
    %1035 = vmatpush.msra.mxu0 0.0
    %1036 = vmatpush.msra.mxu0 0.0
    %1037 = vmatpush.msra.mxu0 0.0
    %1038 = vmatpush.msra.mxu0 %v478
    %1039 = vmatpush.msra.mxu0 %v477
    %1040 = vmatpush.msra.mxu0 %v476
    %1041 = vmatpush.msra.mxu0 %v475
    %1042 = vmatpush.msra.mxu0 %v474
    %1043 = vmatpush.msra.mxu0 %v473
    %1044 = vmatpush.msra.mxu0 %v472
    %1045 = vmatpush.msra.mxu0 %v471
    %1046 = vmatmul.f32.gmra.mxu0 %v548
    %v1047 = vpop.f32.mrf.mxu0
    %v1048 = vadd.f32 %v1028, %v1047
    %1049 = vdwg.mxu0
    %v1050 = vmax.f32 %v1048, 0.0
    %v1051 = vld [vmem:[#allocation7] sm:$0xff]
    %v1052 = vld [vmem:[#allocation7 + $0x8] sm:$0xff]
    %v1053 = vld [vmem:[#allocation7 + $0x10] sm:$0xff]
    %v1054 = vld [vmem:[#allocation7 + $0x18] sm:$0xff]
    %v1055 = vld [vmem:[#allocation7 + $0x20] sm:$0xff]
    %v1056 = vld [vmem:[#allocation7 + $0x28] sm:$0xff]
    %v1057 = vld [vmem:[#allocation7 + $0x30] sm:$0xff]
    %v1058 = vld [vmem:[#allocation7 + $0x38] sm:$0xff]
    %v1059 = vld [vmem:[#allocation7 + $0x40] sm:$0xff]
    %v1060 = vld [vmem:[#allocation7 + $0x48] sm:$0xff]
    %v1061 = vld [vmem:[#allocation7 + $0x50] sm:$0xff]
    %v1062 = vld [vmem:[#allocation7 + $0x58] sm:$0xff]
    %v1063 = vld [vmem:[#allocation7 + $0x60] sm:$0xff]
    %v1064 = vld [vmem:[#allocation7 + $0x68] sm:$0xff]
    %v1065 = vld [vmem:[#allocation7 + $0x70] sm:$0xff]
    %v1066 = vld [vmem:[#allocation7 + $0x78] sm:$0xff]
    %v1067 = vld [vmem:[#allocation8] sm:$0x1]
    %v1069 = vperm.slane %v1067, 0
    %1071 = vmatpush.msra.mxu0 %v1066
    %1072 = vmatpush.msra.mxu0 %v1065
    %1073 = vmatpush.msra.mxu0 %v1064
    %1074 = vmatpush.msra.mxu0 %v1063
    %1075 = vmatpush.msra.mxu0 %v1062
    %1076 = vmatpush.msra.mxu0 %v1061
    %1077 = vmatpush.msra.mxu0 %v1060
    %1078 = vmatpush.msra.mxu0 %v1059
    %1079 = vmatpush.msra.mxu0 %v1058
    %1080 = vmatpush.msra.mxu0 %v1057
    %1081 = vmatpush.msra.mxu0 %v1056
    %1082 = vmatpush.msra.mxu0 %v1055
    %1083 = vmatpush.msra.mxu0 %v1054
    %1084 = vmatpush.msra.mxu0 %v1053
    %1085 = vmatpush.msra.mxu0 %v1052
    %1086 = vmatpush.msra.mxu0 %v1051
    %1087 = vmatmul.f32.gmra.mxu0 %v1050
    %v1088 = vpop.f32.mrf.mxu0
    %v1089 = vadd.f32 %v1069, %v1088
    %1090 = vdwg.mxu0
    %1091 = vst [vmem:[#allocation10] sm:$0x3] %v1089
    // Predicated region
    $region38: #{subclassnet_forward.3} parent=1 // pred_check
      _
    $region39: #{subclassnet_forward.3} parent=1 // pred_check_branch
      %1093 = sbr.rel (0) target = $region41
    $region40: #{subclassnet_forward.3} parent=1 // pred_region
      %1095 = vsyncadd [#allocation4], 0
      %s1097 = sshll.u32 [#allocation10], 4
      %s1098 = int_to_ptr.vmem [resolvable:$true] %s1097
      %s1099 = sshll.u32 %s5, 4
      %s1100 = int_to_ptr.hbm [resolvable:$true] %s1099
      %1102 = dma.vmem_to_hbm [thread:$0]  %s1098, 32, %s1100, [#allocation4]
    $region41: #{subclassnet_forward.3} parent=1 // pred_fallthru
      _
    // Predicated region
    $region42: #{subclassnet_forward.3} parent=1 // pred_check
      _
    $region43: #{subclassnet_forward.3} parent=1 // pred_check_branch
      %1104 = sbr.rel (0) target = $region45
    $region44: #{subclassnet_forward.3} parent=1 // pred_region
      %1106 = dma.done [#allocation4], 32
    $region45: #{subclassnet_forward.3} parent=1 // pred_fallthru
      _
    %1107 = vsyncpa [#allocation3], 1
    %1108 = vsyncpa [#allocation6], 1
    %1109 = vsyncpa [#allocation9], 1
    %1110 = vsyncpa [#allocation4], 1

// kernel: subclassnet_forward.2
$region0: #{subclassnet_forward.2}
  #allocation0 [shape = 'u32[]', space=smem, size = 0x4, offset = 0x4, fixed_abs, tag = 'smem constant byte address 0x4 - core index']
  #allocation1 [shape = 'u32[72,128]{1,0:T(1,128)}', space=vmem, size = 0x9000, scoped, tag = 'internal scratch']
  #allocation2 [shape = 'f32[896,32]{1,0:T(8,128)}', space=vmem, size = 0x70000, scoped, tag = 'scratch operand']
  #allocation3 [shape = 'f32[304,32]{1,0:T(8,128)}', space=vmem, size = 0x26000, scoped, tag = 'scratch operand']
  #allocation4 [shape = 'f32[256,64]{1,0:T(8,128)}', space=vmem, size = 0x20000, scoped, tag = 'scratch operand']
  %s0 = inlined_call_operand.vmem [shape: f32[2,1,1024], index: 0, kind: input, shape index: {}]
  %s1 = inlined_call_operand.vmem [shape: f32[32,9], index: 1, kind: input, shape index: {}]
  %s2 = inlined_call_operand.vmem [shape: f32[32,1], index: 2, kind: input, shape index: {}]
  %s3 = inlined_call_operand.hbm [shape: f32[9,32,64], index: 3, kind: input, shape index: {}]
  %s4 = inlined_call_operand.hbm [shape: f32[1,64], index: 4, kind: input, shape index: {}]
  %s5 = inlined_call_operand.hbm [shape: f32[14,28], index: 5, kind: input, shape index: {}]
  %s6 = inlined_call_operand.hbm [shape: f32[7,14], index: 6, kind: input, shape index: {}]
  %s7 = inlined_call_operand.vmem [shape: f32[2,49,64], index: 7, kind: output, shape index: {}]
  %s8 = sld [smem:[#allocation0]]
  $region77: #{subclassnet_forward.2} parent=0
    _
  %s10 = ssub.s32 1, %s8
  %s11 = scalar_select 0, %s10, %s8
  $region1: #{subclassnet_forward.2} parent=0
    #allocation5 [shape = 'u8[147456]{0}', space=vmem, size = 0x24000, scoped, tag = 'input window, operand 3, single buffered']
    #allocation6 [shape = 's32[2]{0}', space=sflag, size = 0x8, scoped, tag = 'scoped memory for subclassnet_forward.2']
    #allocation7 [shape = 'u8[512]{0}', space=vmem, size = 0x400, scoped, tag = 'input window, operand 4, single buffered']
    #allocation8 [shape = 's32[1]{0}', space=sflag, size = 0x4, scoped, tag = 'scoped memory for subclassnet_forward.2']
    #allocation9 [shape = 'u8[8192]{0}', space=vmem, size = 0x2000, scoped, tag = 'input window, operand 5, single buffered']
    #allocation10 [shape = 'u8[4096]{0}', space=vmem, size = 0x1000, scoped, tag = 'input window, operand 6, single buffered']
    #allocation11 [shape = 's32[1]{0}', space=sflag, size = 0x4, scoped, tag = 'scoped memory for subclassnet_forward.2']
    %12 = vsyncpa [#allocation6], 0
    %13 = vsyncpa [#allocation8], 0
    %14 = vsyncpa [#allocation11], 0
    loop: start=0, step=1, limit=4
    $region2: #{subclassnet_forward.2} parent=1 // loop_pre_header
      _
    $region3: #{subclassnet_forward.2} parent=1 // loop_header
      %s16 = sphi 0, %s20
      %p17 = scmp.ge.s32.totalorder %s16, 4
      %s26 = sphi 0, %s28
      %s29 = sphi 0, %s26
      %s30 = sphi 0, %s29
      %s46 = sphi 0, %s30
      %s50 = sphi 0, %s50
      %s52 = sphi 0, %s50
      %s53 = sphi 0, %s52
      %s67 = sphi 0, %s53
      %s71 = sphi 0, %s71
      %s73 = sphi 0, %s71
      %s74 = sphi 0, %s73
      %s88 = sphi 0, %s74
      %s92 = sphi 0, %s92
      %s94 = sphi 0, %s92
      %s95 = sphi 0, %s94
      %s109 = sphi 0, %s95
      %s113 = sphi 0, %s113
      %s115 = sphi 0, %s113
      %s116 = sphi 0, %s115
      %s130 = sphi 0, %s116
      %s134 = sphi 0, %s134
      %s136 = sphi 0, %s134
      %s137 = sphi 0, %s136
      %s151 = sphi 0, %s137
      %s155 = sphi 0, %s155
      %s157 = sphi 0, %s155
      %s158 = sphi 0, %s157
      %s172 = sphi 0, %s158
      %s178 = sphi 0, %s180
      %s181 = sphi 0, %s178
      %s182 = sphi 0, %s181
      %s198 = sphi 0, %s182
    $region4: #{subclassnet_forward.2} parent=1 // loop_header_branch
      %19 = sbr.rel (%p17) target = $region8
    $region5: #{subclassnet_forward.2} parent=1 // loop_body
      %s21 = ssub.s32 %s16, 1
      %s22 = ssub.s32 %s16, 2
      %s23 = sadd.s32 %s16, 1
      %s24 = ssub.s32 %s16, %s23
      %p25 = scmp.eq.s32.totalorder %s24, 0
      %s27 = sadd.s32 %s26, 1
      %s28 = scalar_select %p25, %s26, %s27
      %p31 = pneg %p25
      %p32 = scmp.eq.s32.totalorder %s16, 1
      %p33 = por %p31, %p32
      %p34 = scmp.ne.s32.totalorder %s26, %s29
      %p35 = scmp.eq.s32.totalorder %s16, 0
      %p36 = por %p34, %p35
      %p37 = scmp.ne.s32.totalorder %s26, %s29
      %p38 = scmp.eq.s32.totalorder %s21, 1
      %p39 = por %p37, %p38
      %p40 = scmp.ne.s32.totalorder %s29, %s30
      %p41 = scmp.eq.s32.totalorder %s21, 0
      %p42 = por %p40, %p41
      %p43 = scmp.ne.s32.totalorder %s29, %s30
      %p44 = scmp.eq.s32.totalorder %s22, 1
      %p45 = por %p43, %p44
      %p47 = scmp.ne.s32.totalorder %s30, %s46
      %p48 = scmp.eq.s32.totalorder %s22, 0
      %p49 = por %p47, %p48
      %s51 = sadd.s32 %s50, 1
      %p54 = scmp.eq.s32.totalorder %s16, 1
      %p55 = scmp.ne.s32.totalorder %s50, %s52
      %p56 = scmp.eq.s32.totalorder %s16, 0
      %p57 = por %p55, %p56
      %p58 = scmp.ne.s32.totalorder %s50, %s52
      %p59 = scmp.eq.s32.totalorder %s21, 1
      %p60 = por %p58, %p59
      %p61 = scmp.ne.s32.totalorder %s52, %s53
      %p62 = scmp.eq.s32.totalorder %s21, 0
      %p63 = por %p61, %p62
      %p64 = scmp.ne.s32.totalorder %s52, %s53
      %p65 = scmp.eq.s32.totalorder %s22, 1
      %p66 = por %p64, %p65
      %p68 = scmp.ne.s32.totalorder %s53, %s67
      %p69 = scmp.eq.s32.totalorder %s22, 0
      %p70 = por %p68, %p69
      %s72 = sadd.s32 %s71, 1
      %p75 = scmp.eq.s32.totalorder %s16, 1
      %p76 = scmp.ne.s32.totalorder %s71, %s73
      %p77 = scmp.eq.s32.totalorder %s16, 0
      %p78 = por %p76, %p77
      %p79 = scmp.ne.s32.totalorder %s71, %s73
      %p80 = scmp.eq.s32.totalorder %s21, 1
      %p81 = por %p79, %p80
      %p82 = scmp.ne.s32.totalorder %s73, %s74
      %p83 = scmp.eq.s32.totalorder %s21, 0
      %p84 = por %p82, %p83
      %p85 = scmp.ne.s32.totalorder %s73, %s74
      %p86 = scmp.eq.s32.totalorder %s22, 1
      %p87 = por %p85, %p86
      %p89 = scmp.ne.s32.totalorder %s74, %s88
      %p90 = scmp.eq.s32.totalorder %s22, 0
      %p91 = por %p89, %p90
      %s93 = sadd.s32 %s92, 1
      %p96 = scmp.eq.s32.totalorder %s16, 1
      %p97 = scmp.ne.s32.totalorder %s92, %s94
      %p98 = scmp.eq.s32.totalorder %s16, 0
      %p99 = por %p97, %p98
      %p100 = scmp.ne.s32.totalorder %s92, %s94
      %p101 = scmp.eq.s32.totalorder %s21, 1
      %p102 = por %p100, %p101
      %p103 = scmp.ne.s32.totalorder %s94, %s95
      %p104 = scmp.eq.s32.totalorder %s21, 0
      %p105 = por %p103, %p104
      %p106 = scmp.ne.s32.totalorder %s94, %s95
      %p107 = scmp.eq.s32.totalorder %s22, 1
      %p108 = por %p106, %p107
      %p110 = scmp.ne.s32.totalorder %s95, %s109
      %p111 = scmp.eq.s32.totalorder %s22, 0
      %p112 = por %p110, %p111
      %s114 = sadd.s32 %s113, 1
      %p117 = scmp.eq.s32.totalorder %s16, 1
      %p118 = scmp.ne.s32.totalorder %s113, %s115
      %p119 = scmp.eq.s32.totalorder %s16, 0
      %p120 = por %p118, %p119
      %p121 = scmp.ne.s32.totalorder %s113, %s115
      %p122 = scmp.eq.s32.totalorder %s21, 1
      %p123 = por %p121, %p122
      %p124 = scmp.ne.s32.totalorder %s115, %s116
      %p125 = scmp.eq.s32.totalorder %s21, 0
      %p126 = por %p124, %p125
      %p127 = scmp.ne.s32.totalorder %s115, %s116
      %p128 = scmp.eq.s32.totalorder %s22, 1
      %p129 = por %p127, %p128
      %p131 = scmp.ne.s32.totalorder %s116, %s130
      %p132 = scmp.eq.s32.totalorder %s22, 0
      %p133 = por %p131, %p132
      %s135 = sadd.s32 %s134, 1
      %p138 = scmp.eq.s32.totalorder %s16, 1
      %p139 = scmp.ne.s32.totalorder %s134, %s136
      %p140 = scmp.eq.s32.totalorder %s16, 0
      %p141 = por %p139, %p140
      %p142 = scmp.ne.s32.totalorder %s134, %s136
      %p143 = scmp.eq.s32.totalorder %s21, 1
      %p144 = por %p142, %p143
      %p145 = scmp.ne.s32.totalorder %s136, %s137
      %p146 = scmp.eq.s32.totalorder %s21, 0
      %p147 = por %p145, %p146
      %p148 = scmp.ne.s32.totalorder %s136, %s137
      %p149 = scmp.eq.s32.totalorder %s22, 1
      %p150 = por %p148, %p149
      %p152 = scmp.ne.s32.totalorder %s137, %s151
      %p153 = scmp.eq.s32.totalorder %s22, 0
      %p154 = por %p152, %p153
      %s156 = sadd.s32 %s155, 1
      %p159 = scmp.eq.s32.totalorder %s16, 1
      %p160 = scmp.ne.s32.totalorder %s155, %s157
      %p161 = scmp.eq.s32.totalorder %s16, 0
      %p162 = por %p160, %p161
      %p163 = scmp.ne.s32.totalorder %s155, %s157
      %p164 = scmp.eq.s32.totalorder %s21, 1
      %p165 = por %p163, %p164
      %p166 = scmp.ne.s32.totalorder %s157, %s158
      %p167 = scmp.eq.s32.totalorder %s21, 0
      %p168 = por %p166, %p167
      %p169 = scmp.ne.s32.totalorder %s157, %s158
      %p170 = scmp.eq.s32.totalorder %s22, 1
      %p171 = por %p169, %p170
      %p173 = scmp.ne.s32.totalorder %s158, %s172
      %p174 = scmp.eq.s32.totalorder %s22, 0
      %p175 = por %p173, %p174
      %s176 = ssub.s32 %s16, %s23
      %p177 = scmp.eq.s32.totalorder %s176, 0
      %s179 = sadd.s32 %s178, 1
      %s180 = scalar_select %p177, %s178, %s179
      %p183 = pneg %p177
      %p184 = scmp.eq.s32.totalorder %s16, 1
      %p185 = por %p183, %p184
      %p186 = scmp.ne.s32.totalorder %s178, %s181
      %p187 = scmp.eq.s32.totalorder %s16, 0
      %p188 = por %p186, %p187
      %p189 = scmp.ne.s32.totalorder %s178, %s181
      %p190 = scmp.eq.s32.totalorder %s21, 1
      %p191 = por %p189, %p190
      %p192 = scmp.ne.s32.totalorder %s181, %s182
      %p193 = scmp.eq.s32.totalorder %s21, 0
      %p194 = por %p192, %p193
      %p195 = scmp.ne.s32.totalorder %s181, %s182
      %p196 = scmp.eq.s32.totalorder %s22, 1
      %p197 = por %p195, %p196
      %p199 = scmp.ne.s32.totalorder %s182, %s198
      %p200 = scmp.eq.s32.totalorder %s22, 0
      %p201 = por %p199, %p200
      %p202 = scmp.le.s32.totalorder 1, %s16
      %p203 = scmp.lt.s32.totalorder %s16, 3
      %p204 = pnand %p202, %p203
      %p205 = pneg %p204
      // Predicated region
      $region9: #{subclassnet_forward.2} parent=5 // pred_check
        _
      $region10: #{subclassnet_forward.2} parent=5 // pred_check_branch
        %207 = sbr.rel (%p204) target = $region12
      $region11: #{subclassnet_forward.2} parent=5 // pred_region
        %s208 = ssub.s32 %s16, 1
        // Predicated region
        $region13: #{subclassnet_forward.2} parent=11 // pred_check
          %p209 = pneg %p63
        $region14: #{subclassnet_forward.2} parent=11 // pred_check_branch
          %211 = sbr.rel (%p209) target = $region16
        $region15: #{subclassnet_forward.2} parent=11 // pred_region
          _
        $region16: #{subclassnet_forward.2} parent=11 // pred_fallthru
          _
        // Predicated region
        $region17: #{subclassnet_forward.2} parent=11 // pred_check
          %p212 = pneg %p84
        $region18: #{subclassnet_forward.2} parent=11 // pred_check_branch
          %214 = sbr.rel (%p212) target = $region20
        $region19: #{subclassnet_forward.2} parent=11 // pred_region
          _
        $region20: #{subclassnet_forward.2} parent=11 // pred_fallthru
          _
        // Predicated region
        $region21: #{subclassnet_forward.2} parent=11 // pred_check
          %p215 = pneg %p105
        $region22: #{subclassnet_forward.2} parent=11 // pred_check_branch
          %217 = sbr.rel (%p215) target = $region24
        $region23: #{subclassnet_forward.2} parent=11 // pred_region
          %219 = vsyncadd [#allocation6], 0
          %s220 = sshll.u32 %s3, 4
          %s221 = int_to_ptr.hbm [resolvable:$true] %s220
          %s222 = sshll.u32 [#allocation5], 4
          %s223 = int_to_ptr.vmem [resolvable:$true] %s222
          %228 = dma.hbm_to_vmem [thread:$0]  %s221, 4608, %s223, [#allocation6], 128, 128, 8
        $region24: #{subclassnet_forward.2} parent=11 // pred_fallthru
          _
        // Predicated region
        $region25: #{subclassnet_forward.2} parent=11 // pred_check
          %p229 = pneg %p126
        $region26: #{subclassnet_forward.2} parent=11 // pred_check_branch
          %231 = sbr.rel (%p229) target = $region28
        $region27: #{subclassnet_forward.2} parent=11 // pred_region
          %233 = vsyncadd [#allocation8], 0
          %s235 = sshll.u32 %s4, 4
          %s236 = int_to_ptr.hbm [resolvable:$true] %s235
          %s237 = sshll.u32 [#allocation7], 4
          %s238 = int_to_ptr.vmem [resolvable:$true] %s237
          %240 = dma.hbm_to_vmem [thread:$0]  %s236, 16, %s238, [#allocation8]
        $region28: #{subclassnet_forward.2} parent=11 // pred_fallthru
          _
        // Predicated region
        $region29: #{subclassnet_forward.2} parent=11 // pred_check
          %p241 = pneg %p147
        $region30: #{subclassnet_forward.2} parent=11 // pred_check_branch
          %243 = sbr.rel (%p241) target = $region32
        $region31: #{subclassnet_forward.2} parent=11 // pred_region
          %245 = vsyncadd [#allocation8], 0
          %s246 = sshll.u32 %s5, 4
          %s247 = int_to_ptr.hbm [resolvable:$true] %s246
          %s248 = sshll.u32 [#allocation9], 4
          %s249 = int_to_ptr.vmem [resolvable:$true] %s248
          %254 = dma.hbm_to_vmem [thread:$0]  %s247, 256, %s249, [#allocation8], 128, 128, 8
        $region32: #{subclassnet_forward.2} parent=11 // pred_fallthru
          _
        // Predicated region
        $region33: #{subclassnet_forward.2} parent=11 // pred_check
          %p255 = pneg %p168
        $region34: #{subclassnet_forward.2} parent=11 // pred_check_branch
          %257 = sbr.rel (%p255) target = $region36
        $region35: #{subclassnet_forward.2} parent=11 // pred_region
          %259 = vsyncadd [#allocation11], 0
          %s261 = sshll.u32 %s6, 4
          %s262 = int_to_ptr.hbm [resolvable:$true] %s261
          %s263 = sshll.u32 [#allocation10], 4
          %s264 = int_to_ptr.vmem [resolvable:$true] %s263
          %266 = dma.hbm_to_vmem [thread:$0]  %s262, 128, %s264, [#allocation11]
        $region36: #{subclassnet_forward.2} parent=11 // pred_fallthru
          _
      $region12: #{subclassnet_forward.2} parent=5 // pred_fallthru
        _
      %p267 = scmp.lt.s32.totalorder %s16, 2
      // Predicated region
      $region37: #{subclassnet_forward.2} parent=5 // pred_check
        %p268 = pneg %p267
      $region38: #{subclassnet_forward.2} parent=5 // pred_check_branch
        %270 = sbr.rel (%p268) target = $region40
      $region39: #{subclassnet_forward.2} parent=5 // pred_region
        // Predicated region
        $region41: #{subclassnet_forward.2} parent=39 // pred_check
          %p271 = pneg %p36
        $region42: #{subclassnet_forward.2} parent=39 // pred_check_branch
          %273 = sbr.rel (%p271) target = $region44
        $region43: #{subclassnet_forward.2} parent=39 // pred_region
          %p274 = scmp.lt.s32.totalorder %s16, 1
          %s275 = scalar_select %p274, %s16, 1
          %s276 = smul.addr %s275, 8
          %s277 = scalar_lea.vmem %s0, %s276
        $region44: #{subclassnet_forward.2} parent=39 // pred_fallthru
          _
      $region40: #{subclassnet_forward.2} parent=5 // pred_fallthru
        _
      %p278 = scmp.le.s32.totalorder 1, %s16
      %p279 = scmp.lt.s32.totalorder %s16, 3
      %p280 = pnand %p278, %p279
      %p281 = pneg %p280
      // Predicated region
      $region45: #{subclassnet_forward.2} parent=5 // pred_check
        _
      $region46: #{subclassnet_forward.2} parent=5 // pred_check_branch
        %283 = sbr.rel (%p280) target = $region48
      $region47: #{subclassnet_forward.2} parent=5 // pred_region
        %s284 = ssub.s32 %s16, 1
        // Predicated region
        $region49: #{subclassnet_forward.2} parent=47 // pred_check
          %p285 = pneg %p105
        $region50: #{subclassnet_forward.2} parent=47 // pred_check_branch
          %287 = sbr.rel (%p285) target = $region52
        $region51: #{subclassnet_forward.2} parent=47 // pred_region
          %289 = dma.done [#allocation6], 4608
        $region52: #{subclassnet_forward.2} parent=47 // pred_fallthru
          _
        // Predicated region
        $region53: #{subclassnet_forward.2} parent=47 // pred_check
          %p290 = pneg %p126
        $region54: #{subclassnet_forward.2} parent=47 // pred_check_branch
          %292 = sbr.rel (%p290) target = $region56
        $region55: #{subclassnet_forward.2} parent=47 // pred_region
          %294 = dma.done [#allocation8], 16
        $region56: #{subclassnet_forward.2} parent=47 // pred_fallthru
          _
        // Predicated region
        $region57: #{subclassnet_forward.2} parent=47 // pred_check
          %p295 = pneg %p147
        $region58: #{subclassnet_forward.2} parent=47 // pred_check_branch
          %297 = sbr.rel (%p295) target = $region60
        $region59: #{subclassnet_forward.2} parent=47 // pred_region
          %299 = dma.done [#allocation8], 256
        $region60: #{subclassnet_forward.2} parent=47 // pred_fallthru
          _
        // Predicated region
        $region61: #{subclassnet_forward.2} parent=47 // pred_check
          %p300 = pneg %p168
        $region62: #{subclassnet_forward.2} parent=47 // pred_check_branch
          %302 = sbr.rel (%p300) target = $region64
        $region63: #{subclassnet_forward.2} parent=47 // pred_region
          %304 = dma.done [#allocation11], 128
        $region64: #{subclassnet_forward.2} parent=47 // pred_fallthru
          _
        %p305 = scmp.lt.s32.totalorder %s21, 1
        %s306 = scalar_select %p305, %s21, 1
        %s307 = smul.addr %s306, 8
        %s308 = scalar_lea.vmem %s0, %s307
        %p309 = pneg %p42
        %p310 = pneg %p39
        %p311 = pneg %p63
        %p312 = pneg %p60
        %p313 = pneg %p84
        %p314 = pneg %p81
        %p315 = pneg %p105
        %p316 = pneg %p102
        %p317 = pneg %p126
        %p318 = pneg %p123
        %p319 = pneg %p147
        %p320 = pneg %p144
        %p321 = pneg %p168
        %p322 = pneg %p165
        %p323 = pneg %p194
        %p324 = pneg %p191
        %p325 = scmp.lt.s32.totalorder %s21, 1
        %s326 = scalar_select %p325, %s21, 1
        %s327 = smul.addr %s326, 7
        %s328 = smul.addr %s327, 8
        %s329 = scalar_lea.vmem %s7, %s328
        %p330 = scmp.lt.s32.totalorder %s21, 1
        %s331 = scalar_select %p330, %s21, 1
        %s332 = smul.addr %s331, 8
        %s333 = scalar_lea.vmem %s0, %s332
        %p334 = scmp.lt.s32.totalorder %s21, 1
        %s335 = scalar_select %p334, %s21, 1
        %s336 = smul.addr %s335, 7
        %s337 = smul.addr %s336, 8
        %s338 = scalar_lea.vmem %s7, %s337
        %v339 = vld [vmem:[%s333] sm:$0xff]
        %v340 = vld [vmem:[%s1] sm:$0xff]
        %v341 = vld [vmem:[%s1 + $0x8] sm:$0xff]
        %v342 = vld [vmem:[%s1 + $0x10] sm:$0xff]
        %v343 = vld [vmem:[%s1 + $0x18] sm:$0xff]
        %345 = vset.pattern.permute.xlu0 0
        %346 = vperm.xlu0 %345, %v340
        %v347 = vpop.permute.xlu0 %346
        %350 = vset.pattern.permute.xlu0 0
        %351 = vperm.xlu0 %350, %v341
        %v352 = vpop.permute.xlu0 %351
        %355 = vset.pattern.permute.xlu0 0
        %356 = vperm.xlu0 %355, %v342
        %v357 = vpop.permute.xlu0 %356
        %360 = vset.pattern.permute.xlu0 0
        %361 = vperm.xlu0 %360, %v343
        %v362 = vpop.permute.xlu0 %361
        %v365 = vperm.slane %v339, 0
        %v366 = vperm.slane %v339, 1
        %v367 = vperm.slane %v339, 2
        %v368 = vperm.slane %v339, 3
        %v369 = vperm.slane %v339, 4
        %v370 = vperm.slane %v339, 5
        %v371 = vperm.slane %v339, 6
        %v379 = vmul.f32 %v347, %v365
        %v380 = vmul.f32 %v347, %v366
        %v381 = vmul.f32 %v347, %v367
        %v382 = vmul.f32 %v347, %v368
        %v383 = vmul.f32 %v347, %v369
        %v384 = vmul.f32 %v347, %v370
        %v385 = vmul.f32 %v347, %v371
        %v386 = vmul.f32 %v352, %v365
        %v387 = vmul.f32 %v352, %v366
        %v388 = vmul.f32 %v352, %v367
        %v389 = vmul.f32 %v352, %v368
        %v390 = vmul.f32 %v352, %v369
        %v391 = vmul.f32 %v352, %v370
        %v392 = vmul.f32 %v352, %v371
        %v393 = vmul.f32 %v357, %v365
        %v394 = vmul.f32 %v357, %v366
        %v395 = vmul.f32 %v357, %v367
        %v396 = vmul.f32 %v357, %v368
        %v397 = vmul.f32 %v357, %v369
        %v398 = vmul.f32 %v357, %v370
        %v399 = vmul.f32 %v357, %v371
        %v400 = vmul.f32 %v362, %v365
        %v401 = vmul.f32 %v362, %v366
        %v402 = vmul.f32 %v362, %v367
        %v403 = vmul.f32 %v362, %v368
        %v404 = vmul.f32 %v362, %v369
        %v405 = vmul.f32 %v362, %v370
        %v406 = vmul.f32 %v362, %v371
        %v407 = vadd.f32 %v379, 0.0
        %v408 = vadd.f32 %v380, 0.0
        %v409 = vadd.f32 %v381, 0.0
        %v410 = vadd.f32 %v382, 0.0
        %v411 = vadd.f32 %v383, 0.0
        %v412 = vadd.f32 %v384, 0.0
        %v413 = vadd.f32 %v385, 0.0
        %v414 = vadd.f32 %v386, 0.0
        %v415 = vadd.f32 %v387, 0.0
        %v416 = vadd.f32 %v388, 0.0
        %v417 = vadd.f32 %v389, 0.0
        %v418 = vadd.f32 %v390, 0.0
        %v419 = vadd.f32 %v391, 0.0
        %v420 = vadd.f32 %v392, 0.0
        %v421 = vadd.f32 %v393, 0.0
        %v422 = vadd.f32 %v394, 0.0
        %v423 = vadd.f32 %v395, 0.0
        %v424 = vadd.f32 %v396, 0.0
        %v425 = vadd.f32 %v397, 0.0
        %v426 = vadd.f32 %v398, 0.0
        %v427 = vadd.f32 %v399, 0.0
        %v428 = vadd.f32 %v400, 0.0
        %v429 = vadd.f32 %v401, 0.0
        %v430 = vadd.f32 %v402, 0.0
        %v431 = vadd.f32 %v403, 0.0
        %v432 = vadd.f32 %v404, 0.0
        %v433 = vadd.f32 %v405, 0.0
        %v434 = vadd.f32 %v406, 0.0
        %v435 = vld [vmem:[%s333] sm:$0xff]
        %436 = vset.pattern.permute.xlu0 1
        %437 = vperm.xlu0 %436, %v340
        %v438 = vpop.permute.xlu0 %437
        %440 = vset.pattern.permute.xlu0 1
        %441 = vperm.xlu0 %440, %v341
        %v442 = vpop.permute.xlu0 %441
        %444 = vset.pattern.permute.xlu0 1
        %445 = vperm.xlu0 %444, %v342
        %v446 = vpop.permute.xlu0 %445
        %448 = vset.pattern.permute.xlu0 1
        %449 = vperm.xlu0 %448, %v343
        %v450 = vpop.permute.xlu0 %449
        %v453 = vperm.slane %v435, 0
        %v454 = vperm.slane %v435, 1
        %v455 = vperm.slane %v435, 2
        %v456 = vperm.slane %v435, 3
        %v457 = vperm.slane %v435, 4
        %v458 = vperm.slane %v435, 5
        %v459 = vperm.slane %v435, 6
        %v460 = vperm.slane %v435, 7
        %v469 = vmul.f32 %v438, %v453
        %v470 = vmul.f32 %v438, %v454
        %v471 = vmul.f32 %v438, %v455
        %v472 = vmul.f32 %v438, %v456
        %v473 = vmul.f32 %v438, %v457
        %v474 = vmul.f32 %v438, %v458
        %v475 = vmul.f32 %v438, %v459
        %v476 = vmul.f32 %v438, %v460
        %v477 = vmul.f32 %v442, %v453
        %v478 = vmul.f32 %v442, %v454
        %v479 = vmul.f32 %v442, %v455
        %v480 = vmul.f32 %v442, %v456
        %v481 = vmul.f32 %v442, %v457
        %v482 = vmul.f32 %v442, %v458
        %v483 = vmul.f32 %v442, %v459
        %v484 = vmul.f32 %v442, %v460
        %v485 = vmul.f32 %v446, %v453
        %v486 = vmul.f32 %v446, %v454
        %v487 = vmul.f32 %v446, %v455
        %v488 = vmul.f32 %v446, %v456
        %v489 = vmul.f32 %v446, %v457
        %v490 = vmul.f32 %v446, %v458
        %v491 = vmul.f32 %v446, %v459
        %v492 = vmul.f32 %v446, %v460
        %v493 = vmul.f32 %v450, %v453
        %v494 = vmul.f32 %v450, %v454
        %v495 = vmul.f32 %v450, %v455
        %v496 = vmul.f32 %v450, %v456
        %v497 = vmul.f32 %v450, %v457
        %v498 = vmul.f32 %v450, %v458
        %v499 = vmul.f32 %v450, %v459
        %v500 = vmul.f32 %v450, %v460
        %533 = vrot.lane.b32.xlu0 %v469, 127
        %v534 = vpop.permute.xlu0 %533
        %535 = vrot.lane.b32.xlu0 %v470, 127
        %v536 = vpop.permute.xlu0 %535
        %537 = vrot.lane.b32.xlu0 %v471, 127
        %v538 = vpop.permute.xlu0 %537
        %539 = vrot.lane.b32.xlu0 %v472, 127
        %v540 = vpop.permute.xlu0 %539
        %541 = vrot.lane.b32.xlu0 %v473, 127
        %v542 = vpop.permute.xlu0 %541
        %543 = vrot.lane.b32.xlu0 %v474, 127
        %v544 = vpop.permute.xlu0 %543
        %545 = vrot.lane.b32.xlu0 %v475, 127
        %v546 = vpop.permute.xlu0 %545
        %547 = vrot.lane.b32.xlu0 %v476, 127
        %v548 = vpop.permute.xlu0 %547
        %549 = vrot.lane.b32.xlu0 %v477, 127
        %v550 = vpop.permute.xlu0 %549
        %551 = vrot.lane.b32.xlu0 %v478, 127
        %v552 = vpop.permute.xlu0 %551
        %553 = vrot.lane.b32.xlu0 %v479, 127
        %v554 = vpop.permute.xlu0 %553
        %555 = vrot.lane.b32.xlu0 %v480, 127
        %v556 = vpop.permute.xlu0 %555
        %557 = vrot.lane.b32.xlu0 %v481, 127
        %v558 = vpop.permute.xlu0 %557
        %559 = vrot.lane.b32.xlu0 %v482, 127
        %v560 = vpop.permute.xlu0 %559
        %561 = vrot.lane.b32.xlu0 %v483, 127
        %v562 = vpop.permute.xlu0 %561
        %563 = vrot.lane.b32.xlu0 %v484, 127
        %v564 = vpop.permute.xlu0 %563
        %565 = vrot.lane.b32.xlu0 %v485, 127
        %v566 = vpop.permute.xlu0 %565
        %567 = vrot.lane.b32.xlu0 %v486, 127
        %v568 = vpop.permute.xlu0 %567
        %569 = vrot.lane.b32.xlu0 %v487, 127
        %v570 = vpop.permute.xlu0 %569
        %571 = vrot.lane.b32.xlu0 %v488, 127
        %v572 = vpop.permute.xlu0 %571
        %573 = vrot.lane.b32.xlu0 %v489, 127
        %v574 = vpop.permute.xlu0 %573
        %575 = vrot.lane.b32.xlu0 %v490, 127
        %v576 = vpop.permute.xlu0 %575
        %577 = vrot.lane.b32.xlu0 %v491, 127
        %v578 = vpop.permute.xlu0 %577
        %579 = vrot.lane.b32.xlu0 %v492, 127
        %v580 = vpop.permute.xlu0 %579
        %581 = vrot.lane.b32.xlu0 %v493, 127
        %v582 = vpop.permute.xlu0 %581
        %583 = vrot.lane.b32.xlu0 %v494, 127
        %v584 = vpop.permute.xlu0 %583
        %585 = vrot.lane.b32.xlu0 %v495, 127
        %v586 = vpop.permute.xlu0 %585
        %587 = vrot.lane.b32.xlu0 %v496, 127
        %v588 = vpop.permute.xlu0 %587
        %589 = vrot.lane.b32.xlu0 %v497, 127
        %v590 = vpop.permute.xlu0 %589
        %591 = vrot.lane.b32.xlu0 %v498, 127
        %v592 = vpop.permute.xlu0 %591
        %593 = vrot.lane.b32.xlu0 %v499, 127
        %v594 = vpop.permute.xlu0 %593
        %595 = vrot.lane.b32.xlu0 %v500, 127
        %v596 = vpop.permute.xlu0 %595
        %vm597 = vcmask 1039360
        %v598 = vsel %vm597, %v534, %v536
        %v599 = vsel %vm597, %v536, %v538
        %v600 = vsel %vm597, %v538, %v540
        %v601 = vsel %vm597, %v540, %v542
        %v602 = vsel %vm597, %v542, %v544
        %v603 = vsel %vm597, %v544, %v546
        %v604 = vsel %vm597, %v546, %v548
        %v605 = vsel %vm597, %v550, %v552
        %v606 = vsel %vm597, %v552, %v554
        %v607 = vsel %vm597, %v554, %v556
        %v608 = vsel %vm597, %v556, %v558
        %v609 = vsel %vm597, %v558, %v560
        %v610 = vsel %vm597, %v560, %v562
        %v611 = vsel %vm597, %v562, %v564
        %v612 = vsel %vm597, %v566, %v568
        %v613 = vsel %vm597, %v568, %v570
        %v614 = vsel %vm597, %v570, %v572
        %v615 = vsel %vm597, %v572, %v574
        %v616 = vsel %vm597, %v574, %v576
        %v617 = vsel %vm597, %v576, %v578
        %v618 = vsel %vm597, %v578, %v580
        %v619 = vsel %vm597, %v582, %v584
        %v620 = vsel %vm597, %v584, %v586
        %v621 = vsel %vm597, %v586, %v588
        %v622 = vsel %vm597, %v588, %v590
        %v623 = vsel %vm597, %v590, %v592
        %v624 = vsel %vm597, %v592, %v594
        %v625 = vsel %vm597, %v594, %v596
        %v654 = vadd.f32 %v407, %v598
        %v655 = vadd.f32 %v408, %v599
        %v656 = vadd.f32 %v409, %v600
        %v657 = vadd.f32 %v410, %v601
        %v658 = vadd.f32 %v411, %v602
        %v659 = vadd.f32 %v412, %v603
        %v660 = vadd.f32 %v413, %v604
        %v661 = vadd.f32 %v414, %v605
        %v662 = vadd.f32 %v415, %v606
        %v663 = vadd.f32 %v416, %v607
        %v664 = vadd.f32 %v417, %v608
        %v665 = vadd.f32 %v418, %v609
        %v666 = vadd.f32 %v419, %v610
        %v667 = vadd.f32 %v420, %v611
        %v668 = vadd.f32 %v421, %v612
        %v669 = vadd.f32 %v422, %v613
        %v670 = vadd.f32 %v423, %v614
        %v671 = vadd.f32 %v424, %v615
        %v672 = vadd.f32 %v425, %v616
        %v673 = vadd.f32 %v426, %v617
        %v674 = vadd.f32 %v427, %v618
        %v675 = vadd.f32 %v428, %v619
        %v676 = vadd.f32 %v429, %v620
        %v677 = vadd.f32 %v430, %v621
        %v678 = vadd.f32 %v431, %v622
        %v679 = vadd.f32 %v432, %v623
        %v680 = vadd.f32 %v433, %v624
        %v681 = vadd.f32 %v434, %v625
        %682 = vset.pattern.permute.xlu0 2
        %683 = vperm.xlu0 %682, %v340
        %v684 = vpop.permute.xlu0 %683
        %686 = vset.pattern.permute.xlu0 2
        %687 = vperm.xlu0 %686, %v341
        %v688 = vpop.permute.xlu0 %687
        %690 = vset.pattern.permute.xlu0 2
        %691 = vperm.xlu0 %690, %v342
        %v692 = vpop.permute.xlu0 %691
        %694 = vset.pattern.permute.xlu0 2
        %695 = vperm.xlu0 %694, %v343
        %v696 = vpop.permute.xlu0 %695
        %v698 = vmul.f32 %v684, %v453
        %v699 = vmul.f32 %v684, %v454
        %v700 = vmul.f32 %v684, %v455
        %v701 = vmul.f32 %v684, %v456
        %v702 = vmul.f32 %v684, %v457
        %v703 = vmul.f32 %v684, %v458
        %v704 = vmul.f32 %v684, %v459
        %v705 = vmul.f32 %v684, %v460
        %v706 = vmul.f32 %v688, %v453
        %v707 = vmul.f32 %v688, %v454
        %v708 = vmul.f32 %v688, %v455
        %v709 = vmul.f32 %v688, %v456
        %v710 = vmul.f32 %v688, %v457
        %v711 = vmul.f32 %v688, %v458
        %v712 = vmul.f32 %v688, %v459
        %v713 = vmul.f32 %v688, %v460
        %v714 = vmul.f32 %v692, %v453
        %v715 = vmul.f32 %v692, %v454
        %v716 = vmul.f32 %v692, %v455
        %v717 = vmul.f32 %v692, %v456
        %v718 = vmul.f32 %v692, %v457
        %v719 = vmul.f32 %v692, %v458
        %v720 = vmul.f32 %v692, %v459
        %v721 = vmul.f32 %v692, %v460
        %v722 = vmul.f32 %v696, %v453
        %v723 = vmul.f32 %v696, %v454
        %v724 = vmul.f32 %v696, %v455
        %v725 = vmul.f32 %v696, %v456
        %v726 = vmul.f32 %v696, %v457
        %v727 = vmul.f32 %v696, %v458
        %v728 = vmul.f32 %v696, %v459
        %v729 = vmul.f32 %v696, %v460
        %762 = vrot.lane.b32.xlu0 %v698, 126
        %v763 = vpop.permute.xlu0 %762
        %764 = vrot.lane.b32.xlu0 %v699, 126
        %v765 = vpop.permute.xlu0 %764
        %766 = vrot.lane.b32.xlu0 %v700, 126
        %v767 = vpop.permute.xlu0 %766
        %768 = vrot.lane.b32.xlu0 %v701, 126
        %v769 = vpop.permute.xlu0 %768
        %770 = vrot.lane.b32.xlu0 %v702, 126
        %v771 = vpop.permute.xlu0 %770
        %772 = vrot.lane.b32.xlu0 %v703, 126
        %v773 = vpop.permute.xlu0 %772
        %774 = vrot.lane.b32.xlu0 %v704, 126
        %v775 = vpop.permute.xlu0 %774
        %776 = vrot.lane.b32.xlu0 %v705, 126
        %v777 = vpop.permute.xlu0 %776
        %778 = vrot.lane.b32.xlu0 %v706, 126
        %v779 = vpop.permute.xlu0 %778
        %780 = vrot.lane.b32.xlu0 %v707, 126
        %v781 = vpop.permute.xlu0 %780
        %782 = vrot.lane.b32.xlu0 %v708, 126
        %v783 = vpop.permute.xlu0 %782
        %784 = vrot.lane.b32.xlu0 %v709, 126
        %v785 = vpop.permute.xlu0 %784
        %786 = vrot.lane.b32.xlu0 %v710, 126
        %v787 = vpop.permute.xlu0 %786
        %788 = vrot.lane.b32.xlu0 %v711, 126
        %v789 = vpop.permute.xlu0 %788
        %790 = vrot.lane.b32.xlu0 %v712, 126
        %v791 = vpop.permute.xlu0 %790
        %792 = vrot.lane.b32.xlu0 %v713, 126
        %v793 = vpop.permute.xlu0 %792
        %794 = vrot.lane.b32.xlu0 %v714, 126
        %v795 = vpop.permute.xlu0 %794
        %796 = vrot.lane.b32.xlu0 %v715, 126
        %v797 = vpop.permute.xlu0 %796
        %798 = vrot.lane.b32.xlu0 %v716, 126
        %v799 = vpop.permute.xlu0 %798
        %800 = vrot.lane.b32.xlu0 %v717, 126
        %v801 = vpop.permute.xlu0 %800
        %802 = vrot.lane.b32.xlu0 %v718, 126
        %v803 = vpop.permute.xlu0 %802
        %804 = vrot.lane.b32.xlu0 %v719, 126
        %v805 = vpop.permute.xlu0 %804
        %806 = vrot.lane.b32.xlu0 %v720, 126
        %v807 = vpop.permute.xlu0 %806
        %808 = vrot.lane.b32.xlu0 %v721, 126
        %v809 = vpop.permute.xlu0 %808
        %810 = vrot.lane.b32.xlu0 %v722, 126
        %v811 = vpop.permute.xlu0 %810
        %812 = vrot.lane.b32.xlu0 %v723, 126
        %v813 = vpop.permute.xlu0 %812
        %814 = vrot.lane.b32.xlu0 %v724, 126
        %v815 = vpop.permute.xlu0 %814
        %816 = vrot.lane.b32.xlu0 %v725, 126
        %v817 = vpop.permute.xlu0 %816
        %818 = vrot.lane.b32.xlu0 %v726, 126
        %v819 = vpop.permute.xlu0 %818
        %820 = vrot.lane.b32.xlu0 %v727, 126
        %v821 = vpop.permute.xlu0 %820
        %822 = vrot.lane.b32.xlu0 %v728, 126
        %v823 = vpop.permute.xlu0 %822
        %824 = vrot.lane.b32.xlu0 %v729, 126
        %v825 = vpop.permute.xlu0 %824
        %vm826 = vcmask 1031168
        %v827 = vsel %vm826, %v763, %v765
        %v828 = vsel %vm826, %v765, %v767
        %v829 = vsel %vm826, %v767, %v769
        %v830 = vsel %vm826, %v769, %v771
        %v831 = vsel %vm826, %v771, %v773
        %v832 = vsel %vm826, %v773, %v775
        %v833 = vsel %vm826, %v775, %v777
        %v834 = vsel %vm826, %v779, %v781
        %v835 = vsel %vm826, %v781, %v783
        %v836 = vsel %vm826, %v783, %v785
        %v837 = vsel %vm826, %v785, %v787
        %v838 = vsel %vm826, %v787, %v789
        %v839 = vsel %vm826, %v789, %v791
        %v840 = vsel %vm826, %v791, %v793
        %v841 = vsel %vm826, %v795, %v797
        %v842 = vsel %vm826, %v797, %v799
        %v843 = vsel %vm826, %v799, %v801
        %v844 = vsel %vm826, %v801, %v803
        %v845 = vsel %vm826, %v803, %v805
        %v846 = vsel %vm826, %v805, %v807
        %v847 = vsel %vm826, %v807, %v809
        %v848 = vsel %vm826, %v811, %v813
        %v849 = vsel %vm826, %v813, %v815
        %v850 = vsel %vm826, %v815, %v817
        %v851 = vsel %vm826, %v817, %v819
        %v852 = vsel %vm826, %v819, %v821
        %v853 = vsel %vm826, %v821, %v823
        %v854 = vsel %vm826, %v823, %v825
        %v883 = vadd.f32 %v654, %v827
        %v884 = vadd.f32 %v655, %v828
        %v885 = vadd.f32 %v656, %v829
        %v886 = vadd.f32 %v657, %v830
        %v887 = vadd.f32 %v658, %v831
        %v888 = vadd.f32 %v659, %v832
        %v889 = vadd.f32 %v660, %v833
        %v890 = vadd.f32 %v661, %v834
        %v891 = vadd.f32 %v662, %v835
        %v892 = vadd.f32 %v663, %v836
        %v893 = vadd.f32 %v664, %v837
        %v894 = vadd.f32 %v665, %v838
        %v895 = vadd.f32 %v666, %v839
        %v896 = vadd.f32 %v667, %v840
        %v897 = vadd.f32 %v668, %v841
        %v898 = vadd.f32 %v669, %v842
        %v899 = vadd.f32 %v670, %v843
        %v900 = vadd.f32 %v671, %v844
        %v901 = vadd.f32 %v672, %v845
        %v902 = vadd.f32 %v673, %v846
        %v903 = vadd.f32 %v674, %v847
        %v904 = vadd.f32 %v675, %v848
        %v905 = vadd.f32 %v676, %v849
        %v906 = vadd.f32 %v677, %v850
        %v907 = vadd.f32 %v678, %v851
        %v908 = vadd.f32 %v679, %v852
        %v909 = vadd.f32 %v680, %v853
        %v910 = vadd.f32 %v681, %v854
        %911 = vset.pattern.permute.xlu0 3
        %912 = vperm.xlu0 %911, %v340
        %v913 = vpop.permute.xlu0 %912
        %915 = vset.pattern.permute.xlu0 3
        %916 = vperm.xlu0 %915, %v341
        %v917 = vpop.permute.xlu0 %916
        %919 = vset.pattern.permute.xlu0 3
        %920 = vperm.xlu0 %919, %v342
        %v921 = vpop.permute.xlu0 %920
        %923 = vset.pattern.permute.xlu0 3
        %924 = vperm.xlu0 %923, %v343
        %v925 = vpop.permute.xlu0 %924
        %v927 = vmul.f32 %v913, %v453
        %v928 = vmul.f32 %v913, %v454
        %v929 = vmul.f32 %v913, %v455
        %v930 = vmul.f32 %v913, %v456
        %v931 = vmul.f32 %v913, %v457
        %v932 = vmul.f32 %v913, %v458
        %v933 = vmul.f32 %v913, %v459
        %v934 = vmul.f32 %v913, %v460
        %v935 = vmul.f32 %v917, %v453
        %v936 = vmul.f32 %v917, %v454
        %v937 = vmul.f32 %v917, %v455
        %v938 = vmul.f32 %v917, %v456
        %v939 = vmul.f32 %v917, %v457
        %v940 = vmul.f32 %v917, %v458
        %v941 = vmul.f32 %v917, %v459
        %v942 = vmul.f32 %v917, %v460
        %v943 = vmul.f32 %v921, %v453
        %v944 = vmul.f32 %v921, %v454
        %v945 = vmul.f32 %v921, %v455
        %v946 = vmul.f32 %v921, %v456
        %v947 = vmul.f32 %v921, %v457
        %v948 = vmul.f32 %v921, %v458
        %v949 = vmul.f32 %v921, %v459
        %v950 = vmul.f32 %v921, %v460
        %v951 = vmul.f32 %v925, %v453
        %v952 = vmul.f32 %v925, %v454
        %v953 = vmul.f32 %v925, %v455
        %v954 = vmul.f32 %v925, %v456
        %v955 = vmul.f32 %v925, %v457
        %v956 = vmul.f32 %v925, %v458
        %v957 = vmul.f32 %v925, %v459
        %v958 = vmul.f32 %v925, %v460
        %991 = vrot.lane.b32.xlu0 %v927, 98
        %v992 = vpop.permute.xlu0 %991
        %993 = vrot.lane.b32.xlu0 %v928, 98
        %v994 = vpop.permute.xlu0 %993
        %995 = vrot.lane.b32.xlu0 %v929, 98
        %v996 = vpop.permute.xlu0 %995
        %997 = vrot.lane.b32.xlu0 %v930, 98
        %v998 = vpop.permute.xlu0 %997
        %999 = vrot.lane.b32.xlu0 %v931, 98
        %v1000 = vpop.permute.xlu0 %999
        %1001 = vrot.lane.b32.xlu0 %v932, 98
        %v1002 = vpop.permute.xlu0 %1001
        %1003 = vrot.lane.b32.xlu0 %v933, 98
        %v1004 = vpop.permute.xlu0 %1003
        %1005 = vrot.lane.b32.xlu0 %v934, 98
        %v1006 = vpop.permute.xlu0 %1005
        %1007 = vrot.lane.b32.xlu0 %v935, 98
        %v1008 = vpop.permute.xlu0 %1007
        %1009 = vrot.lane.b32.xlu0 %v936, 98
        %v1010 = vpop.permute.xlu0 %1009
        %1011 = vrot.lane.b32.xlu0 %v937, 98
        %v1012 = vpop.permute.xlu0 %1011
        %1013 = vrot.lane.b32.xlu0 %v938, 98
        %v1014 = vpop.permute.xlu0 %1013
        %1015 = vrot.lane.b32.xlu0 %v939, 98
        %v1016 = vpop.permute.xlu0 %1015
        %1017 = vrot.lane.b32.xlu0 %v940, 98
        %v1018 = vpop.permute.xlu0 %1017
        %1019 = vrot.lane.b32.xlu0 %v941, 98
        %v1020 = vpop.permute.xlu0 %1019
        %1021 = vrot.lane.b32.xlu0 %v942, 98
        %v1022 = vpop.permute.xlu0 %1021
        %1023 = vrot.lane.b32.xlu0 %v943, 98
        %v1024 = vpop.permute.xlu0 %1023
        %1025 = vrot.lane.b32.xlu0 %v944, 98
        %v1026 = vpop.permute.xlu0 %1025
        %1027 = vrot.lane.b32.xlu0 %v945, 98
        %v1028 = vpop.permute.xlu0 %1027
        %1029 = vrot.lane.b32.xlu0 %v946, 98
        %v1030 = vpop.permute.xlu0 %1029
        %1031 = vrot.lane.b32.xlu0 %v947, 98
        %v1032 = vpop.permute.xlu0 %1031
        %1033 = vrot.lane.b32.xlu0 %v948, 98
        %v1034 = vpop.permute.xlu0 %1033
        %1035 = vrot.lane.b32.xlu0 %v949, 98
        %v1036 = vpop.permute.xlu0 %1035
        %1037 = vrot.lane.b32.xlu0 %v950, 98
        %v1038 = vpop.permute.xlu0 %1037
        %1039 = vrot.lane.b32.xlu0 %v951, 98
        %v1040 = vpop.permute.xlu0 %1039
        %1041 = vrot.lane.b32.xlu0 %v952, 98
        %v1042 = vpop.permute.xlu0 %1041
        %1043 = vrot.lane.b32.xlu0 %v953, 98
        %v1044 = vpop.permute.xlu0 %1043
        %1045 = vrot.lane.b32.xlu0 %v954, 98
        %v1046 = vpop.permute.xlu0 %1045
        %1047 = vrot.lane.b32.xlu0 %v955, 98
        %v1048 = vpop.permute.xlu0 %1047
        %1049 = vrot.lane.b32.xlu0 %v956, 98
        %v1050 = vpop.permute.xlu0 %1049
        %1051 = vrot.lane.b32.xlu0 %v957, 98
        %v1052 = vpop.permute.xlu0 %1051
        %1053 = vrot.lane.b32.xlu0 %v958, 98
        %v1054 = vpop.permute.xlu0 %1053
        %vm1055 = vcmask 801792
        %v1056 = vsel %vm1055, %v992, %v994
        %v1057 = vsel %vm1055, %v994, %v996
        %v1058 = vsel %vm1055, %v996, %v998
        %v1059 = vsel %vm1055, %v998, %v1000
        %v1060 = vsel %vm1055, %v1000, %v1002
        %v1061 = vsel %vm1055, %v1002, %v1004
        %v1062 = vsel %vm1055, %v1004, %v1006
        %v1063 = vsel %vm1055, %v1008, %v1010
        %v1064 = vsel %vm1055, %v1010, %v1012
        %v1065 = vsel %vm1055, %v1012, %v1014
        %v1066 = vsel %vm1055, %v1014, %v1016
        %v1067 = vsel %vm1055, %v1016, %v1018
        %v1068 = vsel %vm1055, %v1018, %v1020
        %v1069 = vsel %vm1055, %v1020, %v1022
        %v1070 = vsel %vm1055, %v1024, %v1026
        %v1071 = vsel %vm1055, %v1026, %v1028
        %v1072 = vsel %vm1055, %v1028, %v1030
        %v1073 = vsel %vm1055, %v1030, %v1032
        %v1074 = vsel %vm1055, %v1032, %v1034
        %v1075 = vsel %vm1055, %v1034, %v1036
        %v1076 = vsel %vm1055, %v1036, %v1038
        %v1077 = vsel %vm1055, %v1040, %v1042
        %v1078 = vsel %vm1055, %v1042, %v1044
        %v1079 = vsel %vm1055, %v1044, %v1046
        %v1080 = vsel %vm1055, %v1046, %v1048
        %v1081 = vsel %vm1055, %v1048, %v1050
        %v1082 = vsel %vm1055, %v1050, %v1052
        %v1083 = vsel %vm1055, %v1052, %v1054
        %v1112 = vadd.f32 %v883, %v1056
        %v1113 = vadd.f32 %v884, %v1057
        %v1114 = vadd.f32 %v885, %v1058
        %v1115 = vadd.f32 %v886, %v1059
        %v1116 = vadd.f32 %v887, %v1060
        %v1117 = vadd.f32 %v888, %v1061
        %v1118 = vadd.f32 %v889, %v1062
        %v1119 = vadd.f32 %v890, %v1063
        %v1120 = vadd.f32 %v891, %v1064
        %v1121 = vadd.f32 %v892, %v1065
        %v1122 = vadd.f32 %v893, %v1066
        %v1123 = vadd.f32 %v894, %v1067
        %v1124 = vadd.f32 %v895, %v1068
        %v1125 = vadd.f32 %v896, %v1069
        %v1126 = vadd.f32 %v897, %v1070
        %v1127 = vadd.f32 %v898, %v1071
        %v1128 = vadd.f32 %v899, %v1072
        %v1129 = vadd.f32 %v900, %v1073
        %v1130 = vadd.f32 %v901, %v1074
        %v1131 = vadd.f32 %v902, %v1075
        %v1132 = vadd.f32 %v903, %v1076
        %v1133 = vadd.f32 %v904, %v1077
        %v1134 = vadd.f32 %v905, %v1078
        %v1135 = vadd.f32 %v906, %v1079
        %v1136 = vadd.f32 %v907, %v1080
        %v1137 = vadd.f32 %v908, %v1081
        %v1138 = vadd.f32 %v909, %v1082
        %v1139 = vadd.f32 %v910, %v1083
        %1140 = vset.pattern.permute.xlu0 4
        %1141 = vperm.xlu0 %1140, %v340
        %v1142 = vpop.permute.xlu0 %1141
        %1144 = vset.pattern.permute.xlu0 4
        %1145 = vperm.xlu0 %1144, %v341
        %v1146 = vpop.permute.xlu0 %1145
        %1148 = vset.pattern.permute.xlu0 4
        %1149 = vperm.xlu0 %1148, %v342
        %v1150 = vpop.permute.xlu0 %1149
        %1152 = vset.pattern.permute.xlu0 4
        %1153 = vperm.xlu0 %1152, %v343
        %v1154 = vpop.permute.xlu0 %1153
        %v1156 = vmul.f32 %v1142, %v453
        %v1157 = vmul.f32 %v1142, %v454
        %v1158 = vmul.f32 %v1142, %v455
        %v1159 = vmul.f32 %v1142, %v456
        %v1160 = vmul.f32 %v1142, %v457
        %v1161 = vmul.f32 %v1142, %v458
        %v1162 = vmul.f32 %v1142, %v459
        %v1163 = vmul.f32 %v1142, %v460
        %v1164 = vmul.f32 %v1146, %v453
        %v1165 = vmul.f32 %v1146, %v454
        %v1166 = vmul.f32 %v1146, %v455
        %v1167 = vmul.f32 %v1146, %v456
        %v1168 = vmul.f32 %v1146, %v457
        %v1169 = vmul.f32 %v1146, %v458
        %v1170 = vmul.f32 %v1146, %v459
        %v1171 = vmul.f32 %v1146, %v460
        %v1172 = vmul.f32 %v1150, %v453
        %v1173 = vmul.f32 %v1150, %v454
        %v1174 = vmul.f32 %v1150, %v455
        %v1175 = vmul.f32 %v1150, %v456
        %v1176 = vmul.f32 %v1150, %v457
        %v1177 = vmul.f32 %v1150, %v458
        %v1178 = vmul.f32 %v1150, %v459
        %v1179 = vmul.f32 %v1150, %v460
        %v1180 = vmul.f32 %v1154, %v453
        %v1181 = vmul.f32 %v1154, %v454
        %v1182 = vmul.f32 %v1154, %v455
        %v1183 = vmul.f32 %v1154, %v456
        %v1184 = vmul.f32 %v1154, %v457
        %v1185 = vmul.f32 %v1154, %v458
        %v1186 = vmul.f32 %v1154, %v459
        %v1187 = vmul.f32 %v1154, %v460
        %1220 = vrot.lane.b32.xlu0 %v1156, 97
        %v1221 = vpop.permute.xlu0 %1220
        %1222 = vrot.lane.b32.xlu0 %v1157, 97
        %v1223 = vpop.permute.xlu0 %1222
        %1224 = vrot.lane.b32.xlu0 %v1158, 97
        %v1225 = vpop.permute.xlu0 %1224
        %1226 = vrot.lane.b32.xlu0 %v1159, 97
        %v1227 = vpop.permute.xlu0 %1226
        %1228 = vrot.lane.b32.xlu0 %v1160, 97
        %v1229 = vpop.permute.xlu0 %1228
        %1230 = vrot.lane.b32.xlu0 %v1161, 97
        %v1231 = vpop.permute.xlu0 %1230
        %1232 = vrot.lane.b32.xlu0 %v1162, 97
        %v1233 = vpop.permute.xlu0 %1232
        %1234 = vrot.lane.b32.xlu0 %v1163, 97
        %v1235 = vpop.permute.xlu0 %1234
        %1236 = vrot.lane.b32.xlu0 %v1164, 97
        %v1237 = vpop.permute.xlu0 %1236
        %1238 = vrot.lane.b32.xlu0 %v1165, 97
        %v1239 = vpop.permute.xlu0 %1238
        %1240 = vrot.lane.b32.xlu0 %v1166, 97
        %v1241 = vpop.permute.xlu0 %1240
        %1242 = vrot.lane.b32.xlu0 %v1167, 97
        %v1243 = vpop.permute.xlu0 %1242
        %1244 = vrot.lane.b32.xlu0 %v1168, 97
        %v1245 = vpop.permute.xlu0 %1244
        %1246 = vrot.lane.b32.xlu0 %v1169, 97
        %v1247 = vpop.permute.xlu0 %1246
        %1248 = vrot.lane.b32.xlu0 %v1170, 97
        %v1249 = vpop.permute.xlu0 %1248
        %1250 = vrot.lane.b32.xlu0 %v1171, 97
        %v1251 = vpop.permute.xlu0 %1250
        %1252 = vrot.lane.b32.xlu0 %v1172, 97
        %v1253 = vpop.permute.xlu0 %1252
        %1254 = vrot.lane.b32.xlu0 %v1173, 97
        %v1255 = vpop.permute.xlu0 %1254
        %1256 = vrot.lane.b32.xlu0 %v1174, 97
        %v1257 = vpop.permute.xlu0 %1256
        %1258 = vrot.lane.b32.xlu0 %v1175, 97
        %v1259 = vpop.permute.xlu0 %1258
        %1260 = vrot.lane.b32.xlu0 %v1176, 97
        %v1261 = vpop.permute.xlu0 %1260
        %1262 = vrot.lane.b32.xlu0 %v1177, 97
        %v1263 = vpop.permute.xlu0 %1262
        %1264 = vrot.lane.b32.xlu0 %v1178, 97
        %v1265 = vpop.permute.xlu0 %1264
        %1266 = vrot.lane.b32.xlu0 %v1179, 97
        %v1267 = vpop.permute.xlu0 %1266
        %1268 = vrot.lane.b32.xlu0 %v1180, 97
        %v1269 = vpop.permute.xlu0 %1268
        %1270 = vrot.lane.b32.xlu0 %v1181, 97
        %v1271 = vpop.permute.xlu0 %1270
        %1272 = vrot.lane.b32.xlu0 %v1182, 97
        %v1273 = vpop.permute.xlu0 %1272
        %1274 = vrot.lane.b32.xlu0 %v1183, 97
        %v1275 = vpop.permute.xlu0 %1274
        %1276 = vrot.lane.b32.xlu0 %v1184, 97
        %v1277 = vpop.permute.xlu0 %1276
        %1278 = vrot.lane.b32.xlu0 %v1185, 97
        %v1279 = vpop.permute.xlu0 %1278
        %1280 = vrot.lane.b32.xlu0 %v1186, 97
        %v1281 = vpop.permute.xlu0 %1280
        %1282 = vrot.lane.b32.xlu0 %v1187, 97
        %v1283 = vpop.permute.xlu0 %1282
        %vm1284 = vcmask 793600
        %v1285 = vsel %vm1284, %v1221, %v1223
        %v1286 = vsel %vm1284, %v1223, %v1225
        %v1287 = vsel %vm1284, %v1225, %v1227
        %v1288 = vsel %vm1284, %v1227, %v1229
        %v1289 = vsel %vm1284, %v1229, %v1231
        %v1290 = vsel %vm1284, %v1231, %v1233
        %v1291 = vsel %vm1284, %v1233, %v1235
        %v1292 = vsel %vm1284, %v1237, %v1239
        %v1293 = vsel %vm1284, %v1239, %v1241
        %v1294 = vsel %vm1284, %v1241, %v1243
        %v1295 = vsel %vm1284, %v1243, %v1245
        %v1296 = vsel %vm1284, %v1245, %v1247
        %v1297 = vsel %vm1284, %v1247, %v1249
        %v1298 = vsel %vm1284, %v1249, %v1251
        %v1299 = vsel %vm1284, %v1253, %v1255
        %v1300 = vsel %vm1284, %v1255, %v1257
        %v1301 = vsel %vm1284, %v1257, %v1259
        %v1302 = vsel %vm1284, %v1259, %v1261
        %v1303 = vsel %vm1284, %v1261, %v1263
        %v1304 = vsel %vm1284, %v1263, %v1265
        %v1305 = vsel %vm1284, %v1265, %v1267
        %v1306 = vsel %vm1284, %v1269, %v1271
        %v1307 = vsel %vm1284, %v1271, %v1273
        %v1308 = vsel %vm1284, %v1273, %v1275
        %v1309 = vsel %vm1284, %v1275, %v1277
        %v1310 = vsel %vm1284, %v1277, %v1279
        %v1311 = vsel %vm1284, %v1279, %v1281
        %v1312 = vsel %vm1284, %v1281, %v1283
        %v1341 = vadd.f32 %v1112, %v1285
        %v1342 = vadd.f32 %v1113, %v1286
        %v1343 = vadd.f32 %v1114, %v1287
        %v1344 = vadd.f32 %v1115, %v1288
        %v1345 = vadd.f32 %v1116, %v1289
        %v1346 = vadd.f32 %v1117, %v1290
        %v1347 = vadd.f32 %v1118, %v1291
        %v1348 = vadd.f32 %v1119, %v1292
        %v1349 = vadd.f32 %v1120, %v1293
        %v1350 = vadd.f32 %v1121, %v1294
        %v1351 = vadd.f32 %v1122, %v1295
        %v1352 = vadd.f32 %v1123, %v1296
        %v1353 = vadd.f32 %v1124, %v1297
        %v1354 = vadd.f32 %v1125, %v1298
        %v1355 = vadd.f32 %v1126, %v1299
        %v1356 = vadd.f32 %v1127, %v1300
        %v1357 = vadd.f32 %v1128, %v1301
        %v1358 = vadd.f32 %v1129, %v1302
        %v1359 = vadd.f32 %v1130, %v1303
        %v1360 = vadd.f32 %v1131, %v1304
        %v1361 = vadd.f32 %v1132, %v1305
        %v1362 = vadd.f32 %v1133, %v1306
        %v1363 = vadd.f32 %v1134, %v1307
        %v1364 = vadd.f32 %v1135, %v1308
        %v1365 = vadd.f32 %v1136, %v1309
        %v1366 = vadd.f32 %v1137, %v1310
        %v1367 = vadd.f32 %v1138, %v1311
        %v1368 = vadd.f32 %v1139, %v1312
        %1369 = vset.pattern.permute.xlu0 5
        %1370 = vperm.xlu0 %1369, %v340
        %v1371 = vpop.permute.xlu0 %1370
        %1373 = vset.pattern.permute.xlu0 5
        %1374 = vperm.xlu0 %1373, %v341
        %v1375 = vpop.permute.xlu0 %1374
        %1377 = vset.pattern.permute.xlu0 5
        %1378 = vperm.xlu0 %1377, %v342
        %v1379 = vpop.permute.xlu0 %1378
        %1381 = vset.pattern.permute.xlu0 5
        %1382 = vperm.xlu0 %1381, %v343
        %v1383 = vpop.permute.xlu0 %1382
        %v1385 = vmul.f32 %v1371, %v453
        %v1386 = vmul.f32 %v1371, %v454
        %v1387 = vmul.f32 %v1371, %v455
        %v1388 = vmul.f32 %v1371, %v456
        %v1389 = vmul.f32 %v1371, %v457
        %v1390 = vmul.f32 %v1371, %v458
        %v1391 = vmul.f32 %v1371, %v459
        %v1392 = vmul.f32 %v1371, %v460
        %v1393 = vmul.f32 %v1375, %v453
        %v1394 = vmul.f32 %v1375, %v454
        %v1395 = vmul.f32 %v1375, %v455
        %v1396 = vmul.f32 %v1375, %v456
        %v1397 = vmul.f32 %v1375, %v457
        %v1398 = vmul.f32 %v1375, %v458
        %v1399 = vmul.f32 %v1375, %v459
        %v1400 = vmul.f32 %v1375, %v460
        %v1401 = vmul.f32 %v1379, %v453
        %v1402 = vmul.f32 %v1379, %v454
        %v1403 = vmul.f32 %v1379, %v455
        %v1404 = vmul.f32 %v1379, %v456
        %v1405 = vmul.f32 %v1379, %v457
        %v1406 = vmul.f32 %v1379, %v458
        %v1407 = vmul.f32 %v1379, %v459
        %v1408 = vmul.f32 %v1379, %v460
        %v1409 = vmul.f32 %v1383, %v453
        %v1410 = vmul.f32 %v1383, %v454
        %v1411 = vmul.f32 %v1383, %v455
        %v1412 = vmul.f32 %v1383, %v456
        %v1413 = vmul.f32 %v1383, %v457
        %v1414 = vmul.f32 %v1383, %v458
        %v1415 = vmul.f32 %v1383, %v459
        %v1416 = vmul.f32 %v1383, %v460
        %1449 = vrot.lane.b32.xlu0 %v1385, 96
        %v1450 = vpop.permute.xlu0 %1449
        %1451 = vrot.lane.b32.xlu0 %v1386, 96
        %v1452 = vpop.permute.xlu0 %1451
        %1453 = vrot.lane.b32.xlu0 %v1387, 96
        %v1454 = vpop.permute.xlu0 %1453
        %1455 = vrot.lane.b32.xlu0 %v1388, 96
        %v1456 = vpop.permute.xlu0 %1455
        %1457 = vrot.lane.b32.xlu0 %v1389, 96
        %v1458 = vpop.permute.xlu0 %1457
        %1459 = vrot.lane.b32.xlu0 %v1390, 96
        %v1460 = vpop.permute.xlu0 %1459
        %1461 = vrot.lane.b32.xlu0 %v1391, 96
        %v1462 = vpop.permute.xlu0 %1461
        %1463 = vrot.lane.b32.xlu0 %v1392, 96
        %v1464 = vpop.permute.xlu0 %1463
        %1465 = vrot.lane.b32.xlu0 %v1393, 96
        %v1466 = vpop.permute.xlu0 %1465
        %1467 = vrot.lane.b32.xlu0 %v1394, 96
        %v1468 = vpop.permute.xlu0 %1467
        %1469 = vrot.lane.b32.xlu0 %v1395, 96
        %v1470 = vpop.permute.xlu0 %1469
        %1471 = vrot.lane.b32.xlu0 %v1396, 96
        %v1472 = vpop.permute.xlu0 %1471
        %1473 = vrot.lane.b32.xlu0 %v1397, 96
        %v1474 = vpop.permute.xlu0 %1473
        %1475 = vrot.lane.b32.xlu0 %v1398, 96
        %v1476 = vpop.permute.xlu0 %1475
        %1477 = vrot.lane.b32.xlu0 %v1399, 96
        %v1478 = vpop.permute.xlu0 %1477
        %1479 = vrot.lane.b32.xlu0 %v1400, 96
        %v1480 = vpop.permute.xlu0 %1479
        %1481 = vrot.lane.b32.xlu0 %v1401, 96
        %v1482 = vpop.permute.xlu0 %1481
        %1483 = vrot.lane.b32.xlu0 %v1402, 96
        %v1484 = vpop.permute.xlu0 %1483
        %1485 = vrot.lane.b32.xlu0 %v1403, 96
        %v1486 = vpop.permute.xlu0 %1485
        %1487 = vrot.lane.b32.xlu0 %v1404, 96
        %v1488 = vpop.permute.xlu0 %1487
        %1489 = vrot.lane.b32.xlu0 %v1405, 96
        %v1490 = vpop.permute.xlu0 %1489
        %1491 = vrot.lane.b32.xlu0 %v1406, 96
        %v1492 = vpop.permute.xlu0 %1491
        %1493 = vrot.lane.b32.xlu0 %v1407, 96
        %v1494 = vpop.permute.xlu0 %1493
        %1495 = vrot.lane.b32.xlu0 %v1408, 96
        %v1496 = vpop.permute.xlu0 %1495
        %1497 = vrot.lane.b32.xlu0 %v1409, 96
        %v1498 = vpop.permute.xlu0 %1497
        %1499 = vrot.lane.b32.xlu0 %v1410, 96
        %v1500 = vpop.permute.xlu0 %1499
        %1501 = vrot.lane.b32.xlu0 %v1411, 96
        %v1502 = vpop.permute.xlu0 %1501
        %1503 = vrot.lane.b32.xlu0 %v1412, 96
        %v1504 = vpop.permute.xlu0 %1503
        %1505 = vrot.lane.b32.xlu0 %v1413, 96
        %v1506 = vpop.permute.xlu0 %1505
        %1507 = vrot.lane.b32.xlu0 %v1414, 96
        %v1508 = vpop.permute.xlu0 %1507
        %1509 = vrot.lane.b32.xlu0 %v1415, 96
        %v1510 = vpop.permute.xlu0 %1509
        %1511 = vrot.lane.b32.xlu0 %v1416, 96
        %v1512 = vpop.permute.xlu0 %1511
        %vm1513 = vcmask 785408
        %v1514 = vsel %vm1513, %v1450, %v1452
        %v1515 = vsel %vm1513, %v1452, %v1454
        %v1516 = vsel %vm1513, %v1454, %v1456
        %v1517 = vsel %vm1513, %v1456, %v1458
        %v1518 = vsel %vm1513, %v1458, %v1460
        %v1519 = vsel %vm1513, %v1460, %v1462
        %v1520 = vsel %vm1513, %v1462, %v1464
        %v1521 = vsel %vm1513, %v1466, %v1468
        %v1522 = vsel %vm1513, %v1468, %v1470
        %v1523 = vsel %vm1513, %v1470, %v1472
        %v1524 = vsel %vm1513, %v1472, %v1474
        %v1525 = vsel %vm1513, %v1474, %v1476
        %v1526 = vsel %vm1513, %v1476, %v1478
        %v1527 = vsel %vm1513, %v1478, %v1480
        %v1528 = vsel %vm1513, %v1482, %v1484
        %v1529 = vsel %vm1513, %v1484, %v1486
        %v1530 = vsel %vm1513, %v1486, %v1488
        %v1531 = vsel %vm1513, %v1488, %v1490
        %v1532 = vsel %vm1513, %v1490, %v1492
        %v1533 = vsel %vm1513, %v1492, %v1494
        %v1534 = vsel %vm1513, %v1494, %v1496
        %v1535 = vsel %vm1513, %v1498, %v1500
        %v1536 = vsel %vm1513, %v1500, %v1502
        %v1537 = vsel %vm1513, %v1502, %v1504
        %v1538 = vsel %vm1513, %v1504, %v1506
        %v1539 = vsel %vm1513, %v1506, %v1508
        %v1540 = vsel %vm1513, %v1508, %v1510
        %v1541 = vsel %vm1513, %v1510, %v1512
        %v1570 = vadd.f32 %v1341, %v1514
        %v1571 = vadd.f32 %v1342, %v1515
        %v1572 = vadd.f32 %v1343, %v1516
        %v1573 = vadd.f32 %v1344, %v1517
        %v1574 = vadd.f32 %v1345, %v1518
        %v1575 = vadd.f32 %v1346, %v1519
        %v1576 = vadd.f32 %v1347, %v1520
        %v1577 = vadd.f32 %v1348, %v1521
        %v1578 = vadd.f32 %v1349, %v1522
        %v1579 = vadd.f32 %v1350, %v1523
        %v1580 = vadd.f32 %v1351, %v1524
        %v1581 = vadd.f32 %v1352, %v1525
        %v1582 = vadd.f32 %v1353, %v1526
        %v1583 = vadd.f32 %v1354, %v1527
        %v1584 = vadd.f32 %v1355, %v1528
        %v1585 = vadd.f32 %v1356, %v1529
        %v1586 = vadd.f32 %v1357, %v1530
        %v1587 = vadd.f32 %v1358, %v1531
        %v1588 = vadd.f32 %v1359, %v1532
        %v1589 = vadd.f32 %v1360, %v1533
        %v1590 = vadd.f32 %v1361, %v1534
        %v1591 = vadd.f32 %v1362, %v1535
        %v1592 = vadd.f32 %v1363, %v1536
        %v1593 = vadd.f32 %v1364, %v1537
        %v1594 = vadd.f32 %v1365, %v1538
        %v1595 = vadd.f32 %v1366, %v1539
        %v1596 = vadd.f32 %v1367, %v1540
        %v1597 = vadd.f32 %v1368, %v1541
        %1598 = vset.pattern.permute.xlu0 6
        %1599 = vperm.xlu0 %1598, %v340
        %v1600 = vpop.permute.xlu0 %1599
        %1602 = vset.pattern.permute.xlu0 6
        %1603 = vperm.xlu0 %1602, %v341
        %v1604 = vpop.permute.xlu0 %1603
        %1606 = vset.pattern.permute.xlu0 6
        %1607 = vperm.xlu0 %1606, %v342
        %v1608 = vpop.permute.xlu0 %1607
        %1610 = vset.pattern.permute.xlu0 6
        %1611 = vperm.xlu0 %1610, %v343
        %v1612 = vpop.permute.xlu0 %1611
        %v1614 = vmul.f32 %v1600, %v453
        %v1615 = vmul.f32 %v1600, %v454
        %v1616 = vmul.f32 %v1600, %v455
        %v1617 = vmul.f32 %v1600, %v456
        %v1618 = vmul.f32 %v1600, %v457
        %v1619 = vmul.f32 %v1600, %v458
        %v1620 = vmul.f32 %v1600, %v459
        %v1621 = vmul.f32 %v1600, %v460
        %v1622 = vmul.f32 %v1604, %v453
        %v1623 = vmul.f32 %v1604, %v454
        %v1624 = vmul.f32 %v1604, %v455
        %v1625 = vmul.f32 %v1604, %v456
        %v1626 = vmul.f32 %v1604, %v457
        %v1627 = vmul.f32 %v1604, %v458
        %v1628 = vmul.f32 %v1604, %v459
        %v1629 = vmul.f32 %v1604, %v460
        %v1630 = vmul.f32 %v1608, %v453
        %v1631 = vmul.f32 %v1608, %v454
        %v1632 = vmul.f32 %v1608, %v455
        %v1633 = vmul.f32 %v1608, %v456
        %v1634 = vmul.f32 %v1608, %v457
        %v1635 = vmul.f32 %v1608, %v458
        %v1636 = vmul.f32 %v1608, %v459
        %v1637 = vmul.f32 %v1608, %v460
        %v1638 = vmul.f32 %v1612, %v453
        %v1639 = vmul.f32 %v1612, %v454
        %v1640 = vmul.f32 %v1612, %v455
        %v1641 = vmul.f32 %v1612, %v456
        %v1642 = vmul.f32 %v1612, %v457
        %v1643 = vmul.f32 %v1612, %v458
        %v1644 = vmul.f32 %v1612, %v459
        %v1645 = vmul.f32 %v1612, %v460
        %1678 = vrot.lane.b32.xlu0 %v1614, 68
        %v1679 = vpop.permute.xlu0 %1678
        %1680 = vrot.lane.b32.xlu0 %v1615, 68
        %v1681 = vpop.permute.xlu0 %1680
        %1682 = vrot.lane.b32.xlu0 %v1616, 68
        %v1683 = vpop.permute.xlu0 %1682
        %1684 = vrot.lane.b32.xlu0 %v1617, 68
        %v1685 = vpop.permute.xlu0 %1684
        %1686 = vrot.lane.b32.xlu0 %v1618, 68
        %v1687 = vpop.permute.xlu0 %1686
        %1688 = vrot.lane.b32.xlu0 %v1619, 68
        %v1689 = vpop.permute.xlu0 %1688
        %1690 = vrot.lane.b32.xlu0 %v1620, 68
        %v1691 = vpop.permute.xlu0 %1690
        %1692 = vrot.lane.b32.xlu0 %v1621, 68
        %v1693 = vpop.permute.xlu0 %1692
        %1694 = vrot.lane.b32.xlu0 %v1622, 68
        %v1695 = vpop.permute.xlu0 %1694
        %1696 = vrot.lane.b32.xlu0 %v1623, 68
        %v1697 = vpop.permute.xlu0 %1696
        %1698 = vrot.lane.b32.xlu0 %v1624, 68
        %v1699 = vpop.permute.xlu0 %1698
        %1700 = vrot.lane.b32.xlu0 %v1625, 68
        %v1701 = vpop.permute.xlu0 %1700
        %1702 = vrot.lane.b32.xlu0 %v1626, 68
        %v1703 = vpop.permute.xlu0 %1702
        %1704 = vrot.lane.b32.xlu0 %v1627, 68
        %v1705 = vpop.permute.xlu0 %1704
        %1706 = vrot.lane.b32.xlu0 %v1628, 68
        %v1707 = vpop.permute.xlu0 %1706
        %1708 = vrot.lane.b32.xlu0 %v1629, 68
        %v1709 = vpop.permute.xlu0 %1708
        %1710 = vrot.lane.b32.xlu0 %v1630, 68
        %v1711 = vpop.permute.xlu0 %1710
        %1712 = vrot.lane.b32.xlu0 %v1631, 68
        %v1713 = vpop.permute.xlu0 %1712
        %1714 = vrot.lane.b32.xlu0 %v1632, 68
        %v1715 = vpop.permute.xlu0 %1714
        %1716 = vrot.lane.b32.xlu0 %v1633, 68
        %v1717 = vpop.permute.xlu0 %1716
        %1718 = vrot.lane.b32.xlu0 %v1634, 68
        %v1719 = vpop.permute.xlu0 %1718
        %1720 = vrot.lane.b32.xlu0 %v1635, 68
        %v1721 = vpop.permute.xlu0 %1720
        %1722 = vrot.lane.b32.xlu0 %v1636, 68
        %v1723 = vpop.permute.xlu0 %1722
        %1724 = vrot.lane.b32.xlu0 %v1637, 68
        %v1725 = vpop.permute.xlu0 %1724
        %1726 = vrot.lane.b32.xlu0 %v1638, 68
        %v1727 = vpop.permute.xlu0 %1726
        %1728 = vrot.lane.b32.xlu0 %v1639, 68
        %v1729 = vpop.permute.xlu0 %1728
        %1730 = vrot.lane.b32.xlu0 %v1640, 68
        %v1731 = vpop.permute.xlu0 %1730
        %1732 = vrot.lane.b32.xlu0 %v1641, 68
        %v1733 = vpop.permute.xlu0 %1732
        %1734 = vrot.lane.b32.xlu0 %v1642, 68
        %v1735 = vpop.permute.xlu0 %1734
        %1736 = vrot.lane.b32.xlu0 %v1643, 68
        %v1737 = vpop.permute.xlu0 %1736
        %1738 = vrot.lane.b32.xlu0 %v1644, 68
        %v1739 = vpop.permute.xlu0 %1738
        %1740 = vrot.lane.b32.xlu0 %v1645, 68
        %v1741 = vpop.permute.xlu0 %1740
        %vm1742 = vcmask 556032
        %v1743 = vsel %vm1742, %v1679, %v1681
        %v1744 = vsel %vm1742, %v1681, %v1683
        %v1745 = vsel %vm1742, %v1683, %v1685
        %v1746 = vsel %vm1742, %v1685, %v1687
        %v1747 = vsel %vm1742, %v1687, %v1689
        %v1748 = vsel %vm1742, %v1689, %v1691
        %v1749 = vsel %vm1742, %v1691, %v1693
        %v1750 = vsel %vm1742, %v1695, %v1697
        %v1751 = vsel %vm1742, %v1697, %v1699
        %v1752 = vsel %vm1742, %v1699, %v1701
        %v1753 = vsel %vm1742, %v1701, %v1703
        %v1754 = vsel %vm1742, %v1703, %v1705
        %v1755 = vsel %vm1742, %v1705, %v1707
        %v1756 = vsel %vm1742, %v1707, %v1709
        %v1757 = vsel %vm1742, %v1711, %v1713
        %v1758 = vsel %vm1742, %v1713, %v1715
        %v1759 = vsel %vm1742, %v1715, %v1717
        %v1760 = vsel %vm1742, %v1717, %v1719
        %v1761 = vsel %vm1742, %v1719, %v1721
        %v1762 = vsel %vm1742, %v1721, %v1723
        %v1763 = vsel %vm1742, %v1723, %v1725
        %v1764 = vsel %vm1742, %v1727, %v1729
        %v1765 = vsel %vm1742, %v1729, %v1731
        %v1766 = vsel %vm1742, %v1731, %v1733
        %v1767 = vsel %vm1742, %v1733, %v1735
        %v1768 = vsel %vm1742, %v1735, %v1737
        %v1769 = vsel %vm1742, %v1737, %v1739
        %v1770 = vsel %vm1742, %v1739, %v1741
        %v1799 = vadd.f32 %v1570, %v1743
        %v1800 = vadd.f32 %v1571, %v1744
        %v1801 = vadd.f32 %v1572, %v1745
        %v1802 = vadd.f32 %v1573, %v1746
        %v1803 = vadd.f32 %v1574, %v1747
        %v1804 = vadd.f32 %v1575, %v1748
        %v1805 = vadd.f32 %v1576, %v1749
        %v1806 = vadd.f32 %v1577, %v1750
        %v1807 = vadd.f32 %v1578, %v1751
        %v1808 = vadd.f32 %v1579, %v1752
        %v1809 = vadd.f32 %v1580, %v1753
        %v1810 = vadd.f32 %v1581, %v1754
        %v1811 = vadd.f32 %v1582, %v1755
        %v1812 = vadd.f32 %v1583, %v1756
        %v1813 = vadd.f32 %v1584, %v1757
        %v1814 = vadd.f32 %v1585, %v1758
        %v1815 = vadd.f32 %v1586, %v1759
        %v1816 = vadd.f32 %v1587, %v1760
        %v1817 = vadd.f32 %v1588, %v1761
        %v1818 = vadd.f32 %v1589, %v1762
        %v1819 = vadd.f32 %v1590, %v1763
        %v1820 = vadd.f32 %v1591, %v1764
        %v1821 = vadd.f32 %v1592, %v1765
        %v1822 = vadd.f32 %v1593, %v1766
        %v1823 = vadd.f32 %v1594, %v1767
        %v1824 = vadd.f32 %v1595, %v1768
        %v1825 = vadd.f32 %v1596, %v1769
        %v1826 = vadd.f32 %v1597, %v1770
        %1827 = vset.pattern.permute.xlu0 7
        %1828 = vperm.xlu0 %1827, %v340
        %v1829 = vpop.permute.xlu0 %1828
        %1831 = vset.pattern.permute.xlu0 7
        %1832 = vperm.xlu0 %1831, %v341
        %v1833 = vpop.permute.xlu0 %1832
        %1835 = vset.pattern.permute.xlu0 7
        %1836 = vperm.xlu0 %1835, %v342
        %v1837 = vpop.permute.xlu0 %1836
        %1839 = vset.pattern.permute.xlu0 7
        %1840 = vperm.xlu0 %1839, %v343
        %v1841 = vpop.permute.xlu0 %1840
        %v1843 = vmul.f32 %v1829, %v453
        %v1844 = vmul.f32 %v1829, %v454
        %v1845 = vmul.f32 %v1829, %v455
        %v1846 = vmul.f32 %v1829, %v456
        %v1847 = vmul.f32 %v1829, %v457
        %v1848 = vmul.f32 %v1829, %v458
        %v1849 = vmul.f32 %v1829, %v459
        %v1850 = vmul.f32 %v1829, %v460
        %v1851 = vmul.f32 %v1833, %v453
        %v1852 = vmul.f32 %v1833, %v454
        %v1853 = vmul.f32 %v1833, %v455
        %v1854 = vmul.f32 %v1833, %v456
        %v1855 = vmul.f32 %v1833, %v457
        %v1856 = vmul.f32 %v1833, %v458
        %v1857 = vmul.f32 %v1833, %v459
        %v1858 = vmul.f32 %v1833, %v460
        %v1859 = vmul.f32 %v1837, %v453
        %v1860 = vmul.f32 %v1837, %v454
        %v1861 = vmul.f32 %v1837, %v455
        %v1862 = vmul.f32 %v1837, %v456
        %v1863 = vmul.f32 %v1837, %v457
        %v1864 = vmul.f32 %v1837, %v458
        %v1865 = vmul.f32 %v1837, %v459
        %v1866 = vmul.f32 %v1837, %v460
        %v1867 = vmul.f32 %v1841, %v453
        %v1868 = vmul.f32 %v1841, %v454
        %v1869 = vmul.f32 %v1841, %v455
        %v1870 = vmul.f32 %v1841, %v456
        %v1871 = vmul.f32 %v1841, %v457
        %v1872 = vmul.f32 %v1841, %v458
        %v1873 = vmul.f32 %v1841, %v459
        %v1874 = vmul.f32 %v1841, %v460
        %1907 = vrot.lane.b32.xlu0 %v1843, 67
        %v1908 = vpop.permute.xlu0 %1907
        %1909 = vrot.lane.b32.xlu0 %v1844, 67
        %v1910 = vpop.permute.xlu0 %1909
        %1911 = vrot.lane.b32.xlu0 %v1845, 67
        %v1912 = vpop.permute.xlu0 %1911
        %1913 = vrot.lane.b32.xlu0 %v1846, 67
        %v1914 = vpop.permute.xlu0 %1913
        %1915 = vrot.lane.b32.xlu0 %v1847, 67
        %v1916 = vpop.permute.xlu0 %1915
        %1917 = vrot.lane.b32.xlu0 %v1848, 67
        %v1918 = vpop.permute.xlu0 %1917
        %1919 = vrot.lane.b32.xlu0 %v1849, 67
        %v1920 = vpop.permute.xlu0 %1919
        %1921 = vrot.lane.b32.xlu0 %v1850, 67
        %v1922 = vpop.permute.xlu0 %1921
        %1923 = vrot.lane.b32.xlu0 %v1851, 67
        %v1924 = vpop.permute.xlu0 %1923
        %1925 = vrot.lane.b32.xlu0 %v1852, 67
        %v1926 = vpop.permute.xlu0 %1925
        %1927 = vrot.lane.b32.xlu0 %v1853, 67
        %v1928 = vpop.permute.xlu0 %1927
        %1929 = vrot.lane.b32.xlu0 %v1854, 67
        %v1930 = vpop.permute.xlu0 %1929
        %1931 = vrot.lane.b32.xlu0 %v1855, 67
        %v1932 = vpop.permute.xlu0 %1931
        %1933 = vrot.lane.b32.xlu0 %v1856, 67
        %v1934 = vpop.permute.xlu0 %1933
        %1935 = vrot.lane.b32.xlu0 %v1857, 67
        %v1936 = vpop.permute.xlu0 %1935
        %1937 = vrot.lane.b32.xlu0 %v1858, 67
        %v1938 = vpop.permute.xlu0 %1937
        %1939 = vrot.lane.b32.xlu0 %v1859, 67
        %v1940 = vpop.permute.xlu0 %1939
        %1941 = vrot.lane.b32.xlu0 %v1860, 67
        %v1942 = vpop.permute.xlu0 %1941
        %1943 = vrot.lane.b32.xlu0 %v1861, 67
        %v1944 = vpop.permute.xlu0 %1943
        %1945 = vrot.lane.b32.xlu0 %v1862, 67
        %v1946 = vpop.permute.xlu0 %1945
        %1947 = vrot.lane.b32.xlu0 %v1863, 67
        %v1948 = vpop.permute.xlu0 %1947
        %1949 = vrot.lane.b32.xlu0 %v1864, 67
        %v1950 = vpop.permute.xlu0 %1949
        %1951 = vrot.lane.b32.xlu0 %v1865, 67
        %v1952 = vpop.permute.xlu0 %1951
        %1953 = vrot.lane.b32.xlu0 %v1866, 67
        %v1954 = vpop.permute.xlu0 %1953
        %1955 = vrot.lane.b32.xlu0 %v1867, 67
        %v1956 = vpop.permute.xlu0 %1955
        %1957 = vrot.lane.b32.xlu0 %v1868, 67
        %v1958 = vpop.permute.xlu0 %1957
        %1959 = vrot.lane.b32.xlu0 %v1869, 67
        %v1960 = vpop.permute.xlu0 %1959
        %1961 = vrot.lane.b32.xlu0 %v1870, 67
        %v1962 = vpop.permute.xlu0 %1961
        %1963 = vrot.lane.b32.xlu0 %v1871, 67
        %v1964 = vpop.permute.xlu0 %1963
        %1965 = vrot.lane.b32.xlu0 %v1872, 67
        %v1966 = vpop.permute.xlu0 %1965
        %1967 = vrot.lane.b32.xlu0 %v1873, 67
        %v1968 = vpop.permute.xlu0 %1967
        %1969 = vrot.lane.b32.xlu0 %v1874, 67
        %v1970 = vpop.permute.xlu0 %1969
        %vm1971 = vcmask 547840
        %v1972 = vsel %vm1971, %v1908, %v1910
        %v1973 = vsel %vm1971, %v1910, %v1912
        %v1974 = vsel %vm1971, %v1912, %v1914
        %v1975 = vsel %vm1971, %v1914, %v1916
        %v1976 = vsel %vm1971, %v1916, %v1918
        %v1977 = vsel %vm1971, %v1918, %v1920
        %v1978 = vsel %vm1971, %v1920, %v1922
        %v1979 = vsel %vm1971, %v1924, %v1926
        %v1980 = vsel %vm1971, %v1926, %v1928
        %v1981 = vsel %vm1971, %v1928, %v1930
        %v1982 = vsel %vm1971, %v1930, %v1932
        %v1983 = vsel %vm1971, %v1932, %v1934
        %v1984 = vsel %vm1971, %v1934, %v1936
        %v1985 = vsel %vm1971, %v1936, %v1938
        %v1986 = vsel %vm1971, %v1940, %v1942
        %v1987 = vsel %vm1971, %v1942, %v1944
        %v1988 = vsel %vm1971, %v1944, %v1946
        %v1989 = vsel %vm1971, %v1946, %v1948
        %v1990 = vsel %vm1971, %v1948, %v1950
        %v1991 = vsel %vm1971, %v1950, %v1952
        %v1992 = vsel %vm1971, %v1952, %v1954
        %v1993 = vsel %vm1971, %v1956, %v1958
        %v1994 = vsel %vm1971, %v1958, %v1960
        %v1995 = vsel %vm1971, %v1960, %v1962
        %v1996 = vsel %vm1971, %v1962, %v1964
        %v1997 = vsel %vm1971, %v1964, %v1966
        %v1998 = vsel %vm1971, %v1966, %v1968
        %v1999 = vsel %vm1971, %v1968, %v1970
        %v2028 = vadd.f32 %v1799, %v1972
        %v2029 = vadd.f32 %v1800, %v1973
        %v2030 = vadd.f32 %v1801, %v1974
        %v2031 = vadd.f32 %v1802, %v1975
        %v2032 = vadd.f32 %v1803, %v1976
        %v2033 = vadd.f32 %v1804, %v1977
        %v2034 = vadd.f32 %v1805, %v1978
        %v2035 = vadd.f32 %v1806, %v1979
        %v2036 = vadd.f32 %v1807, %v1980
        %v2037 = vadd.f32 %v1808, %v1981
        %v2038 = vadd.f32 %v1809, %v1982
        %v2039 = vadd.f32 %v1810, %v1983
        %v2040 = vadd.f32 %v1811, %v1984
        %v2041 = vadd.f32 %v1812, %v1985
        %v2042 = vadd.f32 %v1813, %v1986
        %v2043 = vadd.f32 %v1814, %v1987
        %v2044 = vadd.f32 %v1815, %v1988
        %v2045 = vadd.f32 %v1816, %v1989
        %v2046 = vadd.f32 %v1817, %v1990
        %v2047 = vadd.f32 %v1818, %v1991
        %v2048 = vadd.f32 %v1819, %v1992
        %v2049 = vadd.f32 %v1820, %v1993
        %v2050 = vadd.f32 %v1821, %v1994
        %v2051 = vadd.f32 %v1822, %v1995
        %v2052 = vadd.f32 %v1823, %v1996
        %v2053 = vadd.f32 %v1824, %v1997
        %v2054 = vadd.f32 %v1825, %v1998
        %v2055 = vadd.f32 %v1826, %v1999
        %2056 = vset.pattern.permute.xlu0 8
        %2057 = vperm.xlu0 %2056, %v340
        %v2058 = vpop.permute.xlu0 %2057
        %2060 = vset.pattern.permute.xlu0 8
        %2061 = vperm.xlu0 %2060, %v341
        %v2062 = vpop.permute.xlu0 %2061
        %2064 = vset.pattern.permute.xlu0 8
        %2065 = vperm.xlu0 %2064, %v342
        %v2066 = vpop.permute.xlu0 %2065
        %2068 = vset.pattern.permute.xlu0 8
        %2069 = vperm.xlu0 %2068, %v343
        %v2070 = vpop.permute.xlu0 %2069
        %v2072 = vmul.f32 %v2058, %v453
        %v2073 = vmul.f32 %v2058, %v454
        %v2074 = vmul.f32 %v2058, %v455
        %v2075 = vmul.f32 %v2058, %v456
        %v2076 = vmul.f32 %v2058, %v457
        %v2077 = vmul.f32 %v2058, %v458
        %v2078 = vmul.f32 %v2058, %v459
        %v2079 = vmul.f32 %v2058, %v460
        %v2080 = vmul.f32 %v2062, %v453
        %v2081 = vmul.f32 %v2062, %v454
        %v2082 = vmul.f32 %v2062, %v455
        %v2083 = vmul.f32 %v2062, %v456
        %v2084 = vmul.f32 %v2062, %v457
        %v2085 = vmul.f32 %v2062, %v458
        %v2086 = vmul.f32 %v2062, %v459
        %v2087 = vmul.f32 %v2062, %v460
        %v2088 = vmul.f32 %v2066, %v453
        %v2089 = vmul.f32 %v2066, %v454
        %v2090 = vmul.f32 %v2066, %v455
        %v2091 = vmul.f32 %v2066, %v456
        %v2092 = vmul.f32 %v2066, %v457
        %v2093 = vmul.f32 %v2066, %v458
        %v2094 = vmul.f32 %v2066, %v459
        %v2095 = vmul.f32 %v2066, %v460
        %v2096 = vmul.f32 %v2070, %v453
        %v2097 = vmul.f32 %v2070, %v454
        %v2098 = vmul.f32 %v2070, %v455
        %v2099 = vmul.f32 %v2070, %v456
        %v2100 = vmul.f32 %v2070, %v457
        %v2101 = vmul.f32 %v2070, %v458
        %v2102 = vmul.f32 %v2070, %v459
        %v2103 = vmul.f32 %v2070, %v460
        %2136 = vrot.lane.b32.xlu0 %v2072, 66
        %v2137 = vpop.permute.xlu0 %2136
        %2138 = vrot.lane.b32.xlu0 %v2073, 66
        %v2139 = vpop.permute.xlu0 %2138
        %2140 = vrot.lane.b32.xlu0 %v2074, 66
        %v2141 = vpop.permute.xlu0 %2140
        %2142 = vrot.lane.b32.xlu0 %v2075, 66
        %v2143 = vpop.permute.xlu0 %2142
        %2144 = vrot.lane.b32.xlu0 %v2076, 66
        %v2145 = vpop.permute.xlu0 %2144
        %2146 = vrot.lane.b32.xlu0 %v2077, 66
        %v2147 = vpop.permute.xlu0 %2146
        %2148 = vrot.lane.b32.xlu0 %v2078, 66
        %v2149 = vpop.permute.xlu0 %2148
        %2150 = vrot.lane.b32.xlu0 %v2079, 66
        %v2151 = vpop.permute.xlu0 %2150
        %2152 = vrot.lane.b32.xlu0 %v2080, 66
        %v2153 = vpop.permute.xlu0 %2152
        %2154 = vrot.lane.b32.xlu0 %v2081, 66
        %v2155 = vpop.permute.xlu0 %2154
        %2156 = vrot.lane.b32.xlu0 %v2082, 66
        %v2157 = vpop.permute.xlu0 %2156
        %2158 = vrot.lane.b32.xlu0 %v2083, 66
        %v2159 = vpop.permute.xlu0 %2158
        %2160 = vrot.lane.b32.xlu0 %v2084, 66
        %v2161 = vpop.permute.xlu0 %2160
        %2162 = vrot.lane.b32.xlu0 %v2085, 66
        %v2163 = vpop.permute.xlu0 %2162
        %2164 = vrot.lane.b32.xlu0 %v2086, 66
        %v2165 = vpop.permute.xlu0 %2164
        %2166 = vrot.lane.b32.xlu0 %v2087, 66
        %v2167 = vpop.permute.xlu0 %2166
        %2168 = vrot.lane.b32.xlu0 %v2088, 66
        %v2169 = vpop.permute.xlu0 %2168
        %2170 = vrot.lane.b32.xlu0 %v2089, 66
        %v2171 = vpop.permute.xlu0 %2170
        %2172 = vrot.lane.b32.xlu0 %v2090, 66
        %v2173 = vpop.permute.xlu0 %2172
        %2174 = vrot.lane.b32.xlu0 %v2091, 66
        %v2175 = vpop.permute.xlu0 %2174
        %2176 = vrot.lane.b32.xlu0 %v2092, 66
        %v2177 = vpop.permute.xlu0 %2176
        %2178 = vrot.lane.b32.xlu0 %v2093, 66
        %v2179 = vpop.permute.xlu0 %2178
        %2180 = vrot.lane.b32.xlu0 %v2094, 66
        %v2181 = vpop.permute.xlu0 %2180
        %2182 = vrot.lane.b32.xlu0 %v2095, 66
        %v2183 = vpop.permute.xlu0 %2182
        %2184 = vrot.lane.b32.xlu0 %v2096, 66
        %v2185 = vpop.permute.xlu0 %2184
        %2186 = vrot.lane.b32.xlu0 %v2097, 66
        %v2187 = vpop.permute.xlu0 %2186
        %2188 = vrot.lane.b32.xlu0 %v2098, 66
        %v2189 = vpop.permute.xlu0 %2188
        %2190 = vrot.lane.b32.xlu0 %v2099, 66
        %v2191 = vpop.permute.xlu0 %2190
        %2192 = vrot.lane.b32.xlu0 %v2100, 66
        %v2193 = vpop.permute.xlu0 %2192
        %2194 = vrot.lane.b32.xlu0 %v2101, 66
        %v2195 = vpop.permute.xlu0 %2194
        %2196 = vrot.lane.b32.xlu0 %v2102, 66
        %v2197 = vpop.permute.xlu0 %2196
        %2198 = vrot.lane.b32.xlu0 %v2103, 66
        %v2199 = vpop.permute.xlu0 %2198
        %vm2200 = vcmask 539648
        %v2201 = vsel %vm2200, %v2137, %v2139
        %v2202 = vsel %vm2200, %v2139, %v2141
        %v2203 = vsel %vm2200, %v2141, %v2143
        %v2204 = vsel %vm2200, %v2143, %v2145
        %v2205 = vsel %vm2200, %v2145, %v2147
        %v2206 = vsel %vm2200, %v2147, %v2149
        %v2207 = vsel %vm2200, %v2149, %v2151
        %v2208 = vsel %vm2200, %v2153, %v2155
        %v2209 = vsel %vm2200, %v2155, %v2157
        %v2210 = vsel %vm2200, %v2157, %v2159
        %v2211 = vsel %vm2200, %v2159, %v2161
        %v2212 = vsel %vm2200, %v2161, %v2163
        %v2213 = vsel %vm2200, %v2163, %v2165
        %v2214 = vsel %vm2200, %v2165, %v2167
        %v2215 = vsel %vm2200, %v2169, %v2171
        %v2216 = vsel %vm2200, %v2171, %v2173
        %v2217 = vsel %vm2200, %v2173, %v2175
        %v2218 = vsel %vm2200, %v2175, %v2177
        %v2219 = vsel %vm2200, %v2177, %v2179
        %v2220 = vsel %vm2200, %v2179, %v2181
        %v2221 = vsel %vm2200, %v2181, %v2183
        %v2222 = vsel %vm2200, %v2185, %v2187
        %v2223 = vsel %vm2200, %v2187, %v2189
        %v2224 = vsel %vm2200, %v2189, %v2191
        %v2225 = vsel %vm2200, %v2191, %v2193
        %v2226 = vsel %vm2200, %v2193, %v2195
        %v2227 = vsel %vm2200, %v2195, %v2197
        %v2228 = vsel %vm2200, %v2197, %v2199
        %v2257 = vadd.f32 %v2028, %v2201
        %v2258 = vadd.f32 %v2029, %v2202
        %v2259 = vadd.f32 %v2030, %v2203
        %v2260 = vadd.f32 %v2031, %v2204
        %v2261 = vadd.f32 %v2032, %v2205
        %v2262 = vadd.f32 %v2033, %v2206
        %v2263 = vadd.f32 %v2034, %v2207
        %v2264 = vadd.f32 %v2035, %v2208
        %v2265 = vadd.f32 %v2036, %v2209
        %v2266 = vadd.f32 %v2037, %v2210
        %v2267 = vadd.f32 %v2038, %v2211
        %v2268 = vadd.f32 %v2039, %v2212
        %v2269 = vadd.f32 %v2040, %v2213
        %v2270 = vadd.f32 %v2041, %v2214
        %v2271 = vadd.f32 %v2042, %v2215
        %v2272 = vadd.f32 %v2043, %v2216
        %v2273 = vadd.f32 %v2044, %v2217
        %v2274 = vadd.f32 %v2045, %v2218
        %v2275 = vadd.f32 %v2046, %v2219
        %v2276 = vadd.f32 %v2047, %v2220
        %v2277 = vadd.f32 %v2048, %v2221
        %v2278 = vadd.f32 %v2049, %v2222
        %v2279 = vadd.f32 %v2050, %v2223
        %v2280 = vadd.f32 %v2051, %v2224
        %v2281 = vadd.f32 %v2052, %v2225
        %v2282 = vadd.f32 %v2053, %v2226
        %v2283 = vadd.f32 %v2054, %v2227
        %v2284 = vadd.f32 %v2055, %v2228
        %v2285 = vld [vmem:[%s2] sm:$0xff]
        %v2286 = vld [vmem:[%s2 + $0x8] sm:$0xff]
        %v2287 = vld [vmem:[%s2 + $0x10] sm:$0xff]
        %v2288 = vld [vmem:[%s2 + $0x18] sm:$0xff]
        %2290 = vset.pattern.permute.xlu0 0
        %2291 = vperm.xlu0 %2290, %v2285
        %v2292 = vpop.permute.xlu0 %2291
        %2295 = vset.pattern.permute.xlu0 0
        %2296 = vperm.xlu0 %2295, %v2286
        %v2297 = vpop.permute.xlu0 %2296
        %2300 = vset.pattern.permute.xlu0 0
        %2301 = vperm.xlu0 %2300, %v2287
        %v2302 = vpop.permute.xlu0 %2301
        %2305 = vset.pattern.permute.xlu0 0
        %2306 = vperm.xlu0 %2305, %v2288
        %v2307 = vpop.permute.xlu0 %2306
        %v2309 = vadd.f32 %v2257, %v2292
        %v2310 = vadd.f32 %v2258, %v2292
        %v2311 = vadd.f32 %v2259, %v2292
        %v2312 = vadd.f32 %v2260, %v2292
        %v2313 = vadd.f32 %v2261, %v2292
        %v2314 = vadd.f32 %v2262, %v2292
        %v2315 = vadd.f32 %v2263, %v2292
        %v2316 = vadd.f32 %v2264, %v2297
        %v2317 = vadd.f32 %v2265, %v2297
        %v2318 = vadd.f32 %v2266, %v2297
        %v2319 = vadd.f32 %v2267, %v2297
        %v2320 = vadd.f32 %v2268, %v2297
        %v2321 = vadd.f32 %v2269, %v2297
        %v2322 = vadd.f32 %v2270, %v2297
        %v2323 = vadd.f32 %v2271, %v2302
        %v2324 = vadd.f32 %v2272, %v2302
        %v2325 = vadd.f32 %v2273, %v2302
        %v2326 = vadd.f32 %v2274, %v2302
        %v2327 = vadd.f32 %v2275, %v2302
        %v2328 = vadd.f32 %v2276, %v2302
        %v2329 = vadd.f32 %v2277, %v2302
        %v2330 = vadd.f32 %v2278, %v2307
        %v2331 = vadd.f32 %v2279, %v2307
        %v2332 = vadd.f32 %v2280, %v2307
        %v2333 = vadd.f32 %v2281, %v2307
        %v2334 = vadd.f32 %v2282, %v2307
        %v2335 = vadd.f32 %v2283, %v2307
        %v2336 = vadd.f32 %v2284, %v2307
        %v2337 = vmax.f32 %v2309, 0.0
        %v2338 = vmax.f32 %v2310, 0.0
        %v2339 = vmax.f32 %v2311, 0.0
        %v2340 = vmax.f32 %v2312, 0.0
        %v2341 = vmax.f32 %v2313, 0.0
        %v2342 = vmax.f32 %v2314, 0.0
        %v2343 = vmax.f32 %v2315, 0.0
        %v2344 = vmax.f32 %v2316, 0.0
        %v2345 = vmax.f32 %v2317, 0.0
        %v2346 = vmax.f32 %v2318, 0.0
        %v2347 = vmax.f32 %v2319, 0.0
        %v2348 = vmax.f32 %v2320, 0.0
        %v2349 = vmax.f32 %v2321, 0.0
        %v2350 = vmax.f32 %v2322, 0.0
        %v2351 = vmax.f32 %v2323, 0.0
        %v2352 = vmax.f32 %v2324, 0.0
        %v2353 = vmax.f32 %v2325, 0.0
        %v2354 = vmax.f32 %v2326, 0.0
        %v2355 = vmax.f32 %v2327, 0.0
        %v2356 = vmax.f32 %v2328, 0.0
        %v2357 = vmax.f32 %v2329, 0.0
        %v2358 = vmax.f32 %v2330, 0.0
        %v2359 = vmax.f32 %v2331, 0.0
        %v2360 = vmax.f32 %v2332, 0.0
        %v2361 = vmax.f32 %v2333, 0.0
        %v2362 = vmax.f32 %v2334, 0.0
        %v2363 = vmax.f32 %v2335, 0.0
        %v2364 = vmax.f32 %v2336, 0.0
        %2365 = vxpose.xlu0.b32.start [1/16] %v2337, 128
        %2366 = vxpose.xlu0.b32.cont [2/16] %v2344, 128
        %2367 = vxpose.xlu0.b32.cont [3/16] %v2351, 128
        %2368 = vxpose.xlu0.b32.cont [4/16] %v2358, 128
        %2369 = vxpose.xlu0.b32.cont [5/16] 0.0, 128
        %2370 = vxpose.xlu0.b32.cont [6/16] 0.0, 128
        %2371 = vxpose.xlu0.b32.cont [7/16] 0.0, 128
        %2372 = vxpose.xlu0.b32.cont [8/16] 0.0, 128
        %2373 = vxpose.xlu0.b32.cont [9/16] 0.0, 128
        %2374 = vxpose.xlu0.b32.cont [10/16] 0.0, 128
        %2375 = vxpose.xlu0.b32.cont [11/16] 0.0, 128
        %2376 = vxpose.xlu0.b32.cont [12/16] 0.0, 128
        %2377 = vxpose.xlu0.b32.cont [13/16] 0.0, 128
        %2378 = vxpose.xlu0.b32.cont [14/16] 0.0, 128
        %2379 = vxpose.xlu0.b32.cont [15/16] 0.0, 128
        %2380 = vxpose.xlu0.b32.end [16/16] 0.0, 128
        %v2381 = vpop.trf.xlu0
        %v2382 = vpop.trf.xlu0
        %v2383 = vpop.trf.xlu0
        %v2384 = vpop.trf.xlu0
        %v2385 = vpop.trf.xlu0
        %v2386 = vpop.trf.xlu0
        %v2387 = vpop.trf.xlu0
        %v2388 = vpop.trf.xlu0
        %v2389 = vpop.trf.xlu0
        %v2390 = vpop.trf.xlu0
        %v2391 = vpop.trf.xlu0
        %v2392 = vpop.trf.xlu0
        %v2393 = vpop.trf.xlu0
        %v2394 = vpop.trf.xlu0
        %v2395 = vpop.trf.xlu0
        %v2396 = vpop.trf.xlu0
        %2397 = vxpose.xlu0.b32.start [1/16] %v2338, 128
        %2398 = vxpose.xlu0.b32.cont [2/16] %v2345, 128
        %2399 = vxpose.xlu0.b32.cont [3/16] %v2352, 128
        %2400 = vxpose.xlu0.b32.cont [4/16] %v2359, 128
        %2401 = vxpose.xlu0.b32.cont [5/16] 0.0, 128
        %2402 = vxpose.xlu0.b32.cont [6/16] 0.0, 128
        %2403 = vxpose.xlu0.b32.cont [7/16] 0.0, 128
        %2404 = vxpose.xlu0.b32.cont [8/16] 0.0, 128
        %2405 = vxpose.xlu0.b32.cont [9/16] 0.0, 128
        %2406 = vxpose.xlu0.b32.cont [10/16] 0.0, 128
        %2407 = vxpose.xlu0.b32.cont [11/16] 0.0, 128
        %2408 = vxpose.xlu0.b32.cont [12/16] 0.0, 128
        %2409 = vxpose.xlu0.b32.cont [13/16] 0.0, 128
        %2410 = vxpose.xlu0.b32.cont [14/16] 0.0, 128
        %2411 = vxpose.xlu0.b32.cont [15/16] 0.0, 128
        %2412 = vxpose.xlu0.b32.end [16/16] 0.0, 128
        %v2413 = vpop.trf.xlu0
        %v2414 = vpop.trf.xlu0
        %v2415 = vpop.trf.xlu0
        %v2416 = vpop.trf.xlu0
        %v2417 = vpop.trf.xlu0
        %v2418 = vpop.trf.xlu0
        %v2419 = vpop.trf.xlu0
        %v2420 = vpop.trf.xlu0
        %v2421 = vpop.trf.xlu0
        %v2422 = vpop.trf.xlu0
        %v2423 = vpop.trf.xlu0
        %v2424 = vpop.trf.xlu0
        %v2425 = vpop.trf.xlu0
        %v2426 = vpop.trf.xlu0
        %v2427 = vpop.trf.xlu0
        %v2428 = vpop.trf.xlu0
        %2429 = vxpose.xlu0.b32.start [1/16] %v2339, 128
        %2430 = vxpose.xlu0.b32.cont [2/16] %v2346, 128
        %2431 = vxpose.xlu0.b32.cont [3/16] %v2353, 128
        %2432 = vxpose.xlu0.b32.cont [4/16] %v2360, 128
        %2433 = vxpose.xlu0.b32.cont [5/16] 0.0, 128
        %2434 = vxpose.xlu0.b32.cont [6/16] 0.0, 128
        %2435 = vxpose.xlu0.b32.cont [7/16] 0.0, 128
        %2436 = vxpose.xlu0.b32.cont [8/16] 0.0, 128
        %2437 = vxpose.xlu0.b32.cont [9/16] 0.0, 128
        %2438 = vxpose.xlu0.b32.cont [10/16] 0.0, 128
        %2439 = vxpose.xlu0.b32.cont [11/16] 0.0, 128
        %2440 = vxpose.xlu0.b32.cont [12/16] 0.0, 128
        %2441 = vxpose.xlu0.b32.cont [13/16] 0.0, 128
        %2442 = vxpose.xlu0.b32.cont [14/16] 0.0, 128
        %2443 = vxpose.xlu0.b32.cont [15/16] 0.0, 128
        %2444 = vxpose.xlu0.b32.end [16/16] 0.0, 128
        %v2445 = vpop.trf.xlu0
        %v2446 = vpop.trf.xlu0
        %v2447 = vpop.trf.xlu0
        %v2448 = vpop.trf.xlu0
        %v2449 = vpop.trf.xlu0
        %v2450 = vpop.trf.xlu0
        %v2451 = vpop.trf.xlu0
        %v2452 = vpop.trf.xlu0
        %v2453 = vpop.trf.xlu0
        %v2454 = vpop.trf.xlu0
        %v2455 = vpop.trf.xlu0
        %v2456 = vpop.trf.xlu0
        %v2457 = vpop.trf.xlu0
        %v2458 = vpop.trf.xlu0
        %v2459 = vpop.trf.xlu0
        %v2460 = vpop.trf.xlu0
        %2461 = vxpose.xlu0.b32.start [1/16] %v2340, 128
        %2462 = vxpose.xlu0.b32.cont [2/16] %v2347, 128
        %2463 = vxpose.xlu0.b32.cont [3/16] %v2354, 128
        %2464 = vxpose.xlu0.b32.cont [4/16] %v2361, 128
        %2465 = vxpose.xlu0.b32.cont [5/16] 0.0, 128
        %2466 = vxpose.xlu0.b32.cont [6/16] 0.0, 128
        %2467 = vxpose.xlu0.b32.cont [7/16] 0.0, 128
        %2468 = vxpose.xlu0.b32.cont [8/16] 0.0, 128
        %2469 = vxpose.xlu0.b32.cont [9/16] 0.0, 128
        %2470 = vxpose.xlu0.b32.cont [10/16] 0.0, 128
        %2471 = vxpose.xlu0.b32.cont [11/16] 0.0, 128
        %2472 = vxpose.xlu0.b32.cont [12/16] 0.0, 128
        %2473 = vxpose.xlu0.b32.cont [13/16] 0.0, 128
        %2474 = vxpose.xlu0.b32.cont [14/16] 0.0, 128
        %2475 = vxpose.xlu0.b32.cont [15/16] 0.0, 128
        %2476 = vxpose.xlu0.b32.end [16/16] 0.0, 128
        %v2477 = vpop.trf.xlu0
        %v2478 = vpop.trf.xlu0
        %v2479 = vpop.trf.xlu0
        %v2480 = vpop.trf.xlu0
        %v2481 = vpop.trf.xlu0
        %v2482 = vpop.trf.xlu0
        %v2483 = vpop.trf.xlu0
        %v2484 = vpop.trf.xlu0
        %v2485 = vpop.trf.xlu0
        %v2486 = vpop.trf.xlu0
        %v2487 = vpop.trf.xlu0
        %v2488 = vpop.trf.xlu0
        %v2489 = vpop.trf.xlu0
        %v2490 = vpop.trf.xlu0
        %v2491 = vpop.trf.xlu0
        %v2492 = vpop.trf.xlu0
        %2493 = vxpose.xlu0.b32.start [1/16] %v2341, 128
        %2494 = vxpose.xlu0.b32.cont [2/16] %v2348, 128
        %2495 = vxpose.xlu0.b32.cont [3/16] %v2355, 128
        %2496 = vxpose.xlu0.b32.cont [4/16] %v2362, 128
        %2497 = vxpose.xlu0.b32.cont [5/16] 0.0, 128
        %2498 = vxpose.xlu0.b32.cont [6/16] 0.0, 128
        %2499 = vxpose.xlu0.b32.cont [7/16] 0.0, 128
        %2500 = vxpose.xlu0.b32.cont [8/16] 0.0, 128
        %2501 = vxpose.xlu0.b32.cont [9/16] 0.0, 128
        %2502 = vxpose.xlu0.b32.cont [10/16] 0.0, 128
        %2503 = vxpose.xlu0.b32.cont [11/16] 0.0, 128
        %2504 = vxpose.xlu0.b32.cont [12/16] 0.0, 128
        %2505 = vxpose.xlu0.b32.cont [13/16] 0.0, 128
        %2506 = vxpose.xlu0.b32.cont [14/16] 0.0, 128
        %2507 = vxpose.xlu0.b32.cont [15/16] 0.0, 128
        %2508 = vxpose.xlu0.b32.end [16/16] 0.0, 128
        %v2509 = vpop.trf.xlu0
        %v2510 = vpop.trf.xlu0
        %v2511 = vpop.trf.xlu0
        %v2512 = vpop.trf.xlu0
        %v2513 = vpop.trf.xlu0
        %v2514 = vpop.trf.xlu0
        %v2515 = vpop.trf.xlu0
        %v2516 = vpop.trf.xlu0
        %v2517 = vpop.trf.xlu0
        %v2518 = vpop.trf.xlu0
        %v2519 = vpop.trf.xlu0
        %v2520 = vpop.trf.xlu0
        %v2521 = vpop.trf.xlu0
        %v2522 = vpop.trf.xlu0
        %v2523 = vpop.trf.xlu0
        %v2524 = vpop.trf.xlu0
        %2525 = vxpose.xlu0.b32.start [1/16] %v2342, 128
        %2526 = vxpose.xlu0.b32.cont [2/16] %v2349, 128
        %2527 = vxpose.xlu0.b32.cont [3/16] %v2356, 128
        %2528 = vxpose.xlu0.b32.cont [4/16] %v2363, 128
        %2529 = vxpose.xlu0.b32.cont [5/16] 0.0, 128
        %2530 = vxpose.xlu0.b32.cont [6/16] 0.0, 128
        %2531 = vxpose.xlu0.b32.cont [7/16] 0.0, 128
        %2532 = vxpose.xlu0.b32.cont [8/16] 0.0, 128
        %2533 = vxpose.xlu0.b32.cont [9/16] 0.0, 128
        %2534 = vxpose.xlu0.b32.cont [10/16] 0.0, 128
        %2535 = vxpose.xlu0.b32.cont [11/16] 0.0, 128
        %2536 = vxpose.xlu0.b32.cont [12/16] 0.0, 128
        %2537 = vxpose.xlu0.b32.cont [13/16] 0.0, 128
        %2538 = vxpose.xlu0.b32.cont [14/16] 0.0, 128
        %2539 = vxpose.xlu0.b32.cont [15/16] 0.0, 128
        %2540 = vxpose.xlu0.b32.end [16/16] 0.0, 128
        %v2541 = vpop.trf.xlu0
        %v2542 = vpop.trf.xlu0
        %v2543 = vpop.trf.xlu0
        %v2544 = vpop.trf.xlu0
        %v2545 = vpop.trf.xlu0
        %v2546 = vpop.trf.xlu0
        %v2547 = vpop.trf.xlu0
        %v2548 = vpop.trf.xlu0
        %v2549 = vpop.trf.xlu0
        %v2550 = vpop.trf.xlu0
        %v2551 = vpop.trf.xlu0
        %v2552 = vpop.trf.xlu0
        %v2553 = vpop.trf.xlu0
        %v2554 = vpop.trf.xlu0
        %v2555 = vpop.trf.xlu0
        %v2556 = vpop.trf.xlu0
        %2557 = vxpose.xlu0.b32.start [1/16] %v2343, 128
        %2558 = vxpose.xlu0.b32.cont [2/16] %v2350, 128
        %2559 = vxpose.xlu0.b32.cont [3/16] %v2357, 128
        %2560 = vxpose.xlu0.b32.cont [4/16] %v2364, 128
        %2561 = vxpose.xlu0.b32.cont [5/16] 0.0, 128
        %2562 = vxpose.xlu0.b32.cont [6/16] 0.0, 128
        %2563 = vxpose.xlu0.b32.cont [7/16] 0.0, 128
        %2564 = vxpose.xlu0.b32.cont [8/16] 0.0, 128
        %2565 = vxpose.xlu0.b32.cont [9/16] 0.0, 128
        %2566 = vxpose.xlu0.b32.cont [10/16] 0.0, 128
        %2567 = vxpose.xlu0.b32.cont [11/16] 0.0, 128
        %2568 = vxpose.xlu0.b32.cont [12/16] 0.0, 128
        %2569 = vxpose.xlu0.b32.cont [13/16] 0.0, 128
        %2570 = vxpose.xlu0.b32.cont [14/16] 0.0, 128
        %2571 = vxpose.xlu0.b32.cont [15/16] 0.0, 128
        %2572 = vxpose.xlu0.b32.end [16/16] 0.0, 128
        %v2573 = vpop.trf.xlu0
        %v2574 = vpop.trf.xlu0
        %v2575 = vpop.trf.xlu0
        %v2576 = vpop.trf.xlu0
        %v2577 = vpop.trf.xlu0
        %v2578 = vpop.trf.xlu0
        %v2579 = vpop.trf.xlu0
        %v2580 = vpop.trf.xlu0
        %v2581 = vpop.trf.xlu0
        %v2582 = vpop.trf.xlu0
        %v2583 = vpop.trf.xlu0
        %v2584 = vpop.trf.xlu0
        %v2585 = vpop.trf.xlu0
        %v2586 = vpop.trf.xlu0
        %v2587 = vpop.trf.xlu0
        %v2588 = vpop.trf.xlu0
        %vm2589 = vcmask 261120
        %2590 = vst.msk [vmem:[#allocation2] sm:$0xff] %vm2589, %v2381
        %2591 = vst.msk [vmem:[#allocation2 + $0x8] sm:$0xff] %vm2589, %v2382
        %2592 = vst.msk [vmem:[#allocation2 + $0x10] sm:$0xff] %vm2589, %v2383
        %2593 = vst.msk [vmem:[#allocation2 + $0x18] sm:$0xff] %vm2589, %v2384
        %2594 = vst.msk [vmem:[#allocation2 + $0x20] sm:$0xff] %vm2589, %v2385
        %2595 = vst.msk [vmem:[#allocation2 + $0x28] sm:$0xff] %vm2589, %v2386
        %2596 = vst.msk [vmem:[#allocation2 + $0x30] sm:$0xff] %vm2589, %v2387
        %2597 = vst.msk [vmem:[#allocation2 + $0x38] sm:$0xff] %vm2589, %v2388
        %2598 = vst.msk [vmem:[#allocation2 + $0x40] sm:$0xff] %vm2589, %v2389
        %2599 = vst.msk [vmem:[#allocation2 + $0x48] sm:$0xff] %vm2589, %v2390
        %2600 = vst.msk [vmem:[#allocation2 + $0x50] sm:$0xff] %vm2589, %v2391
        %2601 = vst.msk [vmem:[#allocation2 + $0x58] sm:$0xff] %vm2589, %v2392
        %2602 = vst.msk [vmem:[#allocation2 + $0x60] sm:$0xff] %vm2589, %v2393
        %2603 = vst.msk [vmem:[#allocation2 + $0x68] sm:$0xff] %vm2589, %v2394
        %2604 = vst.msk [vmem:[#allocation2 + $0x70] sm:$0xff] %vm2589, %v2395
        %2605 = vst.msk [vmem:[#allocation2 + $0x78] sm:$0xff] %vm2589, %v2396
        %2606 = vst.msk [vmem:[#allocation2 + $0x80] sm:$0xff] %vm2589, %v2413
        %2607 = vst.msk [vmem:[#allocation2 + $0x88] sm:$0xff] %vm2589, %v2414
        %2608 = vst.msk [vmem:[#allocation2 + $0x90] sm:$0xff] %vm2589, %v2415
        %2609 = vst.msk [vmem:[#allocation2 + $0x98] sm:$0xff] %vm2589, %v2416
        %2610 = vst.msk [vmem:[#allocation2 + $0xa0] sm:$0xff] %vm2589, %v2417
        %2611 = vst.msk [vmem:[#allocation2 + $0xa8] sm:$0xff] %vm2589, %v2418
        %2612 = vst.msk [vmem:[#allocation2 + $0xb0] sm:$0xff] %vm2589, %v2419
        %2613 = vst.msk [vmem:[#allocation2 + $0xb8] sm:$0xff] %vm2589, %v2420
        %2614 = vst.msk [vmem:[#allocation2 + $0xc0] sm:$0xff] %vm2589, %v2421
        %2615 = vst.msk [vmem:[#allocation2 + $0xc8] sm:$0xff] %vm2589, %v2422
        %2616 = vst.msk [vmem:[#allocation2 + $0xd0] sm:$0xff] %vm2589, %v2423
        %2617 = vst.msk [vmem:[#allocation2 + $0xd8] sm:$0xff] %vm2589, %v2424
        %2618 = vst.msk [vmem:[#allocation2 + $0xe0] sm:$0xff] %vm2589, %v2425
        %2619 = vst.msk [vmem:[#allocation2 + $0xe8] sm:$0xff] %vm2589, %v2426
        %2620 = vst.msk [vmem:[#allocation2 + $0xf0] sm:$0xff] %vm2589, %v2427
        %2621 = vst.msk [vmem:[#allocation2 + $0xf8] sm:$0xff] %vm2589, %v2428
        %2622 = vst.msk [vmem:[#allocation2 + $0x100] sm:$0xff] %vm2589, %v2445
        %2623 = vst.msk [vmem:[#allocation2 + $0x108] sm:$0xff] %vm2589, %v2446
        %2624 = vst.msk [vmem:[#allocation2 + $0x110] sm:$0xff] %vm2589, %v2447
        %2625 = vst.msk [vmem:[#allocation2 + $0x118] sm:$0xff] %vm2589, %v2448
        %2626 = vst.msk [vmem:[#allocation2 + $0x120] sm:$0xff] %vm2589, %v2449
        %2627 = vst.msk [vmem:[#allocation2 + $0x128] sm:$0xff] %vm2589, %v2450
        %2628 = vst.msk [vmem:[#allocation2 + $0x130] sm:$0xff] %vm2589, %v2451
        %2629 = vst.msk [vmem:[#allocation2 + $0x138] sm:$0xff] %vm2589, %v2452
        %2630 = vst.msk [vmem:[#allocation2 + $0x140] sm:$0xff] %vm2589, %v2453
        %2631 = vst.msk [vmem:[#allocation2 + $0x148] sm:$0xff] %vm2589, %v2454
        %2632 = vst.msk [vmem:[#allocation2 + $0x150] sm:$0xff] %vm2589, %v2455
        %2633 = vst.msk [vmem:[#allocation2 + $0x158] sm:$0xff] %vm2589, %v2456
        %2634 = vst.msk [vmem:[#allocation2 + $0x160] sm:$0xff] %vm2589, %v2457
        %2635 = vst.msk [vmem:[#allocation2 + $0x168] sm:$0xff] %vm2589, %v2458
        %2636 = vst.msk [vmem:[#allocation2 + $0x170] sm:$0xff] %vm2589, %v2459
        %2637 = vst.msk [vmem:[#allocation2 + $0x178] sm:$0xff] %vm2589, %v2460
        %2638 = vst.msk [vmem:[#allocation2 + $0x180] sm:$0xff] %vm2589, %v2477
        %2639 = vst.msk [vmem:[#allocation2 + $0x188] sm:$0xff] %vm2589, %v2478
        %2640 = vst.msk [vmem:[#allocation2 + $0x190] sm:$0xff] %vm2589, %v2479
        %2641 = vst.msk [vmem:[#allocation2 + $0x198] sm:$0xff] %vm2589, %v2480
        %2642 = vst.msk [vmem:[#allocation2 + $0x1a0] sm:$0xff] %vm2589, %v2481
        %2643 = vst.msk [vmem:[#allocation2 + $0x1a8] sm:$0xff] %vm2589, %v2482
        %2644 = vst.msk [vmem:[#allocation2 + $0x1b0] sm:$0xff] %vm2589, %v2483
        %2645 = vst.msk [vmem:[#allocation2 + $0x1b8] sm:$0xff] %vm2589, %v2484
        %2646 = vst.msk [vmem:[#allocation2 + $0x1c0] sm:$0xff] %vm2589, %v2485
        %2647 = vst.msk [vmem:[#allocation2 + $0x1c8] sm:$0xff] %vm2589, %v2486
        %2648 = vst.msk [vmem:[#allocation2 + $0x1d0] sm:$0xff] %vm2589, %v2487
        %2649 = vst.msk [vmem:[#allocation2 + $0x1d8] sm:$0xff] %vm2589, %v2488
        %2650 = vst.msk [vmem:[#allocation2 + $0x1e0] sm:$0xff] %vm2589, %v2489
        %2651 = vst.msk [vmem:[#allocation2 + $0x1e8] sm:$0xff] %vm2589, %v2490
        %2652 = vst.msk [vmem:[#allocation2 + $0x1f0] sm:$0xff] %vm2589, %v2491
        %2653 = vst.msk [vmem:[#allocation2 + $0x1f8] sm:$0xff] %vm2589, %v2492
        %2654 = vst.msk [vmem:[#allocation2 + $0x200] sm:$0xff] %vm2589, %v2509
        %2655 = vst.msk [vmem:[#allocation2 + $0x208] sm:$0xff] %vm2589, %v2510
        %2656 = vst.msk [vmem:[#allocation2 + $0x210] sm:$0xff] %vm2589, %v2511
        %2657 = vst.msk [vmem:[#allocation2 + $0x218] sm:$0xff] %vm2589, %v2512
        %2658 = vst.msk [vmem:[#allocation2 + $0x220] sm:$0xff] %vm2589, %v2513
        %2659 = vst.msk [vmem:[#allocation2 + $0x228] sm:$0xff] %vm2589, %v2514
        %2660 = vst.msk [vmem:[#allocation2 + $0x230] sm:$0xff] %vm2589, %v2515
        %2661 = vst.msk [vmem:[#allocation2 + $0x238] sm:$0xff] %vm2589, %v2516
        %2662 = vst.msk [vmem:[#allocation2 + $0x240] sm:$0xff] %vm2589, %v2517
        %2663 = vst.msk [vmem:[#allocation2 + $0x248] sm:$0xff] %vm2589, %v2518
        %2664 = vst.msk [vmem:[#allocation2 + $0x250] sm:$0xff] %vm2589, %v2519
        %2665 = vst.msk [vmem:[#allocation2 + $0x258] sm:$0xff] %vm2589, %v2520
        %2666 = vst.msk [vmem:[#allocation2 + $0x260] sm:$0xff] %vm2589, %v2521
        %2667 = vst.msk [vmem:[#allocation2 + $0x268] sm:$0xff] %vm2589, %v2522
        %2668 = vst.msk [vmem:[#allocation2 + $0x270] sm:$0xff] %vm2589, %v2523
        %2669 = vst.msk [vmem:[#allocation2 + $0x278] sm:$0xff] %vm2589, %v2524
        %2670 = vst.msk [vmem:[#allocation2 + $0x280] sm:$0xff] %vm2589, %v2541
        %2671 = vst.msk [vmem:[#allocation2 + $0x288] sm:$0xff] %vm2589, %v2542
        %2672 = vst.msk [vmem:[#allocation2 + $0x290] sm:$0xff] %vm2589, %v2543
        %2673 = vst.msk [vmem:[#allocation2 + $0x298] sm:$0xff] %vm2589, %v2544
        %2674 = vst.msk [vmem:[#allocation2 + $0x2a0] sm:$0xff] %vm2589, %v2545
        %2675 = vst.msk [vmem:[#allocation2 + $0x2a8] sm:$0xff] %vm2589, %v2546
        %2676 = vst.msk [vmem:[#allocation2 + $0x2b0] sm:$0xff] %vm2589, %v2547
        %2677 = vst.msk [vmem:[#allocation2 + $0x2b8] sm:$0xff] %vm2589, %v2548
        %2678 = vst.msk [vmem:[#allocation2 + $0x2c0] sm:$0xff] %vm2589, %v2549
        %2679 = vst.msk [vmem:[#allocation2 + $0x2c8] sm:$0xff] %vm2589, %v2550
        %2680 = vst.msk [vmem:[#allocation2 + $0x2d0] sm:$0xff] %vm2589, %v2551
        %2681 = vst.msk [vmem:[#allocation2 + $0x2d8] sm:$0xff] %vm2589, %v2552
        %2682 = vst.msk [vmem:[#allocation2 + $0x2e0] sm:$0xff] %vm2589, %v2553
        %2683 = vst.msk [vmem:[#allocation2 + $0x2e8] sm:$0xff] %vm2589, %v2554
        %2684 = vst.msk [vmem:[#allocation2 + $0x2f0] sm:$0xff] %vm2589, %v2555
        %2685 = vst.msk [vmem:[#allocation2 + $0x2f8] sm:$0xff] %vm2589, %v2556
        %2686 = vst.msk [vmem:[#allocation2 + $0x300] sm:$0xff] %vm2589, %v2573
        %2687 = vst.msk [vmem:[#allocation2 + $0x308] sm:$0xff] %vm2589, %v2574
        %2688 = vst.msk [vmem:[#allocation2 + $0x310] sm:$0xff] %vm2589, %v2575
        %2689 = vst.msk [vmem:[#allocation2 + $0x318] sm:$0xff] %vm2589, %v2576
        %2690 = vst.msk [vmem:[#allocation2 + $0x320] sm:$0xff] %vm2589, %v2577
        %2691 = vst.msk [vmem:[#allocation2 + $0x328] sm:$0xff] %vm2589, %v2578
        %2692 = vst.msk [vmem:[#allocation2 + $0x330] sm:$0xff] %vm2589, %v2579
        %2693 = vst.msk [vmem:[#allocation2 + $0x338] sm:$0xff] %vm2589, %v2580
        %2694 = vst.msk [vmem:[#allocation2 + $0x340] sm:$0xff] %vm2589, %v2581
        %2695 = vst.msk [vmem:[#allocation2 + $0x348] sm:$0xff] %vm2589, %v2582
        %2696 = vst.msk [vmem:[#allocation2 + $0x350] sm:$0xff] %vm2589, %v2583
        %2697 = vst.msk [vmem:[#allocation2 + $0x358] sm:$0xff] %vm2589, %v2584
        %2698 = vst.msk [vmem:[#allocation2 + $0x360] sm:$0xff] %vm2589, %v2585
        %2699 = vst.msk [vmem:[#allocation2 + $0x368] sm:$0xff] %vm2589, %v2586
        %2700 = vst.msk [vmem:[#allocation2 + $0x370] sm:$0xff] %vm2589, %v2587
        %2701 = vst.msk [vmem:[#allocation2 + $0x378] sm:$0xff] %vm2589, %v2588
        %2702 = vst.msk [vmem:[#allocation3] sm:$0xff] %vm2589, 0.0
        %2703 = vst.msk [vmem:[#allocation3 + $0x8] sm:$0xff] %vm2589, 0.0
        %2704 = vst.msk [vmem:[#allocation3 + $0x10] sm:$0xff] %vm2589, 0.0
        %2705 = vst.msk [vmem:[#allocation3 + $0x18] sm:$0xff] %vm2589, 0.0
        %2706 = vst.msk [vmem:[#allocation3 + $0x20] sm:$0xff] %vm2589, 0.0
        %2707 = vst.msk [vmem:[#allocation3 + $0x28] sm:$0xff] %vm2589, 0.0
        %2708 = vst.msk [vmem:[#allocation3 + $0x30] sm:$0xff] %vm2589, 0.0
        %2709 = vst.msk [vmem:[#allocation3 + $0x38] sm:$0xff] %vm2589, 0.0
        %2710 = vst.msk [vmem:[#allocation3 + $0x40] sm:$0xff] %vm2589, 0.0
        %2711 = vst.msk [vmem:[#allocation3 + $0x48] sm:$0xff] %vm2589, 0.0
        %2712 = vst.msk [vmem:[#allocation3 + $0x50] sm:$0xff] %vm2589, 0.0
        %2713 = vst.msk [vmem:[#allocation3 + $0x58] sm:$0xff] %vm2589, 0.0
        %2714 = vst.msk [vmem:[#allocation3 + $0x60] sm:$0xff] %vm2589, 0.0
        %2715 = vst.msk [vmem:[#allocation3 + $0x68] sm:$0xff] %vm2589, 0.0
        %2716 = vst.msk [vmem:[#allocation3 + $0x70] sm:$0xff] %vm2589, 0.0
        %2717 = vst.msk [vmem:[#allocation3 + $0x78] sm:$0xff] %vm2589, 0.0
        %2718 = vst.msk [vmem:[#allocation3 + $0x80] sm:$0xff] %vm2589, 0.0
        %2719 = vst.msk [vmem:[#allocation3 + $0x88] sm:$0xff] %vm2589, 0.0
        %2720 = vst.msk [vmem:[#allocation3 + $0x90] sm:$0xff] %vm2589, 0.0
        %2721 = vst.msk [vmem:[#allocation3 + $0x98] sm:$0xff] %vm2589, 0.0
        %2722 = vst.msk [vmem:[#allocation3 + $0xa0] sm:$0xff] %vm2589, 0.0
        %2723 = vst.msk [vmem:[#allocation3 + $0xa8] sm:$0xff] %vm2589, 0.0
        %2724 = vst.msk [vmem:[#allocation3 + $0xb0] sm:$0xff] %vm2589, 0.0
        %2725 = vst.msk [vmem:[#allocation3 + $0xb8] sm:$0xff] %vm2589, 0.0
        %2726 = vst.msk [vmem:[#allocation3 + $0xc0] sm:$0xff] %vm2589, 0.0
        %2727 = vst.msk [vmem:[#allocation3 + $0xc8] sm:$0xff] %vm2589, 0.0
        %2728 = vst.msk [vmem:[#allocation3 + $0xd0] sm:$0xff] %vm2589, 0.0
        %2729 = vst.msk [vmem:[#allocation3 + $0xd8] sm:$0xff] %vm2589, 0.0
        %2730 = vst.msk [vmem:[#allocation3 + $0xe0] sm:$0xff] %vm2589, 0.0
        %2731 = vst.msk [vmem:[#allocation3 + $0xe8] sm:$0xff] %vm2589, 0.0
        %2732 = vst.msk [vmem:[#allocation3 + $0xf0] sm:$0xff] %vm2589, 0.0
        %2733 = vst.msk [vmem:[#allocation3 + $0xf8] sm:$0xff] %vm2589, 0.0
        %2734 = vst.msk [vmem:[#allocation3 + $0x100] sm:$0xff] %vm2589, 0.0
        %2735 = vst.msk [vmem:[#allocation3 + $0x108] sm:$0xff] %vm2589, 0.0
        %2736 = vst.msk [vmem:[#allocation3 + $0x110] sm:$0xff] %vm2589, 0.0
        %2737 = vst.msk [vmem:[#allocation3 + $0x118] sm:$0xff] %vm2589, 0.0
        %2738 = vst.msk [vmem:[#allocation3 + $0x120] sm:$0xff] %vm2589, 0.0
        %2739 = vst.msk [vmem:[#allocation3 + $0x128] sm:$0xff] %vm2589, 0.0
        %v2740 = vld [vmem:[#allocation2] sm:$0xff]
        %v2741 = vld [vmem:[#allocation2 + $0x8] sm:$0xff]
        %v2742 = vld [vmem:[#allocation2 + $0x10] sm:$0xff]
        %v2743 = vld [vmem:[#allocation2 + $0x18] sm:$0xf]
        %v2744 = vld [vmem:[#allocation2 + $0x1] sm:$0xff]
        %v2745 = vld [vmem:[#allocation2 + $0x9] sm:$0xff]
        %v2746 = vld [vmem:[#allocation2 + $0x11] sm:$0xff]
        %v2747 = vld [vmem:[#allocation2 + $0x19] sm:$0xf]
        %v2748 = vld [vmem:[#allocation2 + $0x1e] sm:$0xff]
        %v2749 = vld [vmem:[#allocation2 + $0x26] sm:$0xff]
        %v2750 = vld [vmem:[#allocation2 + $0x2e] sm:$0xff]
        %v2751 = vld [vmem:[#allocation2 + $0x36] sm:$0xf]
        %v2752 = vld [vmem:[#allocation2 + $0x1f] sm:$0xff]
        %v2753 = vld [vmem:[#allocation2 + $0x27] sm:$0xff]
        %v2754 = vld [vmem:[#allocation2 + $0x2f] sm:$0xff]
        %v2755 = vld [vmem:[#allocation2 + $0x37] sm:$0xf]
        %v2756 = vmax.f32 %v2740, %v2744
        %v2757 = vmax.f32 %v2741, %v2745
        %v2758 = vmax.f32 %v2742, %v2746
        %v2759 = vmax.f32 %v2743, %v2747
        %v2760 = vmax.f32 %v2748, %v2752
        %v2761 = vmax.f32 %v2749, %v2753
        %v2762 = vmax.f32 %v2750, %v2754
        %v2763 = vmax.f32 %v2751, %v2755
        %v2764 = vmax.f32 %v2756, %v2760
        %v2765 = vmax.f32 %v2757, %v2761
        %v2766 = vmax.f32 %v2758, %v2762
        %v2767 = vmax.f32 %v2759, %v2763
        %v2768 = vld [vmem:[#allocation9] sm:$0xff]
        %v2769 = vld [vmem:[#allocation9 + $0x8] sm:$0x3f]
        %vm2770 = vcmask 228352
        %v2772 = vsel %vm2770, %v2768, 0
        %v2775 = vsel %vm2770, %v2769, 0
        %vm2777 = vcmask 1043456
        %v2779 = vsel %vm2777, %v2767, 0
        %2781 = vmatpush.msra.mxu0 0.0
        %2782 = vmatpush.msra.mxu0 0.0
        %2783 = vmatpush.msra.mxu0 0.0
        %2784 = vmatpush.msra.mxu0 0.0
        %2785 = vmatpush.msra.mxu0 0.0
        %2786 = vmatpush.msra.mxu0 0.0
        %2787 = vmatpush.msra.mxu0 0.0
        %2788 = vmatpush.msra.mxu0 0.0
        %2789 = vmatpush.msra.mxu0 0.0
        %2790 = vmatpush.msra.mxu0 0.0
        %2791 = vmatpush.msra.mxu0 0.0
        %2792 = vmatpush.msra.mxu0 0.0
        %2793 = vmatpush.msra.mxu0 %v2779
        %2794 = vmatpush.msra.mxu0 %v2766
        %2795 = vmatpush.msra.mxu0 %v2765
        %2796 = vmatpush.msra.mxu0 %v2764
        %2797 = vmatmul.f32.gmra.mxu0 %v2772
        %v2798 = vpop.f32.mrf.mxu0
        %v2799 = vadd.f32 0.0, %v2798
        %2800 = vmatmul.f32.gmra.mxu0 %v2775
        %v2801 = vpop.f32.mrf.mxu0
        %v2802 = vadd.f32 0.0, %v2801
        %2803 = vdwg.mxu0
        %2804 = vst.msk [vmem:[#allocation3 + $0x11] sm:$0xff] %vm2589, %v2799
        %vm2805 = vcmask 259072
        %2806 = vst.msk [vmem:[#allocation3 + $0x19] sm:$0x3f] %vm2805, %v2802
        %v2807 = vld [vmem:[#allocation2 + $0x3c] sm:$0xff]
        %v2808 = vld [vmem:[#allocation2 + $0x44] sm:$0xff]
        %v2809 = vld [vmem:[#allocation2 + $0x4c] sm:$0xff]
        %v2810 = vld [vmem:[#allocation2 + $0x54] sm:$0xf]
        %v2811 = vld [vmem:[#allocation2 + $0x3d] sm:$0xff]
        %v2812 = vld [vmem:[#allocation2 + $0x45] sm:$0xff]
        %v2813 = vld [vmem:[#allocation2 + $0x4d] sm:$0xff]
        %v2814 = vld [vmem:[#allocation2 + $0x55] sm:$0xf]
        %v2815 = vld [vmem:[#allocation2 + $0x5a] sm:$0xff]
        %v2816 = vld [vmem:[#allocation2 + $0x62] sm:$0xff]
        %v2817 = vld [vmem:[#allocation2 + $0x6a] sm:$0xff]
        %v2818 = vld [vmem:[#allocation2 + $0x72] sm:$0xf]
        %v2819 = vld [vmem:[#allocation2 + $0x5b] sm:$0xff]
        %v2820 = vld [vmem:[#allocation2 + $0x63] sm:$0xff]
        %v2821 = vld [vmem:[#allocation2 + $0x6b] sm:$0xff]
        %v2822 = vld [vmem:[#allocation2 + $0x73] sm:$0xf]
        %v2823 = vmax.f32 %v2807, %v2811
        %v2824 = vmax.f32 %v2808, %v2812
        %v2825 = vmax.f32 %v2809, %v2813
        %v2826 = vmax.f32 %v2810, %v2814
        %v2827 = vmax.f32 %v2815, %v2819
        %v2828 = vmax.f32 %v2816, %v2820
        %v2829 = vmax.f32 %v2817, %v2821
        %v2830 = vmax.f32 %v2818, %v2822
        %v2831 = vmax.f32 %v2823, %v2827
        %v2832 = vmax.f32 %v2824, %v2828
        %v2833 = vmax.f32 %v2825, %v2829
        %v2834 = vmax.f32 %v2826, %v2830
        %v2835 = vld [vmem:[#allocation9] sm:$0xff]
        %v2836 = vld [vmem:[#allocation9 + $0x8] sm:$0x3f]
        %v2838 = vsel %vm2770, %v2835, 0
        %v2841 = vsel %vm2770, %v2836, 0
        %v2844 = vsel %vm2777, %v2834, 0
        %2846 = vmatpush.msra.mxu0 0.0
        %2847 = vmatpush.msra.mxu0 0.0
        %2848 = vmatpush.msra.mxu0 0.0
        %2849 = vmatpush.msra.mxu0 0.0
        %2850 = vmatpush.msra.mxu0 0.0
        %2851 = vmatpush.msra.mxu0 0.0
        %2852 = vmatpush.msra.mxu0 0.0
        %2853 = vmatpush.msra.mxu0 0.0
        %2854 = vmatpush.msra.mxu0 0.0
        %2855 = vmatpush.msra.mxu0 0.0
        %2856 = vmatpush.msra.mxu0 0.0
        %2857 = vmatpush.msra.mxu0 0.0
        %2858 = vmatpush.msra.mxu0 %v2844
        %2859 = vmatpush.msra.mxu0 %v2833
        %2860 = vmatpush.msra.mxu0 %v2832
        %2861 = vmatpush.msra.mxu0 %v2831
        %2862 = vmatmul.f32.gmra.mxu0 %v2838
        %v2863 = vpop.f32.mrf.mxu0
        %v2864 = vadd.f32 0.0, %v2863
        %2865 = vmatmul.f32.gmra.mxu0 %v2841
        %v2866 = vpop.f32.mrf.mxu0
        %v2867 = vadd.f32 0.0, %v2866
        %2868 = vdwg.mxu0
        %2869 = vst.msk [vmem:[#allocation3 + $0x21] sm:$0xff] %vm2589, %v2864
        %2870 = vst.msk [vmem:[#allocation3 + $0x29] sm:$0x3f] %vm2805, %v2867
        %v2871 = vld [vmem:[#allocation2 + $0x78] sm:$0xff]
        %v2872 = vld [vmem:[#allocation2 + $0x80] sm:$0xff]
        %v2873 = vld [vmem:[#allocation2 + $0x88] sm:$0xff]
        %v2874 = vld [vmem:[#allocation2 + $0x90] sm:$0xf]
        %v2875 = vld [vmem:[#allocation2 + $0x79] sm:$0xff]
        %v2876 = vld [vmem:[#allocation2 + $0x81] sm:$0xff]
        %v2877 = vld [vmem:[#allocation2 + $0x89] sm:$0xff]
        %v2878 = vld [vmem:[#allocation2 + $0x91] sm:$0xf]
        %v2879 = vld [vmem:[#allocation2 + $0x96] sm:$0xff]
        %v2880 = vld [vmem:[#allocation2 + $0x9e] sm:$0xff]
        %v2881 = vld [vmem:[#allocation2 + $0xa6] sm:$0xff]
        %v2882 = vld [vmem:[#allocation2 + $0xae] sm:$0xf]
        %v2883 = vld [vmem:[#allocation2 + $0x97] sm:$0xff]
        %v2884 = vld [vmem:[#allocation2 + $0x9f] sm:$0xff]
        %v2885 = vld [vmem:[#allocation2 + $0xa7] sm:$0xff]
        %v2886 = vld [vmem:[#allocation2 + $0xaf] sm:$0xf]
        %v2887 = vmax.f32 %v2871, %v2875
        %v2888 = vmax.f32 %v2872, %v2876
        %v2889 = vmax.f32 %v2873, %v2877
        %v2890 = vmax.f32 %v2874, %v2878
        %v2891 = vmax.f32 %v2879, %v2883
        %v2892 = vmax.f32 %v2880, %v2884
        %v2893 = vmax.f32 %v2881, %v2885
        %v2894 = vmax.f32 %v2882, %v2886
        %v2895 = vmax.f32 %v2887, %v2891
        %v2896 = vmax.f32 %v2888, %v2892
        %v2897 = vmax.f32 %v2889, %v2893
        %v2898 = vmax.f32 %v2890, %v2894
        %v2899 = vld [vmem:[#allocation9] sm:$0xff]
        %v2900 = vld [vmem:[#allocation9 + $0x8] sm:$0x3f]
        %v2902 = vsel %vm2770, %v2899, 0
        %v2905 = vsel %vm2770, %v2900, 0
        %v2908 = vsel %vm2777, %v2898, 0
        %2910 = vmatpush.msra.mxu0 0.0
        %2911 = vmatpush.msra.mxu0 0.0
        %2912 = vmatpush.msra.mxu0 0.0
        %2913 = vmatpush.msra.mxu0 0.0
        %2914 = vmatpush.msra.mxu0 0.0
        %2915 = vmatpush.msra.mxu0 0.0
        %2916 = vmatpush.msra.mxu0 0.0
        %2917 = vmatpush.msra.mxu0 0.0
        %2918 = vmatpush.msra.mxu0 0.0
        %2919 = vmatpush.msra.mxu0 0.0
        %2920 = vmatpush.msra.mxu0 0.0
        %2921 = vmatpush.msra.mxu0 0.0
        %2922 = vmatpush.msra.mxu0 %v2908
        %2923 = vmatpush.msra.mxu0 %v2897
        %2924 = vmatpush.msra.mxu0 %v2896
        %2925 = vmatpush.msra.mxu0 %v2895
        %2926 = vmatmul.f32.gmra.mxu0 %v2902
        %v2927 = vpop.f32.mrf.mxu0
        %v2928 = vadd.f32 0.0, %v2927
        %2929 = vmatmul.f32.gmra.mxu0 %v2905
        %v2930 = vpop.f32.mrf.mxu0
        %v2931 = vadd.f32 0.0, %v2930
        %2932 = vdwg.mxu0
        %2933 = vst.msk [vmem:[#allocation3 + $0x31] sm:$0xff] %vm2589, %v2928
        %2934 = vst.msk [vmem:[#allocation3 + $0x39] sm:$0x3f] %vm2805, %v2931
        %v2935 = vld [vmem:[#allocation2 + $0xb4] sm:$0xff]
        %v2936 = vld [vmem:[#allocation2 + $0xbc] sm:$0xff]
        %v2937 = vld [vmem:[#allocation2 + $0xc4] sm:$0xff]
        %v2938 = vld [vmem:[#allocation2 + $0xcc] sm:$0xf]
        %v2939 = vld [vmem:[#allocation2 + $0xb5] sm:$0xff]
        %v2940 = vld [vmem:[#allocation2 + $0xbd] sm:$0xff]
        %v2941 = vld [vmem:[#allocation2 + $0xc5] sm:$0xff]
        %v2942 = vld [vmem:[#allocation2 + $0xcd] sm:$0xf]
        %v2943 = vld [vmem:[#allocation2 + $0xd2] sm:$0xff]
        %v2944 = vld [vmem:[#allocation2 + $0xda] sm:$0xff]
        %v2945 = vld [vmem:[#allocation2 + $0xe2] sm:$0xff]
        %v2946 = vld [vmem:[#allocation2 + $0xea] sm:$0xf]
        %v2947 = vld [vmem:[#allocation2 + $0xd3] sm:$0xff]
        %v2948 = vld [vmem:[#allocation2 + $0xdb] sm:$0xff]
        %v2949 = vld [vmem:[#allocation2 + $0xe3] sm:$0xff]
        %v2950 = vld [vmem:[#allocation2 + $0xeb] sm:$0xf]
        %v2951 = vmax.f32 %v2935, %v2939
        %v2952 = vmax.f32 %v2936, %v2940
        %v2953 = vmax.f32 %v2937, %v2941
        %v2954 = vmax.f32 %v2938, %v2942
        %v2955 = vmax.f32 %v2943, %v2947
        %v2956 = vmax.f32 %v2944, %v2948
        %v2957 = vmax.f32 %v2945, %v2949
        %v2958 = vmax.f32 %v2946, %v2950
        %v2959 = vmax.f32 %v2951, %v2955
        %v2960 = vmax.f32 %v2952, %v2956
        %v2961 = vmax.f32 %v2953, %v2957
        %v2962 = vmax.f32 %v2954, %v2958
        %v2963 = vld [vmem:[#allocation9] sm:$0xff]
        %v2964 = vld [vmem:[#allocation9 + $0x8] sm:$0x3f]
        %v2966 = vsel %vm2770, %v2963, 0
        %v2969 = vsel %vm2770, %v2964, 0
        %v2972 = vsel %vm2777, %v2962, 0
        %2974 = vmatpush.msra.mxu0 0.0
        %2975 = vmatpush.msra.mxu0 0.0
        %2976 = vmatpush.msra.mxu0 0.0
        %2977 = vmatpush.msra.mxu0 0.0
        %2978 = vmatpush.msra.mxu0 0.0
        %2979 = vmatpush.msra.mxu0 0.0
        %2980 = vmatpush.msra.mxu0 0.0
        %2981 = vmatpush.msra.mxu0 0.0
        %2982 = vmatpush.msra.mxu0 0.0
        %2983 = vmatpush.msra.mxu0 0.0
        %2984 = vmatpush.msra.mxu0 0.0
        %2985 = vmatpush.msra.mxu0 0.0
        %2986 = vmatpush.msra.mxu0 %v2972
        %2987 = vmatpush.msra.mxu0 %v2961
        %2988 = vmatpush.msra.mxu0 %v2960
        %2989 = vmatpush.msra.mxu0 %v2959
        %2990 = vmatmul.f32.gmra.mxu0 %v2966
        %v2991 = vpop.f32.mrf.mxu0
        %v2992 = vadd.f32 0.0, %v2991
        %2993 = vmatmul.f32.gmra.mxu0 %v2969
        %v2994 = vpop.f32.mrf.mxu0
        %v2995 = vadd.f32 0.0, %v2994
        %2996 = vdwg.mxu0
        %2997 = vst.msk [vmem:[#allocation3 + $0x41] sm:$0xff] %vm2589, %v2992
        %2998 = vst.msk [vmem:[#allocation3 + $0x49] sm:$0x3f] %vm2805, %v2995
        %v2999 = vld [vmem:[#allocation2 + $0xf0] sm:$0xff]
        %v3000 = vld [vmem:[#allocation2 + $0xf8] sm:$0xff]
        %v3001 = vld [vmem:[#allocation2 + $0x100] sm:$0xff]
        %v3002 = vld [vmem:[#allocation2 + $0x108] sm:$0xf]
        %v3003 = vld [vmem:[#allocation2 + $0xf1] sm:$0xff]
        %v3004 = vld [vmem:[#allocation2 + $0xf9] sm:$0xff]
        %v3005 = vld [vmem:[#allocation2 + $0x101] sm:$0xff]
        %v3006 = vld [vmem:[#allocation2 + $0x109] sm:$0xf]
        %v3007 = vld [vmem:[#allocation2 + $0x10e] sm:$0xff]
        %v3008 = vld [vmem:[#allocation2 + $0x116] sm:$0xff]
        %v3009 = vld [vmem:[#allocation2 + $0x11e] sm:$0xff]
        %v3010 = vld [vmem:[#allocation2 + $0x126] sm:$0xf]
        %v3011 = vld [vmem:[#allocation2 + $0x10f] sm:$0xff]
        %v3012 = vld [vmem:[#allocation2 + $0x117] sm:$0xff]
        %v3013 = vld [vmem:[#allocation2 + $0x11f] sm:$0xff]
        %v3014 = vld [vmem:[#allocation2 + $0x127] sm:$0xf]
        %v3015 = vmax.f32 %v2999, %v3003
        %v3016 = vmax.f32 %v3000, %v3004
        %v3017 = vmax.f32 %v3001, %v3005
        %v3018 = vmax.f32 %v3002, %v3006
        %v3019 = vmax.f32 %v3007, %v3011
        %v3020 = vmax.f32 %v3008, %v3012
        %v3021 = vmax.f32 %v3009, %v3013
        %v3022 = vmax.f32 %v3010, %v3014
        %v3023 = vmax.f32 %v3015, %v3019
        %v3024 = vmax.f32 %v3016, %v3020
        %v3025 = vmax.f32 %v3017, %v3021
        %v3026 = vmax.f32 %v3018, %v3022
        %v3027 = vld [vmem:[#allocation9] sm:$0xff]
        %v3028 = vld [vmem:[#allocation9 + $0x8] sm:$0x3f]
        %v3030 = vsel %vm2770, %v3027, 0
        %v3033 = vsel %vm2770, %v3028, 0
        %v3036 = vsel %vm2777, %v3026, 0
        %3038 = vmatpush.msra.mxu0 0.0
        %3039 = vmatpush.msra.mxu0 0.0
        %3040 = vmatpush.msra.mxu0 0.0
        %3041 = vmatpush.msra.mxu0 0.0
        %3042 = vmatpush.msra.mxu0 0.0
        %3043 = vmatpush.msra.mxu0 0.0
        %3044 = vmatpush.msra.mxu0 0.0
        %3045 = vmatpush.msra.mxu0 0.0
        %3046 = vmatpush.msra.mxu0 0.0
        %3047 = vmatpush.msra.mxu0 0.0
        %3048 = vmatpush.msra.mxu0 0.0
        %3049 = vmatpush.msra.mxu0 0.0
        %3050 = vmatpush.msra.mxu0 %v3036
        %3051 = vmatpush.msra.mxu0 %v3025
        %3052 = vmatpush.msra.mxu0 %v3024
        %3053 = vmatpush.msra.mxu0 %v3023
        %3054 = vmatmul.f32.gmra.mxu0 %v3030
        %v3055 = vpop.f32.mrf.mxu0
        %v3056 = vadd.f32 0.0, %v3055
        %3057 = vmatmul.f32.gmra.mxu0 %v3033
        %v3058 = vpop.f32.mrf.mxu0
        %v3059 = vadd.f32 0.0, %v3058
        %3060 = vdwg.mxu0
        %3061 = vst.msk [vmem:[#allocation3 + $0x51] sm:$0xff] %vm2589, %v3056
        %3062 = vst.msk [vmem:[#allocation3 + $0x59] sm:$0x3f] %vm2805, %v3059
        %v3063 = vld [vmem:[#allocation2 + $0x12c] sm:$0xff]
        %v3064 = vld [vmem:[#allocation2 + $0x134] sm:$0xff]
        %v3065 = vld [vmem:[#allocation2 + $0x13c] sm:$0xff]
        %v3066 = vld [vmem:[#allocation2 + $0x144] sm:$0xf]
        %v3067 = vld [vmem:[#allocation2 + $0x12d] sm:$0xff]
        %v3068 = vld [vmem:[#allocation2 + $0x135] sm:$0xff]
        %v3069 = vld [vmem:[#allocation2 + $0x13d] sm:$0xff]
        %v3070 = vld [vmem:[#allocation2 + $0x145] sm:$0xf]
        %v3071 = vld [vmem:[#allocation2 + $0x14a] sm:$0xff]
        %v3072 = vld [vmem:[#allocation2 + $0x152] sm:$0xff]
        %v3073 = vld [vmem:[#allocation2 + $0x15a] sm:$0xff]
        %v3074 = vld [vmem:[#allocation2 + $0x162] sm:$0xf]
        %v3075 = vld [vmem:[#allocation2 + $0x14b] sm:$0xff]
        %v3076 = vld [vmem:[#allocation2 + $0x153] sm:$0xff]
        %v3077 = vld [vmem:[#allocation2 + $0x15b] sm:$0xff]
        %v3078 = vld [vmem:[#allocation2 + $0x163] sm:$0xf]
        %v3079 = vmax.f32 %v3063, %v3067
        %v3080 = vmax.f32 %v3064, %v3068
        %v3081 = vmax.f32 %v3065, %v3069
        %v3082 = vmax.f32 %v3066, %v3070
        %v3083 = vmax.f32 %v3071, %v3075
        %v3084 = vmax.f32 %v3072, %v3076
        %v3085 = vmax.f32 %v3073, %v3077
        %v3086 = vmax.f32 %v3074, %v3078
        %v3087 = vmax.f32 %v3079, %v3083
        %v3088 = vmax.f32 %v3080, %v3084
        %v3089 = vmax.f32 %v3081, %v3085
        %v3090 = vmax.f32 %v3082, %v3086
        %v3091 = vld [vmem:[#allocation9] sm:$0xff]
        %v3092 = vld [vmem:[#allocation9 + $0x8] sm:$0x3f]
        %v3094 = vsel %vm2770, %v3091, 0
        %v3097 = vsel %vm2770, %v3092, 0
        %v3100 = vsel %vm2777, %v3090, 0
        %3102 = vmatpush.msra.mxu0 0.0
        %3103 = vmatpush.msra.mxu0 0.0
        %3104 = vmatpush.msra.mxu0 0.0
        %3105 = vmatpush.msra.mxu0 0.0
        %3106 = vmatpush.msra.mxu0 0.0
        %3107 = vmatpush.msra.mxu0 0.0
        %3108 = vmatpush.msra.mxu0 0.0
        %3109 = vmatpush.msra.mxu0 0.0
        %3110 = vmatpush.msra.mxu0 0.0
        %3111 = vmatpush.msra.mxu0 0.0
        %3112 = vmatpush.msra.mxu0 0.0
        %3113 = vmatpush.msra.mxu0 0.0
        %3114 = vmatpush.msra.mxu0 %v3100
        %3115 = vmatpush.msra.mxu0 %v3089
        %3116 = vmatpush.msra.mxu0 %v3088
        %3117 = vmatpush.msra.mxu0 %v3087
        %3118 = vmatmul.f32.gmra.mxu0 %v3094
        %v3119 = vpop.f32.mrf.mxu0
        %v3120 = vadd.f32 0.0, %v3119
        %3121 = vmatmul.f32.gmra.mxu0 %v3097
        %v3122 = vpop.f32.mrf.mxu0
        %v3123 = vadd.f32 0.0, %v3122
        %3124 = vdwg.mxu0
        %3125 = vst.msk [vmem:[#allocation3 + $0x61] sm:$0xff] %vm2589, %v3120
        %3126 = vst.msk [vmem:[#allocation3 + $0x69] sm:$0x3f] %vm2805, %v3123
        %v3127 = vld [vmem:[#allocation2 + $0x168] sm:$0xff]
        %v3128 = vld [vmem:[#allocation2 + $0x170] sm:$0xff]
        %v3129 = vld [vmem:[#allocation2 + $0x178] sm:$0xff]
        %v3130 = vld [vmem:[#allocation2 + $0x180] sm:$0xf]
        %v3131 = vld [vmem:[#allocation2 + $0x169] sm:$0xff]
        %v3132 = vld [vmem:[#allocation2 + $0x171] sm:$0xff]
        %v3133 = vld [vmem:[#allocation2 + $0x179] sm:$0xff]
        %v3134 = vld [vmem:[#allocation2 + $0x181] sm:$0xf]
        %v3135 = vld [vmem:[#allocation2 + $0x186] sm:$0xff]
        %v3136 = vld [vmem:[#allocation2 + $0x18e] sm:$0xff]
        %v3137 = vld [vmem:[#allocation2 + $0x196] sm:$0xff]
        %v3138 = vld [vmem:[#allocation2 + $0x19e] sm:$0xf]
        %v3139 = vld [vmem:[#allocation2 + $0x187] sm:$0xff]
        %v3140 = vld [vmem:[#allocation2 + $0x18f] sm:$0xff]
        %v3141 = vld [vmem:[#allocation2 + $0x197] sm:$0xff]
        %v3142 = vld [vmem:[#allocation2 + $0x19f] sm:$0xf]
        %v3143 = vmax.f32 %v3127, %v3131
        %v3144 = vmax.f32 %v3128, %v3132
        %v3145 = vmax.f32 %v3129, %v3133
        %v3146 = vmax.f32 %v3130, %v3134
        %v3147 = vmax.f32 %v3135, %v3139
        %v3148 = vmax.f32 %v3136, %v3140
        %v3149 = vmax.f32 %v3137, %v3141
        %v3150 = vmax.f32 %v3138, %v3142
        %v3151 = vmax.f32 %v3143, %v3147
        %v3152 = vmax.f32 %v3144, %v3148
        %v3153 = vmax.f32 %v3145, %v3149
        %v3154 = vmax.f32 %v3146, %v3150
        %v3155 = vld [vmem:[#allocation9] sm:$0xff]
        %v3156 = vld [vmem:[#allocation9 + $0x8] sm:$0x3f]
        %v3158 = vsel %vm2770, %v3155, 0
        %v3161 = vsel %vm2770, %v3156, 0
        %v3164 = vsel %vm2777, %v3154, 0
        %3166 = vmatpush.msra.mxu0 0.0
        %3167 = vmatpush.msra.mxu0 0.0
        %3168 = vmatpush.msra.mxu0 0.0
        %3169 = vmatpush.msra.mxu0 0.0
        %3170 = vmatpush.msra.mxu0 0.0
        %3171 = vmatpush.msra.mxu0 0.0
        %3172 = vmatpush.msra.mxu0 0.0
        %3173 = vmatpush.msra.mxu0 0.0
        %3174 = vmatpush.msra.mxu0 0.0
        %3175 = vmatpush.msra.mxu0 0.0
        %3176 = vmatpush.msra.mxu0 0.0
        %3177 = vmatpush.msra.mxu0 0.0
        %3178 = vmatpush.msra.mxu0 %v3164
        %3179 = vmatpush.msra.mxu0 %v3153
        %3180 = vmatpush.msra.mxu0 %v3152
        %3181 = vmatpush.msra.mxu0 %v3151
        %3182 = vmatmul.f32.gmra.mxu0 %v3158
        %v3183 = vpop.f32.mrf.mxu0
        %v3184 = vadd.f32 0.0, %v3183
        %3185 = vmatmul.f32.gmra.mxu0 %v3161
        %v3186 = vpop.f32.mrf.mxu0
        %v3187 = vadd.f32 0.0, %v3186
        %3188 = vdwg.mxu0
        %3189 = vst.msk [vmem:[#allocation3 + $0x71] sm:$0xff] %vm2589, %v3184
        %3190 = vst.msk [vmem:[#allocation3 + $0x79] sm:$0x3f] %vm2805, %v3187
        %v3191 = vld [vmem:[#allocation2 + $0x1a4] sm:$0xff]
        %v3192 = vld [vmem:[#allocation2 + $0x1ac] sm:$0xff]
        %v3193 = vld [vmem:[#allocation2 + $0x1b4] sm:$0xff]
        %v3194 = vld [vmem:[#allocation2 + $0x1bc] sm:$0xf]
        %v3195 = vld [vmem:[#allocation2 + $0x1a5] sm:$0xff]
        %v3196 = vld [vmem:[#allocation2 + $0x1ad] sm:$0xff]
        %v3197 = vld [vmem:[#allocation2 + $0x1b5] sm:$0xff]
        %v3198 = vld [vmem:[#allocation2 + $0x1bd] sm:$0xf]
        %v3199 = vld [vmem:[#allocation2 + $0x1c2] sm:$0xff]
        %v3200 = vld [vmem:[#allocation2 + $0x1ca] sm:$0xff]
        %v3201 = vld [vmem:[#allocation2 + $0x1d2] sm:$0xff]
        %v3202 = vld [vmem:[#allocation2 + $0x1da] sm:$0xf]
        %v3203 = vld [vmem:[#allocation2 + $0x1c3] sm:$0xff]
        %v3204 = vld [vmem:[#allocation2 + $0x1cb] sm:$0xff]
        %v3205 = vld [vmem:[#allocation2 + $0x1d3] sm:$0xff]
        %v3206 = vld [vmem:[#allocation2 + $0x1db] sm:$0xf]
        %v3207 = vmax.f32 %v3191, %v3195
        %v3208 = vmax.f32 %v3192, %v3196
        %v3209 = vmax.f32 %v3193, %v3197
        %v3210 = vmax.f32 %v3194, %v3198
        %v3211 = vmax.f32 %v3199, %v3203
        %v3212 = vmax.f32 %v3200, %v3204
        %v3213 = vmax.f32 %v3201, %v3205
        %v3214 = vmax.f32 %v3202, %v3206
        %v3215 = vmax.f32 %v3207, %v3211
        %v3216 = vmax.f32 %v3208, %v3212
        %v3217 = vmax.f32 %v3209, %v3213
        %v3218 = vmax.f32 %v3210, %v3214
        %v3219 = vld [vmem:[#allocation9] sm:$0xff]
        %v3220 = vld [vmem:[#allocation9 + $0x8] sm:$0x3f]
        %v3222 = vsel %vm2770, %v3219, 0
        %v3225 = vsel %vm2770, %v3220, 0
        %v3228 = vsel %vm2777, %v3218, 0
        %3230 = vmatpush.msra.mxu0 0.0
        %3231 = vmatpush.msra.mxu0 0.0
        %3232 = vmatpush.msra.mxu0 0.0
        %3233 = vmatpush.msra.mxu0 0.0
        %3234 = vmatpush.msra.mxu0 0.0
        %3235 = vmatpush.msra.mxu0 0.0
        %3236 = vmatpush.msra.mxu0 0.0
        %3237 = vmatpush.msra.mxu0 0.0
        %3238 = vmatpush.msra.mxu0 0.0
        %3239 = vmatpush.msra.mxu0 0.0
        %3240 = vmatpush.msra.mxu0 0.0
        %3241 = vmatpush.msra.mxu0 0.0
        %3242 = vmatpush.msra.mxu0 %v3228
        %3243 = vmatpush.msra.mxu0 %v3217
        %3244 = vmatpush.msra.mxu0 %v3216
        %3245 = vmatpush.msra.mxu0 %v3215
        %3246 = vmatmul.f32.gmra.mxu0 %v3222
        %v3247 = vpop.f32.mrf.mxu0
        %v3248 = vadd.f32 0.0, %v3247
        %3249 = vmatmul.f32.gmra.mxu0 %v3225
        %v3250 = vpop.f32.mrf.mxu0
        %v3251 = vadd.f32 0.0, %v3250
        %3252 = vdwg.mxu0
        %3253 = vst.msk [vmem:[#allocation3 + $0x81] sm:$0xff] %vm2589, %v3248
        %3254 = vst.msk [vmem:[#allocation3 + $0x89] sm:$0x3f] %vm2805, %v3251
        %v3255 = vld [vmem:[#allocation2 + $0x1e0] sm:$0xff]
        %v3256 = vld [vmem:[#allocation2 + $0x1e8] sm:$0xff]
        %v3257 = vld [vmem:[#allocation2 + $0x1f0] sm:$0xff]
        %v3258 = vld [vmem:[#allocation2 + $0x1f8] sm:$0xf]
        %v3259 = vld [vmem:[#allocation2 + $0x1e1] sm:$0xff]
        %v3260 = vld [vmem:[#allocation2 + $0x1e9] sm:$0xff]
        %v3261 = vld [vmem:[#allocation2 + $0x1f1] sm:$0xff]
        %v3262 = vld [vmem:[#allocation2 + $0x1f9] sm:$0xf]
        %v3263 = vld [vmem:[#allocation2 + $0x1fe] sm:$0xff]
        %v3264 = vld [vmem:[#allocation2 + $0x206] sm:$0xff]
        %v3265 = vld [vmem:[#allocation2 + $0x20e] sm:$0xff]
        %v3266 = vld [vmem:[#allocation2 + $0x216] sm:$0xf]
        %v3267 = vld [vmem:[#allocation2 + $0x1ff] sm:$0xff]
        %v3268 = vld [vmem:[#allocation2 + $0x207] sm:$0xff]
        %v3269 = vld [vmem:[#allocation2 + $0x20f] sm:$0xff]
        %v3270 = vld [vmem:[#allocation2 + $0x217] sm:$0xf]
        %v3271 = vmax.f32 %v3255, %v3259
        %v3272 = vmax.f32 %v3256, %v3260
        %v3273 = vmax.f32 %v3257, %v3261
        %v3274 = vmax.f32 %v3258, %v3262
        %v3275 = vmax.f32 %v3263, %v3267
        %v3276 = vmax.f32 %v3264, %v3268
        %v3277 = vmax.f32 %v3265, %v3269
        %v3278 = vmax.f32 %v3266, %v3270
        %v3279 = vmax.f32 %v3271, %v3275
        %v3280 = vmax.f32 %v3272, %v3276
        %v3281 = vmax.f32 %v3273, %v3277
        %v3282 = vmax.f32 %v3274, %v3278
        %v3283 = vld [vmem:[#allocation9] sm:$0xff]
        %v3284 = vld [vmem:[#allocation9 + $0x8] sm:$0x3f]
        %v3286 = vsel %vm2770, %v3283, 0
        %v3289 = vsel %vm2770, %v3284, 0
        %v3292 = vsel %vm2777, %v3282, 0
        %3294 = vmatpush.msra.mxu0 0.0
        %3295 = vmatpush.msra.mxu0 0.0
        %3296 = vmatpush.msra.mxu0 0.0
        %3297 = vmatpush.msra.mxu0 0.0
        %3298 = vmatpush.msra.mxu0 0.0
        %3299 = vmatpush.msra.mxu0 0.0
        %3300 = vmatpush.msra.mxu0 0.0
        %3301 = vmatpush.msra.mxu0 0.0
        %3302 = vmatpush.msra.mxu0 0.0
        %3303 = vmatpush.msra.mxu0 0.0
        %3304 = vmatpush.msra.mxu0 0.0
        %3305 = vmatpush.msra.mxu0 0.0
        %3306 = vmatpush.msra.mxu0 %v3292
        %3307 = vmatpush.msra.mxu0 %v3281
        %3308 = vmatpush.msra.mxu0 %v3280
        %3309 = vmatpush.msra.mxu0 %v3279
        %3310 = vmatmul.f32.gmra.mxu0 %v3286
        %v3311 = vpop.f32.mrf.mxu0
        %v3312 = vadd.f32 0.0, %v3311
        %3313 = vmatmul.f32.gmra.mxu0 %v3289
        %v3314 = vpop.f32.mrf.mxu0
        %v3315 = vadd.f32 0.0, %v3314
        %3316 = vdwg.mxu0
        %3317 = vst.msk [vmem:[#allocation3 + $0x91] sm:$0xff] %vm2589, %v3312
        %3318 = vst.msk [vmem:[#allocation3 + $0x99] sm:$0x3f] %vm2805, %v3315
        %v3319 = vld [vmem:[#allocation2 + $0x21c] sm:$0xff]
        %v3320 = vld [vmem:[#allocation2 + $0x224] sm:$0xff]
        %v3321 = vld [vmem:[#allocation2 + $0x22c] sm:$0xff]
        %v3322 = vld [vmem:[#allocation2 + $0x234] sm:$0xf]
        %v3323 = vld [vmem:[#allocation2 + $0x21d] sm:$0xff]
        %v3324 = vld [vmem:[#allocation2 + $0x225] sm:$0xff]
        %v3325 = vld [vmem:[#allocation2 + $0x22d] sm:$0xff]
        %v3326 = vld [vmem:[#allocation2 + $0x235] sm:$0xf]
        %v3327 = vld [vmem:[#allocation2 + $0x23a] sm:$0xff]
        %v3328 = vld [vmem:[#allocation2 + $0x242] sm:$0xff]
        %v3329 = vld [vmem:[#allocation2 + $0x24a] sm:$0xff]
        %v3330 = vld [vmem:[#allocation2 + $0x252] sm:$0xf]
        %v3331 = vld [vmem:[#allocation2 + $0x23b] sm:$0xff]
        %v3332 = vld [vmem:[#allocation2 + $0x243] sm:$0xff]
        %v3333 = vld [vmem:[#allocation2 + $0x24b] sm:$0xff]
        %v3334 = vld [vmem:[#allocation2 + $0x253] sm:$0xf]
        %v3335 = vmax.f32 %v3319, %v3323
        %v3336 = vmax.f32 %v3320, %v3324
        %v3337 = vmax.f32 %v3321, %v3325
        %v3338 = vmax.f32 %v3322, %v3326
        %v3339 = vmax.f32 %v3327, %v3331
        %v3340 = vmax.f32 %v3328, %v3332
        %v3341 = vmax.f32 %v3329, %v3333
        %v3342 = vmax.f32 %v3330, %v3334
        %v3343 = vmax.f32 %v3335, %v3339
        %v3344 = vmax.f32 %v3336, %v3340
        %v3345 = vmax.f32 %v3337, %v3341
        %v3346 = vmax.f32 %v3338, %v3342
        %v3347 = vld [vmem:[#allocation9] sm:$0xff]
        %v3348 = vld [vmem:[#allocation9 + $0x8] sm:$0x3f]
        %v3350 = vsel %vm2770, %v3347, 0
        %v3353 = vsel %vm2770, %v3348, 0
        %v3356 = vsel %vm2777, %v3346, 0
        %3358 = vmatpush.msra.mxu0 0.0
        %3359 = vmatpush.msra.mxu0 0.0
        %3360 = vmatpush.msra.mxu0 0.0
        %3361 = vmatpush.msra.mxu0 0.0
        %3362 = vmatpush.msra.mxu0 0.0
        %3363 = vmatpush.msra.mxu0 0.0
        %3364 = vmatpush.msra.mxu0 0.0
        %3365 = vmatpush.msra.mxu0 0.0
        %3366 = vmatpush.msra.mxu0 0.0
        %3367 = vmatpush.msra.mxu0 0.0
        %3368 = vmatpush.msra.mxu0 0.0
        %3369 = vmatpush.msra.mxu0 0.0
        %3370 = vmatpush.msra.mxu0 %v3356
        %3371 = vmatpush.msra.mxu0 %v3345
        %3372 = vmatpush.msra.mxu0 %v3344
        %3373 = vmatpush.msra.mxu0 %v3343
        %3374 = vmatmul.f32.gmra.mxu0 %v3350
        %v3375 = vpop.f32.mrf.mxu0
        %v3376 = vadd.f32 0.0, %v3375
        %3377 = vmatmul.f32.gmra.mxu0 %v3353
        %v3378 = vpop.f32.mrf.mxu0
        %v3379 = vadd.f32 0.0, %v3378
        %3380 = vdwg.mxu0
        %3381 = vst.msk [vmem:[#allocation3 + $0xa1] sm:$0xff] %vm2589, %v3376
        %3382 = vst.msk [vmem:[#allocation3 + $0xa9] sm:$0x3f] %vm2805, %v3379
        %v3383 = vld [vmem:[#allocation2 + $0x258] sm:$0xff]
        %v3384 = vld [vmem:[#allocation2 + $0x260] sm:$0xff]
        %v3385 = vld [vmem:[#allocation2 + $0x268] sm:$0xff]
        %v3386 = vld [vmem:[#allocation2 + $0x270] sm:$0xf]
        %v3387 = vld [vmem:[#allocation2 + $0x259] sm:$0xff]
        %v3388 = vld [vmem:[#allocation2 + $0x261] sm:$0xff]
        %v3389 = vld [vmem:[#allocation2 + $0x269] sm:$0xff]
        %v3390 = vld [vmem:[#allocation2 + $0x271] sm:$0xf]
        %v3391 = vld [vmem:[#allocation2 + $0x276] sm:$0xff]
        %v3392 = vld [vmem:[#allocation2 + $0x27e] sm:$0xff]
        %v3393 = vld [vmem:[#allocation2 + $0x286] sm:$0xff]
        %v3394 = vld [vmem:[#allocation2 + $0x28e] sm:$0xf]
        %v3395 = vld [vmem:[#allocation2 + $0x277] sm:$0xff]
        %v3396 = vld [vmem:[#allocation2 + $0x27f] sm:$0xff]
        %v3397 = vld [vmem:[#allocation2 + $0x287] sm:$0xff]
        %v3398 = vld [vmem:[#allocation2 + $0x28f] sm:$0xf]
        %v3399 = vmax.f32 %v3383, %v3387
        %v3400 = vmax.f32 %v3384, %v3388
        %v3401 = vmax.f32 %v3385, %v3389
        %v3402 = vmax.f32 %v3386, %v3390
        %v3403 = vmax.f32 %v3391, %v3395
        %v3404 = vmax.f32 %v3392, %v3396
        %v3405 = vmax.f32 %v3393, %v3397
        %v3406 = vmax.f32 %v3394, %v3398
        %v3407 = vmax.f32 %v3399, %v3403
        %v3408 = vmax.f32 %v3400, %v3404
        %v3409 = vmax.f32 %v3401, %v3405
        %v3410 = vmax.f32 %v3402, %v3406
        %v3411 = vld [vmem:[#allocation9] sm:$0xff]
        %v3412 = vld [vmem:[#allocation9 + $0x8] sm:$0x3f]
        %v3414 = vsel %vm2770, %v3411, 0
        %v3417 = vsel %vm2770, %v3412, 0
        %v3420 = vsel %vm2777, %v3410, 0
        %3422 = vmatpush.msra.mxu0 0.0
        %3423 = vmatpush.msra.mxu0 0.0
        %3424 = vmatpush.msra.mxu0 0.0
        %3425 = vmatpush.msra.mxu0 0.0
        %3426 = vmatpush.msra.mxu0 0.0
        %3427 = vmatpush.msra.mxu0 0.0
        %3428 = vmatpush.msra.mxu0 0.0
        %3429 = vmatpush.msra.mxu0 0.0
        %3430 = vmatpush.msra.mxu0 0.0
        %3431 = vmatpush.msra.mxu0 0.0
        %3432 = vmatpush.msra.mxu0 0.0
        %3433 = vmatpush.msra.mxu0 0.0
        %3434 = vmatpush.msra.mxu0 %v3420
        %3435 = vmatpush.msra.mxu0 %v3409
        %3436 = vmatpush.msra.mxu0 %v3408
        %3437 = vmatpush.msra.mxu0 %v3407
        %3438 = vmatmul.f32.gmra.mxu0 %v3414
        %v3439 = vpop.f32.mrf.mxu0
        %v3440 = vadd.f32 0.0, %v3439
        %3441 = vmatmul.f32.gmra.mxu0 %v3417
        %v3442 = vpop.f32.mrf.mxu0
        %v3443 = vadd.f32 0.0, %v3442
        %3444 = vdwg.mxu0
        %3445 = vst.msk [vmem:[#allocation3 + $0xb1] sm:$0xff] %vm2589, %v3440
        %3446 = vst.msk [vmem:[#allocation3 + $0xb9] sm:$0x3f] %vm2805, %v3443
        %v3447 = vld [vmem:[#allocation2 + $0x294] sm:$0xff]
        %v3448 = vld [vmem:[#allocation2 + $0x29c] sm:$0xff]
        %v3449 = vld [vmem:[#allocation2 + $0x2a4] sm:$0xff]
        %v3450 = vld [vmem:[#allocation2 + $0x2ac] sm:$0xf]
        %v3451 = vld [vmem:[#allocation2 + $0x295] sm:$0xff]
        %v3452 = vld [vmem:[#allocation2 + $0x29d] sm:$0xff]
        %v3453 = vld [vmem:[#allocation2 + $0x2a5] sm:$0xff]
        %v3454 = vld [vmem:[#allocation2 + $0x2ad] sm:$0xf]
        %v3455 = vld [vmem:[#allocation2 + $0x2b2] sm:$0xff]
        %v3456 = vld [vmem:[#allocation2 + $0x2ba] sm:$0xff]
        %v3457 = vld [vmem:[#allocation2 + $0x2c2] sm:$0xff]
        %v3458 = vld [vmem:[#allocation2 + $0x2ca] sm:$0xf]
        %v3459 = vld [vmem:[#allocation2 + $0x2b3] sm:$0xff]
        %v3460 = vld [vmem:[#allocation2 + $0x2bb] sm:$0xff]
        %v3461 = vld [vmem:[#allocation2 + $0x2c3] sm:$0xff]
        %v3462 = vld [vmem:[#allocation2 + $0x2cb] sm:$0xf]
        %v3463 = vmax.f32 %v3447, %v3451
        %v3464 = vmax.f32 %v3448, %v3452
        %v3465 = vmax.f32 %v3449, %v3453
        %v3466 = vmax.f32 %v3450, %v3454
        %v3467 = vmax.f32 %v3455, %v3459
        %v3468 = vmax.f32 %v3456, %v3460
        %v3469 = vmax.f32 %v3457, %v3461
        %v3470 = vmax.f32 %v3458, %v3462
        %v3471 = vmax.f32 %v3463, %v3467
        %v3472 = vmax.f32 %v3464, %v3468
        %v3473 = vmax.f32 %v3465, %v3469
        %v3474 = vmax.f32 %v3466, %v3470
        %v3475 = vld [vmem:[#allocation9] sm:$0xff]
        %v3476 = vld [vmem:[#allocation9 + $0x8] sm:$0x3f]
        %v3478 = vsel %vm2770, %v3475, 0
        %v3481 = vsel %vm2770, %v3476, 0
        %v3484 = vsel %vm2777, %v3474, 0
        %3486 = vmatpush.msra.mxu0 0.0
        %3487 = vmatpush.msra.mxu0 0.0
        %3488 = vmatpush.msra.mxu0 0.0
        %3489 = vmatpush.msra.mxu0 0.0
        %3490 = vmatpush.msra.mxu0 0.0
        %3491 = vmatpush.msra.mxu0 0.0
        %3492 = vmatpush.msra.mxu0 0.0
        %3493 = vmatpush.msra.mxu0 0.0
        %3494 = vmatpush.msra.mxu0 0.0
        %3495 = vmatpush.msra.mxu0 0.0
        %3496 = vmatpush.msra.mxu0 0.0
        %3497 = vmatpush.msra.mxu0 0.0
        %3498 = vmatpush.msra.mxu0 %v3484
        %3499 = vmatpush.msra.mxu0 %v3473
        %3500 = vmatpush.msra.mxu0 %v3472
        %3501 = vmatpush.msra.mxu0 %v3471
        %3502 = vmatmul.f32.gmra.mxu0 %v3478
        %v3503 = vpop.f32.mrf.mxu0
        %v3504 = vadd.f32 0.0, %v3503
        %3505 = vmatmul.f32.gmra.mxu0 %v3481
        %v3506 = vpop.f32.mrf.mxu0
        %v3507 = vadd.f32 0.0, %v3506
        %3508 = vdwg.mxu0
        %3509 = vst.msk [vmem:[#allocation3 + $0xc1] sm:$0xff] %vm2589, %v3504
        %3510 = vst.msk [vmem:[#allocation3 + $0xc9] sm:$0x3f] %vm2805, %v3507
        %v3511 = vld [vmem:[#allocation2 + $0x2d0] sm:$0xff]
        %v3512 = vld [vmem:[#allocation2 + $0x2d8] sm:$0xff]
        %v3513 = vld [vmem:[#allocation2 + $0x2e0] sm:$0xff]
        %v3514 = vld [vmem:[#allocation2 + $0x2e8] sm:$0xf]
        %v3515 = vld [vmem:[#allocation2 + $0x2d1] sm:$0xff]
        %v3516 = vld [vmem:[#allocation2 + $0x2d9] sm:$0xff]
        %v3517 = vld [vmem:[#allocation2 + $0x2e1] sm:$0xff]
        %v3518 = vld [vmem:[#allocation2 + $0x2e9] sm:$0xf]
        %v3519 = vld [vmem:[#allocation2 + $0x2ee] sm:$0xff]
        %v3520 = vld [vmem:[#allocation2 + $0x2f6] sm:$0xff]
        %v3521 = vld [vmem:[#allocation2 + $0x2fe] sm:$0xff]
        %v3522 = vld [vmem:[#allocation2 + $0x306] sm:$0xf]
        %v3523 = vld [vmem:[#allocation2 + $0x2ef] sm:$0xff]
        %v3524 = vld [vmem:[#allocation2 + $0x2f7] sm:$0xff]
        %v3525 = vld [vmem:[#allocation2 + $0x2ff] sm:$0xff]
        %v3526 = vld [vmem:[#allocation2 + $0x307] sm:$0xf]
        %v3527 = vmax.f32 %v3511, %v3515
        %v3528 = vmax.f32 %v3512, %v3516
        %v3529 = vmax.f32 %v3513, %v3517
        %v3530 = vmax.f32 %v3514, %v3518
        %v3531 = vmax.f32 %v3519, %v3523
        %v3532 = vmax.f32 %v3520, %v3524
        %v3533 = vmax.f32 %v3521, %v3525
        %v3534 = vmax.f32 %v3522, %v3526
        %v3535 = vmax.f32 %v3527, %v3531
        %v3536 = vmax.f32 %v3528, %v3532
        %v3537 = vmax.f32 %v3529, %v3533
        %v3538 = vmax.f32 %v3530, %v3534
        %v3539 = vld [vmem:[#allocation9] sm:$0xff]
        %v3540 = vld [vmem:[#allocation9 + $0x8] sm:$0x3f]
        %v3542 = vsel %vm2770, %v3539, 0
        %v3545 = vsel %vm2770, %v3540, 0
        %v3548 = vsel %vm2777, %v3538, 0
        %3550 = vmatpush.msra.mxu0 0.0
        %3551 = vmatpush.msra.mxu0 0.0
        %3552 = vmatpush.msra.mxu0 0.0
        %3553 = vmatpush.msra.mxu0 0.0
        %3554 = vmatpush.msra.mxu0 0.0
        %3555 = vmatpush.msra.mxu0 0.0
        %3556 = vmatpush.msra.mxu0 0.0
        %3557 = vmatpush.msra.mxu0 0.0
        %3558 = vmatpush.msra.mxu0 0.0
        %3559 = vmatpush.msra.mxu0 0.0
        %3560 = vmatpush.msra.mxu0 0.0
        %3561 = vmatpush.msra.mxu0 0.0
        %3562 = vmatpush.msra.mxu0 %v3548
        %3563 = vmatpush.msra.mxu0 %v3537
        %3564 = vmatpush.msra.mxu0 %v3536
        %3565 = vmatpush.msra.mxu0 %v3535
        %3566 = vmatmul.f32.gmra.mxu0 %v3542
        %v3567 = vpop.f32.mrf.mxu0
        %v3568 = vadd.f32 0.0, %v3567
        %3569 = vmatmul.f32.gmra.mxu0 %v3545
        %v3570 = vpop.f32.mrf.mxu0
        %v3571 = vadd.f32 0.0, %v3570
        %3572 = vdwg.mxu0
        %3573 = vst.msk [vmem:[#allocation3 + $0xd1] sm:$0xff] %vm2589, %v3568
        %3574 = vst.msk [vmem:[#allocation3 + $0xd9] sm:$0x3f] %vm2805, %v3571
        %v3575 = vld [vmem:[#allocation2 + $0x30c] sm:$0xff]
        %v3576 = vld [vmem:[#allocation2 + $0x314] sm:$0xff]
        %v3577 = vld [vmem:[#allocation2 + $0x31c] sm:$0xff]
        %v3578 = vld [vmem:[#allocation2 + $0x324] sm:$0xf]
        %v3579 = vld [vmem:[#allocation2 + $0x30d] sm:$0xff]
        %v3580 = vld [vmem:[#allocation2 + $0x315] sm:$0xff]
        %v3581 = vld [vmem:[#allocation2 + $0x31d] sm:$0xff]
        %v3582 = vld [vmem:[#allocation2 + $0x325] sm:$0xf]
        %v3583 = vld [vmem:[#allocation2 + $0x32a] sm:$0xff]
        %v3584 = vld [vmem:[#allocation2 + $0x332] sm:$0xff]
        %v3585 = vld [vmem:[#allocation2 + $0x33a] sm:$0xff]
        %v3586 = vld [vmem:[#allocation2 + $0x342] sm:$0xf]
        %v3587 = vld [vmem:[#allocation2 + $0x32b] sm:$0xff]
        %v3588 = vld [vmem:[#allocation2 + $0x333] sm:$0xff]
        %v3589 = vld [vmem:[#allocation2 + $0x33b] sm:$0xff]
        %v3590 = vld [vmem:[#allocation2 + $0x343] sm:$0xf]
        %v3591 = vmax.f32 %v3575, %v3579
        %v3592 = vmax.f32 %v3576, %v3580
        %v3593 = vmax.f32 %v3577, %v3581
        %v3594 = vmax.f32 %v3578, %v3582
        %v3595 = vmax.f32 %v3583, %v3587
        %v3596 = vmax.f32 %v3584, %v3588
        %v3597 = vmax.f32 %v3585, %v3589
        %v3598 = vmax.f32 %v3586, %v3590
        %v3599 = vmax.f32 %v3591, %v3595
        %v3600 = vmax.f32 %v3592, %v3596
        %v3601 = vmax.f32 %v3593, %v3597
        %v3602 = vmax.f32 %v3594, %v3598
        %v3603 = vld [vmem:[#allocation9] sm:$0xff]
        %v3604 = vld [vmem:[#allocation9 + $0x8] sm:$0x3f]
        %v3606 = vsel %vm2770, %v3603, 0
        %v3609 = vsel %vm2770, %v3604, 0
        %v3612 = vsel %vm2777, %v3602, 0
        %3614 = vmatpush.msra.mxu0 0.0
        %3615 = vmatpush.msra.mxu0 0.0
        %3616 = vmatpush.msra.mxu0 0.0
        %3617 = vmatpush.msra.mxu0 0.0
        %3618 = vmatpush.msra.mxu0 0.0
        %3619 = vmatpush.msra.mxu0 0.0
        %3620 = vmatpush.msra.mxu0 0.0
        %3621 = vmatpush.msra.mxu0 0.0
        %3622 = vmatpush.msra.mxu0 0.0
        %3623 = vmatpush.msra.mxu0 0.0
        %3624 = vmatpush.msra.mxu0 0.0
        %3625 = vmatpush.msra.mxu0 0.0
        %3626 = vmatpush.msra.mxu0 %v3612
        %3627 = vmatpush.msra.mxu0 %v3601
        %3628 = vmatpush.msra.mxu0 %v3600
        %3629 = vmatpush.msra.mxu0 %v3599
        %3630 = vmatmul.f32.gmra.mxu0 %v3606
        %v3631 = vpop.f32.mrf.mxu0
        %v3632 = vadd.f32 0.0, %v3631
        %3633 = vmatmul.f32.gmra.mxu0 %v3609
        %v3634 = vpop.f32.mrf.mxu0
        %v3635 = vadd.f32 0.0, %v3634
        %3636 = vdwg.mxu0
        %3637 = vst.msk [vmem:[#allocation3 + $0xe1] sm:$0xff] %vm2589, %v3632
        %3638 = vst.msk [vmem:[#allocation3 + $0xe9] sm:$0x3f] %vm2805, %v3635
        %v3639 = vld [vmem:[#allocation3] sm:$0xff]
        %v3640 = vld [vmem:[#allocation3 + $0x8] sm:$0xff]
        %v3641 = vld [vmem:[#allocation3 + $0x10] sm:$0xff]
        %v3642 = vld [vmem:[#allocation3 + $0x18] sm:$0xff]
        %v3643 = vld [vmem:[#allocation3 + $0x20] sm:$0xff]
        %v3644 = vld [vmem:[#allocation3 + $0x28] sm:$0xff]
        %v3645 = vld [vmem:[#allocation3 + $0x30] sm:$0xff]
        %v3646 = vld [vmem:[#allocation3 + $0x38] sm:$0xff]
        %v3647 = vld [vmem:[#allocation3 + $0x40] sm:$0xff]
        %v3648 = vld [vmem:[#allocation3 + $0x48] sm:$0xff]
        %v3649 = vld [vmem:[#allocation3 + $0x50] sm:$0xff]
        %v3650 = vld [vmem:[#allocation3 + $0x58] sm:$0xff]
        %v3651 = vld [vmem:[#allocation3 + $0x60] sm:$0xff]
        %v3652 = vld [vmem:[#allocation3 + $0x68] sm:$0xff]
        %v3653 = vld [vmem:[#allocation3 + $0x70] sm:$0xff]
        %v3654 = vld [vmem:[#allocation3 + $0x78] sm:$0xff]
        %v3655 = vld [vmem:[#allocation3 + $0x80] sm:$0xff]
        %v3656 = vld [vmem:[#allocation3 + $0x88] sm:$0xff]
        %v3657 = vld [vmem:[#allocation3 + $0x90] sm:$0xff]
        %v3658 = vld [vmem:[#allocation3 + $0x98] sm:$0xff]
        %v3659 = vld [vmem:[#allocation3 + $0xa0] sm:$0xff]
        %v3660 = vld [vmem:[#allocation3 + $0xa8] sm:$0xff]
        %v3661 = vld [vmem:[#allocation3 + $0xb0] sm:$0xff]
        %v3662 = vld [vmem:[#allocation3 + $0xb8] sm:$0xff]
        %v3663 = vld [vmem:[#allocation3 + $0xc0] sm:$0xff]
        %v3664 = vld [vmem:[#allocation3 + $0xc8] sm:$0xff]
        %v3665 = vld [vmem:[#allocation3 + $0xd0] sm:$0xff]
        %v3666 = vld [vmem:[#allocation3 + $0xd8] sm:$0xff]
        %v3667 = vld [vmem:[#allocation3 + $0xe0] sm:$0xff]
        %v3668 = vld [vmem:[#allocation3 + $0xe8] sm:$0xff]
        %v3669 = vld [vmem:[#allocation3 + $0xf0] sm:$0xff]
        %v3670 = vld [vmem:[#allocation3 + $0xf8] sm:$0xff]
        %v3671 = vld [vmem:[#allocation5] sm:$0xff]
        %v3672 = vld [vmem:[#allocation5 + $0x8] sm:$0xff]
        %v3673 = vld [vmem:[#allocation5 + $0x10] sm:$0xff]
        %v3674 = vld [vmem:[#allocation5 + $0x18] sm:$0xff]
        %v3675 = vld [vmem:[#allocation3 + $0x1] sm:$0xff]
        %v3676 = vld [vmem:[#allocation3 + $0x9] sm:$0xff]
        %v3677 = vld [vmem:[#allocation3 + $0x11] sm:$0xff]
        %v3678 = vld [vmem:[#allocation3 + $0x19] sm:$0xff]
        %v3679 = vld [vmem:[#allocation3 + $0x21] sm:$0xff]
        %v3680 = vld [vmem:[#allocation3 + $0x29] sm:$0xff]
        %v3681 = vld [vmem:[#allocation3 + $0x31] sm:$0xff]
        %v3682 = vld [vmem:[#allocation3 + $0x39] sm:$0xff]
        %v3683 = vld [vmem:[#allocation3 + $0x41] sm:$0xff]
        %v3684 = vld [vmem:[#allocation3 + $0x49] sm:$0xff]
        %v3685 = vld [vmem:[#allocation3 + $0x51] sm:$0xff]
        %v3686 = vld [vmem:[#allocation3 + $0x59] sm:$0xff]
        %v3687 = vld [vmem:[#allocation3 + $0x61] sm:$0xff]
        %v3688 = vld [vmem:[#allocation3 + $0x69] sm:$0xff]
        %v3689 = vld [vmem:[#allocation3 + $0x71] sm:$0xff]
        %v3690 = vld [vmem:[#allocation3 + $0x79] sm:$0xff]
        %v3691 = vld [vmem:[#allocation3 + $0x81] sm:$0xff]
        %v3692 = vld [vmem:[#allocation3 + $0x89] sm:$0xff]
        %v3693 = vld [vmem:[#allocation3 + $0x91] sm:$0xff]
        %v3694 = vld [vmem:[#allocation3 + $0x99] sm:$0xff]
        %v3695 = vld [vmem:[#allocation3 + $0xa1] sm:$0xff]
        %v3696 = vld [vmem:[#allocation3 + $0xa9] sm:$0xff]
        %v3697 = vld [vmem:[#allocation3 + $0xb1] sm:$0xff]
        %v3698 = vld [vmem:[#allocation3 + $0xb9] sm:$0xff]
        %v3699 = vld [vmem:[#allocation3 + $0xc1] sm:$0xff]
        %v3700 = vld [vmem:[#allocation3 + $0xc9] sm:$0xff]
        %v3701 = vld [vmem:[#allocation3 + $0xd1] sm:$0xff]
        %v3702 = vld [vmem:[#allocation3 + $0xd9] sm:$0xff]
        %v3703 = vld [vmem:[#allocation3 + $0xe1] sm:$0xff]
        %v3704 = vld [vmem:[#allocation3 + $0xe9] sm:$0xff]
        %v3705 = vld [vmem:[#allocation3 + $0xf1] sm:$0xff]
        %v3706 = vld [vmem:[#allocation3 + $0xf9] sm:$0xff]
        %s3707 = scalar_lea.vmem [#allocation5], 32
        %v3708 = vld [vmem:[%s3707] sm:$0xff]
        %v3709 = vld [vmem:[%s3707 + $0x8] sm:$0xff]
        %v3710 = vld [vmem:[%s3707 + $0x10] sm:$0xff]
        %v3711 = vld [vmem:[%s3707 + $0x18] sm:$0xff]
        %v3713 = vsel %vm2589, %v3675, 0
        %v3716 = vsel %vm2589, %v3676, 0
        %v3719 = vsel %vm2589, %v3677, 0
        %v3722 = vsel %vm2589, %v3678, 0
        %v3725 = vsel %vm2589, %v3679, 0
        %v3728 = vsel %vm2589, %v3680, 0
        %v3731 = vsel %vm2589, %v3681, 0
        %v3734 = vsel %vm2589, %v3682, 0
        %v3737 = vsel %vm2589, %v3683, 0
        %v3740 = vsel %vm2589, %v3684, 0
        %v3743 = vsel %vm2589, %v3685, 0
        %v3746 = vsel %vm2589, %v3686, 0
        %v3749 = vsel %vm2589, %v3687, 0
        %v3752 = vsel %vm2589, %v3688, 0
        %v3755 = vsel %vm2589, %v3689, 0
        %v3758 = vsel %vm2589, %v3690, 0
        %v3761 = vsel %vm2589, %v3691, 0
        %v3764 = vsel %vm2589, %v3692, 0
        %v3767 = vsel %vm2589, %v3693, 0
        %v3770 = vsel %vm2589, %v3694, 0
        %v3773 = vsel %vm2589, %v3695, 0
        %v3776 = vsel %vm2589, %v3696, 0
        %v3779 = vsel %vm2589, %v3697, 0
        %v3782 = vsel %vm2589, %v3698, 0
        %v3785 = vsel %vm2589, %v3699, 0
        %v3788 = vsel %vm2589, %v3700, 0
        %v3791 = vsel %vm2589, %v3701, 0
        %v3794 = vsel %vm2589, %v3702, 0
        %v3797 = vsel %vm2589, %v3703, 0
        %v3800 = vsel %vm2589, %v3704, 0
        %v3803 = vsel %vm2589, %v3705, 0
        %v3806 = vsel %vm2589, %v3706, 0
        %3808 = vmatpush.msra.mxu0 0.0
        %3809 = vmatpush.msra.mxu0 0.0
        %3810 = vmatpush.msra.mxu0 0.0
        %3811 = vmatpush.msra.mxu0 0.0
        %3812 = vmatpush.msra.mxu0 0.0
        %3813 = vmatpush.msra.mxu0 0.0
        %3814 = vmatpush.msra.mxu0 0.0
        %3815 = vmatpush.msra.mxu0 0.0
        %3816 = vmatpush.msra.mxu0 0.0
        %3817 = vmatpush.msra.mxu0 0.0
        %3818 = vmatpush.msra.mxu0 0.0
        %3819 = vmatpush.msra.mxu0 0.0
        %3820 = vmatpush.msra.mxu0 %v3711
        %3821 = vmatpush.msra.mxu0 %v3710
        %3822 = vmatpush.msra.mxu0 %v3709
        %3823 = vmatpush.msra.mxu0 %v3708
        %3824 = vmatmul.f32.gmra.mxu0 %v3713
        %v3825 = vpop.f32.mrf.mxu0
        %v3826 = vadd.f32 0.0, %v3825
        %3827 = vmatmul.f32.gmra.mxu0 %v3716
        %v3828 = vpop.f32.mrf.mxu0
        %v3829 = vadd.f32 0.0, %v3828
        %3830 = vmatmul.f32.gmra.mxu0 %v3719
        %v3831 = vpop.f32.mrf.mxu0
        %v3832 = vadd.f32 0.0, %v3831
        %3833 = vmatmul.f32.gmra.mxu0 %v3722
        %v3834 = vpop.f32.mrf.mxu0
        %v3835 = vadd.f32 0.0, %v3834
        %3836 = vmatmul.f32.gmra.mxu0 %v3725
        %v3837 = vpop.f32.mrf.mxu0
        %v3838 = vadd.f32 0.0, %v3837
        %3839 = vmatmul.f32.gmra.mxu0 %v3728
        %v3840 = vpop.f32.mrf.mxu0
        %v3841 = vadd.f32 0.0, %v3840
        %3842 = vmatmul.f32.gmra.mxu0 %v3731
        %v3843 = vpop.f32.mrf.mxu0
        %v3844 = vadd.f32 0.0, %v3843
        %3845 = vmatmul.f32.gmra.mxu0 %v3734
        %v3846 = vpop.f32.mrf.mxu0
        %v3847 = vadd.f32 0.0, %v3846
        %3848 = vmatmul.f32.gmra.mxu0 %v3737
        %v3849 = vpop.f32.mrf.mxu0
        %v3850 = vadd.f32 0.0, %v3849
        %3851 = vmatmul.f32.gmra.mxu0 %v3740
        %v3852 = vpop.f32.mrf.mxu0
        %v3853 = vadd.f32 0.0, %v3852
        %3854 = vmatmul.f32.gmra.mxu0 %v3743
        %v3855 = vpop.f32.mrf.mxu0
        %v3856 = vadd.f32 0.0, %v3855
        %3857 = vmatmul.f32.gmra.mxu0 %v3746
        %v3858 = vpop.f32.mrf.mxu0
        %v3859 = vadd.f32 0.0, %v3858
        %3860 = vmatmul.f32.gmra.mxu0 %v3749
        %v3861 = vpop.f32.mrf.mxu0
        %v3862 = vadd.f32 0.0, %v3861
        %3863 = vmatmul.f32.gmra.mxu0 %v3752
        %v3864 = vpop.f32.mrf.mxu0
        %v3865 = vadd.f32 0.0, %v3864
        %3866 = vmatmul.f32.gmra.mxu0 %v3755
        %v3867 = vpop.f32.mrf.mxu0
        %v3868 = vadd.f32 0.0, %v3867
        %3869 = vmatmul.f32.gmra.mxu0 %v3758
        %v3870 = vpop.f32.mrf.mxu0
        %v3871 = vadd.f32 0.0, %v3870
        %3872 = vmatmul.f32.gmra.mxu0 %v3761
        %v3873 = vpop.f32.mrf.mxu0
        %v3874 = vadd.f32 0.0, %v3873
        %3875 = vmatmul.f32.gmra.mxu0 %v3764
        %v3876 = vpop.f32.mrf.mxu0
        %v3877 = vadd.f32 0.0, %v3876
        %3878 = vmatmul.f32.gmra.mxu0 %v3767
        %v3879 = vpop.f32.mrf.mxu0
        %v3880 = vadd.f32 0.0, %v3879
        %3881 = vmatmul.f32.gmra.mxu0 %v3770
        %v3882 = vpop.f32.mrf.mxu0
        %v3883 = vadd.f32 0.0, %v3882
        %3884 = vmatmul.f32.gmra.mxu0 %v3773
        %v3885 = vpop.f32.mrf.mxu0
        %v3886 = vadd.f32 0.0, %v3885
        %3887 = vmatmul.f32.gmra.mxu0 %v3776
        %v3888 = vpop.f32.mrf.mxu0
        %v3889 = vadd.f32 0.0, %v3888
        %3890 = vmatmul.f32.gmra.mxu0 %v3779
        %v3891 = vpop.f32.mrf.mxu0
        %v3892 = vadd.f32 0.0, %v3891
        %3893 = vmatmul.f32.gmra.mxu0 %v3782
        %v3894 = vpop.f32.mrf.mxu0
        %v3895 = vadd.f32 0.0, %v3894
        %3896 = vmatmul.f32.gmra.mxu0 %v3785
        %v3897 = vpop.f32.mrf.mxu0
        %v3898 = vadd.f32 0.0, %v3897
        %3899 = vmatmul.f32.gmra.mxu0 %v3788
        %v3900 = vpop.f32.mrf.mxu0
        %v3901 = vadd.f32 0.0, %v3900
        %3902 = vmatmul.f32.gmra.mxu0 %v3791
        %v3903 = vpop.f32.mrf.mxu0
        %v3904 = vadd.f32 0.0, %v3903
        %3905 = vmatmul.f32.gmra.mxu0 %v3794
        %v3906 = vpop.f32.mrf.mxu0
        %v3907 = vadd.f32 0.0, %v3906
        %3908 = vmatmul.f32.gmra.mxu0 %v3797
        %v3909 = vpop.f32.mrf.mxu0
        %v3910 = vadd.f32 0.0, %v3909
        %3911 = vmatmul.f32.gmra.mxu0 %v3800
        %v3912 = vpop.f32.mrf.mxu0
        %v3913 = vadd.f32 0.0, %v3912
        %3914 = vmatmul.f32.gmra.mxu0 %v3803
        %v3915 = vpop.f32.mrf.mxu0
        %v3916 = vadd.f32 0.0, %v3915
        %3917 = vmatmul.f32.gmra.mxu0 %v3806
        %v3918 = vpop.f32.mrf.mxu0
        %v3919 = vadd.f32 0.0, %v3918
        %3920 = vdwg.mxu0
        %v3922 = vsel %vm2589, %v3639, 0
        %v3925 = vsel %vm2589, %v3640, 0
        %v3928 = vsel %vm2589, %v3641, 0
        %v3931 = vsel %vm2589, %v3642, 0
        %v3934 = vsel %vm2589, %v3643, 0
        %v3937 = vsel %vm2589, %v3644, 0
        %v3940 = vsel %vm2589, %v3645, 0
        %v3943 = vsel %vm2589, %v3646, 0
        %v3946 = vsel %vm2589, %v3647, 0
        %v3949 = vsel %vm2589, %v3648, 0
        %v3952 = vsel %vm2589, %v3649, 0
        %v3955 = vsel %vm2589, %v3650, 0
        %v3958 = vsel %vm2589, %v3651, 0
        %v3961 = vsel %vm2589, %v3652, 0
        %v3964 = vsel %vm2589, %v3653, 0
        %v3967 = vsel %vm2589, %v3654, 0
        %v3970 = vsel %vm2589, %v3655, 0
        %v3973 = vsel %vm2589, %v3656, 0
        %v3976 = vsel %vm2589, %v3657, 0
        %v3979 = vsel %vm2589, %v3658, 0
        %v3982 = vsel %vm2589, %v3659, 0
        %v3985 = vsel %vm2589, %v3660, 0
        %v3988 = vsel %vm2589, %v3661, 0
        %v3991 = vsel %vm2589, %v3662, 0
        %v3994 = vsel %vm2589, %v3663, 0
        %v3997 = vsel %vm2589, %v3664, 0
        %v4000 = vsel %vm2589, %v3665, 0
        %v4003 = vsel %vm2589, %v3666, 0
        %v4006 = vsel %vm2589, %v3667, 0
        %v4009 = vsel %vm2589, %v3668, 0
        %v4012 = vsel %vm2589, %v3669, 0
        %v4015 = vsel %vm2589, %v3670, 0
        %4017 = vmatpush.msra.mxu0 0.0
        %4018 = vmatpush.msra.mxu0 0.0
        %4019 = vmatpush.msra.mxu0 0.0
        %4020 = vmatpush.msra.mxu0 0.0
        %4021 = vmatpush.msra.mxu0 0.0
        %4022 = vmatpush.msra.mxu0 0.0
        %4023 = vmatpush.msra.mxu0 0.0
        %4024 = vmatpush.msra.mxu0 0.0
        %4025 = vmatpush.msra.mxu0 0.0
        %4026 = vmatpush.msra.mxu0 0.0
        %4027 = vmatpush.msra.mxu0 0.0
        %4028 = vmatpush.msra.mxu0 0.0
        %4029 = vmatpush.msra.mxu0 %v3674
        %4030 = vmatpush.msra.mxu0 %v3673
        %4031 = vmatpush.msra.mxu0 %v3672
        %4032 = vmatpush.msra.mxu0 %v3671
        %4033 = vmatmul.f32.gmra.mxu0 %v3922
        %v4034 = vpop.f32.mrf.mxu0
        %v4035 = vadd.f32 %v3826, %v4034
        %4036 = vmatmul.f32.gmra.mxu0 %v3925
        %v4037 = vpop.f32.mrf.mxu0
        %v4038 = vadd.f32 %v3829, %v4037
        %4039 = vmatmul.f32.gmra.mxu0 %v3928
        %v4040 = vpop.f32.mrf.mxu0
        %v4041 = vadd.f32 %v3832, %v4040
        %4042 = vmatmul.f32.gmra.mxu0 %v3931
        %v4043 = vpop.f32.mrf.mxu0
        %v4044 = vadd.f32 %v3835, %v4043
        %4045 = vmatmul.f32.gmra.mxu0 %v3934
        %v4046 = vpop.f32.mrf.mxu0
        %v4047 = vadd.f32 %v3838, %v4046
        %4048 = vmatmul.f32.gmra.mxu0 %v3937
        %v4049 = vpop.f32.mrf.mxu0
        %v4050 = vadd.f32 %v3841, %v4049
        %4051 = vmatmul.f32.gmra.mxu0 %v3940
        %v4052 = vpop.f32.mrf.mxu0
        %v4053 = vadd.f32 %v3844, %v4052
        %4054 = vmatmul.f32.gmra.mxu0 %v3943
        %v4055 = vpop.f32.mrf.mxu0
        %v4056 = vadd.f32 %v3847, %v4055
        %4057 = vmatmul.f32.gmra.mxu0 %v3946
        %v4058 = vpop.f32.mrf.mxu0
        %v4059 = vadd.f32 %v3850, %v4058
        %4060 = vmatmul.f32.gmra.mxu0 %v3949
        %v4061 = vpop.f32.mrf.mxu0
        %v4062 = vadd.f32 %v3853, %v4061
        %4063 = vmatmul.f32.gmra.mxu0 %v3952
        %v4064 = vpop.f32.mrf.mxu0
        %v4065 = vadd.f32 %v3856, %v4064
        %4066 = vmatmul.f32.gmra.mxu0 %v3955
        %v4067 = vpop.f32.mrf.mxu0
        %v4068 = vadd.f32 %v3859, %v4067
        %4069 = vmatmul.f32.gmra.mxu0 %v3958
        %v4070 = vpop.f32.mrf.mxu0
        %v4071 = vadd.f32 %v3862, %v4070
        %4072 = vmatmul.f32.gmra.mxu0 %v3961
        %v4073 = vpop.f32.mrf.mxu0
        %v4074 = vadd.f32 %v3865, %v4073
        %4075 = vmatmul.f32.gmra.mxu0 %v3964
        %v4076 = vpop.f32.mrf.mxu0
        %v4077 = vadd.f32 %v3868, %v4076
        %4078 = vmatmul.f32.gmra.mxu0 %v3967
        %v4079 = vpop.f32.mrf.mxu0
        %v4080 = vadd.f32 %v3871, %v4079
        %4081 = vmatmul.f32.gmra.mxu0 %v3970
        %v4082 = vpop.f32.mrf.mxu0
        %v4083 = vadd.f32 %v3874, %v4082
        %4084 = vmatmul.f32.gmra.mxu0 %v3973
        %v4085 = vpop.f32.mrf.mxu0
        %v4086 = vadd.f32 %v3877, %v4085
        %4087 = vmatmul.f32.gmra.mxu0 %v3976
        %v4088 = vpop.f32.mrf.mxu0
        %v4089 = vadd.f32 %v3880, %v4088
        %4090 = vmatmul.f32.gmra.mxu0 %v3979
        %v4091 = vpop.f32.mrf.mxu0
        %v4092 = vadd.f32 %v3883, %v4091
        %4093 = vmatmul.f32.gmra.mxu0 %v3982
        %v4094 = vpop.f32.mrf.mxu0
        %v4095 = vadd.f32 %v3886, %v4094
        %4096 = vmatmul.f32.gmra.mxu0 %v3985
        %v4097 = vpop.f32.mrf.mxu0
        %v4098 = vadd.f32 %v3889, %v4097
        %4099 = vmatmul.f32.gmra.mxu0 %v3988
        %v4100 = vpop.f32.mrf.mxu0
        %v4101 = vadd.f32 %v3892, %v4100
        %4102 = vmatmul.f32.gmra.mxu0 %v3991
        %v4103 = vpop.f32.mrf.mxu0
        %v4104 = vadd.f32 %v3895, %v4103
        %4105 = vmatmul.f32.gmra.mxu0 %v3994
        %v4106 = vpop.f32.mrf.mxu0
        %v4107 = vadd.f32 %v3898, %v4106
        %4108 = vmatmul.f32.gmra.mxu0 %v3997
        %v4109 = vpop.f32.mrf.mxu0
        %v4110 = vadd.f32 %v3901, %v4109
        %4111 = vmatmul.f32.gmra.mxu0 %v4000
        %v4112 = vpop.f32.mrf.mxu0
        %v4113 = vadd.f32 %v3904, %v4112
        %4114 = vmatmul.f32.gmra.mxu0 %v4003
        %v4115 = vpop.f32.mrf.mxu0
        %v4116 = vadd.f32 %v3907, %v4115
        %4117 = vmatmul.f32.gmra.mxu0 %v4006
        %v4118 = vpop.f32.mrf.mxu0
        %v4119 = vadd.f32 %v3910, %v4118
        %4120 = vmatmul.f32.gmra.mxu0 %v4009
        %v4121 = vpop.f32.mrf.mxu0
        %v4122 = vadd.f32 %v3913, %v4121
        %4123 = vmatmul.f32.gmra.mxu0 %v4012
        %v4124 = vpop.f32.mrf.mxu0
        %v4125 = vadd.f32 %v3916, %v4124
        %4126 = vmatmul.f32.gmra.mxu0 %v4015
        %v4127 = vpop.f32.mrf.mxu0
        %v4128 = vadd.f32 %v3919, %v4127
        %4129 = vdwg.mxu0
        %v4130 = vld [vmem:[#allocation3 + $0x2] sm:$0xff]
        %v4131 = vld [vmem:[#allocation3 + $0xa] sm:$0xff]
        %v4132 = vld [vmem:[#allocation3 + $0x12] sm:$0xff]
        %v4133 = vld [vmem:[#allocation3 + $0x1a] sm:$0xff]
        %v4134 = vld [vmem:[#allocation3 + $0x22] sm:$0xff]
        %v4135 = vld [vmem:[#allocation3 + $0x2a] sm:$0xff]
        %v4136 = vld [vmem:[#allocation3 + $0x32] sm:$0xff]
        %v4137 = vld [vmem:[#allocation3 + $0x3a] sm:$0xff]
        %v4138 = vld [vmem:[#allocation3 + $0x42] sm:$0xff]
        %v4139 = vld [vmem:[#allocation3 + $0x4a] sm:$0xff]
        %v4140 = vld [vmem:[#allocation3 + $0x52] sm:$0xff]
        %v4141 = vld [vmem:[#allocation3 + $0x5a] sm:$0xff]
        %v4142 = vld [vmem:[#allocation3 + $0x62] sm:$0xff]
        %v4143 = vld [vmem:[#allocation3 + $0x6a] sm:$0xff]
        %v4144 = vld [vmem:[#allocation3 + $0x72] sm:$0xff]
        %v4145 = vld [vmem:[#allocation3 + $0x7a] sm:$0xff]
        %v4146 = vld [vmem:[#allocation3 + $0x82] sm:$0xff]
        %v4147 = vld [vmem:[#allocation3 + $0x8a] sm:$0xff]
        %v4148 = vld [vmem:[#allocation3 + $0x92] sm:$0xff]
        %v4149 = vld [vmem:[#allocation3 + $0x9a] sm:$0xff]
        %v4150 = vld [vmem:[#allocation3 + $0xa2] sm:$0xff]
        %v4151 = vld [vmem:[#allocation3 + $0xaa] sm:$0xff]
        %v4152 = vld [vmem:[#allocation3 + $0xb2] sm:$0xff]
        %v4153 = vld [vmem:[#allocation3 + $0xba] sm:$0xff]
        %v4154 = vld [vmem:[#allocation3 + $0xc2] sm:$0xff]
        %v4155 = vld [vmem:[#allocation3 + $0xca] sm:$0xff]
        %v4156 = vld [vmem:[#allocation3 + $0xd2] sm:$0xff]
        %v4157 = vld [vmem:[#allocation3 + $0xda] sm:$0xff]
        %v4158 = vld [vmem:[#allocation3 + $0xe2] sm:$0xff]
        %v4159 = vld [vmem:[#allocation3 + $0xea] sm:$0xff]
        %v4160 = vld [vmem:[#allocation3 + $0xf2] sm:$0xff]
        %v4161 = vld [vmem:[#allocation3 + $0xfa] sm:$0xff]
        %s4162 = scalar_lea.vmem [#allocation5], 64
        %v4163 = vld [vmem:[%s4162] sm:$0xff]
        %v4164 = vld [vmem:[%s4162 + $0x8] sm:$0xff]
        %v4165 = vld [vmem:[%s4162 + $0x10] sm:$0xff]
        %v4166 = vld [vmem:[%s4162 + $0x18] sm:$0xff]
        %v4168 = vsel %vm2589, %v4130, 0
        %v4171 = vsel %vm2589, %v4131, 0
        %v4174 = vsel %vm2589, %v4132, 0
        %v4177 = vsel %vm2589, %v4133, 0
        %v4180 = vsel %vm2589, %v4134, 0
        %v4183 = vsel %vm2589, %v4135, 0
        %v4186 = vsel %vm2589, %v4136, 0
        %v4189 = vsel %vm2589, %v4137, 0
        %v4192 = vsel %vm2589, %v4138, 0
        %v4195 = vsel %vm2589, %v4139, 0
        %v4198 = vsel %vm2589, %v4140, 0
        %v4201 = vsel %vm2589, %v4141, 0
        %v4204 = vsel %vm2589, %v4142, 0
        %v4207 = vsel %vm2589, %v4143, 0
        %v4210 = vsel %vm2589, %v4144, 0
        %v4213 = vsel %vm2589, %v4145, 0
        %v4216 = vsel %vm2589, %v4146, 0
        %v4219 = vsel %vm2589, %v4147, 0
        %v4222 = vsel %vm2589, %v4148, 0
        %v4225 = vsel %vm2589, %v4149, 0
        %v4228 = vsel %vm2589, %v4150, 0
        %v4231 = vsel %vm2589, %v4151, 0
        %v4234 = vsel %vm2589, %v4152, 0
        %v4237 = vsel %vm2589, %v4153, 0
        %v4240 = vsel %vm2589, %v4154, 0
        %v4243 = vsel %vm2589, %v4155, 0
        %v4246 = vsel %vm2589, %v4156, 0
        %v4249 = vsel %vm2589, %v4157, 0
        %v4252 = vsel %vm2589, %v4158, 0
        %v4255 = vsel %vm2589, %v4159, 0
        %v4258 = vsel %vm2589, %v4160, 0
        %v4261 = vsel %vm2589, %v4161, 0
        %4263 = vmatpush.msra.mxu0 0.0
        %4264 = vmatpush.msra.mxu0 0.0
        %4265 = vmatpush.msra.mxu0 0.0
        %4266 = vmatpush.msra.mxu0 0.0
        %4267 = vmatpush.msra.mxu0 0.0
        %4268 = vmatpush.msra.mxu0 0.0
        %4269 = vmatpush.msra.mxu0 0.0
        %4270 = vmatpush.msra.mxu0 0.0
        %4271 = vmatpush.msra.mxu0 0.0
        %4272 = vmatpush.msra.mxu0 0.0
        %4273 = vmatpush.msra.mxu0 0.0
        %4274 = vmatpush.msra.mxu0 0.0
        %4275 = vmatpush.msra.mxu0 %v4166
        %4276 = vmatpush.msra.mxu0 %v4165
        %4277 = vmatpush.msra.mxu0 %v4164
        %4278 = vmatpush.msra.mxu0 %v4163
        %4279 = vmatmul.f32.gmra.mxu0 %v4168
        %v4280 = vpop.f32.mrf.mxu0
        %v4281 = vadd.f32 0.0, %v4280
        %4282 = vmatmul.f32.gmra.mxu0 %v4171
        %v4283 = vpop.f32.mrf.mxu0
        %v4284 = vadd.f32 0.0, %v4283
        %4285 = vmatmul.f32.gmra.mxu0 %v4174
        %v4286 = vpop.f32.mrf.mxu0
        %v4287 = vadd.f32 0.0, %v4286
        %4288 = vmatmul.f32.gmra.mxu0 %v4177
        %v4289 = vpop.f32.mrf.mxu0
        %v4290 = vadd.f32 0.0, %v4289
        %4291 = vmatmul.f32.gmra.mxu0 %v4180
        %v4292 = vpop.f32.mrf.mxu0
        %v4293 = vadd.f32 0.0, %v4292
        %4294 = vmatmul.f32.gmra.mxu0 %v4183
        %v4295 = vpop.f32.mrf.mxu0
        %v4296 = vadd.f32 0.0, %v4295
        %4297 = vmatmul.f32.gmra.mxu0 %v4186
        %v4298 = vpop.f32.mrf.mxu0
        %v4299 = vadd.f32 0.0, %v4298
        %4300 = vmatmul.f32.gmra.mxu0 %v4189
        %v4301 = vpop.f32.mrf.mxu0
        %v4302 = vadd.f32 0.0, %v4301
        %4303 = vmatmul.f32.gmra.mxu0 %v4192
        %v4304 = vpop.f32.mrf.mxu0
        %v4305 = vadd.f32 0.0, %v4304
        %4306 = vmatmul.f32.gmra.mxu0 %v4195
        %v4307 = vpop.f32.mrf.mxu0
        %v4308 = vadd.f32 0.0, %v4307
        %4309 = vmatmul.f32.gmra.mxu0 %v4198
        %v4310 = vpop.f32.mrf.mxu0
        %v4311 = vadd.f32 0.0, %v4310
        %4312 = vmatmul.f32.gmra.mxu0 %v4201
        %v4313 = vpop.f32.mrf.mxu0
        %v4314 = vadd.f32 0.0, %v4313
        %4315 = vmatmul.f32.gmra.mxu0 %v4204
        %v4316 = vpop.f32.mrf.mxu0
        %v4317 = vadd.f32 0.0, %v4316
        %4318 = vmatmul.f32.gmra.mxu0 %v4207
        %v4319 = vpop.f32.mrf.mxu0
        %v4320 = vadd.f32 0.0, %v4319
        %4321 = vmatmul.f32.gmra.mxu0 %v4210
        %v4322 = vpop.f32.mrf.mxu0
        %v4323 = vadd.f32 0.0, %v4322
        %4324 = vmatmul.f32.gmra.mxu0 %v4213
        %v4325 = vpop.f32.mrf.mxu0
        %v4326 = vadd.f32 0.0, %v4325
        %4327 = vmatmul.f32.gmra.mxu0 %v4216
        %v4328 = vpop.f32.mrf.mxu0
        %v4329 = vadd.f32 0.0, %v4328
        %4330 = vmatmul.f32.gmra.mxu0 %v4219
        %v4331 = vpop.f32.mrf.mxu0
        %v4332 = vadd.f32 0.0, %v4331
        %4333 = vmatmul.f32.gmra.mxu0 %v4222
        %v4334 = vpop.f32.mrf.mxu0
        %v4335 = vadd.f32 0.0, %v4334
        %4336 = vmatmul.f32.gmra.mxu0 %v4225
        %v4337 = vpop.f32.mrf.mxu0
        %v4338 = vadd.f32 0.0, %v4337
        %4339 = vmatmul.f32.gmra.mxu0 %v4228
        %v4340 = vpop.f32.mrf.mxu0
        %v4341 = vadd.f32 0.0, %v4340
        %4342 = vmatmul.f32.gmra.mxu0 %v4231
        %v4343 = vpop.f32.mrf.mxu0
        %v4344 = vadd.f32 0.0, %v4343
        %4345 = vmatmul.f32.gmra.mxu0 %v4234
        %v4346 = vpop.f32.mrf.mxu0
        %v4347 = vadd.f32 0.0, %v4346
        %4348 = vmatmul.f32.gmra.mxu0 %v4237
        %v4349 = vpop.f32.mrf.mxu0
        %v4350 = vadd.f32 0.0, %v4349
        %4351 = vmatmul.f32.gmra.mxu0 %v4240
        %v4352 = vpop.f32.mrf.mxu0
        %v4353 = vadd.f32 0.0, %v4352
        %4354 = vmatmul.f32.gmra.mxu0 %v4243
        %v4355 = vpop.f32.mrf.mxu0
        %v4356 = vadd.f32 0.0, %v4355
        %4357 = vmatmul.f32.gmra.mxu0 %v4246
        %v4358 = vpop.f32.mrf.mxu0
        %v4359 = vadd.f32 0.0, %v4358
        %4360 = vmatmul.f32.gmra.mxu0 %v4249
        %v4361 = vpop.f32.mrf.mxu0
        %v4362 = vadd.f32 0.0, %v4361
        %4363 = vmatmul.f32.gmra.mxu0 %v4252
        %v4364 = vpop.f32.mrf.mxu0
        %v4365 = vadd.f32 0.0, %v4364
        %4366 = vmatmul.f32.gmra.mxu0 %v4255
        %v4367 = vpop.f32.mrf.mxu0
        %v4368 = vadd.f32 0.0, %v4367
        %4369 = vmatmul.f32.gmra.mxu0 %v4258
        %v4370 = vpop.f32.mrf.mxu0
        %v4371 = vadd.f32 0.0, %v4370
        %4372 = vmatmul.f32.gmra.mxu0 %v4261
        %v4373 = vpop.f32.mrf.mxu0
        %v4374 = vadd.f32 0.0, %v4373
        %4375 = vdwg.mxu0
        %v4376 = vadd.f32 %v4035, %v4281
        %v4377 = vadd.f32 %v4038, %v4284
        %v4378 = vadd.f32 %v4041, %v4287
        %v4379 = vadd.f32 %v4044, %v4290
        %v4380 = vadd.f32 %v4047, %v4293
        %v4381 = vadd.f32 %v4050, %v4296
        %v4382 = vadd.f32 %v4053, %v4299
        %v4383 = vadd.f32 %v4056, %v4302
        %v4384 = vadd.f32 %v4059, %v4305
        %v4385 = vadd.f32 %v4062, %v4308
        %v4386 = vadd.f32 %v4065, %v4311
        %v4387 = vadd.f32 %v4068, %v4314
        %v4388 = vadd.f32 %v4071, %v4317
        %v4389 = vadd.f32 %v4074, %v4320
        %v4390 = vadd.f32 %v4077, %v4323
        %v4391 = vadd.f32 %v4080, %v4326
        %v4392 = vadd.f32 %v4083, %v4329
        %v4393 = vadd.f32 %v4086, %v4332
        %v4394 = vadd.f32 %v4089, %v4335
        %v4395 = vadd.f32 %v4092, %v4338
        %v4396 = vadd.f32 %v4095, %v4341
        %v4397 = vadd.f32 %v4098, %v4344
        %v4398 = vadd.f32 %v4101, %v4347
        %v4399 = vadd.f32 %v4104, %v4350
        %v4400 = vadd.f32 %v4107, %v4353
        %v4401 = vadd.f32 %v4110, %v4356
        %v4402 = vadd.f32 %v4113, %v4359
        %v4403 = vadd.f32 %v4116, %v4362
        %v4404 = vadd.f32 %v4119, %v4365
        %v4405 = vadd.f32 %v4122, %v4368
        %v4406 = vadd.f32 %v4125, %v4371
        %v4407 = vadd.f32 %v4128, %v4374
        %v4408 = vld [vmem:[#allocation3 + $0x10] sm:$0xff]
        %v4409 = vld [vmem:[#allocation3 + $0x18] sm:$0xff]
        %v4410 = vld [vmem:[#allocation3 + $0x20] sm:$0xff]
        %v4411 = vld [vmem:[#allocation3 + $0x28] sm:$0xff]
        %v4412 = vld [vmem:[#allocation3 + $0x30] sm:$0xff]
        %v4413 = vld [vmem:[#allocation3 + $0x38] sm:$0xff]
        %v4414 = vld [vmem:[#allocation3 + $0x40] sm:$0xff]
        %v4415 = vld [vmem:[#allocation3 + $0x48] sm:$0xff]
        %v4416 = vld [vmem:[#allocation3 + $0x50] sm:$0xff]
        %v4417 = vld [vmem:[#allocation3 + $0x58] sm:$0xff]
        %v4418 = vld [vmem:[#allocation3 + $0x60] sm:$0xff]
        %v4419 = vld [vmem:[#allocation3 + $0x68] sm:$0xff]
        %v4420 = vld [vmem:[#allocation3 + $0x70] sm:$0xff]
        %v4421 = vld [vmem:[#allocation3 + $0x78] sm:$0xff]
        %v4422 = vld [vmem:[#allocation3 + $0x80] sm:$0xff]
        %v4423 = vld [vmem:[#allocation3 + $0x88] sm:$0xff]
        %v4424 = vld [vmem:[#allocation3 + $0x90] sm:$0xff]
        %v4425 = vld [vmem:[#allocation3 + $0x98] sm:$0xff]
        %v4426 = vld [vmem:[#allocation3 + $0xa0] sm:$0xff]
        %v4427 = vld [vmem:[#allocation3 + $0xa8] sm:$0xff]
        %v4428 = vld [vmem:[#allocation3 + $0xb0] sm:$0xff]
        %v4429 = vld [vmem:[#allocation3 + $0xb8] sm:$0xff]
        %v4430 = vld [vmem:[#allocation3 + $0xc0] sm:$0xff]
        %v4431 = vld [vmem:[#allocation3 + $0xc8] sm:$0xff]
        %v4432 = vld [vmem:[#allocation3 + $0xd0] sm:$0xff]
        %v4433 = vld [vmem:[#allocation3 + $0xd8] sm:$0xff]
        %v4434 = vld [vmem:[#allocation3 + $0xe0] sm:$0xff]
        %v4435 = vld [vmem:[#allocation3 + $0xe8] sm:$0xff]
        %v4436 = vld [vmem:[#allocation3 + $0xf0] sm:$0xff]
        %v4437 = vld [vmem:[#allocation3 + $0xf8] sm:$0xff]
        %v4438 = vld [vmem:[#allocation3 + $0x100] sm:$0xff]
        %v4439 = vld [vmem:[#allocation3 + $0x108] sm:$0xff]
        %s4440 = scalar_lea.vmem [#allocation5], 96
        %v4441 = vld [vmem:[%s4440] sm:$0xff]
        %v4442 = vld [vmem:[%s4440 + $0x8] sm:$0xff]
        %v4443 = vld [vmem:[%s4440 + $0x10] sm:$0xff]
        %v4444 = vld [vmem:[%s4440 + $0x18] sm:$0xff]
        %v4446 = vsel %vm2589, %v4408, 0
        %v4449 = vsel %vm2589, %v4409, 0
        %v4452 = vsel %vm2589, %v4410, 0
        %v4455 = vsel %vm2589, %v4411, 0
        %v4458 = vsel %vm2589, %v4412, 0
        %v4461 = vsel %vm2589, %v4413, 0
        %v4464 = vsel %vm2589, %v4414, 0
        %v4467 = vsel %vm2589, %v4415, 0
        %v4470 = vsel %vm2589, %v4416, 0
        %v4473 = vsel %vm2589, %v4417, 0
        %v4476 = vsel %vm2589, %v4418, 0
        %v4479 = vsel %vm2589, %v4419, 0
        %v4482 = vsel %vm2589, %v4420, 0
        %v4485 = vsel %vm2589, %v4421, 0
        %v4488 = vsel %vm2589, %v4422, 0
        %v4491 = vsel %vm2589, %v4423, 0
        %v4494 = vsel %vm2589, %v4424, 0
        %v4497 = vsel %vm2589, %v4425, 0
        %v4500 = vsel %vm2589, %v4426, 0
        %v4503 = vsel %vm2589, %v4427, 0
        %v4506 = vsel %vm2589, %v4428, 0
        %v4509 = vsel %vm2589, %v4429, 0
        %v4512 = vsel %vm2589, %v4430, 0
        %v4515 = vsel %vm2589, %v4431, 0
        %v4518 = vsel %vm2589, %v4432, 0
        %v4521 = vsel %vm2589, %v4433, 0
        %v4524 = vsel %vm2589, %v4434, 0
        %v4527 = vsel %vm2589, %v4435, 0
        %v4530 = vsel %vm2589, %v4436, 0
        %v4533 = vsel %vm2589, %v4437, 0
        %v4536 = vsel %vm2589, %v4438, 0
        %v4539 = vsel %vm2589, %v4439, 0
        %4541 = vmatpush.msra.mxu0 0.0
        %4542 = vmatpush.msra.mxu0 0.0
        %4543 = vmatpush.msra.mxu0 0.0
        %4544 = vmatpush.msra.mxu0 0.0
        %4545 = vmatpush.msra.mxu0 0.0
        %4546 = vmatpush.msra.mxu0 0.0
        %4547 = vmatpush.msra.mxu0 0.0
        %4548 = vmatpush.msra.mxu0 0.0
        %4549 = vmatpush.msra.mxu0 0.0
        %4550 = vmatpush.msra.mxu0 0.0
        %4551 = vmatpush.msra.mxu0 0.0
        %4552 = vmatpush.msra.mxu0 0.0
        %4553 = vmatpush.msra.mxu0 %v4444
        %4554 = vmatpush.msra.mxu0 %v4443
        %4555 = vmatpush.msra.mxu0 %v4442
        %4556 = vmatpush.msra.mxu0 %v4441
        %4557 = vmatmul.f32.gmra.mxu0 %v4446
        %v4558 = vpop.f32.mrf.mxu0
        %v4559 = vadd.f32 0.0, %v4558
        %4560 = vmatmul.f32.gmra.mxu0 %v4449
        %v4561 = vpop.f32.mrf.mxu0
        %v4562 = vadd.f32 0.0, %v4561
        %4563 = vmatmul.f32.gmra.mxu0 %v4452
        %v4564 = vpop.f32.mrf.mxu0
        %v4565 = vadd.f32 0.0, %v4564
        %4566 = vmatmul.f32.gmra.mxu0 %v4455
        %v4567 = vpop.f32.mrf.mxu0
        %v4568 = vadd.f32 0.0, %v4567
        %4569 = vmatmul.f32.gmra.mxu0 %v4458
        %v4570 = vpop.f32.mrf.mxu0
        %v4571 = vadd.f32 0.0, %v4570
        %4572 = vmatmul.f32.gmra.mxu0 %v4461
        %v4573 = vpop.f32.mrf.mxu0
        %v4574 = vadd.f32 0.0, %v4573
        %4575 = vmatmul.f32.gmra.mxu0 %v4464
        %v4576 = vpop.f32.mrf.mxu0
        %v4577 = vadd.f32 0.0, %v4576
        %4578 = vmatmul.f32.gmra.mxu0 %v4467
        %v4579 = vpop.f32.mrf.mxu0
        %v4580 = vadd.f32 0.0, %v4579
        %4581 = vmatmul.f32.gmra.mxu0 %v4470
        %v4582 = vpop.f32.mrf.mxu0
        %v4583 = vadd.f32 0.0, %v4582
        %4584 = vmatmul.f32.gmra.mxu0 %v4473
        %v4585 = vpop.f32.mrf.mxu0
        %v4586 = vadd.f32 0.0, %v4585
        %4587 = vmatmul.f32.gmra.mxu0 %v4476
        %v4588 = vpop.f32.mrf.mxu0
        %v4589 = vadd.f32 0.0, %v4588
        %4590 = vmatmul.f32.gmra.mxu0 %v4479
        %v4591 = vpop.f32.mrf.mxu0
        %v4592 = vadd.f32 0.0, %v4591
        %4593 = vmatmul.f32.gmra.mxu0 %v4482
        %v4594 = vpop.f32.mrf.mxu0
        %v4595 = vadd.f32 0.0, %v4594
        %4596 = vmatmul.f32.gmra.mxu0 %v4485
        %v4597 = vpop.f32.mrf.mxu0
        %v4598 = vadd.f32 0.0, %v4597
        %4599 = vmatmul.f32.gmra.mxu0 %v4488
        %v4600 = vpop.f32.mrf.mxu0
        %v4601 = vadd.f32 0.0, %v4600
        %4602 = vmatmul.f32.gmra.mxu0 %v4491
        %v4603 = vpop.f32.mrf.mxu0
        %v4604 = vadd.f32 0.0, %v4603
        %4605 = vmatmul.f32.gmra.mxu0 %v4494
        %v4606 = vpop.f32.mrf.mxu0
        %v4607 = vadd.f32 0.0, %v4606
        %4608 = vmatmul.f32.gmra.mxu0 %v4497
        %v4609 = vpop.f32.mrf.mxu0
        %v4610 = vadd.f32 0.0, %v4609
        %4611 = vmatmul.f32.gmra.mxu0 %v4500
        %v4612 = vpop.f32.mrf.mxu0
        %v4613 = vadd.f32 0.0, %v4612
        %4614 = vmatmul.f32.gmra.mxu0 %v4503
        %v4615 = vpop.f32.mrf.mxu0
        %v4616 = vadd.f32 0.0, %v4615
        %4617 = vmatmul.f32.gmra.mxu0 %v4506
        %v4618 = vpop.f32.mrf.mxu0
        %v4619 = vadd.f32 0.0, %v4618
        %4620 = vmatmul.f32.gmra.mxu0 %v4509
        %v4621 = vpop.f32.mrf.mxu0
        %v4622 = vadd.f32 0.0, %v4621
        %4623 = vmatmul.f32.gmra.mxu0 %v4512
        %v4624 = vpop.f32.mrf.mxu0
        %v4625 = vadd.f32 0.0, %v4624
        %4626 = vmatmul.f32.gmra.mxu0 %v4515
        %v4627 = vpop.f32.mrf.mxu0
        %v4628 = vadd.f32 0.0, %v4627
        %4629 = vmatmul.f32.gmra.mxu0 %v4518
        %v4630 = vpop.f32.mrf.mxu0
        %v4631 = vadd.f32 0.0, %v4630
        %4632 = vmatmul.f32.gmra.mxu0 %v4521
        %v4633 = vpop.f32.mrf.mxu0
        %v4634 = vadd.f32 0.0, %v4633
        %4635 = vmatmul.f32.gmra.mxu0 %v4524
        %v4636 = vpop.f32.mrf.mxu0
        %v4637 = vadd.f32 0.0, %v4636
        %4638 = vmatmul.f32.gmra.mxu0 %v4527
        %v4639 = vpop.f32.mrf.mxu0
        %v4640 = vadd.f32 0.0, %v4639
        %4641 = vmatmul.f32.gmra.mxu0 %v4530
        %v4642 = vpop.f32.mrf.mxu0
        %v4643 = vadd.f32 0.0, %v4642
        %4644 = vmatmul.f32.gmra.mxu0 %v4533
        %v4645 = vpop.f32.mrf.mxu0
        %v4646 = vadd.f32 0.0, %v4645
        %4647 = vmatmul.f32.gmra.mxu0 %v4536
        %v4648 = vpop.f32.mrf.mxu0
        %v4649 = vadd.f32 0.0, %v4648
        %4650 = vmatmul.f32.gmra.mxu0 %v4539
        %v4651 = vpop.f32.mrf.mxu0
        %v4652 = vadd.f32 0.0, %v4651
        %4653 = vdwg.mxu0
        %v4654 = vadd.f32 %v4376, %v4559
        %v4655 = vadd.f32 %v4377, %v4562
        %v4656 = vadd.f32 %v4378, %v4565
        %v4657 = vadd.f32 %v4379, %v4568
        %v4658 = vadd.f32 %v4380, %v4571
        %v4659 = vadd.f32 %v4381, %v4574
        %v4660 = vadd.f32 %v4382, %v4577
        %v4661 = vadd.f32 %v4383, %v4580
        %v4662 = vadd.f32 %v4384, %v4583
        %v4663 = vadd.f32 %v4385, %v4586
        %v4664 = vadd.f32 %v4386, %v4589
        %v4665 = vadd.f32 %v4387, %v4592
        %v4666 = vadd.f32 %v4388, %v4595
        %v4667 = vadd.f32 %v4389, %v4598
        %v4668 = vadd.f32 %v4390, %v4601
        %v4669 = vadd.f32 %v4391, %v4604
        %v4670 = vadd.f32 %v4392, %v4607
        %v4671 = vadd.f32 %v4393, %v4610
        %v4672 = vadd.f32 %v4394, %v4613
        %v4673 = vadd.f32 %v4395, %v4616
        %v4674 = vadd.f32 %v4396, %v4619
        %v4675 = vadd.f32 %v4397, %v4622
        %v4676 = vadd.f32 %v4398, %v4625
        %v4677 = vadd.f32 %v4399, %v4628
        %v4678 = vadd.f32 %v4400, %v4631
        %v4679 = vadd.f32 %v4401, %v4634
        %v4680 = vadd.f32 %v4402, %v4637
        %v4681 = vadd.f32 %v4403, %v4640
        %v4682 = vadd.f32 %v4404, %v4643
        %v4683 = vadd.f32 %v4405, %v4646
        %v4684 = vadd.f32 %v4406, %v4649
        %v4685 = vadd.f32 %v4407, %v4652
        %v4686 = vld [vmem:[#allocation3 + $0x11] sm:$0xff]
        %v4687 = vld [vmem:[#allocation3 + $0x19] sm:$0xff]
        %v4688 = vld [vmem:[#allocation3 + $0x21] sm:$0xff]
        %v4689 = vld [vmem:[#allocation3 + $0x29] sm:$0xff]
        %v4690 = vld [vmem:[#allocation3 + $0x31] sm:$0xff]
        %v4691 = vld [vmem:[#allocation3 + $0x39] sm:$0xff]
        %v4692 = vld [vmem:[#allocation3 + $0x41] sm:$0xff]
        %v4693 = vld [vmem:[#allocation3 + $0x49] sm:$0xff]
        %v4694 = vld [vmem:[#allocation3 + $0x51] sm:$0xff]
        %v4695 = vld [vmem:[#allocation3 + $0x59] sm:$0xff]
        %v4696 = vld [vmem:[#allocation3 + $0x61] sm:$0xff]
        %v4697 = vld [vmem:[#allocation3 + $0x69] sm:$0xff]
        %v4698 = vld [vmem:[#allocation3 + $0x71] sm:$0xff]
        %v4699 = vld [vmem:[#allocation3 + $0x79] sm:$0xff]
        %v4700 = vld [vmem:[#allocation3 + $0x81] sm:$0xff]
        %v4701 = vld [vmem:[#allocation3 + $0x89] sm:$0xff]
        %v4702 = vld [vmem:[#allocation3 + $0x91] sm:$0xff]
        %v4703 = vld [vmem:[#allocation3 + $0x99] sm:$0xff]
        %v4704 = vld [vmem:[#allocation3 + $0xa1] sm:$0xff]
        %v4705 = vld [vmem:[#allocation3 + $0xa9] sm:$0xff]
        %v4706 = vld [vmem:[#allocation3 + $0xb1] sm:$0xff]
        %v4707 = vld [vmem:[#allocation3 + $0xb9] sm:$0xff]
        %v4708 = vld [vmem:[#allocation3 + $0xc1] sm:$0xff]
        %v4709 = vld [vmem:[#allocation3 + $0xc9] sm:$0xff]
        %v4710 = vld [vmem:[#allocation3 + $0xd1] sm:$0xff]
        %v4711 = vld [vmem:[#allocation3 + $0xd9] sm:$0xff]
        %v4712 = vld [vmem:[#allocation3 + $0xe1] sm:$0xff]
        %v4713 = vld [vmem:[#allocation3 + $0xe9] sm:$0xff]
        %v4714 = vld [vmem:[#allocation3 + $0xf1] sm:$0xff]
        %v4715 = vld [vmem:[#allocation3 + $0xf9] sm:$0xff]
        %v4716 = vld [vmem:[#allocation3 + $0x101] sm:$0xff]
        %v4717 = vld [vmem:[#allocation3 + $0x109] sm:$0xff]
        %s4718 = scalar_lea.vmem [#allocation5], 128
        %v4719 = vld [vmem:[%s4718] sm:$0xff]
        %v4720 = vld [vmem:[%s4718 + $0x8] sm:$0xff]
        %v4721 = vld [vmem:[%s4718 + $0x10] sm:$0xff]
        %v4722 = vld [vmem:[%s4718 + $0x18] sm:$0xff]
        %v4724 = vsel %vm2589, %v4686, 0
        %v4727 = vsel %vm2589, %v4687, 0
        %v4730 = vsel %vm2589, %v4688, 0
        %v4733 = vsel %vm2589, %v4689, 0
        %v4736 = vsel %vm2589, %v4690, 0
        %v4739 = vsel %vm2589, %v4691, 0
        %v4742 = vsel %vm2589, %v4692, 0
        %v4745 = vsel %vm2589, %v4693, 0
        %v4748 = vsel %vm2589, %v4694, 0
        %v4751 = vsel %vm2589, %v4695, 0
        %v4754 = vsel %vm2589, %v4696, 0
        %v4757 = vsel %vm2589, %v4697, 0
        %v4760 = vsel %vm2589, %v4698, 0
        %v4763 = vsel %vm2589, %v4699, 0
        %v4766 = vsel %vm2589, %v4700, 0
        %v4769 = vsel %vm2589, %v4701, 0
        %v4772 = vsel %vm2589, %v4702, 0
        %v4775 = vsel %vm2589, %v4703, 0
        %v4778 = vsel %vm2589, %v4704, 0
        %v4781 = vsel %vm2589, %v4705, 0
        %v4784 = vsel %vm2589, %v4706, 0
        %v4787 = vsel %vm2589, %v4707, 0
        %v4790 = vsel %vm2589, %v4708, 0
        %v4793 = vsel %vm2589, %v4709, 0
        %v4796 = vsel %vm2589, %v4710, 0
        %v4799 = vsel %vm2589, %v4711, 0
        %v4802 = vsel %vm2589, %v4712, 0
        %v4805 = vsel %vm2589, %v4713, 0
        %v4808 = vsel %vm2589, %v4714, 0
        %v4811 = vsel %vm2589, %v4715, 0
        %v4814 = vsel %vm2589, %v4716, 0
        %v4817 = vsel %vm2589, %v4717, 0
        %4819 = vmatpush.msra.mxu0 0.0
        %4820 = vmatpush.msra.mxu0 0.0
        %4821 = vmatpush.msra.mxu0 0.0
        %4822 = vmatpush.msra.mxu0 0.0
        %4823 = vmatpush.msra.mxu0 0.0
        %4824 = vmatpush.msra.mxu0 0.0
        %4825 = vmatpush.msra.mxu0 0.0
        %4826 = vmatpush.msra.mxu0 0.0
        %4827 = vmatpush.msra.mxu0 0.0
        %4828 = vmatpush.msra.mxu0 0.0
        %4829 = vmatpush.msra.mxu0 0.0
        %4830 = vmatpush.msra.mxu0 0.0
        %4831 = vmatpush.msra.mxu0 %v4722
        %4832 = vmatpush.msra.mxu0 %v4721
        %4833 = vmatpush.msra.mxu0 %v4720
        %4834 = vmatpush.msra.mxu0 %v4719
        %4835 = vmatmul.f32.gmra.mxu0 %v4724
        %v4836 = vpop.f32.mrf.mxu0
        %v4837 = vadd.f32 0.0, %v4836
        %4838 = vmatmul.f32.gmra.mxu0 %v4727
        %v4839 = vpop.f32.mrf.mxu0
        %v4840 = vadd.f32 0.0, %v4839
        %4841 = vmatmul.f32.gmra.mxu0 %v4730
        %v4842 = vpop.f32.mrf.mxu0
        %v4843 = vadd.f32 0.0, %v4842
        %4844 = vmatmul.f32.gmra.mxu0 %v4733
        %v4845 = vpop.f32.mrf.mxu0
        %v4846 = vadd.f32 0.0, %v4845
        %4847 = vmatmul.f32.gmra.mxu0 %v4736
        %v4848 = vpop.f32.mrf.mxu0
        %v4849 = vadd.f32 0.0, %v4848
        %4850 = vmatmul.f32.gmra.mxu0 %v4739
        %v4851 = vpop.f32.mrf.mxu0
        %v4852 = vadd.f32 0.0, %v4851
        %4853 = vmatmul.f32.gmra.mxu0 %v4742
        %v4854 = vpop.f32.mrf.mxu0
        %v4855 = vadd.f32 0.0, %v4854
        %4856 = vmatmul.f32.gmra.mxu0 %v4745
        %v4857 = vpop.f32.mrf.mxu0
        %v4858 = vadd.f32 0.0, %v4857
        %4859 = vmatmul.f32.gmra.mxu0 %v4748
        %v4860 = vpop.f32.mrf.mxu0
        %v4861 = vadd.f32 0.0, %v4860
        %4862 = vmatmul.f32.gmra.mxu0 %v4751
        %v4863 = vpop.f32.mrf.mxu0
        %v4864 = vadd.f32 0.0, %v4863
        %4865 = vmatmul.f32.gmra.mxu0 %v4754
        %v4866 = vpop.f32.mrf.mxu0
        %v4867 = vadd.f32 0.0, %v4866
        %4868 = vmatmul.f32.gmra.mxu0 %v4757
        %v4869 = vpop.f32.mrf.mxu0
        %v4870 = vadd.f32 0.0, %v4869
        %4871 = vmatmul.f32.gmra.mxu0 %v4760
        %v4872 = vpop.f32.mrf.mxu0
        %v4873 = vadd.f32 0.0, %v4872
        %4874 = vmatmul.f32.gmra.mxu0 %v4763
        %v4875 = vpop.f32.mrf.mxu0
        %v4876 = vadd.f32 0.0, %v4875
        %4877 = vmatmul.f32.gmra.mxu0 %v4766
        %v4878 = vpop.f32.mrf.mxu0
        %v4879 = vadd.f32 0.0, %v4878
        %4880 = vmatmul.f32.gmra.mxu0 %v4769
        %v4881 = vpop.f32.mrf.mxu0
        %v4882 = vadd.f32 0.0, %v4881
        %4883 = vmatmul.f32.gmra.mxu0 %v4772
        %v4884 = vpop.f32.mrf.mxu0
        %v4885 = vadd.f32 0.0, %v4884
        %4886 = vmatmul.f32.gmra.mxu0 %v4775
        %v4887 = vpop.f32.mrf.mxu0
        %v4888 = vadd.f32 0.0, %v4887
        %4889 = vmatmul.f32.gmra.mxu0 %v4778
        %v4890 = vpop.f32.mrf.mxu0
        %v4891 = vadd.f32 0.0, %v4890
        %4892 = vmatmul.f32.gmra.mxu0 %v4781
        %v4893 = vpop.f32.mrf.mxu0
        %v4894 = vadd.f32 0.0, %v4893
        %4895 = vmatmul.f32.gmra.mxu0 %v4784
        %v4896 = vpop.f32.mrf.mxu0
        %v4897 = vadd.f32 0.0, %v4896
        %4898 = vmatmul.f32.gmra.mxu0 %v4787
        %v4899 = vpop.f32.mrf.mxu0
        %v4900 = vadd.f32 0.0, %v4899
        %4901 = vmatmul.f32.gmra.mxu0 %v4790
        %v4902 = vpop.f32.mrf.mxu0
        %v4903 = vadd.f32 0.0, %v4902
        %4904 = vmatmul.f32.gmra.mxu0 %v4793
        %v4905 = vpop.f32.mrf.mxu0
        %v4906 = vadd.f32 0.0, %v4905
        %4907 = vmatmul.f32.gmra.mxu0 %v4796
        %v4908 = vpop.f32.mrf.mxu0
        %v4909 = vadd.f32 0.0, %v4908
        %4910 = vmatmul.f32.gmra.mxu0 %v4799
        %v4911 = vpop.f32.mrf.mxu0
        %v4912 = vadd.f32 0.0, %v4911
        %4913 = vmatmul.f32.gmra.mxu0 %v4802
        %v4914 = vpop.f32.mrf.mxu0
        %v4915 = vadd.f32 0.0, %v4914
        %4916 = vmatmul.f32.gmra.mxu0 %v4805
        %v4917 = vpop.f32.mrf.mxu0
        %v4918 = vadd.f32 0.0, %v4917
        %4919 = vmatmul.f32.gmra.mxu0 %v4808
        %v4920 = vpop.f32.mrf.mxu0
        %v4921 = vadd.f32 0.0, %v4920
        %4922 = vmatmul.f32.gmra.mxu0 %v4811
        %v4923 = vpop.f32.mrf.mxu0
        %v4924 = vadd.f32 0.0, %v4923
        %4925 = vmatmul.f32.gmra.mxu0 %v4814
        %v4926 = vpop.f32.mrf.mxu0
        %v4927 = vadd.f32 0.0, %v4926
        %4928 = vmatmul.f32.gmra.mxu0 %v4817
        %v4929 = vpop.f32.mrf.mxu0
        %v4930 = vadd.f32 0.0, %v4929
        %4931 = vdwg.mxu0
        %v4932 = vadd.f32 %v4654, %v4837
        %v4933 = vadd.f32 %v4655, %v4840
        %v4934 = vadd.f32 %v4656, %v4843
        %v4935 = vadd.f32 %v4657, %v4846
        %v4936 = vadd.f32 %v4658, %v4849
        %v4937 = vadd.f32 %v4659, %v4852
        %v4938 = vadd.f32 %v4660, %v4855
        %v4939 = vadd.f32 %v4661, %v4858
        %v4940 = vadd.f32 %v4662, %v4861
        %v4941 = vadd.f32 %v4663, %v4864
        %v4942 = vadd.f32 %v4664, %v4867
        %v4943 = vadd.f32 %v4665, %v4870
        %v4944 = vadd.f32 %v4666, %v4873
        %v4945 = vadd.f32 %v4667, %v4876
        %v4946 = vadd.f32 %v4668, %v4879
        %v4947 = vadd.f32 %v4669, %v4882
        %v4948 = vadd.f32 %v4670, %v4885
        %v4949 = vadd.f32 %v4671, %v4888
        %v4950 = vadd.f32 %v4672, %v4891
        %v4951 = vadd.f32 %v4673, %v4894
        %v4952 = vadd.f32 %v4674, %v4897
        %v4953 = vadd.f32 %v4675, %v4900
        %v4954 = vadd.f32 %v4676, %v4903
        %v4955 = vadd.f32 %v4677, %v4906
        %v4956 = vadd.f32 %v4678, %v4909
        %v4957 = vadd.f32 %v4679, %v4912
        %v4958 = vadd.f32 %v4680, %v4915
        %v4959 = vadd.f32 %v4681, %v4918
        %v4960 = vadd.f32 %v4682, %v4921
        %v4961 = vadd.f32 %v4683, %v4924
        %v4962 = vadd.f32 %v4684, %v4927
        %v4963 = vadd.f32 %v4685, %v4930
        %v4964 = vld [vmem:[#allocation3 + $0x12] sm:$0xff]
        %v4965 = vld [vmem:[#allocation3 + $0x1a] sm:$0xff]
        %v4966 = vld [vmem:[#allocation3 + $0x22] sm:$0xff]
        %v4967 = vld [vmem:[#allocation3 + $0x2a] sm:$0xff]
        %v4968 = vld [vmem:[#allocation3 + $0x32] sm:$0xff]
        %v4969 = vld [vmem:[#allocation3 + $0x3a] sm:$0xff]
        %v4970 = vld [vmem:[#allocation3 + $0x42] sm:$0xff]
        %v4971 = vld [vmem:[#allocation3 + $0x4a] sm:$0xff]
        %v4972 = vld [vmem:[#allocation3 + $0x52] sm:$0xff]
        %v4973 = vld [vmem:[#allocation3 + $0x5a] sm:$0xff]
        %v4974 = vld [vmem:[#allocation3 + $0x62] sm:$0xff]
        %v4975 = vld [vmem:[#allocation3 + $0x6a] sm:$0xff]
        %v4976 = vld [vmem:[#allocation3 + $0x72] sm:$0xff]
        %v4977 = vld [vmem:[#allocation3 + $0x7a] sm:$0xff]
        %v4978 = vld [vmem:[#allocation3 + $0x82] sm:$0xff]
        %v4979 = vld [vmem:[#allocation3 + $0x8a] sm:$0xff]
        %v4980 = vld [vmem:[#allocation3 + $0x92] sm:$0xff]
        %v4981 = vld [vmem:[#allocation3 + $0x9a] sm:$0xff]
        %v4982 = vld [vmem:[#allocation3 + $0xa2] sm:$0xff]
        %v4983 = vld [vmem:[#allocation3 + $0xaa] sm:$0xff]
        %v4984 = vld [vmem:[#allocation3 + $0xb2] sm:$0xff]
        %v4985 = vld [vmem:[#allocation3 + $0xba] sm:$0xff]
        %v4986 = vld [vmem:[#allocation3 + $0xc2] sm:$0xff]
        %v4987 = vld [vmem:[#allocation3 + $0xca] sm:$0xff]
        %v4988 = vld [vmem:[#allocation3 + $0xd2] sm:$0xff]
        %v4989 = vld [vmem:[#allocation3 + $0xda] sm:$0xff]
        %v4990 = vld [vmem:[#allocation3 + $0xe2] sm:$0xff]
        %v4991 = vld [vmem:[#allocation3 + $0xea] sm:$0xff]
        %v4992 = vld [vmem:[#allocation3 + $0xf2] sm:$0xff]
        %v4993 = vld [vmem:[#allocation3 + $0xfa] sm:$0xff]
        %v4994 = vld [vmem:[#allocation3 + $0x102] sm:$0xff]
        %v4995 = vld [vmem:[#allocation3 + $0x10a] sm:$0xff]
        %s4996 = scalar_lea.vmem [#allocation5], 160
        %v4997 = vld [vmem:[%s4996] sm:$0xff]
        %v4998 = vld [vmem:[%s4996 + $0x8] sm:$0xff]
        %v4999 = vld [vmem:[%s4996 + $0x10] sm:$0xff]
        %v5000 = vld [vmem:[%s4996 + $0x18] sm:$0xff]
        %v5002 = vsel %vm2589, %v4964, 0
        %v5005 = vsel %vm2589, %v4965, 0
        %v5008 = vsel %vm2589, %v4966, 0
        %v5011 = vsel %vm2589, %v4967, 0
        %v5014 = vsel %vm2589, %v4968, 0
        %v5017 = vsel %vm2589, %v4969, 0
        %v5020 = vsel %vm2589, %v4970, 0
        %v5023 = vsel %vm2589, %v4971, 0
        %v5026 = vsel %vm2589, %v4972, 0
        %v5029 = vsel %vm2589, %v4973, 0
        %v5032 = vsel %vm2589, %v4974, 0
        %v5035 = vsel %vm2589, %v4975, 0
        %v5038 = vsel %vm2589, %v4976, 0
        %v5041 = vsel %vm2589, %v4977, 0
        %v5044 = vsel %vm2589, %v4978, 0
        %v5047 = vsel %vm2589, %v4979, 0
        %v5050 = vsel %vm2589, %v4980, 0
        %v5053 = vsel %vm2589, %v4981, 0
        %v5056 = vsel %vm2589, %v4982, 0
        %v5059 = vsel %vm2589, %v4983, 0
        %v5062 = vsel %vm2589, %v4984, 0
        %v5065 = vsel %vm2589, %v4985, 0
        %v5068 = vsel %vm2589, %v4986, 0
        %v5071 = vsel %vm2589, %v4987, 0
        %v5074 = vsel %vm2589, %v4988, 0
        %v5077 = vsel %vm2589, %v4989, 0
        %v5080 = vsel %vm2589, %v4990, 0
        %v5083 = vsel %vm2589, %v4991, 0
        %v5086 = vsel %vm2589, %v4992, 0
        %v5089 = vsel %vm2589, %v4993, 0
        %v5092 = vsel %vm2589, %v4994, 0
        %v5095 = vsel %vm2589, %v4995, 0
        %5097 = vmatpush.msra.mxu0 0.0
        %5098 = vmatpush.msra.mxu0 0.0
        %5099 = vmatpush.msra.mxu0 0.0
        %5100 = vmatpush.msra.mxu0 0.0
        %5101 = vmatpush.msra.mxu0 0.0
        %5102 = vmatpush.msra.mxu0 0.0
        %5103 = vmatpush.msra.mxu0 0.0
        %5104 = vmatpush.msra.mxu0 0.0
        %5105 = vmatpush.msra.mxu0 0.0
        %5106 = vmatpush.msra.mxu0 0.0
        %5107 = vmatpush.msra.mxu0 0.0
        %5108 = vmatpush.msra.mxu0 0.0
        %5109 = vmatpush.msra.mxu0 %v5000
        %5110 = vmatpush.msra.mxu0 %v4999
        %5111 = vmatpush.msra.mxu0 %v4998
        %5112 = vmatpush.msra.mxu0 %v4997
        %5113 = vmatmul.f32.gmra.mxu0 %v5002
        %v5114 = vpop.f32.mrf.mxu0
        %v5115 = vadd.f32 0.0, %v5114
        %5116 = vmatmul.f32.gmra.mxu0 %v5005
        %v5117 = vpop.f32.mrf.mxu0
        %v5118 = vadd.f32 0.0, %v5117
        %5119 = vmatmul.f32.gmra.mxu0 %v5008
        %v5120 = vpop.f32.mrf.mxu0
        %v5121 = vadd.f32 0.0, %v5120
        %5122 = vmatmul.f32.gmra.mxu0 %v5011
        %v5123 = vpop.f32.mrf.mxu0
        %v5124 = vadd.f32 0.0, %v5123
        %5125 = vmatmul.f32.gmra.mxu0 %v5014
        %v5126 = vpop.f32.mrf.mxu0
        %v5127 = vadd.f32 0.0, %v5126
        %5128 = vmatmul.f32.gmra.mxu0 %v5017
        %v5129 = vpop.f32.mrf.mxu0
        %v5130 = vadd.f32 0.0, %v5129
        %5131 = vmatmul.f32.gmra.mxu0 %v5020
        %v5132 = vpop.f32.mrf.mxu0
        %v5133 = vadd.f32 0.0, %v5132
        %5134 = vmatmul.f32.gmra.mxu0 %v5023
        %v5135 = vpop.f32.mrf.mxu0
        %v5136 = vadd.f32 0.0, %v5135
        %5137 = vmatmul.f32.gmra.mxu0 %v5026
        %v5138 = vpop.f32.mrf.mxu0
        %v5139 = vadd.f32 0.0, %v5138
        %5140 = vmatmul.f32.gmra.mxu0 %v5029
        %v5141 = vpop.f32.mrf.mxu0
        %v5142 = vadd.f32 0.0, %v5141
        %5143 = vmatmul.f32.gmra.mxu0 %v5032
        %v5144 = vpop.f32.mrf.mxu0
        %v5145 = vadd.f32 0.0, %v5144
        %5146 = vmatmul.f32.gmra.mxu0 %v5035
        %v5147 = vpop.f32.mrf.mxu0
        %v5148 = vadd.f32 0.0, %v5147
        %5149 = vmatmul.f32.gmra.mxu0 %v5038
        %v5150 = vpop.f32.mrf.mxu0
        %v5151 = vadd.f32 0.0, %v5150
        %5152 = vmatmul.f32.gmra.mxu0 %v5041
        %v5153 = vpop.f32.mrf.mxu0
        %v5154 = vadd.f32 0.0, %v5153
        %5155 = vmatmul.f32.gmra.mxu0 %v5044
        %v5156 = vpop.f32.mrf.mxu0
        %v5157 = vadd.f32 0.0, %v5156
        %5158 = vmatmul.f32.gmra.mxu0 %v5047
        %v5159 = vpop.f32.mrf.mxu0
        %v5160 = vadd.f32 0.0, %v5159
        %5161 = vmatmul.f32.gmra.mxu0 %v5050
        %v5162 = vpop.f32.mrf.mxu0
        %v5163 = vadd.f32 0.0, %v5162
        %5164 = vmatmul.f32.gmra.mxu0 %v5053
        %v5165 = vpop.f32.mrf.mxu0
        %v5166 = vadd.f32 0.0, %v5165
        %5167 = vmatmul.f32.gmra.mxu0 %v5056
        %v5168 = vpop.f32.mrf.mxu0
        %v5169 = vadd.f32 0.0, %v5168
        %5170 = vmatmul.f32.gmra.mxu0 %v5059
        %v5171 = vpop.f32.mrf.mxu0
        %v5172 = vadd.f32 0.0, %v5171
        %5173 = vmatmul.f32.gmra.mxu0 %v5062
        %v5174 = vpop.f32.mrf.mxu0
        %v5175 = vadd.f32 0.0, %v5174
        %5176 = vmatmul.f32.gmra.mxu0 %v5065
        %v5177 = vpop.f32.mrf.mxu0
        %v5178 = vadd.f32 0.0, %v5177
        %5179 = vmatmul.f32.gmra.mxu0 %v5068
        %v5180 = vpop.f32.mrf.mxu0
        %v5181 = vadd.f32 0.0, %v5180
        %5182 = vmatmul.f32.gmra.mxu0 %v5071
        %v5183 = vpop.f32.mrf.mxu0
        %v5184 = vadd.f32 0.0, %v5183
        %5185 = vmatmul.f32.gmra.mxu0 %v5074
        %v5186 = vpop.f32.mrf.mxu0
        %v5187 = vadd.f32 0.0, %v5186
        %5188 = vmatmul.f32.gmra.mxu0 %v5077
        %v5189 = vpop.f32.mrf.mxu0
        %v5190 = vadd.f32 0.0, %v5189
        %5191 = vmatmul.f32.gmra.mxu0 %v5080
        %v5192 = vpop.f32.mrf.mxu0
        %v5193 = vadd.f32 0.0, %v5192
        %5194 = vmatmul.f32.gmra.mxu0 %v5083
        %v5195 = vpop.f32.mrf.mxu0
        %v5196 = vadd.f32 0.0, %v5195
        %5197 = vmatmul.f32.gmra.mxu0 %v5086
        %v5198 = vpop.f32.mrf.mxu0
        %v5199 = vadd.f32 0.0, %v5198
        %5200 = vmatmul.f32.gmra.mxu0 %v5089
        %v5201 = vpop.f32.mrf.mxu0
        %v5202 = vadd.f32 0.0, %v5201
        %5203 = vmatmul.f32.gmra.mxu0 %v5092
        %v5204 = vpop.f32.mrf.mxu0
        %v5205 = vadd.f32 0.0, %v5204
        %5206 = vmatmul.f32.gmra.mxu0 %v5095
        %v5207 = vpop.f32.mrf.mxu0
        %v5208 = vadd.f32 0.0, %v5207
        %5209 = vdwg.mxu0
        %v5210 = vadd.f32 %v4932, %v5115
        %v5211 = vadd.f32 %v4933, %v5118
        %v5212 = vadd.f32 %v4934, %v5121
        %v5213 = vadd.f32 %v4935, %v5124
        %v5214 = vadd.f32 %v4936, %v5127
        %v5215 = vadd.f32 %v4937, %v5130
        %v5216 = vadd.f32 %v4938, %v5133
        %v5217 = vadd.f32 %v4939, %v5136
        %v5218 = vadd.f32 %v4940, %v5139
        %v5219 = vadd.f32 %v4941, %v5142
        %v5220 = vadd.f32 %v4942, %v5145
        %v5221 = vadd.f32 %v4943, %v5148
        %v5222 = vadd.f32 %v4944, %v5151
        %v5223 = vadd.f32 %v4945, %v5154
        %v5224 = vadd.f32 %v4946, %v5157
        %v5225 = vadd.f32 %v4947, %v5160
        %v5226 = vadd.f32 %v4948, %v5163
        %v5227 = vadd.f32 %v4949, %v5166
        %v5228 = vadd.f32 %v4950, %v5169
        %v5229 = vadd.f32 %v4951, %v5172
        %v5230 = vadd.f32 %v4952, %v5175
        %v5231 = vadd.f32 %v4953, %v5178
        %v5232 = vadd.f32 %v4954, %v5181
        %v5233 = vadd.f32 %v4955, %v5184
        %v5234 = vadd.f32 %v4956, %v5187
        %v5235 = vadd.f32 %v4957, %v5190
        %v5236 = vadd.f32 %v4958, %v5193
        %v5237 = vadd.f32 %v4959, %v5196
        %v5238 = vadd.f32 %v4960, %v5199
        %v5239 = vadd.f32 %v4961, %v5202
        %v5240 = vadd.f32 %v4962, %v5205
        %v5241 = vadd.f32 %v4963, %v5208
        %v5242 = vld [vmem:[#allocation3 + $0x20] sm:$0xff]
        %v5243 = vld [vmem:[#allocation3 + $0x28] sm:$0xff]
        %v5244 = vld [vmem:[#allocation3 + $0x30] sm:$0xff]
        %v5245 = vld [vmem:[#allocation3 + $0x38] sm:$0xff]
        %v5246 = vld [vmem:[#allocation3 + $0x40] sm:$0xff]
        %v5247 = vld [vmem:[#allocation3 + $0x48] sm:$0xff]
        %v5248 = vld [vmem:[#allocation3 + $0x50] sm:$0xff]
        %v5249 = vld [vmem:[#allocation3 + $0x58] sm:$0xff]
        %v5250 = vld [vmem:[#allocation3 + $0x60] sm:$0xff]
        %v5251 = vld [vmem:[#allocation3 + $0x68] sm:$0xff]
        %v5252 = vld [vmem:[#allocation3 + $0x70] sm:$0xff]
        %v5253 = vld [vmem:[#allocation3 + $0x78] sm:$0xff]
        %v5254 = vld [vmem:[#allocation3 + $0x80] sm:$0xff]
        %v5255 = vld [vmem:[#allocation3 + $0x88] sm:$0xff]
        %v5256 = vld [vmem:[#allocation3 + $0x90] sm:$0xff]
        %v5257 = vld [vmem:[#allocation3 + $0x98] sm:$0xff]
        %v5258 = vld [vmem:[#allocation3 + $0xa0] sm:$0xff]
        %v5259 = vld [vmem:[#allocation3 + $0xa8] sm:$0xff]
        %v5260 = vld [vmem:[#allocation3 + $0xb0] sm:$0xff]
        %v5261 = vld [vmem:[#allocation3 + $0xb8] sm:$0xff]
        %v5262 = vld [vmem:[#allocation3 + $0xc0] sm:$0xff]
        %v5263 = vld [vmem:[#allocation3 + $0xc8] sm:$0xff]
        %v5264 = vld [vmem:[#allocation3 + $0xd0] sm:$0xff]
        %v5265 = vld [vmem:[#allocation3 + $0xd8] sm:$0xff]
        %v5266 = vld [vmem:[#allocation3 + $0xe0] sm:$0xff]
        %v5267 = vld [vmem:[#allocation3 + $0xe8] sm:$0xff]
        %v5268 = vld [vmem:[#allocation3 + $0xf0] sm:$0xff]
        %v5269 = vld [vmem:[#allocation3 + $0xf8] sm:$0xff]
        %v5270 = vld [vmem:[#allocation3 + $0x100] sm:$0xff]
        %v5271 = vld [vmem:[#allocation3 + $0x108] sm:$0xff]
        %v5272 = vld [vmem:[#allocation3 + $0x110] sm:$0xff]
        %v5273 = vld [vmem:[#allocation3 + $0x118] sm:$0xff]
        %s5274 = scalar_lea.vmem [#allocation5], 192
        %v5275 = vld [vmem:[%s5274] sm:$0xff]
        %v5276 = vld [vmem:[%s5274 + $0x8] sm:$0xff]
        %v5277 = vld [vmem:[%s5274 + $0x10] sm:$0xff]
        %v5278 = vld [vmem:[%s5274 + $0x18] sm:$0xff]
        %v5280 = vsel %vm2589, %v5242, 0
        %v5283 = vsel %vm2589, %v5243, 0
        %v5286 = vsel %vm2589, %v5244, 0
        %v5289 = vsel %vm2589, %v5245, 0
        %v5292 = vsel %vm2589, %v5246, 0
        %v5295 = vsel %vm2589, %v5247, 0
        %v5298 = vsel %vm2589, %v5248, 0
        %v5301 = vsel %vm2589, %v5249, 0
        %v5304 = vsel %vm2589, %v5250, 0
        %v5307 = vsel %vm2589, %v5251, 0
        %v5310 = vsel %vm2589, %v5252, 0
        %v5313 = vsel %vm2589, %v5253, 0
        %v5316 = vsel %vm2589, %v5254, 0
        %v5319 = vsel %vm2589, %v5255, 0
        %v5322 = vsel %vm2589, %v5256, 0
        %v5325 = vsel %vm2589, %v5257, 0
        %v5328 = vsel %vm2589, %v5258, 0
        %v5331 = vsel %vm2589, %v5259, 0
        %v5334 = vsel %vm2589, %v5260, 0
        %v5337 = vsel %vm2589, %v5261, 0
        %v5340 = vsel %vm2589, %v5262, 0
        %v5343 = vsel %vm2589, %v5263, 0
        %v5346 = vsel %vm2589, %v5264, 0
        %v5349 = vsel %vm2589, %v5265, 0
        %v5352 = vsel %vm2589, %v5266, 0
        %v5355 = vsel %vm2589, %v5267, 0
        %v5358 = vsel %vm2589, %v5268, 0
        %v5361 = vsel %vm2589, %v5269, 0
        %v5364 = vsel %vm2589, %v5270, 0
        %v5367 = vsel %vm2589, %v5271, 0
        %v5370 = vsel %vm2589, %v5272, 0
        %v5373 = vsel %vm2589, %v5273, 0
        %5375 = vmatpush.msra.mxu0 0.0
        %5376 = vmatpush.msra.mxu0 0.0
        %5377 = vmatpush.msra.mxu0 0.0
        %5378 = vmatpush.msra.mxu0 0.0
        %5379 = vmatpush.msra.mxu0 0.0
        %5380 = vmatpush.msra.mxu0 0.0
        %5381 = vmatpush.msra.mxu0 0.0
        %5382 = vmatpush.msra.mxu0 0.0
        %5383 = vmatpush.msra.mxu0 0.0
        %5384 = vmatpush.msra.mxu0 0.0
        %5385 = vmatpush.msra.mxu0 0.0
        %5386 = vmatpush.msra.mxu0 0.0
        %5387 = vmatpush.msra.mxu0 %v5278
        %5388 = vmatpush.msra.mxu0 %v5277
        %5389 = vmatpush.msra.mxu0 %v5276
        %5390 = vmatpush.msra.mxu0 %v5275
        %5391 = vmatmul.f32.gmra.mxu0 %v5280
        %v5392 = vpop.f32.mrf.mxu0
        %v5393 = vadd.f32 0.0, %v5392
        %5394 = vmatmul.f32.gmra.mxu0 %v5283
        %v5395 = vpop.f32.mrf.mxu0
        %v5396 = vadd.f32 0.0, %v5395
        %5397 = vmatmul.f32.gmra.mxu0 %v5286
        %v5398 = vpop.f32.mrf.mxu0
        %v5399 = vadd.f32 0.0, %v5398
        %5400 = vmatmul.f32.gmra.mxu0 %v5289
        %v5401 = vpop.f32.mrf.mxu0
        %v5402 = vadd.f32 0.0, %v5401
        %5403 = vmatmul.f32.gmra.mxu0 %v5292
        %v5404 = vpop.f32.mrf.mxu0
        %v5405 = vadd.f32 0.0, %v5404
        %5406 = vmatmul.f32.gmra.mxu0 %v5295
        %v5407 = vpop.f32.mrf.mxu0
        %v5408 = vadd.f32 0.0, %v5407
        %5409 = vmatmul.f32.gmra.mxu0 %v5298
        %v5410 = vpop.f32.mrf.mxu0
        %v5411 = vadd.f32 0.0, %v5410
        %5412 = vmatmul.f32.gmra.mxu0 %v5301
        %v5413 = vpop.f32.mrf.mxu0
        %v5414 = vadd.f32 0.0, %v5413
        %5415 = vmatmul.f32.gmra.mxu0 %v5304
        %v5416 = vpop.f32.mrf.mxu0
        %v5417 = vadd.f32 0.0, %v5416
        %5418 = vmatmul.f32.gmra.mxu0 %v5307
        %v5419 = vpop.f32.mrf.mxu0
        %v5420 = vadd.f32 0.0, %v5419
        %5421 = vmatmul.f32.gmra.mxu0 %v5310
        %v5422 = vpop.f32.mrf.mxu0
        %v5423 = vadd.f32 0.0, %v5422
        %5424 = vmatmul.f32.gmra.mxu0 %v5313
        %v5425 = vpop.f32.mrf.mxu0
        %v5426 = vadd.f32 0.0, %v5425
        %5427 = vmatmul.f32.gmra.mxu0 %v5316
        %v5428 = vpop.f32.mrf.mxu0
        %v5429 = vadd.f32 0.0, %v5428
        %5430 = vmatmul.f32.gmra.mxu0 %v5319
        %v5431 = vpop.f32.mrf.mxu0
        %v5432 = vadd.f32 0.0, %v5431
        %5433 = vmatmul.f32.gmra.mxu0 %v5322
        %v5434 = vpop.f32.mrf.mxu0
        %v5435 = vadd.f32 0.0, %v5434
        %5436 = vmatmul.f32.gmra.mxu0 %v5325
        %v5437 = vpop.f32.mrf.mxu0
        %v5438 = vadd.f32 0.0, %v5437
        %5439 = vmatmul.f32.gmra.mxu0 %v5328
        %v5440 = vpop.f32.mrf.mxu0
        %v5441 = vadd.f32 0.0, %v5440
        %5442 = vmatmul.f32.gmra.mxu0 %v5331
        %v5443 = vpop.f32.mrf.mxu0
        %v5444 = vadd.f32 0.0, %v5443
        %5445 = vmatmul.f32.gmra.mxu0 %v5334
        %v5446 = vpop.f32.mrf.mxu0
        %v5447 = vadd.f32 0.0, %v5446
        %5448 = vmatmul.f32.gmra.mxu0 %v5337
        %v5449 = vpop.f32.mrf.mxu0
        %v5450 = vadd.f32 0.0, %v5449
        %5451 = vmatmul.f32.gmra.mxu0 %v5340
        %v5452 = vpop.f32.mrf.mxu0
        %v5453 = vadd.f32 0.0, %v5452
        %5454 = vmatmul.f32.gmra.mxu0 %v5343
        %v5455 = vpop.f32.mrf.mxu0
        %v5456 = vadd.f32 0.0, %v5455
        %5457 = vmatmul.f32.gmra.mxu0 %v5346
        %v5458 = vpop.f32.mrf.mxu0
        %v5459 = vadd.f32 0.0, %v5458
        %5460 = vmatmul.f32.gmra.mxu0 %v5349
        %v5461 = vpop.f32.mrf.mxu0
        %v5462 = vadd.f32 0.0, %v5461
        %5463 = vmatmul.f32.gmra.mxu0 %v5352
        %v5464 = vpop.f32.mrf.mxu0
        %v5465 = vadd.f32 0.0, %v5464
        %5466 = vmatmul.f32.gmra.mxu0 %v5355
        %v5467 = vpop.f32.mrf.mxu0
        %v5468 = vadd.f32 0.0, %v5467
        %5469 = vmatmul.f32.gmra.mxu0 %v5358
        %v5470 = vpop.f32.mrf.mxu0
        %v5471 = vadd.f32 0.0, %v5470
        %5472 = vmatmul.f32.gmra.mxu0 %v5361
        %v5473 = vpop.f32.mrf.mxu0
        %v5474 = vadd.f32 0.0, %v5473
        %5475 = vmatmul.f32.gmra.mxu0 %v5364
        %v5476 = vpop.f32.mrf.mxu0
        %v5477 = vadd.f32 0.0, %v5476
        %5478 = vmatmul.f32.gmra.mxu0 %v5367
        %v5479 = vpop.f32.mrf.mxu0
        %v5480 = vadd.f32 0.0, %v5479
        %5481 = vmatmul.f32.gmra.mxu0 %v5370
        %v5482 = vpop.f32.mrf.mxu0
        %v5483 = vadd.f32 0.0, %v5482
        %5484 = vmatmul.f32.gmra.mxu0 %v5373
        %v5485 = vpop.f32.mrf.mxu0
        %v5486 = vadd.f32 0.0, %v5485
        %5487 = vdwg.mxu0
        %v5488 = vadd.f32 %v5210, %v5393
        %v5489 = vadd.f32 %v5211, %v5396
        %v5490 = vadd.f32 %v5212, %v5399
        %v5491 = vadd.f32 %v5213, %v5402
        %v5492 = vadd.f32 %v5214, %v5405
        %v5493 = vadd.f32 %v5215, %v5408
        %v5494 = vadd.f32 %v5216, %v5411
        %v5495 = vadd.f32 %v5217, %v5414
        %v5496 = vadd.f32 %v5218, %v5417
        %v5497 = vadd.f32 %v5219, %v5420
        %v5498 = vadd.f32 %v5220, %v5423
        %v5499 = vadd.f32 %v5221, %v5426
        %v5500 = vadd.f32 %v5222, %v5429
        %v5501 = vadd.f32 %v5223, %v5432
        %v5502 = vadd.f32 %v5224, %v5435
        %v5503 = vadd.f32 %v5225, %v5438
        %v5504 = vadd.f32 %v5226, %v5441
        %v5505 = vadd.f32 %v5227, %v5444
        %v5506 = vadd.f32 %v5228, %v5447
        %v5507 = vadd.f32 %v5229, %v5450
        %v5508 = vadd.f32 %v5230, %v5453
        %v5509 = vadd.f32 %v5231, %v5456
        %v5510 = vadd.f32 %v5232, %v5459
        %v5511 = vadd.f32 %v5233, %v5462
        %v5512 = vadd.f32 %v5234, %v5465
        %v5513 = vadd.f32 %v5235, %v5468
        %v5514 = vadd.f32 %v5236, %v5471
        %v5515 = vadd.f32 %v5237, %v5474
        %v5516 = vadd.f32 %v5238, %v5477
        %v5517 = vadd.f32 %v5239, %v5480
        %v5518 = vadd.f32 %v5240, %v5483
        %v5519 = vadd.f32 %v5241, %v5486
        %v5520 = vld [vmem:[#allocation3 + $0x21] sm:$0xff]
        %v5521 = vld [vmem:[#allocation3 + $0x29] sm:$0xff]
        %v5522 = vld [vmem:[#allocation3 + $0x31] sm:$0xff]
        %v5523 = vld [vmem:[#allocation3 + $0x39] sm:$0xff]
        %v5524 = vld [vmem:[#allocation3 + $0x41] sm:$0xff]
        %v5525 = vld [vmem:[#allocation3 + $0x49] sm:$0xff]
        %v5526 = vld [vmem:[#allocation3 + $0x51] sm:$0xff]
        %v5527 = vld [vmem:[#allocation3 + $0x59] sm:$0xff]
        %v5528 = vld [vmem:[#allocation3 + $0x61] sm:$0xff]
        %v5529 = vld [vmem:[#allocation3 + $0x69] sm:$0xff]
        %v5530 = vld [vmem:[#allocation3 + $0x71] sm:$0xff]
        %v5531 = vld [vmem:[#allocation3 + $0x79] sm:$0xff]
        %v5532 = vld [vmem:[#allocation3 + $0x81] sm:$0xff]
        %v5533 = vld [vmem:[#allocation3 + $0x89] sm:$0xff]
        %v5534 = vld [vmem:[#allocation3 + $0x91] sm:$0xff]
        %v5535 = vld [vmem:[#allocation3 + $0x99] sm:$0xff]
        %v5536 = vld [vmem:[#allocation3 + $0xa1] sm:$0xff]
        %v5537 = vld [vmem:[#allocation3 + $0xa9] sm:$0xff]
        %v5538 = vld [vmem:[#allocation3 + $0xb1] sm:$0xff]
        %v5539 = vld [vmem:[#allocation3 + $0xb9] sm:$0xff]
        %v5540 = vld [vmem:[#allocation3 + $0xc1] sm:$0xff]
        %v5541 = vld [vmem:[#allocation3 + $0xc9] sm:$0xff]
        %v5542 = vld [vmem:[#allocation3 + $0xd1] sm:$0xff]
        %v5543 = vld [vmem:[#allocation3 + $0xd9] sm:$0xff]
        %v5544 = vld [vmem:[#allocation3 + $0xe1] sm:$0xff]
        %v5545 = vld [vmem:[#allocation3 + $0xe9] sm:$0xff]
        %v5546 = vld [vmem:[#allocation3 + $0xf1] sm:$0xff]
        %v5547 = vld [vmem:[#allocation3 + $0xf9] sm:$0xff]
        %v5548 = vld [vmem:[#allocation3 + $0x101] sm:$0xff]
        %v5549 = vld [vmem:[#allocation3 + $0x109] sm:$0xff]
        %v5550 = vld [vmem:[#allocation3 + $0x111] sm:$0xff]
        %v5551 = vld [vmem:[#allocation3 + $0x119] sm:$0xff]
        %s5552 = scalar_lea.vmem [#allocation5], 224
        %v5553 = vld [vmem:[%s5552] sm:$0xff]
        %v5554 = vld [vmem:[%s5552 + $0x8] sm:$0xff]
        %v5555 = vld [vmem:[%s5552 + $0x10] sm:$0xff]
        %v5556 = vld [vmem:[%s5552 + $0x18] sm:$0xff]
        %v5558 = vsel %vm2589, %v5520, 0
        %v5561 = vsel %vm2589, %v5521, 0
        %v5564 = vsel %vm2589, %v5522, 0
        %v5567 = vsel %vm2589, %v5523, 0
        %v5570 = vsel %vm2589, %v5524, 0
        %v5573 = vsel %vm2589, %v5525, 0
        %v5576 = vsel %vm2589, %v5526, 0
        %v5579 = vsel %vm2589, %v5527, 0
        %v5582 = vsel %vm2589, %v5528, 0
        %v5585 = vsel %vm2589, %v5529, 0
        %v5588 = vsel %vm2589, %v5530, 0
        %v5591 = vsel %vm2589, %v5531, 0
        %v5594 = vsel %vm2589, %v5532, 0
        %v5597 = vsel %vm2589, %v5533, 0
        %v5600 = vsel %vm2589, %v5534, 0
        %v5603 = vsel %vm2589, %v5535, 0
        %v5606 = vsel %vm2589, %v5536, 0
        %v5609 = vsel %vm2589, %v5537, 0
        %v5612 = vsel %vm2589, %v5538, 0
        %v5615 = vsel %vm2589, %v5539, 0
        %v5618 = vsel %vm2589, %v5540, 0
        %v5621 = vsel %vm2589, %v5541, 0
        %v5624 = vsel %vm2589, %v5542, 0
        %v5627 = vsel %vm2589, %v5543, 0
        %v5630 = vsel %vm2589, %v5544, 0
        %v5633 = vsel %vm2589, %v5545, 0
        %v5636 = vsel %vm2589, %v5546, 0
        %v5639 = vsel %vm2589, %v5547, 0
        %v5642 = vsel %vm2589, %v5548, 0
        %v5645 = vsel %vm2589, %v5549, 0
        %v5648 = vsel %vm2589, %v5550, 0
        %v5651 = vsel %vm2589, %v5551, 0
        %5653 = vmatpush.msra.mxu0 0.0
        %5654 = vmatpush.msra.mxu0 0.0
        %5655 = vmatpush.msra.mxu0 0.0
        %5656 = vmatpush.msra.mxu0 0.0
        %5657 = vmatpush.msra.mxu0 0.0
        %5658 = vmatpush.msra.mxu0 0.0
        %5659 = vmatpush.msra.mxu0 0.0
        %5660 = vmatpush.msra.mxu0 0.0
        %5661 = vmatpush.msra.mxu0 0.0
        %5662 = vmatpush.msra.mxu0 0.0
        %5663 = vmatpush.msra.mxu0 0.0
        %5664 = vmatpush.msra.mxu0 0.0
        %5665 = vmatpush.msra.mxu0 %v5556
        %5666 = vmatpush.msra.mxu0 %v5555
        %5667 = vmatpush.msra.mxu0 %v5554
        %5668 = vmatpush.msra.mxu0 %v5553
        %5669 = vmatmul.f32.gmra.mxu0 %v5558
        %v5670 = vpop.f32.mrf.mxu0
        %v5671 = vadd.f32 0.0, %v5670
        %5672 = vmatmul.f32.gmra.mxu0 %v5561
        %v5673 = vpop.f32.mrf.mxu0
        %v5674 = vadd.f32 0.0, %v5673
        %5675 = vmatmul.f32.gmra.mxu0 %v5564
        %v5676 = vpop.f32.mrf.mxu0
        %v5677 = vadd.f32 0.0, %v5676
        %5678 = vmatmul.f32.gmra.mxu0 %v5567
        %v5679 = vpop.f32.mrf.mxu0
        %v5680 = vadd.f32 0.0, %v5679
        %5681 = vmatmul.f32.gmra.mxu0 %v5570
        %v5682 = vpop.f32.mrf.mxu0
        %v5683 = vadd.f32 0.0, %v5682
        %5684 = vmatmul.f32.gmra.mxu0 %v5573
        %v5685 = vpop.f32.mrf.mxu0
        %v5686 = vadd.f32 0.0, %v5685
        %5687 = vmatmul.f32.gmra.mxu0 %v5576
        %v5688 = vpop.f32.mrf.mxu0
        %v5689 = vadd.f32 0.0, %v5688
        %5690 = vmatmul.f32.gmra.mxu0 %v5579
        %v5691 = vpop.f32.mrf.mxu0
        %v5692 = vadd.f32 0.0, %v5691
        %5693 = vmatmul.f32.gmra.mxu0 %v5582
        %v5694 = vpop.f32.mrf.mxu0
        %v5695 = vadd.f32 0.0, %v5694
        %5696 = vmatmul.f32.gmra.mxu0 %v5585
        %v5697 = vpop.f32.mrf.mxu0
        %v5698 = vadd.f32 0.0, %v5697
        %5699 = vmatmul.f32.gmra.mxu0 %v5588
        %v5700 = vpop.f32.mrf.mxu0
        %v5701 = vadd.f32 0.0, %v5700
        %5702 = vmatmul.f32.gmra.mxu0 %v5591
        %v5703 = vpop.f32.mrf.mxu0
        %v5704 = vadd.f32 0.0, %v5703
        %5705 = vmatmul.f32.gmra.mxu0 %v5594
        %v5706 = vpop.f32.mrf.mxu0
        %v5707 = vadd.f32 0.0, %v5706
        %5708 = vmatmul.f32.gmra.mxu0 %v5597
        %v5709 = vpop.f32.mrf.mxu0
        %v5710 = vadd.f32 0.0, %v5709
        %5711 = vmatmul.f32.gmra.mxu0 %v5600
        %v5712 = vpop.f32.mrf.mxu0
        %v5713 = vadd.f32 0.0, %v5712
        %5714 = vmatmul.f32.gmra.mxu0 %v5603
        %v5715 = vpop.f32.mrf.mxu0
        %v5716 = vadd.f32 0.0, %v5715
        %5717 = vmatmul.f32.gmra.mxu0 %v5606
        %v5718 = vpop.f32.mrf.mxu0
        %v5719 = vadd.f32 0.0, %v5718
        %5720 = vmatmul.f32.gmra.mxu0 %v5609
        %v5721 = vpop.f32.mrf.mxu0
        %v5722 = vadd.f32 0.0, %v5721
        %5723 = vmatmul.f32.gmra.mxu0 %v5612
        %v5724 = vpop.f32.mrf.mxu0
        %v5725 = vadd.f32 0.0, %v5724
        %5726 = vmatmul.f32.gmra.mxu0 %v5615
        %v5727 = vpop.f32.mrf.mxu0
        %v5728 = vadd.f32 0.0, %v5727
        %5729 = vmatmul.f32.gmra.mxu0 %v5618
        %v5730 = vpop.f32.mrf.mxu0
        %v5731 = vadd.f32 0.0, %v5730
        %5732 = vmatmul.f32.gmra.mxu0 %v5621
        %v5733 = vpop.f32.mrf.mxu0
        %v5734 = vadd.f32 0.0, %v5733
        %5735 = vmatmul.f32.gmra.mxu0 %v5624
        %v5736 = vpop.f32.mrf.mxu0
        %v5737 = vadd.f32 0.0, %v5736
        %5738 = vmatmul.f32.gmra.mxu0 %v5627
        %v5739 = vpop.f32.mrf.mxu0
        %v5740 = vadd.f32 0.0, %v5739
        %5741 = vmatmul.f32.gmra.mxu0 %v5630
        %v5742 = vpop.f32.mrf.mxu0
        %v5743 = vadd.f32 0.0, %v5742
        %5744 = vmatmul.f32.gmra.mxu0 %v5633
        %v5745 = vpop.f32.mrf.mxu0
        %v5746 = vadd.f32 0.0, %v5745
        %5747 = vmatmul.f32.gmra.mxu0 %v5636
        %v5748 = vpop.f32.mrf.mxu0
        %v5749 = vadd.f32 0.0, %v5748
        %5750 = vmatmul.f32.gmra.mxu0 %v5639
        %v5751 = vpop.f32.mrf.mxu0
        %v5752 = vadd.f32 0.0, %v5751
        %5753 = vmatmul.f32.gmra.mxu0 %v5642
        %v5754 = vpop.f32.mrf.mxu0
        %v5755 = vadd.f32 0.0, %v5754
        %5756 = vmatmul.f32.gmra.mxu0 %v5645
        %v5757 = vpop.f32.mrf.mxu0
        %v5758 = vadd.f32 0.0, %v5757
        %5759 = vmatmul.f32.gmra.mxu0 %v5648
        %v5760 = vpop.f32.mrf.mxu0
        %v5761 = vadd.f32 0.0, %v5760
        %5762 = vmatmul.f32.gmra.mxu0 %v5651
        %v5763 = vpop.f32.mrf.mxu0
        %v5764 = vadd.f32 0.0, %v5763
        %5765 = vdwg.mxu0
        %v5766 = vadd.f32 %v5488, %v5671
        %v5767 = vadd.f32 %v5489, %v5674
        %v5768 = vadd.f32 %v5490, %v5677
        %v5769 = vadd.f32 %v5491, %v5680
        %v5770 = vadd.f32 %v5492, %v5683
        %v5771 = vadd.f32 %v5493, %v5686
        %v5772 = vadd.f32 %v5494, %v5689
        %v5773 = vadd.f32 %v5495, %v5692
        %v5774 = vadd.f32 %v5496, %v5695
        %v5775 = vadd.f32 %v5497, %v5698
        %v5776 = vadd.f32 %v5498, %v5701
        %v5777 = vadd.f32 %v5499, %v5704
        %v5778 = vadd.f32 %v5500, %v5707
        %v5779 = vadd.f32 %v5501, %v5710
        %v5780 = vadd.f32 %v5502, %v5713
        %v5781 = vadd.f32 %v5503, %v5716
        %v5782 = vadd.f32 %v5504, %v5719
        %v5783 = vadd.f32 %v5505, %v5722
        %v5784 = vadd.f32 %v5506, %v5725
        %v5785 = vadd.f32 %v5507, %v5728
        %v5786 = vadd.f32 %v5508, %v5731
        %v5787 = vadd.f32 %v5509, %v5734
        %v5788 = vadd.f32 %v5510, %v5737
        %v5789 = vadd.f32 %v5511, %v5740
        %v5790 = vadd.f32 %v5512, %v5743
        %v5791 = vadd.f32 %v5513, %v5746
        %v5792 = vadd.f32 %v5514, %v5749
        %v5793 = vadd.f32 %v5515, %v5752
        %v5794 = vadd.f32 %v5516, %v5755
        %v5795 = vadd.f32 %v5517, %v5758
        %v5796 = vadd.f32 %v5518, %v5761
        %v5797 = vadd.f32 %v5519, %v5764
        %v5798 = vld [vmem:[#allocation3 + $0x22] sm:$0xff]
        %v5799 = vld [vmem:[#allocation3 + $0x2a] sm:$0xff]
        %v5800 = vld [vmem:[#allocation3 + $0x32] sm:$0xff]
        %v5801 = vld [vmem:[#allocation3 + $0x3a] sm:$0xff]
        %v5802 = vld [vmem:[#allocation3 + $0x42] sm:$0xff]
        %v5803 = vld [vmem:[#allocation3 + $0x4a] sm:$0xff]
        %v5804 = vld [vmem:[#allocation3 + $0x52] sm:$0xff]
        %v5805 = vld [vmem:[#allocation3 + $0x5a] sm:$0xff]
        %v5806 = vld [vmem:[#allocation3 + $0x62] sm:$0xff]
        %v5807 = vld [vmem:[#allocation3 + $0x6a] sm:$0xff]
        %v5808 = vld [vmem:[#allocation3 + $0x72] sm:$0xff]
        %v5809 = vld [vmem:[#allocation3 + $0x7a] sm:$0xff]
        %v5810 = vld [vmem:[#allocation3 + $0x82] sm:$0xff]
        %v5811 = vld [vmem:[#allocation3 + $0x8a] sm:$0xff]
        %v5812 = vld [vmem:[#allocation3 + $0x92] sm:$0xff]
        %v5813 = vld [vmem:[#allocation3 + $0x9a] sm:$0xff]
        %v5814 = vld [vmem:[#allocation3 + $0xa2] sm:$0xff]
        %v5815 = vld [vmem:[#allocation3 + $0xaa] sm:$0xff]
        %v5816 = vld [vmem:[#allocation3 + $0xb2] sm:$0xff]
        %v5817 = vld [vmem:[#allocation3 + $0xba] sm:$0xff]
        %v5818 = vld [vmem:[#allocation3 + $0xc2] sm:$0xff]
        %v5819 = vld [vmem:[#allocation3 + $0xca] sm:$0xff]
        %v5820 = vld [vmem:[#allocation3 + $0xd2] sm:$0xff]
        %v5821 = vld [vmem:[#allocation3 + $0xda] sm:$0xff]
        %v5822 = vld [vmem:[#allocation3 + $0xe2] sm:$0xff]
        %v5823 = vld [vmem:[#allocation3 + $0xea] sm:$0xff]
        %v5824 = vld [vmem:[#allocation3 + $0xf2] sm:$0xff]
        %v5825 = vld [vmem:[#allocation3 + $0xfa] sm:$0xff]
        %v5826 = vld [vmem:[#allocation3 + $0x102] sm:$0xff]
        %v5827 = vld [vmem:[#allocation3 + $0x10a] sm:$0xff]
        %v5828 = vld [vmem:[#allocation3 + $0x112] sm:$0xff]
        %v5829 = vld [vmem:[#allocation3 + $0x11a] sm:$0xff]
        %s5830 = scalar_lea.vmem [#allocation5], 256
        %v5831 = vld [vmem:[%s5830] sm:$0xff]
        %v5832 = vld [vmem:[%s5830 + $0x8] sm:$0xff]
        %v5833 = vld [vmem:[%s5830 + $0x10] sm:$0xff]
        %v5834 = vld [vmem:[%s5830 + $0x18] sm:$0xff]
        %v5836 = vsel %vm2589, %v5798, 0
        %v5839 = vsel %vm2589, %v5799, 0
        %v5842 = vsel %vm2589, %v5800, 0
        %v5845 = vsel %vm2589, %v5801, 0
        %v5848 = vsel %vm2589, %v5802, 0
        %v5851 = vsel %vm2589, %v5803, 0
        %v5854 = vsel %vm2589, %v5804, 0
        %v5857 = vsel %vm2589, %v5805, 0
        %v5860 = vsel %vm2589, %v5806, 0
        %v5863 = vsel %vm2589, %v5807, 0
        %v5866 = vsel %vm2589, %v5808, 0
        %v5869 = vsel %vm2589, %v5809, 0
        %v5872 = vsel %vm2589, %v5810, 0
        %v5875 = vsel %vm2589, %v5811, 0
        %v5878 = vsel %vm2589, %v5812, 0
        %v5881 = vsel %vm2589, %v5813, 0
        %v5884 = vsel %vm2589, %v5814, 0
        %v5887 = vsel %vm2589, %v5815, 0
        %v5890 = vsel %vm2589, %v5816, 0
        %v5893 = vsel %vm2589, %v5817, 0
        %v5896 = vsel %vm2589, %v5818, 0
        %v5899 = vsel %vm2589, %v5819, 0
        %v5902 = vsel %vm2589, %v5820, 0
        %v5905 = vsel %vm2589, %v5821, 0
        %v5908 = vsel %vm2589, %v5822, 0
        %v5911 = vsel %vm2589, %v5823, 0
        %v5914 = vsel %vm2589, %v5824, 0
        %v5917 = vsel %vm2589, %v5825, 0
        %v5920 = vsel %vm2589, %v5826, 0
        %v5923 = vsel %vm2589, %v5827, 0
        %v5926 = vsel %vm2589, %v5828, 0
        %v5929 = vsel %vm2589, %v5829, 0
        %5931 = vmatpush.msra.mxu0 0.0
        %5932 = vmatpush.msra.mxu0 0.0
        %5933 = vmatpush.msra.mxu0 0.0
        %5934 = vmatpush.msra.mxu0 0.0
        %5935 = vmatpush.msra.mxu0 0.0
        %5936 = vmatpush.msra.mxu0 0.0
        %5937 = vmatpush.msra.mxu0 0.0
        %5938 = vmatpush.msra.mxu0 0.0
        %5939 = vmatpush.msra.mxu0 0.0
        %5940 = vmatpush.msra.mxu0 0.0
        %5941 = vmatpush.msra.mxu0 0.0
        %5942 = vmatpush.msra.mxu0 0.0
        %5943 = vmatpush.msra.mxu0 %v5834
        %5944 = vmatpush.msra.mxu0 %v5833
        %5945 = vmatpush.msra.mxu0 %v5832
        %5946 = vmatpush.msra.mxu0 %v5831
        %5947 = vmatmul.f32.gmra.mxu0 %v5836
        %v5948 = vpop.f32.mrf.mxu0
        %v5949 = vadd.f32 0.0, %v5948
        %5950 = vmatmul.f32.gmra.mxu0 %v5839
        %v5951 = vpop.f32.mrf.mxu0
        %v5952 = vadd.f32 0.0, %v5951
        %5953 = vmatmul.f32.gmra.mxu0 %v5842
        %v5954 = vpop.f32.mrf.mxu0
        %v5955 = vadd.f32 0.0, %v5954
        %5956 = vmatmul.f32.gmra.mxu0 %v5845
        %v5957 = vpop.f32.mrf.mxu0
        %v5958 = vadd.f32 0.0, %v5957
        %5959 = vmatmul.f32.gmra.mxu0 %v5848
        %v5960 = vpop.f32.mrf.mxu0
        %v5961 = vadd.f32 0.0, %v5960
        %5962 = vmatmul.f32.gmra.mxu0 %v5851
        %v5963 = vpop.f32.mrf.mxu0
        %v5964 = vadd.f32 0.0, %v5963
        %5965 = vmatmul.f32.gmra.mxu0 %v5854
        %v5966 = vpop.f32.mrf.mxu0
        %v5967 = vadd.f32 0.0, %v5966
        %5968 = vmatmul.f32.gmra.mxu0 %v5857
        %v5969 = vpop.f32.mrf.mxu0
        %v5970 = vadd.f32 0.0, %v5969
        %5971 = vmatmul.f32.gmra.mxu0 %v5860
        %v5972 = vpop.f32.mrf.mxu0
        %v5973 = vadd.f32 0.0, %v5972
        %5974 = vmatmul.f32.gmra.mxu0 %v5863
        %v5975 = vpop.f32.mrf.mxu0
        %v5976 = vadd.f32 0.0, %v5975
        %5977 = vmatmul.f32.gmra.mxu0 %v5866
        %v5978 = vpop.f32.mrf.mxu0
        %v5979 = vadd.f32 0.0, %v5978
        %5980 = vmatmul.f32.gmra.mxu0 %v5869
        %v5981 = vpop.f32.mrf.mxu0
        %v5982 = vadd.f32 0.0, %v5981
        %5983 = vmatmul.f32.gmra.mxu0 %v5872
        %v5984 = vpop.f32.mrf.mxu0
        %v5985 = vadd.f32 0.0, %v5984
        %5986 = vmatmul.f32.gmra.mxu0 %v5875
        %v5987 = vpop.f32.mrf.mxu0
        %v5988 = vadd.f32 0.0, %v5987
        %5989 = vmatmul.f32.gmra.mxu0 %v5878
        %v5990 = vpop.f32.mrf.mxu0
        %v5991 = vadd.f32 0.0, %v5990
        %5992 = vmatmul.f32.gmra.mxu0 %v5881
        %v5993 = vpop.f32.mrf.mxu0
        %v5994 = vadd.f32 0.0, %v5993
        %5995 = vmatmul.f32.gmra.mxu0 %v5884
        %v5996 = vpop.f32.mrf.mxu0
        %v5997 = vadd.f32 0.0, %v5996
        %5998 = vmatmul.f32.gmra.mxu0 %v5887
        %v5999 = vpop.f32.mrf.mxu0
        %v6000 = vadd.f32 0.0, %v5999
        %6001 = vmatmul.f32.gmra.mxu0 %v5890
        %v6002 = vpop.f32.mrf.mxu0
        %v6003 = vadd.f32 0.0, %v6002
        %6004 = vmatmul.f32.gmra.mxu0 %v5893
        %v6005 = vpop.f32.mrf.mxu0
        %v6006 = vadd.f32 0.0, %v6005
        %6007 = vmatmul.f32.gmra.mxu0 %v5896
        %v6008 = vpop.f32.mrf.mxu0
        %v6009 = vadd.f32 0.0, %v6008
        %6010 = vmatmul.f32.gmra.mxu0 %v5899
        %v6011 = vpop.f32.mrf.mxu0
        %v6012 = vadd.f32 0.0, %v6011
        %6013 = vmatmul.f32.gmra.mxu0 %v5902
        %v6014 = vpop.f32.mrf.mxu0
        %v6015 = vadd.f32 0.0, %v6014
        %6016 = vmatmul.f32.gmra.mxu0 %v5905
        %v6017 = vpop.f32.mrf.mxu0
        %v6018 = vadd.f32 0.0, %v6017
        %6019 = vmatmul.f32.gmra.mxu0 %v5908
        %v6020 = vpop.f32.mrf.mxu0
        %v6021 = vadd.f32 0.0, %v6020
        %6022 = vmatmul.f32.gmra.mxu0 %v5911
        %v6023 = vpop.f32.mrf.mxu0
        %v6024 = vadd.f32 0.0, %v6023
        %6025 = vmatmul.f32.gmra.mxu0 %v5914
        %v6026 = vpop.f32.mrf.mxu0
        %v6027 = vadd.f32 0.0, %v6026
        %6028 = vmatmul.f32.gmra.mxu0 %v5917
        %v6029 = vpop.f32.mrf.mxu0
        %v6030 = vadd.f32 0.0, %v6029
        %6031 = vmatmul.f32.gmra.mxu0 %v5920
        %v6032 = vpop.f32.mrf.mxu0
        %v6033 = vadd.f32 0.0, %v6032
        %6034 = vmatmul.f32.gmra.mxu0 %v5923
        %v6035 = vpop.f32.mrf.mxu0
        %v6036 = vadd.f32 0.0, %v6035
        %6037 = vmatmul.f32.gmra.mxu0 %v5926
        %v6038 = vpop.f32.mrf.mxu0
        %v6039 = vadd.f32 0.0, %v6038
        %6040 = vmatmul.f32.gmra.mxu0 %v5929
        %v6041 = vpop.f32.mrf.mxu0
        %v6042 = vadd.f32 0.0, %v6041
        %6043 = vdwg.mxu0
        %v6044 = vadd.f32 %v5766, %v5949
        %v6045 = vadd.f32 %v5767, %v5952
        %v6046 = vadd.f32 %v5768, %v5955
        %v6047 = vadd.f32 %v5769, %v5958
        %v6048 = vadd.f32 %v5770, %v5961
        %v6049 = vadd.f32 %v5771, %v5964
        %v6050 = vadd.f32 %v5772, %v5967
        %v6051 = vadd.f32 %v5773, %v5970
        %v6052 = vadd.f32 %v5774, %v5973
        %v6053 = vadd.f32 %v5775, %v5976
        %v6054 = vadd.f32 %v5776, %v5979
        %v6055 = vadd.f32 %v5777, %v5982
        %v6056 = vadd.f32 %v5778, %v5985
        %v6057 = vadd.f32 %v5779, %v5988
        %v6058 = vadd.f32 %v5780, %v5991
        %v6059 = vadd.f32 %v5781, %v5994
        %v6060 = vadd.f32 %v5782, %v5997
        %v6061 = vadd.f32 %v5783, %v6000
        %v6062 = vadd.f32 %v5784, %v6003
        %v6063 = vadd.f32 %v5785, %v6006
        %v6064 = vadd.f32 %v5786, %v6009
        %v6065 = vadd.f32 %v5787, %v6012
        %v6066 = vadd.f32 %v5788, %v6015
        %v6067 = vadd.f32 %v5789, %v6018
        %v6068 = vadd.f32 %v5790, %v6021
        %v6069 = vadd.f32 %v5791, %v6024
        %v6070 = vadd.f32 %v5792, %v6027
        %v6071 = vadd.f32 %v5793, %v6030
        %v6072 = vadd.f32 %v5794, %v6033
        %v6073 = vadd.f32 %v5795, %v6036
        %v6074 = vadd.f32 %v5796, %v6039
        %v6075 = vadd.f32 %v5797, %v6042
        %v6076 = vld [vmem:[#allocation7] sm:$0x1]
        %v6078 = vperm.slane %v6076, 0
        %v6080 = vadd.f32 %v6044, %v6078
        %v6081 = vadd.f32 %v6045, %v6078
        %v6082 = vadd.f32 %v6046, %v6078
        %v6083 = vadd.f32 %v6047, %v6078
        %v6084 = vadd.f32 %v6048, %v6078
        %v6085 = vadd.f32 %v6049, %v6078
        %v6086 = vadd.f32 %v6050, %v6078
        %v6087 = vadd.f32 %v6051, %v6078
        %v6088 = vadd.f32 %v6052, %v6078
        %v6089 = vadd.f32 %v6053, %v6078
        %v6090 = vadd.f32 %v6054, %v6078
        %v6091 = vadd.f32 %v6055, %v6078
        %v6092 = vadd.f32 %v6056, %v6078
        %v6093 = vadd.f32 %v6057, %v6078
        %v6094 = vadd.f32 %v6058, %v6078
        %v6095 = vadd.f32 %v6059, %v6078
        %v6096 = vadd.f32 %v6060, %v6078
        %v6097 = vadd.f32 %v6061, %v6078
        %v6098 = vadd.f32 %v6062, %v6078
        %v6099 = vadd.f32 %v6063, %v6078
        %v6100 = vadd.f32 %v6064, %v6078
        %v6101 = vadd.f32 %v6065, %v6078
        %v6102 = vadd.f32 %v6066, %v6078
        %v6103 = vadd.f32 %v6067, %v6078
        %v6104 = vadd.f32 %v6068, %v6078
        %v6105 = vadd.f32 %v6069, %v6078
        %v6106 = vadd.f32 %v6070, %v6078
        %v6107 = vadd.f32 %v6071, %v6078
        %v6108 = vadd.f32 %v6072, %v6078
        %v6109 = vadd.f32 %v6073, %v6078
        %v6110 = vadd.f32 %v6074, %v6078
        %v6111 = vadd.f32 %v6075, %v6078
        %v6112 = vmax.f32 %v6080, 0.0
        %v6113 = vmax.f32 %v6081, 0.0
        %v6114 = vmax.f32 %v6082, 0.0
        %v6115 = vmax.f32 %v6083, 0.0
        %v6116 = vmax.f32 %v6084, 0.0
        %v6117 = vmax.f32 %v6085, 0.0
        %v6118 = vmax.f32 %v6086, 0.0
        %v6119 = vmax.f32 %v6087, 0.0
        %v6120 = vmax.f32 %v6088, 0.0
        %v6121 = vmax.f32 %v6089, 0.0
        %v6122 = vmax.f32 %v6090, 0.0
        %v6123 = vmax.f32 %v6091, 0.0
        %v6124 = vmax.f32 %v6092, 0.0
        %v6125 = vmax.f32 %v6093, 0.0
        %v6126 = vmax.f32 %v6094, 0.0
        %v6127 = vmax.f32 %v6095, 0.0
        %v6128 = vmax.f32 %v6096, 0.0
        %v6129 = vmax.f32 %v6097, 0.0
        %v6130 = vmax.f32 %v6098, 0.0
        %v6131 = vmax.f32 %v6099, 0.0
        %v6132 = vmax.f32 %v6100, 0.0
        %v6133 = vmax.f32 %v6101, 0.0
        %v6134 = vmax.f32 %v6102, 0.0
        %v6135 = vmax.f32 %v6103, 0.0
        %v6136 = vmax.f32 %v6104, 0.0
        %v6137 = vmax.f32 %v6105, 0.0
        %v6138 = vmax.f32 %v6106, 0.0
        %v6139 = vmax.f32 %v6107, 0.0
        %v6140 = vmax.f32 %v6108, 0.0
        %v6141 = vmax.f32 %v6109, 0.0
        %v6142 = vmax.f32 %v6110, 0.0
        %v6143 = vmax.f32 %v6111, 0.0
        %vm6144 = vcmask 523264
        %6145 = vst.msk [vmem:[#allocation4] sm:$0xff] %vm6144, %v6112
        %6146 = vst.msk [vmem:[#allocation4 + $0x8] sm:$0xff] %vm6144, %v6113
        %6147 = vst.msk [vmem:[#allocation4 + $0x10] sm:$0xff] %vm6144, %v6114
        %6148 = vst.msk [vmem:[#allocation4 + $0x18] sm:$0xff] %vm6144, %v6115
        %6149 = vst.msk [vmem:[#allocation4 + $0x20] sm:$0xff] %vm6144, %v6116
        %6150 = vst.msk [vmem:[#allocation4 + $0x28] sm:$0xff] %vm6144, %v6117
        %6151 = vst.msk [vmem:[#allocation4 + $0x30] sm:$0xff] %vm6144, %v6118
        %6152 = vst.msk [vmem:[#allocation4 + $0x38] sm:$0xff] %vm6144, %v6119
        %6153 = vst.msk [vmem:[#allocation4 + $0x40] sm:$0xff] %vm6144, %v6120
        %6154 = vst.msk [vmem:[#allocation4 + $0x48] sm:$0xff] %vm6144, %v6121
        %6155 = vst.msk [vmem:[#allocation4 + $0x50] sm:$0xff] %vm6144, %v6122
        %6156 = vst.msk [vmem:[#allocation4 + $0x58] sm:$0xff] %vm6144, %v6123
        %6157 = vst.msk [vmem:[#allocation4 + $0x60] sm:$0xff] %vm6144, %v6124
        %6158 = vst.msk [vmem:[#allocation4 + $0x68] sm:$0xff] %vm6144, %v6125
        %6159 = vst.msk [vmem:[#allocation4 + $0x70] sm:$0xff] %vm6144, %v6126
        %6160 = vst.msk [vmem:[#allocation4 + $0x78] sm:$0xff] %vm6144, %v6127
        %6161 = vst.msk [vmem:[#allocation4 + $0x80] sm:$0xff] %vm6144, %v6128
        %6162 = vst.msk [vmem:[#allocation4 + $0x88] sm:$0xff] %vm6144, %v6129
        %6163 = vst.msk [vmem:[#allocation4 + $0x90] sm:$0xff] %vm6144, %v6130
        %6164 = vst.msk [vmem:[#allocation4 + $0x98] sm:$0xff] %vm6144, %v6131
        %6165 = vst.msk [vmem:[#allocation4 + $0xa0] sm:$0xff] %vm6144, %v6132
        %6166 = vst.msk [vmem:[#allocation4 + $0xa8] sm:$0xff] %vm6144, %v6133
        %6167 = vst.msk [vmem:[#allocation4 + $0xb0] sm:$0xff] %vm6144, %v6134
        %6168 = vst.msk [vmem:[#allocation4 + $0xb8] sm:$0xff] %vm6144, %v6135
        %6169 = vst.msk [vmem:[#allocation4 + $0xc0] sm:$0xff] %vm6144, %v6136
        %6170 = vst.msk [vmem:[#allocation4 + $0xc8] sm:$0xff] %vm6144, %v6137
        %6171 = vst.msk [vmem:[#allocation4 + $0xd0] sm:$0xff] %vm6144, %v6138
        %6172 = vst.msk [vmem:[#allocation4 + $0xd8] sm:$0xff] %vm6144, %v6139
        %6173 = vst.msk [vmem:[#allocation4 + $0xe0] sm:$0xff] %vm6144, %v6140
        %6174 = vst.msk [vmem:[#allocation4 + $0xe8] sm:$0xff] %vm6144, %v6141
        %6175 = vst.msk [vmem:[#allocation4 + $0xf0] sm:$0xff] %vm6144, %v6142
        %6176 = vst.msk [vmem:[#allocation4 + $0xf8] sm:$0xff] %vm6144, %v6143
        %v6177 = vld [vmem:[#allocation4] sm:$0xff]
        %v6178 = vld [vmem:[#allocation4 + $0x8] sm:$0x3f]
        %v6179 = vld [vmem:[#allocation4 + $0x1] sm:$0xff]
        %v6180 = vld [vmem:[#allocation4 + $0x9] sm:$0x3f]
        %v6181 = vld [vmem:[#allocation4 + $0x10] sm:$0xff]
        %v6182 = vld [vmem:[#allocation4 + $0x18] sm:$0x3f]
        %v6183 = vld [vmem:[#allocation4 + $0x11] sm:$0xff]
        %v6184 = vld [vmem:[#allocation4 + $0x19] sm:$0x3f]
        %v6185 = vmax.f32 %v6177, %v6179
        %v6186 = vmax.f32 %v6178, %v6180
        %v6187 = vmax.f32 %v6181, %v6183
        %v6188 = vmax.f32 %v6182, %v6184
        %v6189 = vmax.f32 %v6185, %v6187
        %v6190 = vmax.f32 %v6186, %v6188
        %v6191 = vld [vmem:[#allocation10] sm:$0x7f]
        %vm6192 = vcmask 113664
        %v6194 = vsel %vm6192, %v6191, 0
        %vm6196 = vcmask 1045504
        %v6198 = vsel %vm6196, %v6190, 0
        %6200 = vmatpush.msra.mxu0 0.0
        %6201 = vmatpush.msra.mxu0 0.0
        %6202 = vmatpush.msra.mxu0 0.0
        %6203 = vmatpush.msra.mxu0 0.0
        %6204 = vmatpush.msra.mxu0 0.0
        %6205 = vmatpush.msra.mxu0 0.0
        %6206 = vmatpush.msra.mxu0 0.0
        %6207 = vmatpush.msra.mxu0 0.0
        %6208 = vmatpush.msra.mxu0 0.0
        %6209 = vmatpush.msra.mxu0 0.0
        %6210 = vmatpush.msra.mxu0 0.0
        %6211 = vmatpush.msra.mxu0 0.0
        %6212 = vmatpush.msra.mxu0 0.0
        %6213 = vmatpush.msra.mxu0 0.0
        %6214 = vmatpush.msra.mxu0 %v6198
        %6215 = vmatpush.msra.mxu0 %v6189
        %6216 = vmatmul.f32.gmra.mxu0 %v6194
        %v6217 = vpop.f32.mrf.mxu0
        %v6218 = vadd.f32 0.0, %v6217
        %6219 = vdwg.mxu0
        %vm6220 = vcmask 522240
        %6221 = vst.msk [vmem:[%s338] sm:$0x7f] %vm6220, %v6218
        %v6222 = vld [vmem:[#allocation4 + $0x20] sm:$0xff]
        %v6223 = vld [vmem:[#allocation4 + $0x28] sm:$0x3f]
        %v6224 = vld [vmem:[#allocation4 + $0x21] sm:$0xff]
        %v6225 = vld [vmem:[#allocation4 + $0x29] sm:$0x3f]
        %v6226 = vld [vmem:[#allocation4 + $0x30] sm:$0xff]
        %v6227 = vld [vmem:[#allocation4 + $0x38] sm:$0x3f]
        %v6228 = vld [vmem:[#allocation4 + $0x31] sm:$0xff]
        %v6229 = vld [vmem:[#allocation4 + $0x39] sm:$0x3f]
        %v6230 = vmax.f32 %v6222, %v6224
        %v6231 = vmax.f32 %v6223, %v6225
        %v6232 = vmax.f32 %v6226, %v6228
        %v6233 = vmax.f32 %v6227, %v6229
        %v6234 = vmax.f32 %v6230, %v6232
        %v6235 = vmax.f32 %v6231, %v6233
        %v6236 = vld [vmem:[#allocation10] sm:$0x7f]
        %v6238 = vsel %vm6192, %v6236, 0
        %v6241 = vsel %vm6196, %v6235, 0
        %6243 = vmatpush.msra.mxu0 0.0
        %6244 = vmatpush.msra.mxu0 0.0
        %6245 = vmatpush.msra.mxu0 0.0
        %6246 = vmatpush.msra.mxu0 0.0
        %6247 = vmatpush.msra.mxu0 0.0
        %6248 = vmatpush.msra.mxu0 0.0
        %6249 = vmatpush.msra.mxu0 0.0
        %6250 = vmatpush.msra.mxu0 0.0
        %6251 = vmatpush.msra.mxu0 0.0
        %6252 = vmatpush.msra.mxu0 0.0
        %6253 = vmatpush.msra.mxu0 0.0
        %6254 = vmatpush.msra.mxu0 0.0
        %6255 = vmatpush.msra.mxu0 0.0
        %6256 = vmatpush.msra.mxu0 0.0
        %6257 = vmatpush.msra.mxu0 %v6241
        %6258 = vmatpush.msra.mxu0 %v6234
        %6259 = vmatmul.f32.gmra.mxu0 %v6238
        %v6260 = vpop.f32.mrf.mxu0
        %v6261 = vadd.f32 0.0, %v6260
        %6262 = vdwg.mxu0
        %6263 = vst.msk [vmem:[%s338 + $0x7] sm:$0x7f] %vm6220, %v6261
        %v6264 = vld [vmem:[#allocation4 + $0x40] sm:$0xff]
        %v6265 = vld [vmem:[#allocation4 + $0x48] sm:$0x3f]
        %v6266 = vld [vmem:[#allocation4 + $0x41] sm:$0xff]
        %v6267 = vld [vmem:[#allocation4 + $0x49] sm:$0x3f]
        %v6268 = vld [vmem:[#allocation4 + $0x50] sm:$0xff]
        %v6269 = vld [vmem:[#allocation4 + $0x58] sm:$0x3f]
        %v6270 = vld [vmem:[#allocation4 + $0x51] sm:$0xff]
        %v6271 = vld [vmem:[#allocation4 + $0x59] sm:$0x3f]
        %v6272 = vmax.f32 %v6264, %v6266
        %v6273 = vmax.f32 %v6265, %v6267
        %v6274 = vmax.f32 %v6268, %v6270
        %v6275 = vmax.f32 %v6269, %v6271
        %v6276 = vmax.f32 %v6272, %v6274
        %v6277 = vmax.f32 %v6273, %v6275
        %v6278 = vld [vmem:[#allocation10] sm:$0x7f]
        %v6280 = vsel %vm6192, %v6278, 0
        %v6283 = vsel %vm6196, %v6277, 0
        %6285 = vmatpush.msra.mxu0 0.0
        %6286 = vmatpush.msra.mxu0 0.0
        %6287 = vmatpush.msra.mxu0 0.0
        %6288 = vmatpush.msra.mxu0 0.0
        %6289 = vmatpush.msra.mxu0 0.0
        %6290 = vmatpush.msra.mxu0 0.0
        %6291 = vmatpush.msra.mxu0 0.0
        %6292 = vmatpush.msra.mxu0 0.0
        %6293 = vmatpush.msra.mxu0 0.0
        %6294 = vmatpush.msra.mxu0 0.0
        %6295 = vmatpush.msra.mxu0 0.0
        %6296 = vmatpush.msra.mxu0 0.0
        %6297 = vmatpush.msra.mxu0 0.0
        %6298 = vmatpush.msra.mxu0 0.0
        %6299 = vmatpush.msra.mxu0 %v6283
        %6300 = vmatpush.msra.mxu0 %v6276
        %6301 = vmatmul.f32.gmra.mxu0 %v6280
        %v6302 = vpop.f32.mrf.mxu0
        %v6303 = vadd.f32 0.0, %v6302
        %6304 = vdwg.mxu0
        %6305 = vst.msk [vmem:[%s338 + $0xe] sm:$0x7f] %vm6220, %v6303
        %v6306 = vld [vmem:[#allocation4 + $0x60] sm:$0xff]
        %v6307 = vld [vmem:[#allocation4 + $0x68] sm:$0x3f]
        %v6308 = vld [vmem:[#allocation4 + $0x61] sm:$0xff]
        %v6309 = vld [vmem:[#allocation4 + $0x69] sm:$0x3f]
        %v6310 = vld [vmem:[#allocation4 + $0x70] sm:$0xff]
        %v6311 = vld [vmem:[#allocation4 + $0x78] sm:$0x3f]
        %v6312 = vld [vmem:[#allocation4 + $0x71] sm:$0xff]
        %v6313 = vld [vmem:[#allocation4 + $0x79] sm:$0x3f]
        %v6314 = vmax.f32 %v6306, %v6308
        %v6315 = vmax.f32 %v6307, %v6309
        %v6316 = vmax.f32 %v6310, %v6312
        %v6317 = vmax.f32 %v6311, %v6313
        %v6318 = vmax.f32 %v6314, %v6316
        %v6319 = vmax.f32 %v6315, %v6317
        %v6320 = vld [vmem:[#allocation10] sm:$0x7f]
        %v6322 = vsel %vm6192, %v6320, 0
        %v6325 = vsel %vm6196, %v6319, 0
        %6327 = vmatpush.msra.mxu0 0.0
        %6328 = vmatpush.msra.mxu0 0.0
        %6329 = vmatpush.msra.mxu0 0.0
        %6330 = vmatpush.msra.mxu0 0.0
        %6331 = vmatpush.msra.mxu0 0.0
        %6332 = vmatpush.msra.mxu0 0.0
        %6333 = vmatpush.msra.mxu0 0.0
        %6334 = vmatpush.msra.mxu0 0.0
        %6335 = vmatpush.msra.mxu0 0.0
        %6336 = vmatpush.msra.mxu0 0.0
        %6337 = vmatpush.msra.mxu0 0.0
        %6338 = vmatpush.msra.mxu0 0.0
        %6339 = vmatpush.msra.mxu0 0.0
        %6340 = vmatpush.msra.mxu0 0.0
        %6341 = vmatpush.msra.mxu0 %v6325
        %6342 = vmatpush.msra.mxu0 %v6318
        %6343 = vmatmul.f32.gmra.mxu0 %v6322
        %v6344 = vpop.f32.mrf.mxu0
        %v6345 = vadd.f32 0.0, %v6344
        %6346 = vdwg.mxu0
        %6347 = vst.msk [vmem:[%s338 + $0x15] sm:$0x7f] %vm6220, %v6345
        %v6348 = vld [vmem:[#allocation4 + $0x80] sm:$0xff]
        %v6349 = vld [vmem:[#allocation4 + $0x88] sm:$0x3f]
        %v6350 = vld [vmem:[#allocation4 + $0x81] sm:$0xff]
        %v6351 = vld [vmem:[#allocation4 + $0x89] sm:$0x3f]
        %v6352 = vld [vmem:[#allocation4 + $0x90] sm:$0xff]
        %v6353 = vld [vmem:[#allocation4 + $0x98] sm:$0x3f]
        %v6354 = vld [vmem:[#allocation4 + $0x91] sm:$0xff]
        %v6355 = vld [vmem:[#allocation4 + $0x99] sm:$0x3f]
        %v6356 = vmax.f32 %v6348, %v6350
        %v6357 = vmax.f32 %v6349, %v6351
        %v6358 = vmax.f32 %v6352, %v6354
        %v6359 = vmax.f32 %v6353, %v6355
        %v6360 = vmax.f32 %v6356, %v6358
        %v6361 = vmax.f32 %v6357, %v6359
        %v6362 = vld [vmem:[#allocation10] sm:$0x7f]
        %v6364 = vsel %vm6192, %v6362, 0
        %v6367 = vsel %vm6196, %v6361, 0
        %6369 = vmatpush.msra.mxu0 0.0
        %6370 = vmatpush.msra.mxu0 0.0
        %6371 = vmatpush.msra.mxu0 0.0
        %6372 = vmatpush.msra.mxu0 0.0
        %6373 = vmatpush.msra.mxu0 0.0
        %6374 = vmatpush.msra.mxu0 0.0
        %6375 = vmatpush.msra.mxu0 0.0
        %6376 = vmatpush.msra.mxu0 0.0
        %6377 = vmatpush.msra.mxu0 0.0
        %6378 = vmatpush.msra.mxu0 0.0
        %6379 = vmatpush.msra.mxu0 0.0
        %6380 = vmatpush.msra.mxu0 0.0
        %6381 = vmatpush.msra.mxu0 0.0
        %6382 = vmatpush.msra.mxu0 0.0
        %6383 = vmatpush.msra.mxu0 %v6367
        %6384 = vmatpush.msra.mxu0 %v6360
        %6385 = vmatmul.f32.gmra.mxu0 %v6364
        %v6386 = vpop.f32.mrf.mxu0
        %v6387 = vadd.f32 0.0, %v6386
        %6388 = vdwg.mxu0
        %6389 = vst.msk [vmem:[%s338 + $0x1c] sm:$0x7f] %vm6220, %v6387
        %v6390 = vld [vmem:[#allocation4 + $0xa0] sm:$0xff]
        %v6391 = vld [vmem:[#allocation4 + $0xa8] sm:$0x3f]
        %v6392 = vld [vmem:[#allocation4 + $0xa1] sm:$0xff]
        %v6393 = vld [vmem:[#allocation4 + $0xa9] sm:$0x3f]
        %v6394 = vld [vmem:[#allocation4 + $0xb0] sm:$0xff]
        %v6395 = vld [vmem:[#allocation4 + $0xb8] sm:$0x3f]
        %v6396 = vld [vmem:[#allocation4 + $0xb1] sm:$0xff]
        %v6397 = vld [vmem:[#allocation4 + $0xb9] sm:$0x3f]
        %v6398 = vmax.f32 %v6390, %v6392
        %v6399 = vmax.f32 %v6391, %v6393
        %v6400 = vmax.f32 %v6394, %v6396
        %v6401 = vmax.f32 %v6395, %v6397
        %v6402 = vmax.f32 %v6398, %v6400
        %v6403 = vmax.f32 %v6399, %v6401
        %v6404 = vld [vmem:[#allocation10] sm:$0x7f]
        %v6406 = vsel %vm6192, %v6404, 0
        %v6409 = vsel %vm6196, %v6403, 0
        %6411 = vmatpush.msra.mxu0 0.0
        %6412 = vmatpush.msra.mxu0 0.0
        %6413 = vmatpush.msra.mxu0 0.0
        %6414 = vmatpush.msra.mxu0 0.0
        %6415 = vmatpush.msra.mxu0 0.0
        %6416 = vmatpush.msra.mxu0 0.0
        %6417 = vmatpush.msra.mxu0 0.0
        %6418 = vmatpush.msra.mxu0 0.0
        %6419 = vmatpush.msra.mxu0 0.0
        %6420 = vmatpush.msra.mxu0 0.0
        %6421 = vmatpush.msra.mxu0 0.0
        %6422 = vmatpush.msra.mxu0 0.0
        %6423 = vmatpush.msra.mxu0 0.0
        %6424 = vmatpush.msra.mxu0 0.0
        %6425 = vmatpush.msra.mxu0 %v6409
        %6426 = vmatpush.msra.mxu0 %v6402
        %6427 = vmatmul.f32.gmra.mxu0 %v6406
        %v6428 = vpop.f32.mrf.mxu0
        %v6429 = vadd.f32 0.0, %v6428
        %6430 = vdwg.mxu0
        %6431 = vst.msk [vmem:[%s338 + $0x23] sm:$0x7f] %vm6220, %v6429
        %v6432 = vld [vmem:[#allocation4 + $0xc0] sm:$0xff]
        %v6433 = vld [vmem:[#allocation4 + $0xc8] sm:$0x3f]
        %v6434 = vld [vmem:[#allocation4 + $0xc1] sm:$0xff]
        %v6435 = vld [vmem:[#allocation4 + $0xc9] sm:$0x3f]
        %v6436 = vld [vmem:[#allocation4 + $0xd0] sm:$0xff]
        %v6437 = vld [vmem:[#allocation4 + $0xd8] sm:$0x3f]
        %v6438 = vld [vmem:[#allocation4 + $0xd1] sm:$0xff]
        %v6439 = vld [vmem:[#allocation4 + $0xd9] sm:$0x3f]
        %v6440 = vmax.f32 %v6432, %v6434
        %v6441 = vmax.f32 %v6433, %v6435
        %v6442 = vmax.f32 %v6436, %v6438
        %v6443 = vmax.f32 %v6437, %v6439
        %v6444 = vmax.f32 %v6440, %v6442
        %v6445 = vmax.f32 %v6441, %v6443
        %v6446 = vld [vmem:[#allocation10] sm:$0x7f]
        %v6448 = vsel %vm6192, %v6446, 0
        %v6451 = vsel %vm6196, %v6445, 0
        %6453 = vmatpush.msra.mxu0 0.0
        %6454 = vmatpush.msra.mxu0 0.0
        %6455 = vmatpush.msra.mxu0 0.0
        %6456 = vmatpush.msra.mxu0 0.0
        %6457 = vmatpush.msra.mxu0 0.0
        %6458 = vmatpush.msra.mxu0 0.0
        %6459 = vmatpush.msra.mxu0 0.0
        %6460 = vmatpush.msra.mxu0 0.0
        %6461 = vmatpush.msra.mxu0 0.0
        %6462 = vmatpush.msra.mxu0 0.0
        %6463 = vmatpush.msra.mxu0 0.0
        %6464 = vmatpush.msra.mxu0 0.0
        %6465 = vmatpush.msra.mxu0 0.0
        %6466 = vmatpush.msra.mxu0 0.0
        %6467 = vmatpush.msra.mxu0 %v6451
        %6468 = vmatpush.msra.mxu0 %v6444
        %6469 = vmatmul.f32.gmra.mxu0 %v6448
        %v6470 = vpop.f32.mrf.mxu0
        %v6471 = vadd.f32 0.0, %v6470
        %6472 = vdwg.mxu0
        %6473 = vst.msk [vmem:[%s338 + $0x2a] sm:$0x7f] %vm6220, %v6471
        %p6474 = scmp.lt.s32.totalorder %s21, 1
        %s6475 = scalar_select %p6474, %s21, 1
        %s6476 = smul.addr %s6475, 7
        %s6477 = smul.addr %s6476, 8
        %s6478 = scalar_lea.vmem %s7, %s6477
        // Predicated region
        $region65: #{subclassnet_forward.2} parent=47 // pred_check
          %p6479 = pneg %p191
        $region66: #{subclassnet_forward.2} parent=47 // pred_check_branch
          %6481 = sbr.rel (%p6479) target = $region68
        $region67: #{subclassnet_forward.2} parent=47 // pred_region
          _
        $region68: #{subclassnet_forward.2} parent=47 // pred_fallthru
          _
      $region48: #{subclassnet_forward.2} parent=5 // pred_fallthru
        _
      %p6482 = scmp.le.s32.totalorder 2, %s16
      // Predicated region
      $region69: #{subclassnet_forward.2} parent=5 // pred_check
        %p6483 = pneg %p6482
      $region70: #{subclassnet_forward.2} parent=5 // pred_check_branch
        %6485 = sbr.rel (%p6483) target = $region72
      $region71: #{subclassnet_forward.2} parent=5 // pred_region
        %s6486 = ssub.s32 %s16, 2
        // Predicated region
        $region73: #{subclassnet_forward.2} parent=71 // pred_check
          %p6487 = pneg %p197
        $region74: #{subclassnet_forward.2} parent=71 // pred_check_branch
          %6489 = sbr.rel (%p6487) target = $region76
        $region75: #{subclassnet_forward.2} parent=71 // pred_region
          %p6490 = scmp.lt.s32.totalorder %s22, 1
          %s6491 = scalar_select %p6490, %s22, 1
          %s6492 = smul.addr %s6491, 7
          %s6493 = smul.addr %s6492, 8
          %s6494 = scalar_lea.vmem %s7, %s6493
        $region76: #{subclassnet_forward.2} parent=71 // pred_fallthru
          _
      $region72: #{subclassnet_forward.2} parent=5 // pred_fallthru
        _
    $region6: #{subclassnet_forward.2} parent=1 // loop_footer
      %s20 = sadd.s32 1, %s16
    $region7: #{subclassnet_forward.2} parent=1 // loop_footer_branch
      %15 = sbr.rel target = $region3
    $region8: #{subclassnet_forward.2} parent=1 // loop_exit
      _
    %6495 = vsyncpa [#allocation6], 1
    %s6496 = scalar_lea.sflag [#allocation6], 1
    %6497 = vsyncpa %s6496, 1
    %6498 = vsyncpa [#allocation8], 1
    %6499 = vsyncpa [#allocation11], 1

</llo_original>
